<compile_context>
chip_gen: v7x
topology: tpu7x:2x2x1
jax: 0.10.0
libtpu: 0.0.40
codegen_flags: <defaults>
</compile_context>

<pallas_src>
import math
import functools

import jax
import jax.numpy as jnp
from jax import lax
from jax.experimental import pallas as pl
from jax.experimental.pallas import tpu as pltpu


# ----------------------------------------------------------------------------
# Kernel body (values in channel-major (C, H*W) layout, H*W in lanes)
# ----------------------------------------------------------------------------

def _make_kernel(C, H1, W1):
    H2, W2 = 2 * H1, 2 * W1
    H3, W3 = 4 * H1, 4 * W1

    def upsample(x, u_ref):
        # Bilinear 2x (align_corners=True) as one MXU matmul against kron(U,U).T
        return jnp.dot(x.astype(jnp.bfloat16), u_ref[...],
                       preferred_element_type=jnp.float32)

    def im2col_bf16(x, W, mask_ref):
        """3x3 im2col via XLU lane rotations + precomputed boundary masks.

        x:        (Cin, S) f32 flattened activation
        mask_ref: (9, S)   f32 validity masks, tap order (dh, dw) row-major
        returns   (9*Cin, S) bf16 patches (tap-major, cin minor)
        """
        Cin, S = x.shape
        cols = []
        t = 0
        for dh in (-1, 0, 1):
            for dw in (-1, 0, 1):
                d = dh * W + dw
                if d == 0:
                    cols.append(x)                       # center tap, always valid
                else:
                    shifted = pltpu.roll(x, (-d) % S, axis=1)
                    cols.append(shifted * mask_ref[t:t + 1, :])
                t += 1
        return jnp.concatenate(cols, axis=0).astype(jnp.bfloat16)

    def conv(patches_bf16, w_ref, shift_ref):
        # BN scale is folded into w_ref rows host-side; only shift + ReLU here.
        y = jnp.dot(w_ref[...], patches_bf16, preferred_element_type=jnp.float32)
        return jnp.maximum(y + shift_ref[...], 0.0)

    def kernel(x1_ref, x2_ref, x3_ref, u1_ref, u2_ref, m2_ref, m3_ref,
               w14_ref, s14_ref, wcu2_ref, scu2_ref, wcu3_ref, scu3_ref,
               wcc2_ref, scc2_ref, wcu5_ref, scu5_ref, wcc3_ref, scc3_ref,
               wc4_ref, sc4_ref, wc5_ref, bc5_ref, o_ref):
        x1 = x1_ref[...]                                  # (C, S1)
        x2 = x2_ref[...]                                  # (C, S2)
        x3 = x3_ref[...]                                  # (C, S3)

        x1_up = upsample(x1, u1_ref)                      # (C, S2)
        x1_upup = upsample(x1_up, u2_ref)                 # (C, S3)
        x2_up = upsample(x2, u2_ref)                      # (C, S3)

        # Shared im2col + stacked weights for conv_upsample1 / conv_upsample4.
        p_x1up = im2col_bf16(x1_up, W2, m2_ref)           # (9C, S2)
        y14 = conv(p_x1up, w14_ref, s14_ref)              # (2C, S2)
        x2_1 = y14[0:C, :] * x2                           # conv_upsample1 * x2
        cu4 = y14[C:2 * C, :]                             # conv_upsample4

        cu2 = conv(im2col_bf16(x1_upup, W3, m3_ref), wcu2_ref, scu2_ref)
        cu3 = conv(im2col_bf16(x2_up, W3, m3_ref), wcu3_ref, scu3_ref)
        x3_1 = cu2 * cu3 * x3                             # (C, S3)

        x2_2_in = jnp.concatenate([x2_1, cu4], axis=0)    # (2C, S2)
        x2_2 = conv(im2col_bf16(x2_2_in, W2, m2_ref), wcc2_ref, scc2_ref)

        x2_2_up = upsample(x2_2, u2_ref)                  # (2C, S3)
        cu5 = conv(im2col_bf16(x2_2_up, W3, m3_ref), wcu5_ref, scu5_ref)

        x3_2_in = jnp.concatenate([x3_1, cu5], axis=0)    # (3C, S3)
        x3_2 = conv(im2col_bf16(x3_2_in, W3, m3_ref), wcc3_ref, scc3_ref)

        x4 = conv(im2col_bf16(x3_2, W3, m3_ref), wc4_ref, sc4_ref)   # (3C, S3)

        out = jnp.dot(wc5_ref[...], x4.astype(jnp.bfloat16),
                      preferred_element_type=jnp.float32) + bc5_ref[...]
        o_ref[...] = out                                  # (1, S3), lane-dense

    return kernel


# ----------------------------------------------------------------------------
# Host-side parameter / constant plumbing
# ----------------------------------------------------------------------------

def _upsample_matrix(n):
    """(2n, n) bilinear interpolation matrix, scale 2, align_corners=True."""
    m = 2 * n
    src = jnp.arange(m, dtype=jnp.float32) * ((n - 1) / (m - 1))
    i0 = jnp.floor(src).astype(jnp.int32)
    i1 = jnp.minimum(i0 + 1, n - 1)
    frac = src - i0.astype(jnp.float32)
    rows = jnp.arange(m)
    mat = jnp.zeros((m, n), jnp.float32)
    mat = mat.at[rows, i0].add(1.0 - frac)
    mat = mat.at[rows, i1].add(frac)
    return mat


def _tap_masks(H, W):
    """(9, H*W) f32 validity masks for the 3x3 taps, (dh, dw) row-major."""
    S = H * W
    lane = jnp.arange(S, dtype=jnp.int32)
    h = lane // W
    w = lane - h * W
    rows = []
    for dh in (-1, 0, 1):
        for dw in (-1, 0, 1):
            valid = ((h + dh >= 0) & (h + dh < H) &
                     (w + dw >= 0) & (w + dw < W))
            rows.append(valid.astype(jnp.float32))
    return jnp.stack(rows, axis=0)


def _folded_conv(p_entry):
    """(3,3,Cin,Cout) HWIO + BN -> ((Cout, 9*Cin) scale-folded f32, (Cout,1) shift)."""
    w_hwio, scale, shift = p_entry
    cout = w_hwio.shape[-1]
    wm = jnp.transpose(w_hwio, (3, 0, 1, 2)).reshape(cout, -1)
    wm = wm * scale.reshape(-1, 1)          # fold BN scale into weight rows
    return wm, shift.reshape(-1, 1)


def aggregation_forward(p, x1, x2, x3):
    """Inputs x1,x2,x3 in NCHW (PyTorch convention). Returns (N, 1, 4H1, 4W1)."""
    N, C, H1, W1 = x1.shape
    H2, W2, H3, W3 = 2 * H1, 2 * W1, 4 * H1, 4 * W1
    S1, S2, S3 = H1 * W1, H2 * W2, H3 * W3

    u1 = _upsample_matrix(H1)                              # (H2, H1)
    u2 = _upsample_matrix(H2)                              # (H3, H2)
    u1k = jnp.kron(u1, u1).T.astype(jnp.bfloat16)          # (S1, S2)
    u2k = jnp.kron(u2, u2).T.astype(jnp.bfloat16)          # (S2, S3)

    m2 = _tap_masks(H2, W2)                                # (9, S2) f32
    m3 = _tap_masks(H3, W3)                                # (9, S3) f32

    # Stacked weights for conv_upsample1 / conv_upsample4 (shared input x1_up).
    w_cu1, s_cu1 = _folded_conv(p["conv_upsample1"])
    w_cu4, s_cu4 = _folded_conv(p["conv_upsample4"])
    w14 = jnp.concatenate([w_cu1, w_cu4], axis=0).astype(jnp.bfloat16)
    s14 = jnp.concatenate([s_cu1, s_cu4], axis=0)

    consts = [u1k, u2k, m2, m3, w14, s14]
    for name in ("conv_upsample2", "conv_upsample3", "conv_concat2",
                 "conv_upsample5", "conv_concat3", "conv4"):
        wm, sh = _folded_conv(p[name])
        consts += [wm.astype(jnp.bfloat16), sh]
    consts += [p["conv5_w"].astype(jnp.bfloat16), p["conv5_b"].reshape(1, 1)]

    operands = [x1.reshape(N, C, S1), x2.reshape(N, C, S2),
                x3.reshape(N, C, S3)] + consts

    def _const_spec(a):
        idx = (0,) * a.ndim
        return pl.BlockSpec(a.shape, lambda b, _idx=idx: _idx)

    in_specs = [
        pl.BlockSpec((None, C, S1), lambda b: (b, 0, 0)),
        pl.BlockSpec((None, C, S2), lambda b: (b, 0, 0)),
        pl.BlockSpec((None, C, S3), lambda b: (b, 0, 0)),
    ] + [_const_spec(a) for a in consts]

    out_flat = pl.pallas_call(
        _make_kernel(C, H1, W1),
        out_shape=jax.ShapeDtypeStruct((N, 1, S3), jnp.float32),
        grid=(N,),
        in_specs=in_specs,
        out_specs=pl.BlockSpec((None, 1, S3), lambda b: (b, 0, 0)),
        compiler_params=pltpu.CompilerParams(
            dimension_semantics=("parallel",)),            # batch is independent
    )(*operands)
    return out_flat.reshape(N, 1, H3, W3)


# ----------------------------------------------------------------------------
# Deterministic parameter init (eval-mode BN)
# ----------------------------------------------------------------------------

def init_basic_conv(key, cin, cout):
    k1, k2, k3, k4, k5 = jax.random.split(key, 5)
    w = jax.random.normal(k1, (3, 3, cin, cout), jnp.float32) / math.sqrt(9 * cin)
    gamma = 1.0 + 0.1 * jax.random.normal(k2, (cout,), jnp.float32)
    beta = 0.1 * jax.random.normal(k3, (cout,), jnp.float32)
    mean = 0.1 * jax.random.normal(k4, (cout,), jnp.float32)
    var = 1.0 + 0.1 * jnp.abs(jax.random.normal(k5, (cout,), jnp.float32))
    scale = gamma / jnp.sqrt(var + 1e-5)
    shift = beta - mean * scale
    return (w, scale, shift)


def init_params(key, channel):
    keys = jax.random.split(key, 10)
    return {
        "conv_upsample1": init_basic_conv(keys[0], channel, channel),
        "conv_upsample2": init_basic_conv(keys[1], channel, channel),
        "conv_upsample3": init_basic_conv(keys[2], channel, channel),
        "conv_upsample4": init_basic_conv(keys[3], channel, channel),
        "conv_upsample5": init_basic_conv(keys[4], 2 * channel, 2 * channel),
        "conv_concat2":   init_basic_conv(keys[5], 2 * channel, 2 * channel),
        "conv_concat3":   init_basic_conv(keys[6], 3 * channel, 3 * channel),
        "conv4":          init_basic_conv(keys[7], 3 * channel, 3 * channel),
        "conv5_w": jax.random.normal(keys[8], (1, 3 * channel), jnp.float32)
                   / math.sqrt(3 * channel),
        "conv5_b": 0.1 * jax.random.normal(keys[9], (1,), jnp.float32),
    }


# ----------------------------------------------------------------------------
# Pure-JAX reference (NCHW, f32 HIGHEST precision) for correctness checking
# ----------------------------------------------------------------------------

def _ref_conv(x, w_hwio, scale, shift):
    y = lax.conv_general_dilated(
        x, w_hwio, window_strides=(1, 1), padding="SAME",
        dimension_numbers=("NCHW", "HWIO", "NCHW"),
        precision=lax.Precision.HIGHEST)
    y = y * scale.reshape(1, -1, 1, 1) + shift.reshape(1, -1, 1, 1)
    return jnp.maximum(y, 0.0)


def _ref_upsample(x):
    N, C, H, W = x.shape
    Ho, Wo = 2 * H, 2 * W
    hy = jnp.arange(Ho, dtype=jnp.float32) * (H - 1) / (Ho - 1)
    wx = jnp.arange(Wo, dtype=jnp.float32) * (W - 1) / (Wo - 1)
    h0 = jnp.floor(hy).astype(jnp.int32)
    w0 = jnp.floor(wx).astype(jnp.int32)
    h1 = jnp.minimum(h0 + 1, H - 1)
    w1 = jnp.minimum(w0 + 1, W - 1)
    ah = (hy - h0.astype(jnp.float32))[None, None, :, None]
    aw = (wx - w0.astype(jnp.float32))[None, None, None, :]
    xt = x[:, :, h0, :]
    xb = x[:, :, h1, :]
    top = xt[:, :, :, w0] * (1.0 - aw) + xt[:, :, :, w1] * aw
    bot = xb[:, :, :, w0] * (1.0 - aw) + xb[:, :, :, w1] * aw
    return top * (1.0 - ah) + bot * ah


def aggregation_forward_ref(p, x1, x2, x3):
    up = _ref_upsample
    x1_1 = x1
    x2_1 = _ref_conv(up(x1), *p["conv_upsample1"]) * x2
    x3_1 = (_ref_conv(up(up(x1)), *p["conv_upsample2"])
            * _ref_conv(up(x2), *p["conv_upsample3"]) * x3)
    x2_2 = jnp.concatenate(
        [x2_1, _ref_conv(up(x1_1), *p["conv_upsample4"])], axis=1)
    x2_2 = _ref_conv(x2_2, *p["conv_concat2"])
    x3_2 = jnp.concatenate(
        [x3_1, _ref_conv(up(x2_2), *p["conv_upsample5"])], axis=1)
    x3_2 = _ref_conv(x3_2, *p["conv_concat3"])
    x = _ref_conv(x3_2, *p["conv4"])
    x = (jnp.einsum("oc,nchw->nohw", p["conv5_w"], x,
                    precision=lax.Precision.HIGHEST)
         + p["conv5_b"].reshape(1, -1, 1, 1))
    return x


# ----------------------------------------------------------------------------

if __name__ == "__main__":
    channel = 8
    N, H1 = 2, 8      # x1 is the coarsest feature map
    key = jax.random.PRNGKey(0)
    kx1, kx2, kx3, kp = jax.random.split(key, 4)

    # PyTorch-convention NCHW inputs (kernel operates channel-major internally)
    x1 = jax.random.normal(kx1, (N, channel, H1, H1), jnp.float32)
    x2 = jax.random.normal(kx2, (N, channel, 2 * H1, 2 * H1), jnp.float32)
    x3 = jax.random.normal(kx3, (N, channel, 4 * H1, 4 * H1), jnp.float32)

    params = init_params(kp, channel)

    fwd = jax.jit(functools.partial(aggregation_forward, params))
    out = jax.block_until_ready(fwd(x1, x2, x3))       # (N, 1, 4*H1, 4*H1)

    # Correctness check vs. f32-HIGHEST pure-JAX reference. Kernel MXU operands
    # are bf16 (f32 accumulation), so allow ~3% of the reference dynamic range.
    ref = aggregation_forward_ref(params, x1, x2, x3)
    max_err = float(jnp.max(jnp.abs(out - ref)))
    ref_scale = max(1.0, float(jnp.max(jnp.abs(ref))))
    assert out.shape == (N, 1, 4 * H1, 4 * H1), out.shape
    assert max_err < 3e-2 * ref_scale, f"mismatch vs reference: {max_err}"

    print("KERNEL_OK")
</pallas_src>

<mosaic_0001>
module attributes {stable_mosaic.version = 11 : i64} {
  func.func private @main(%arg0: i32) attributes {dimension_semantics = [#tpu.dimension_semantics<core_parallel>], iteration_bounds = array<i64: 2>, tpu.core_type = #tpu.core_type<sc_scalar_subcore>, window_params = []} {
    return
  }
}

module attributes {stable_mosaic.version = 11 : i64} {
  func.func private @main(%arg0: i32) attributes {dimension_semantics = [#tpu.dimension_semantics<core_parallel>], iteration_bounds = array<i64: 2>, tpu.core_type = #tpu.core_type<sc_scalar_subcore>, window_params = []} {
    return
  }
}

module attributes {stable_mosaic.version = 11 : i64} {
  func.func @kernel(%arg0: i32, %arg1: memref<1x8x64xf32, #tpu.memory_space<vmem>>, %arg2: memref<1x8x256xf32, #tpu.memory_space<vmem>>, %arg3: memref<1x8x1024xf32, #tpu.memory_space<vmem>>, %arg4: memref<64x256xbf16, #tpu.memory_space<vmem>>, %arg5: memref<256x1024xbf16, #tpu.memory_space<vmem>>, %arg6: memref<9x256xf32, #tpu.memory_space<vmem>>, %arg7: memref<9x1024xf32, #tpu.memory_space<vmem>>, %arg8: memref<16x72xbf16, #tpu.memory_space<vmem>>, %arg9: memref<16x1xf32, #tpu.memory_space<vmem>>, %arg10: memref<8x72xbf16, #tpu.memory_space<vmem>>, %arg11: memref<8x1xf32, #tpu.memory_space<vmem>>, %arg12: memref<8x72xbf16, #tpu.memory_space<vmem>>, %arg13: memref<8x1xf32, #tpu.memory_space<vmem>>, %arg14: memref<16x144xbf16, #tpu.memory_space<vmem>>, %arg15: memref<16x1xf32, #tpu.memory_space<vmem>>, %arg16: memref<16x144xbf16, #tpu.memory_space<vmem>>, %arg17: memref<16x1xf32, #tpu.memory_space<vmem>>, %arg18: memref<24x216xbf16, #tpu.memory_space<vmem>>, %arg19: memref<24x1xf32, #tpu.memory_space<vmem>>, %arg20: memref<24x216xbf16, #tpu.memory_space<vmem>>, %arg21: memref<24x1xf32, #tpu.memory_space<vmem>>, %arg22: memref<1x24xbf16, #tpu.memory_space<vmem>>, %arg23: memref<1x1xf32, #tpu.memory_space<vmem>>, %arg24: memref<1x1x1024xf32, #tpu.memory_space<vmem>>) attributes {dimension_semantics = [#tpu.dimension_semantics<parallel>], iteration_bounds = array<i64: 2>, scalar_prefetch = 0 : i64, scratch_operands = 0 : i64, tpu.core_type = #tpu.core_type<tc>, window_params = [{transform_indices = @transform_0, window_bounds = array<i64: 1, 8, 64>}, {transform_indices = @transform_1, window_bounds = array<i64: 1, 8, 256>}, {transform_indices = @transform_2, window_bounds = array<i64: 1, 8, 1024>}, {pipeline_mode = #tpu.pipeline_mode<synchronous>, transform_indices = @transform_3, window_bounds = array<i64: 64, 256>}, {pipeline_mode = #tpu.pipeline_mode<synchronous>, transform_indices = @transform_4, window_bounds = array<i64: 256, 1024>}, {pipeline_mode = #tpu.pipeline_mode<synchronous>, transform_indices = @transform_5, window_bounds = array<i64: 9, 256>}, {pipeline_mode = #tpu.pipeline_mode<synchronous>, transform_indices = @transform_6, window_bounds = array<i64: 9, 1024>}, {pipeline_mode = #tpu.pipeline_mode<synchronous>, transform_indices = @transform_7, window_bounds = array<i64: 16, 72>}, {pipeline_mode = #tpu.pipeline_mode<synchronous>, transform_indices = @transform_8, window_bounds = array<i64: 16, 1>}, {pipeline_mode = #tpu.pipeline_mode<synchronous>, transform_indices = @transform_9, window_bounds = array<i64: 8, 72>}, {pipeline_mode = #tpu.pipeline_mode<synchronous>, transform_indices = @transform_10, window_bounds = array<i64: 8, 1>}, {pipeline_mode = #tpu.pipeline_mode<synchronous>, transform_indices = @transform_11, window_bounds = array<i64: 8, 72>}, {pipeline_mode = #tpu.pipeline_mode<synchronous>, transform_indices = @transform_12, window_bounds = array<i64: 8, 1>}, {pipeline_mode = #tpu.pipeline_mode<synchronous>, transform_indices = @transform_13, window_bounds = array<i64: 16, 144>}, {pipeline_mode = #tpu.pipeline_mode<synchronous>, transform_indices = @transform_14, window_bounds = array<i64: 16, 1>}, {pipeline_mode = #tpu.pipeline_mode<synchronous>, transform_indices = @transform_15, window_bounds = array<i64: 16, 144>}, {pipeline_mode = #tpu.pipeline_mode<synchronous>, transform_indices = @transform_16, window_bounds = array<i64: 16, 1>}, {pipeline_mode = #tpu.pipeline_mode<synchronous>, transform_indices = @transform_17, window_bounds = array<i64: 24, 216>}, {pipeline_mode = #tpu.pipeline_mode<synchronous>, transform_indices = @transform_18, window_bounds = array<i64: 24, 1>}, {pipeline_mode = #tpu.pipeline_mode<synchronous>, transform_indices = @transform_19, window_bounds = array<i64: 24, 216>}, {pipeline_mode = #tpu.pipeline_mode<synchronous>, transform_indices = @transform_20, window_bounds = array<i64: 24, 1>}, {pipeline_mode = #tpu.pipeline_mode<synchronous>, transform_indices = @transform_21, window_bounds = array<i64: 1, 24>}, {pipeline_mode = #tpu.pipeline_mode<synchronous>, transform_indices = @transform_22, window_bounds = array<i64: 1, 1>}, {transform_indices = @transform_23, window_bounds = array<i64: 1, 1, 1024>}]} {
    %c0 = arith.constant 0 : index
    %c0_0 = arith.constant 0 : index
    %c0_1 = arith.constant 0 : index
    %0 = vector.load %arg1[%c0, %c0_0, %c0_1] : memref<1x8x64xf32, #tpu.memory_space<vmem>>, vector<1x8x64xf32>
    %1 = vector.shape_cast %0 : vector<1x8x64xf32> to vector<8x64xf32>
    %c0_2 = arith.constant 0 : index
    %c0_3 = arith.constant 0 : index
    %c0_4 = arith.constant 0 : index
    %2 = vector.load %arg2[%c0_2, %c0_3, %c0_4] : memref<1x8x256xf32, #tpu.memory_space<vmem>>, vector<1x8x256xf32>
    %3 = vector.shape_cast %2 : vector<1x8x256xf32> to vector<8x256xf32>
    %c0_5 = arith.constant 0 : index
    %c0_6 = arith.constant 0 : index
    %c0_7 = arith.constant 0 : index
    %4 = vector.load %arg3[%c0_5, %c0_6, %c0_7] : memref<1x8x1024xf32, #tpu.memory_space<vmem>>, vector<1x8x1024xf32>
    %5 = vector.shape_cast %4 : vector<1x8x1024xf32> to vector<8x1024xf32>
    %6 = arith.truncf %1 : vector<8x64xf32> to vector<8x64xbf16>
    %c0_8 = arith.constant 0 : index
    %c0_9 = arith.constant 0 : index
    %7 = vector.load %arg4[%c0_8, %c0_9] : memref<64x256xbf16, #tpu.memory_space<vmem>>, vector<64x256xbf16>
    %cst = arith.constant dense<0.000000e+00> : vector<8x256xf32>
    %8 = tpu.matmul %6, %7, %cst {dimension_numbers = #tpu.dot_dimension_numbers<[1], [0], [0], [1], [0, 0, 1, 1], [], []>} : vector<8x64xbf16>, vector<64x256xbf16>, vector<8x256xf32> -> vector<8x256xf32>
    %9 = arith.truncf %8 : vector<8x256xf32> to vector<8x256xbf16>
    %c0_10 = arith.constant 0 : index
    %c0_11 = arith.constant 0 : index
    %10 = vector.load %arg5[%c0_10, %c0_11] : memref<256x1024xbf16, #tpu.memory_space<vmem>>, vector<256x1024xbf16>
    %cst_12 = arith.constant dense<0.000000e+00> : vector<8x1024xf32>
    %11 = tpu.matmul %9, %10, %cst_12 {dimension_numbers = #tpu.dot_dimension_numbers<[1], [0], [0], [1], [0, 0, 1, 1], [], []>} : vector<8x256xbf16>, vector<256x1024xbf16>, vector<8x1024xf32> -> vector<8x1024xf32>
    %12 = arith.truncf %3 : vector<8x256xf32> to vector<8x256xbf16>
    %c0_13 = arith.constant 0 : index
    %c0_14 = arith.constant 0 : index
    %13 = vector.load %arg5[%c0_13, %c0_14] : memref<256x1024xbf16, #tpu.memory_space<vmem>>, vector<256x1024xbf16>
    %cst_15 = arith.constant dense<0.000000e+00> : vector<8x1024xf32>
    %14 = tpu.matmul %12, %13, %cst_15 {dimension_numbers = #tpu.dot_dimension_numbers<[1], [0], [0], [1], [0, 0, 1, 1], [], []>} : vector<8x256xbf16>, vector<256x1024xbf16>, vector<8x1024xf32> -> vector<8x1024xf32>
    %c17_i32 = arith.constant 17 : i32
    %15 = tpu.dynamic_rotate %8 by %c17_i32 dim 1 : vector<8x256xf32>, i32 -> vector<8x256xf32>
    %c0_16 = arith.constant 0 : index
    %c0_17 = arith.constant 0 : index
    %16 = vector.load %arg6[%c0_16, %c0_17] : memref<9x256xf32, #tpu.memory_space<vmem>>, vector<1x256xf32>
    %17 = vector.broadcast %16 : vector<1x256xf32> to vector<8x256xf32>
    %18 = arith.mulf %15, %17 : vector<8x256xf32>
    %c16_i32 = arith.constant 16 : i32
    %19 = tpu.dynamic_rotate %8 by %c16_i32 dim 1 : vector<8x256xf32>, i32 -> vector<8x256xf32>
    %c1 = arith.constant 1 : index
    %c0_18 = arith.constant 0 : index
    %20 = vector.load %arg6[%c1, %c0_18] : memref<9x256xf32, #tpu.memory_space<vmem>>, vector<1x256xf32>
    %21 = vector.broadcast %20 : vector<1x256xf32> to vector<8x256xf32>
    %22 = arith.mulf %19, %21 : vector<8x256xf32>
    %c15_i32 = arith.constant 15 : i32
    %23 = tpu.dynamic_rotate %8 by %c15_i32 dim 1 : vector<8x256xf32>, i32 -> vector<8x256xf32>
    %c2 = arith.constant 2 : index
    %c0_19 = arith.constant 0 : index
    %24 = vector.load %arg6[%c2, %c0_19] : memref<9x256xf32, #tpu.memory_space<vmem>>, vector<1x256xf32>
    %25 = vector.broadcast %24 : vector<1x256xf32> to vector<8x256xf32>
    %26 = arith.mulf %23, %25 : vector<8x256xf32>
    %c1_i32 = arith.constant 1 : i32
    %27 = tpu.dynamic_rotate %8 by %c1_i32 dim 1 : vector<8x256xf32>, i32 -> vector<8x256xf32>
    %c3 = arith.constant 3 : index
    %c0_20 = arith.constant 0 : index
    %28 = vector.load %arg6[%c3, %c0_20] : memref<9x256xf32, #tpu.memory_space<vmem>>, vector<1x256xf32>
    %29 = vector.broadcast %28 : vector<1x256xf32> to vector<8x256xf32>
    %30 = arith.mulf %27, %29 : vector<8x256xf32>
    %c255_i32 = arith.constant 255 : i32
    %31 = tpu.dynamic_rotate %8 by %c255_i32 dim 1 : vector<8x256xf32>, i32 -> vector<8x256xf32>
    %c5 = arith.constant 5 : index
    %c0_21 = arith.constant 0 : index
    %32 = vector.load %arg6[%c5, %c0_21] : memref<9x256xf32, #tpu.memory_space<vmem>>, vector<1x256xf32>
    %33 = vector.broadcast %32 : vector<1x256xf32> to vector<8x256xf32>
    %34 = arith.mulf %31, %33 : vector<8x256xf32>
    %c241_i32 = arith.constant 241 : i32
    %35 = tpu.dynamic_rotate %8 by %c241_i32 dim 1 : vector<8x256xf32>, i32 -> vector<8x256xf32>
    %c6 = arith.constant 6 : index
    %c0_22 = arith.constant 0 : index
    %36 = vector.load %arg6[%c6, %c0_22] : memref<9x256xf32, #tpu.memory_space<vmem>>, vector<1x256xf32>
    %37 = vector.broadcast %36 : vector<1x256xf32> to vector<8x256xf32>
    %38 = arith.mulf %35, %37 : vector<8x256xf32>
    %c240_i32 = arith.constant 240 : i32
    %39 = tpu.dynamic_rotate %8 by %c240_i32 dim 1 : vector<8x256xf32>, i32 -> vector<8x256xf32>
    %c7 = arith.constant 7 : index
    %c0_23 = arith.constant 0 : index
    %40 = vector.load %arg6[%c7, %c0_23] : memref<9x256xf32, #tpu.memory_space<vmem>>, vector<1x256xf32>
    %41 = vector.broadcast %40 : vector<1x256xf32> to vector<8x256xf32>
    %42 = arith.mulf %39, %41 : vector<8x256xf32>
    %c239_i32 = arith.constant 239 : i32
    %43 = tpu.dynamic_rotate %8 by %c239_i32 dim 1 : vector<8x256xf32>, i32 -> vector<8x256xf32>
    %c8 = arith.constant 8 : index
    %c0_24 = arith.constant 0 : index
    %44 = vector.load %arg6[%c8, %c0_24] : memref<9x256xf32, #tpu.memory_space<vmem>>, vector<1x256xf32>
    %45 = vector.broadcast %44 : vector<1x256xf32> to vector<8x256xf32>
    %46 = arith.mulf %43, %45 : vector<8x256xf32>
    %47 = tpu.concatenate %18, %22, %26, %30, %8, %34, %38, %42, %46 in 0 : vector<8x256xf32>, vector<8x256xf32>, vector<8x256xf32>, vector<8x256xf32>, vector<8x256xf32>, vector<8x256xf32>, vector<8x256xf32>, vector<8x256xf32>, vector<8x256xf32> -> vector<72x256xf32>
    %48 = arith.truncf %47 : vector<72x256xf32> to vector<72x256xbf16>
    %c0_25 = arith.constant 0 : index
    %c0_26 = arith.constant 0 : index
    %49 = vector.load %arg8[%c0_25, %c0_26] : memref<16x72xbf16, #tpu.memory_space<vmem>>, vector<16x72xbf16>
    %cst_27 = arith.constant dense<0.000000e+00> : vector<16x256xf32>
    %50 = tpu.matmul %49, %48, %cst_27 {dimension_numbers = #tpu.dot_dimension_numbers<[1], [0], [0], [1], [0, 0, 1, 1], [], []>} : vector<16x72xbf16>, vector<72x256xbf16>, vector<16x256xf32> -> vector<16x256xf32>
    %c0_28 = arith.constant 0 : index
    %c0_29 = arith.constant 0 : index
    %51 = vector.load %arg9[%c0_28, %c0_29] : memref<16x1xf32, #tpu.memory_space<vmem>>, vector<16x1xf32>
    %52 = vector.broadcast %51 : vector<16x1xf32> to vector<16x256xf32>
    %53 = arith.addf %50, %52 : vector<16x256xf32>
    %cst_30 = arith.constant 0.000000e+00 : f32
    %54 = vector.broadcast %cst_30 : f32 to vector<16x256xf32>
    %55 = arith.maximumf %53, %54 : vector<16x256xf32>
    %56 = vector.extract_strided_slice %55 {offsets = [0, 0], sizes = [8, 256], strides = [1, 1]} : vector<16x256xf32> to vector<8x256xf32>
    %57 = arith.mulf %56, %3 : vector<8x256xf32>
    %58 = vector.extract_strided_slice %55 {offsets = [8, 0], sizes = [8, 256], strides = [1, 1]} : vector<16x256xf32> to vector<8x256xf32>
    %c33_i32 = arith.constant 33 : i32
    %59 = tpu.dynamic_rotate %11 by %c33_i32 dim 1 : vector<8x1024xf32>, i32 -> vector<8x1024xf32>
    %c0_31 = arith.constant 0 : index
    %c0_32 = arith.constant 0 : index
    %60 = vector.load %arg7[%c0_31, %c0_32] : memref<9x1024xf32, #tpu.memory_space<vmem>>, vector<1x1024xf32>
    %61 = vector.broadcast %60 : vector<1x1024xf32> to vector<8x1024xf32>
    %62 = arith.mulf %59, %61 : vector<8x1024xf32>
    %c32_i32 = arith.constant 32 : i32
    %63 = tpu.dynamic_rotate %11 by %c32_i32 dim 1 : vector<8x1024xf32>, i32 -> vector<8x1024xf32>
    %c1_33 = arith.constant 1 : index
    %c0_34 = arith.constant 0 : index
    %64 = vector.load %arg7[%c1_33, %c0_34] : memref<9x1024xf32, #tpu.memory_space<vmem>>, vector<1x1024xf32>
    %65 = vector.broadcast %64 : vector<1x1024xf32> to vector<8x1024xf32>
    %66 = arith.mulf %63, %65 : vector<8x1024xf32>
    %c31_i32 = arith.constant 31 : i32
    %67 = tpu.dynamic_rotate %11 by %c31_i32 dim 1 : vector<8x1024xf32>, i32 -> vector<8x1024xf32>
    %c2_35 = arith.constant 2 : index
    %c0_36 = arith.constant 0 : index
    %68 = vector.load %arg7[%c2_35, %c0_36] : memref<9x1024xf32, #tpu.memory_space<vmem>>, vector<1x1024xf32>
    %69 = vector.broadcast %68 : vector<1x1024xf32> to vector<8x1024xf32>
    %70 = arith.mulf %67, %69 : vector<8x1024xf32>
    %c1_i32_37 = arith.constant 1 : i32
    %71 = tpu.dynamic_rotate %11 by %c1_i32_37 dim 1 : vector<8x1024xf32>, i32 -> vector<8x1024xf32>
    %c3_38 = arith.constant 3 : index
    %c0_39 = arith.constant 0 : index
    %72 = vector.load %arg7[%c3_38, %c0_39] : memref<9x1024xf32, #tpu.memory_space<vmem>>, vector<1x1024xf32>
    %73 = vector.broadcast %72 : vector<1x1024xf32> to vector<8x1024xf32>
    %74 = arith.mulf %71, %73 : vector<8x1024xf32>
    %c1023_i32 = arith.constant 1023 : i32
    %75 = tpu.dynamic_rotate %11 by %c1023_i32 dim 1 : vector<8x1024xf32>, i32 -> vector<8x1024xf32>
    %c5_40 = arith.constant 5 : index
    %c0_41 = arith.constant 0 : index
    %76 = vector.load %arg7[%c5_40, %c0_41] : memref<9x1024xf32, #tpu.memory_space<vmem>>, vector<1x1024xf32>
    %77 = vector.broadcast %76 : vector<1x1024xf32> to vector<8x1024xf32>
    %78 = arith.mulf %75, %77 : vector<8x1024xf32>
    %c993_i32 = arith.constant 993 : i32
    %79 = tpu.dynamic_rotate %11 by %c993_i32 dim 1 : vector<8x1024xf32>, i32 -> vector<8x1024xf32>
    %c6_42 = arith.constant 6 : index
    %c0_43 = arith.constant 0 : index
    %80 = vector.load %arg7[%c6_42, %c0_43] : memref<9x1024xf32, #tpu.memory_space<vmem>>, vector<1x1024xf32>
    %81 = vector.broadcast %80 : vector<1x1024xf32> to vector<8x1024xf32>
    %82 = arith.mulf %79, %81 : vector<8x1024xf32>
    %c992_i32 = arith.constant 992 : i32
    %83 = tpu.dynamic_rotate %11 by %c992_i32 dim 1 : vector<8x1024xf32>, i32 -> vector<8x1024xf32>
    %c7_44 = arith.constant 7 : index
    %c0_45 = arith.constant 0 : index
    %84 = vector.load %arg7[%c7_44, %c0_45] : memref<9x1024xf32, #tpu.memory_space<vmem>>, vector<1x1024xf32>
    %85 = vector.broadcast %84 : vector<1x1024xf32> to vector<8x1024xf32>
    %86 = arith.mulf %83, %85 : vector<8x1024xf32>
    %c991_i32 = arith.constant 991 : i32
    %87 = tpu.dynamic_rotate %11 by %c991_i32 dim 1 : vector<8x1024xf32>, i32 -> vector<8x1024xf32>
    %c8_46 = arith.constant 8 : index
    %c0_47 = arith.constant 0 : index
    %88 = vector.load %arg7[%c8_46, %c0_47] : memref<9x1024xf32, #tpu.memory_space<vmem>>, vector<1x1024xf32>
    %89 = vector.broadcast %88 : vector<1x1024xf32> to vector<8x1024xf32>
    %90 = arith.mulf %87, %89 : vector<8x1024xf32>
    %91 = tpu.concatenate %62, %66, %70, %74, %11, %78, %82, %86, %90 in 0 : vector<8x1024xf32>, vector<8x1024xf32>, vector<8x1024xf32>, vector<8x1024xf32>, vector<8x1024xf32>, vector<8x1024xf32>, vector<8x1024xf32>, vector<8x1024xf32>, vector<8x1024xf32> -> vector<72x1024xf32>
    %92 = arith.truncf %91 : vector<72x1024xf32> to vector<72x1024xbf16>
    %c0_48 = arith.constant 0 : index
    %c0_49 = arith.constant 0 : index
    %93 = vector.load %arg10[%c0_48, %c0_49] : memref<8x72xbf16, #tpu.memory_space<vmem>>, vector<8x72xbf16>
    %cst_50 = arith.constant dense<0.000000e+00> : vector<8x1024xf32>
    %94 = tpu.matmul %93, %92, %cst_50 {dimension_numbers = #tpu.dot_dimension_numbers<[1], [0], [0], [1], [0, 0, 1, 1], [], []>} : vector<8x72xbf16>, vector<72x1024xbf16>, vector<8x1024xf32> -> vector<8x1024xf32>
    %c0_51 = arith.constant 0 : index
    %c0_52 = arith.constant 0 : index
    %95 = vector.load %arg11[%c0_51, %c0_52] : memref<8x1xf32, #tpu.memory_space<vmem>>, vector<8x1xf32>
    %96 = vector.broadcast %95 : vector<8x1xf32> to vector<8x1024xf32>
    %97 = arith.addf %94, %96 : vector<8x1024xf32>
    %cst_53 = arith.constant 0.000000e+00 : f32
    %98 = vector.broadcast %cst_53 : f32 to vector<8x1024xf32>
    %99 = arith.maximumf %97, %98 : vector<8x1024xf32>
    %c33_i32_54 = arith.constant 33 : i32
    %100 = tpu.dynamic_rotate %14 by %c33_i32_54 dim 1 : vector<8x1024xf32>, i32 -> vector<8x1024xf32>
    %c0_55 = arith.constant 0 : index
    %c0_56 = arith.constant 0 : index
    %101 = vector.load %arg7[%c0_55, %c0_56] : memref<9x1024xf32, #tpu.memory_space<vmem>>, vector<1x1024xf32>
    %102 = vector.broadcast %101 : vector<1x1024xf32> to vector<8x1024xf32>
    %103 = arith.mulf %100, %102 : vector<8x1024xf32>
    %c32_i32_57 = arith.constant 32 : i32
    %104 = tpu.dynamic_rotate %14 by %c32_i32_57 dim 1 : vector<8x1024xf32>, i32 -> vector<8x1024xf32>
    %c1_58 = arith.constant 1 : index
    %c0_59 = arith.constant 0 : index
    %105 = vector.load %arg7[%c1_58, %c0_59] : memref<9x1024xf32, #tpu.memory_space<vmem>>, vector<1x1024xf32>
    %106 = vector.broadcast %105 : vector<1x1024xf32> to vector<8x1024xf32>
    %107 = arith.mulf %104, %106 : vector<8x1024xf32>
    %c31_i32_60 = arith.constant 31 : i32
    %108 = tpu.dynamic_rotate %14 by %c31_i32_60 dim 1 : vector<8x1024xf32>, i32 -> vector<8x1024xf32>
    %c2_61 = arith.constant 2 : index
    %c0_62 = arith.constant 0 : index
    %109 = vector.load %arg7[%c2_61, %c0_62] : memref<9x1024xf32, #tpu.memory_space<vmem>>, vector<1x1024xf32>
    %110 = vector.broadcast %109 : vector<1x1024xf32> to vector<8x1024xf32>
    %111 = arith.mulf %108, %110 : vector<8x1024xf32>
    %c1_i32_63 = arith.constant 1 : i32
    %112 = tpu.dynamic_rotate %14 by %c1_i32_63 dim 1 : vector<8x1024xf32>, i32 -> vector<8x1024xf32>
    %c3_64 = arith.constant 3 : index
    %c0_65 = arith.constant 0 : index
    %113 = vector.load %arg7[%c3_64, %c0_65] : memref<9x1024xf32, #tpu.memory_space<vmem>>, vector<1x1024xf32>
    %114 = vector.broadcast %113 : vector<1x1024xf32> to vector<8x1024xf32>
    %115 = arith.mulf %112, %114 : vector<8x1024xf32>
    %c1023_i32_66 = arith.constant 1023 : i32
    %116 = tpu.dynamic_rotate %14 by %c1023_i32_66 dim 1 : vector<8x1024xf32>, i32 -> vector<8x1024xf32>
    %c5_67 = arith.constant 5 : index
    %c0_68 = arith.constant 0 : index
    %117 = vector.load %arg7[%c5_67, %c0_68] : memref<9x1024xf32, #tpu.memory_space<vmem>>, vector<1x1024xf32>
    %118 = vector.broadcast %117 : vector<1x1024xf32> to vector<8x1024xf32>
    %119 = arith.mulf %116, %118 : vector<8x1024xf32>
    %c993_i32_69 = arith.constant 993 : i32
    %120 = tpu.dynamic_rotate %14 by %c993_i32_69 dim 1 : vector<8x1024xf32>, i32 -> vector<8x1024xf32>
    %c6_70 = arith.constant 6 : index
    %c0_71 = arith.constant 0 : index
    %121 = vector.load %arg7[%c6_70, %c0_71] : memref<9x1024xf32, #tpu.memory_space<vmem>>, vector<1x1024xf32>
    %122 = vector.broadcast %121 : vector<1x1024xf32> to vector<8x1024xf32>
    %123 = arith.mulf %120, %122 : vector<8x1024xf32>
    %c992_i32_72 = arith.constant 992 : i32
    %124 = tpu.dynamic_rotate %14 by %c992_i32_72 dim 1 : vector<8x1024xf32>, i32 -> vector<8x1024xf32>
    %c7_73 = arith.constant 7 : index
    %c0_74 = arith.constant 0 : index
    %125 = vector.load %arg7[%c7_73, %c0_74] : memref<9x1024xf32, #tpu.memory_space<vmem>>, vector<1x1024xf32>
    %126 = vector.broadcast %125 : vector<1x1024xf32> to vector<8x1024xf32>
    %127 = arith.mulf %124, %126 : vector<8x1024xf32>
    %c991_i32_75 = arith.constant 991 : i32
    %128 = tpu.dynamic_rotate %14 by %c991_i32_75 dim 1 : vector<8x1024xf32>, i32 -> vector<8x1024xf32>
    %c8_76 = arith.constant 8 : index
    %c0_77 = arith.constant 0 : index
    %129 = vector.load %arg7[%c8_76, %c0_77] : memref<9x1024xf32, #tpu.memory_space<vmem>>, vector<1x1024xf32>
    %130 = vector.broadcast %129 : vector<1x1024xf32> to vector<8x1024xf32>
    %131 = arith.mulf %128, %130 : vector<8x1024xf32>
    %132 = tpu.concatenate %103, %107, %111, %115, %14, %119, %123, %127, %131 in 0 : vector<8x1024xf32>, vector<8x1024xf32>, vector<8x1024xf32>, vector<8x1024xf32>, vector<8x1024xf32>, vector<8x1024xf32>, vector<8x1024xf32>, vector<8x1024xf32>, vector<8x1024xf32> -> vector<72x1024xf32>
    %133 = arith.truncf %132 : vector<72x1024xf32> to vector<72x1024xbf16>
    %c0_78 = arith.constant 0 : index
    %c0_79 = arith.constant 0 : index
    %134 = vector.load %arg12[%c0_78, %c0_79] : memref<8x72xbf16, #tpu.memory_space<vmem>>, vector<8x72xbf16>
    %cst_80 = arith.constant dense<0.000000e+00> : vector<8x1024xf32>
    %135 = tpu.matmul %134, %133, %cst_80 {dimension_numbers = #tpu.dot_dimension_numbers<[1], [0], [0], [1], [0, 0, 1, 1], [], []>} : vector<8x72xbf16>, vector<72x1024xbf16>, vector<8x1024xf32> -> vector<8x1024xf32>
    %c0_81 = arith.constant 0 : index
    %c0_82 = arith.constant 0 : index
    %136 = vector.load %arg13[%c0_81, %c0_82] : memref<8x1xf32, #tpu.memory_space<vmem>>, vector<8x1xf32>
    %137 = vector.broadcast %136 : vector<8x1xf32> to vector<8x1024xf32>
    %138 = arith.addf %135, %137 : vector<8x1024xf32>
    %cst_83 = arith.constant 0.000000e+00 : f32
    %139 = vector.broadcast %cst_83 : f32 to vector<8x1024xf32>
    %140 = arith.maximumf %138, %139 : vector<8x1024xf32>
    %141 = arith.mulf %99, %140 : vector<8x1024xf32>
    %142 = arith.mulf %141, %5 : vector<8x1024xf32>
    %143 = tpu.concatenate %57, %58 in 0 : vector<8x256xf32>, vector<8x256xf32> -> vector<16x256xf32>
    %c17_i32_84 = arith.constant 17 : i32
    %144 = tpu.dynamic_rotate %143 by %c17_i32_84 dim 1 : vector<16x256xf32>, i32 -> vector<16x256xf32>
    %c0_85 = arith.constant 0 : index
    %c0_86 = arith.constant 0 : index
    %145 = vector.load %arg6[%c0_85, %c0_86] : memref<9x256xf32, #tpu.memory_space<vmem>>, vector<1x256xf32>
    %146 = vector.broadcast %145 : vector<1x256xf32> to vector<16x256xf32>
    %147 = arith.mulf %144, %146 : vector<16x256xf32>
    %c16_i32_87 = arith.constant 16 : i32
    %148 = tpu.dynamic_rotate %143 by %c16_i32_87 dim 1 : vector<16x256xf32>, i32 -> vector<16x256xf32>
    %c1_88 = arith.constant 1 : index
    %c0_89 = arith.constant 0 : index
    %149 = vector.load %arg6[%c1_88, %c0_89] : memref<9x256xf32, #tpu.memory_space<vmem>>, vector<1x256xf32>
    %150 = vector.broadcast %149 : vector<1x256xf32> to vector<16x256xf32>
    %151 = arith.mulf %148, %150 : vector<16x256xf32>
    %c15_i32_90 = arith.constant 15 : i32
    %152 = tpu.dynamic_rotate %143 by %c15_i32_90 dim 1 : vector<16x256xf32>, i32 -> vector<16x256xf32>
    %c2_91 = arith.constant 2 : index
    %c0_92 = arith.constant 0 : index
    %153 = vector.load %arg6[%c2_91, %c0_92] : memref<9x256xf32, #tpu.memory_space<vmem>>, vector<1x256xf32>
    %154 = vector.broadcast %153 : vector<1x256xf32> to vector<16x256xf32>
    %155 = arith.mulf %152, %154 : vector<16x256xf32>
    %c1_i32_93 = arith.constant 1 : i32
    %156 = tpu.dynamic_rotate %143 by %c1_i32_93 dim 1 : vector<16x256xf32>, i32 -> vector<16x256xf32>
    %c3_94 = arith.constant 3 : index
    %c0_95 = arith.constant 0 : index
    %157 = vector.load %arg6[%c3_94, %c0_95] : memref<9x256xf32, #tpu.memory_space<vmem>>, vector<1x256xf32>
    %158 = vector.broadcast %157 : vector<1x256xf32> to vector<16x256xf32>
    %159 = arith.mulf %156, %158 : vector<16x256xf32>
    %c255_i32_96 = arith.constant 255 : i32
    %160 = tpu.dynamic_rotate %143 by %c255_i32_96 dim 1 : vector<16x256xf32>, i32 -> vector<16x256xf32>
    %c5_97 = arith.constant 5 : index
    %c0_98 = arith.constant 0 : index
    %161 = vector.load %arg6[%c5_97, %c0_98] : memref<9x256xf32, #tpu.memory_space<vmem>>, vector<1x256xf32>
    %162 = vector.broadcast %161 : vector<1x256xf32> to vector<16x256xf32>
    %163 = arith.mulf %160, %162 : vector<16x256xf32>
    %c241_i32_99 = arith.constant 241 : i32
    %164 = tpu.dynamic_rotate %143 by %c241_i32_99 dim 1 : vector<16x256xf32>, i32 -> vector<16x256xf32>
    %c6_100 = arith.constant 6 : index
    %c0_101 = arith.constant 0 : index
    %165 = vector.load %arg6[%c6_100, %c0_101] : memref<9x256xf32, #tpu.memory_space<vmem>>, vector<1x256xf32>
    %166 = vector.broadcast %165 : vector<1x256xf32> to vector<16x256xf32>
    %167 = arith.mulf %164, %166 : vector<16x256xf32>
    %c240_i32_102 = arith.constant 240 : i32
    %168 = tpu.dynamic_rotate %143 by %c240_i32_102 dim 1 : vector<16x256xf32>, i32 -> vector<16x256xf32>
    %c7_103 = arith.constant 7 : index
    %c0_104 = arith.constant 0 : index
    %169 = vector.load %arg6[%c7_103, %c0_104] : memref<9x256xf32, #tpu.memory_space<vmem>>, vector<1x256xf32>
    %170 = vector.broadcast %169 : vector<1x256xf32> to vector<16x256xf32>
    %171 = arith.mulf %168, %170 : vector<16x256xf32>
    %c239_i32_105 = arith.constant 239 : i32
    %172 = tpu.dynamic_rotate %143 by %c239_i32_105 dim 1 : vector<16x256xf32>, i32 -> vector<16x256xf32>
    %c8_106 = arith.constant 8 : index
    %c0_107 = arith.constant 0 : index
    %173 = vector.load %arg6[%c8_106, %c0_107] : memref<9x256xf32, #tpu.memory_space<vmem>>, vector<1x256xf32>
    %174 = vector.broadcast %173 : vector<1x256xf32> to vector<16x256xf32>
    %175 = arith.mulf %172, %174 : vector<16x256xf32>
    %176 = tpu.concatenate %147, %151, %155, %159, %143, %163, %167, %171, %175 in 0 : vector<16x256xf32>, vector<16x256xf32>, vector<16x256xf32>, vector<16x256xf32>, vector<16x256xf32>, vector<16x256xf32>, vector<16x256xf32>, vector<16x256xf32>, vector<16x256xf32> -> vector<144x256xf32>
    %177 = arith.truncf %176 : vector<144x256xf32> to vector<144x256xbf16>
    %c0_108 = arith.constant 0 : index
    %c0_109 = arith.constant 0 : index
    %178 = vector.load %arg14[%c0_108, %c0_109] : memref<16x144xbf16, #tpu.memory_space<vmem>>, vector<16x144xbf16>
    %cst_110 = arith.constant dense<0.000000e+00> : vector<16x256xf32>
    %179 = tpu.matmul %178, %177, %cst_110 {dimension_numbers = #tpu.dot_dimension_numbers<[1], [0], [0], [1], [0, 0, 1, 1], [], []>} : vector<16x144xbf16>, vector<144x256xbf16>, vector<16x256xf32> -> vector<16x256xf32>
    %c0_111 = arith.constant 0 : index
    %c0_112 = arith.constant 0 : index
    %180 = vector.load %arg15[%c0_111, %c0_112] : memref<16x1xf32, #tpu.memory_space<vmem>>, vector<16x1xf32>
    %181 = vector.broadcast %180 : vector<16x1xf32> to vector<16x256xf32>
    %182 = arith.addf %179, %181 : vector<16x256xf32>
    %cst_113 = arith.constant 0.000000e+00 : f32
    %183 = vector.broadcast %cst_113 : f32 to vector<16x256xf32>
    %184 = arith.maximumf %182, %183 : vector<16x256xf32>
    %185 = arith.truncf %184 : vector<16x256xf32> to vector<16x256xbf16>
    %c0_114 = arith.constant 0 : index
    %c0_115 = arith.constant 0 : index
    %186 = vector.load %arg5[%c0_114, %c0_115] : memref<256x1024xbf16, #tpu.memory_space<vmem>>, vector<256x1024xbf16>
    %cst_116 = arith.constant dense<0.000000e+00> : vector<16x1024xf32>
    %187 = tpu.matmul %185, %186, %cst_116 {dimension_numbers = #tpu.dot_dimension_numbers<[1], [0], [0], [1], [0, 0, 1, 1], [], []>} : vector<16x256xbf16>, vector<256x1024xbf16>, vector<16x1024xf32> -> vector<16x1024xf32>
    %c33_i32_117 = arith.constant 33 : i32
    %188 = tpu.dynamic_rotate %187 by %c33_i32_117 dim 1 : vector<16x1024xf32>, i32 -> vector<16x1024xf32>
    %c0_118 = arith.constant 0 : index
    %c0_119 = arith.constant 0 : index
    %189 = vector.load %arg7[%c0_118, %c0_119] : memref<9x1024xf32, #tpu.memory_space<vmem>>, vector<1x1024xf32>
    %190 = vector.broadcast %189 : vector<1x1024xf32> to vector<16x1024xf32>
    %191 = arith.mulf %188, %190 : vector<16x1024xf32>
    %c32_i32_120 = arith.constant 32 : i32
    %192 = tpu.dynamic_rotate %187 by %c32_i32_120 dim 1 : vector<16x1024xf32>, i32 -> vector<16x1024xf32>
    %c1_121 = arith.constant 1 : index
    %c0_122 = arith.constant 0 : index
    %193 = vector.load %arg7[%c1_121, %c0_122] : memref<9x1024xf32, #tpu.memory_space<vmem>>, vector<1x1024xf32>
    %194 = vector.broadcast %193 : vector<1x1024xf32> to vector<16x1024xf32>
    %195 = arith.mulf %192, %194 : vector<16x1024xf32>
    %c31_i32_123 = arith.constant 31 : i32
    %196 = tpu.dynamic_rotate %187 by %c31_i32_123 dim 1 : vector<16x1024xf32>, i32 -> vector<16x1024xf32>
    %c2_124 = arith.constant 2 : index
    %c0_125 = arith.constant 0 : index
    %197 = vector.load %arg7[%c2_124, %c0_125] : memref<9x1024xf32, #tpu.memory_space<vmem>>, vector<1x1024xf32>
    %198 = vector.broadcast %197 : vector<1x1024xf32> to vector<16x1024xf32>
    %199 = arith.mulf %196, %198 : vector<16x1024xf32>
    %c1_i32_126 = arith.constant 1 : i32
    %200 = tpu.dynamic_rotate %187 by %c1_i32_126 dim 1 : vector<16x1024xf32>, i32 -> vector<16x1024xf32>
    %c3_127 = arith.constant 3 : index
    %c0_128 = arith.constant 0 : index
    %201 = vector.load %arg7[%c3_127, %c0_128] : memref<9x1024xf32, #tpu.memory_space<vmem>>, vector<1x1024xf32>
    %202 = vector.broadcast %201 : vector<1x1024xf32> to vector<16x1024xf32>
    %203 = arith.mulf %200, %202 : vector<16x1024xf32>
    %c1023_i32_129 = arith.constant 1023 : i32
    %204 = tpu.dynamic_rotate %187 by %c1023_i32_129 dim 1 : vector<16x1024xf32>, i32 -> vector<16x1024xf32>
    %c5_130 = arith.constant 5 : index
    %c0_131 = arith.constant 0 : index
    %205 = vector.load %arg7[%c5_130, %c0_131] : memref<9x1024xf32, #tpu.memory_space<vmem>>, vector<1x1024xf32>
    %206 = vector.broadcast %205 : vector<1x1024xf32> to vector<16x1024xf32>
    %207 = arith.mulf %204, %206 : vector<16x1024xf32>
    %c993_i32_132 = arith.constant 993 : i32
    %208 = tpu.dynamic_rotate %187 by %c993_i32_132 dim 1 : vector<16x1024xf32>, i32 -> vector<16x1024xf32>
    %c6_133 = arith.constant 6 : index
    %c0_134 = arith.constant 0 : index
    %209 = vector.load %arg7[%c6_133, %c0_134] : memref<9x1024xf32, #tpu.memory_space<vmem>>, vector<1x1024xf32>
    %210 = vector.broadcast %209 : vector<1x1024xf32> to vector<16x1024xf32>
    %211 = arith.mulf %208, %210 : vector<16x1024xf32>
    %c992_i32_135 = arith.constant 992 : i32
    %212 = tpu.dynamic_rotate %187 by %c992_i32_135 dim 1 : vector<16x1024xf32>, i32 -> vector<16x1024xf32>
    %c7_136 = arith.constant 7 : index
    %c0_137 = arith.constant 0 : index
    %213 = vector.load %arg7[%c7_136, %c0_137] : memref<9x1024xf32, #tpu.memory_space<vmem>>, vector<1x1024xf32>
    %214 = vector.broadcast %213 : vector<1x1024xf32> to vector<16x1024xf32>
    %215 = arith.mulf %212, %214 : vector<16x1024xf32>
    %c991_i32_138 = arith.constant 991 : i32
    %216 = tpu.dynamic_rotate %187 by %c991_i32_138 dim 1 : vector<16x1024xf32>, i32 -> vector<16x1024xf32>
    %c8_139 = arith.constant 8 : index
    %c0_140 = arith.constant 0 : index
    %217 = vector.load %arg7[%c8_139, %c0_140] : memref<9x1024xf32, #tpu.memory_space<vmem>>, vector<1x1024xf32>
    %218 = vector.broadcast %217 : vector<1x1024xf32> to vector<16x1024xf32>
    %219 = arith.mulf %216, %218 : vector<16x1024xf32>
    %220 = tpu.concatenate %191, %195, %199, %203, %187, %207, %211, %215, %219 in 0 : vector<16x1024xf32>, vector<16x1024xf32>, vector<16x1024xf32>, vector<16x1024xf32>, vector<16x1024xf32>, vector<16x1024xf32>, vector<16x1024xf32>, vector<16x1024xf32>, vector<16x1024xf32> -> vector<144x1024xf32>
    %221 = arith.truncf %220 : vector<144x1024xf32> to vector<144x1024xbf16>
    %c0_141 = arith.constant 0 : index
    %c0_142 = arith.constant 0 : index
    %222 = vector.load %arg16[%c0_141, %c0_142] : memref<16x144xbf16, #tpu.memory_space<vmem>>, vector<16x144xbf16>
    %cst_143 = arith.constant dense<0.000000e+00> : vector<16x1024xf32>
    %223 = tpu.matmul %222, %221, %cst_143 {dimension_numbers = #tpu.dot_dimension_numbers<[1], [0], [0], [1], [0, 0, 1, 1], [], []>} : vector<16x144xbf16>, vector<144x1024xbf16>, vector<16x1024xf32> -> vector<16x1024xf32>
    %c0_144 = arith.constant 0 : index
    %c0_145 = arith.constant 0 : index
    %224 = vector.load %arg17[%c0_144, %c0_145] : memref<16x1xf32, #tpu.memory_space<vmem>>, vector<16x1xf32>
    %225 = vector.broadcast %224 : vector<16x1xf32> to vector<16x1024xf32>
    %226 = arith.addf %223, %225 : vector<16x1024xf32>
    %cst_146 = arith.constant 0.000000e+00 : f32
    %227 = vector.broadcast %cst_146 : f32 to vector<16x1024xf32>
    %228 = arith.maximumf %226, %227 : vector<16x1024xf32>
    %229 = tpu.concatenate %142, %228 in 0 : vector<8x1024xf32>, vector<16x1024xf32> -> vector<24x1024xf32>
    %c33_i32_147 = arith.constant 33 : i32
    %230 = tpu.dynamic_rotate %229 by %c33_i32_147 dim 1 : vector<24x1024xf32>, i32 -> vector<24x1024xf32>
    %c0_148 = arith.constant 0 : index
    %c0_149 = arith.constant 0 : index
    %231 = vector.load %arg7[%c0_148, %c0_149] : memref<9x1024xf32, #tpu.memory_space<vmem>>, vector<1x1024xf32>
    %232 = vector.broadcast %231 : vector<1x1024xf32> to vector<24x1024xf32>
    %233 = arith.mulf %230, %232 : vector<24x1024xf32>
    %c32_i32_150 = arith.constant 32 : i32
    %234 = tpu.dynamic_rotate %229 by %c32_i32_150 dim 1 : vector<24x1024xf32>, i32 -> vector<24x1024xf32>
    %c1_151 = arith.constant 1 : index
    %c0_152 = arith.constant 0 : index
    %235 = vector.load %arg7[%c1_151, %c0_152] : memref<9x1024xf32, #tpu.memory_space<vmem>>, vector<1x1024xf32>
    %236 = vector.broadcast %235 : vector<1x1024xf32> to vector<24x1024xf32>
    %237 = arith.mulf %234, %236 : vector<24x1024xf32>
    %c31_i32_153 = arith.constant 31 : i32
    %238 = tpu.dynamic_rotate %229 by %c31_i32_153 dim 1 : vector<24x1024xf32>, i32 -> vector<24x1024xf32>
    %c2_154 = arith.constant 2 : index
    %c0_155 = arith.constant 0 : index
    %239 = vector.load %arg7[%c2_154, %c0_155] : memref<9x1024xf32, #tpu.memory_space<vmem>>, vector<1x1024xf32>
    %240 = vector.broadcast %239 : vector<1x1024xf32> to vector<24x1024xf32>
    %241 = arith.mulf %238, %240 : vector<24x1024xf32>
    %c1_i32_156 = arith.constant 1 : i32
    %242 = tpu.dynamic_rotate %229 by %c1_i32_156 dim 1 : vector<24x1024xf32>, i32 -> vector<24x1024xf32>
    %c3_157 = arith.constant 3 : index
    %c0_158 = arith.constant 0 : index
    %243 = vector.load %arg7[%c3_157, %c0_158] : memref<9x1024xf32, #tpu.memory_space<vmem>>, vector<1x1024xf32>
    %244 = vector.broadcast %243 : vector<1x1024xf32> to vector<24x1024xf32>
    %245 = arith.mulf %242, %244 : vector<24x1024xf32>
    %c1023_i32_159 = arith.constant 1023 : i32
    %246 = tpu.dynamic_rotate %229 by %c1023_i32_159 dim 1 : vector<24x1024xf32>, i32 -> vector<24x1024xf32>
    %c5_160 = arith.constant 5 : index
    %c0_161 = arith.constant 0 : index
    %247 = vector.load %arg7[%c5_160, %c0_161] : memref<9x1024xf32, #tpu.memory_space<vmem>>, vector<1x1024xf32>
    %248 = vector.broadcast %247 : vector<1x1024xf32> to vector<24x1024xf32>
    %249 = arith.mulf %246, %248 : vector<24x1024xf32>
    %c993_i32_162 = arith.constant 993 : i32
    %250 = tpu.dynamic_rotate %229 by %c993_i32_162 dim 1 : vector<24x1024xf32>, i32 -> vector<24x1024xf32>
    %c6_163 = arith.constant 6 : index
    %c0_164 = arith.constant 0 : index
    %251 = vector.load %arg7[%c6_163, %c0_164] : memref<9x1024xf32, #tpu.memory_space<vmem>>, vector<1x1024xf32>
    %252 = vector.broadcast %251 : vector<1x1024xf32> to vector<24x1024xf32>
    %253 = arith.mulf %250, %252 : vector<24x1024xf32>
    %c992_i32_165 = arith.constant 992 : i32
    %254 = tpu.dynamic_rotate %229 by %c992_i32_165 dim 1 : vector<24x1024xf32>, i32 -> vector<24x1024xf32>
    %c7_166 = arith.constant 7 : index
    %c0_167 = arith.constant 0 : index
    %255 = vector.load %arg7[%c7_166, %c0_167] : memref<9x1024xf32, #tpu.memory_space<vmem>>, vector<1x1024xf32>
    %256 = vector.broadcast %255 : vector<1x1024xf32> to vector<24x1024xf32>
    %257 = arith.mulf %254, %256 : vector<24x1024xf32>
    %c991_i32_168 = arith.constant 991 : i32
    %258 = tpu.dynamic_rotate %229 by %c991_i32_168 dim 1 : vector<24x1024xf32>, i32 -> vector<24x1024xf32>
    %c8_169 = arith.constant 8 : index
    %c0_170 = arith.constant 0 : index
    %259 = vector.load %arg7[%c8_169, %c0_170] : memref<9x1024xf32, #tpu.memory_space<vmem>>, vector<1x1024xf32>
    %260 = vector.broadcast %259 : vector<1x1024xf32> to vector<24x1024xf32>
    %261 = arith.mulf %258, %260 : vector<24x1024xf32>
    %262 = tpu.concatenate %233, %237, %241, %245, %229, %249, %253, %257, %261 in 0 : vector<24x1024xf32>, vector<24x1024xf32>, vector<24x1024xf32>, vector<24x1024xf32>, vector<24x1024xf32>, vector<24x1024xf32>, vector<24x1024xf32>, vector<24x1024xf32>, vector<24x1024xf32> -> vector<216x1024xf32>
    %263 = arith.truncf %262 : vector<216x1024xf32> to vector<216x1024xbf16>
    %c0_171 = arith.constant 0 : index
    %c0_172 = arith.constant 0 : index
    %264 = vector.load %arg18[%c0_171, %c0_172] : memref<24x216xbf16, #tpu.memory_space<vmem>>, vector<24x216xbf16>
    %cst_173 = arith.constant dense<0.000000e+00> : vector<24x1024xf32>
    %265 = tpu.matmul %264, %263, %cst_173 {dimension_numbers = #tpu.dot_dimension_numbers<[1], [0], [0], [1], [0, 0, 1, 1], [], []>} : vector<24x216xbf16>, vector<216x1024xbf16>, vector<24x1024xf32> -> vector<24x1024xf32>
    %c0_174 = arith.constant 0 : index
    %c0_175 = arith.constant 0 : index
    %266 = vector.load %arg19[%c0_174, %c0_175] : memref<24x1xf32, #tpu.memory_space<vmem>>, vector<24x1xf32>
    %267 = vector.broadcast %266 : vector<24x1xf32> to vector<24x1024xf32>
    %268 = arith.addf %265, %267 : vector<24x1024xf32>
    %cst_176 = arith.constant 0.000000e+00 : f32
    %269 = vector.broadcast %cst_176 : f32 to vector<24x1024xf32>
    %270 = arith.maximumf %268, %269 : vector<24x1024xf32>
    %c33_i32_177 = arith.constant 33 : i32
    %271 = tpu.dynamic_rotate %270 by %c33_i32_177 dim 1 : vector<24x1024xf32>, i32 -> vector<24x1024xf32>
    %c0_178 = arith.constant 0 : index
    %c0_179 = arith.constant 0 : index
    %272 = vector.load %arg7[%c0_178, %c0_179] : memref<9x1024xf32, #tpu.memory_space<vmem>>, vector<1x1024xf32>
    %273 = vector.broadcast %272 : vector<1x1024xf32> to vector<24x1024xf32>
    %274 = arith.mulf %271, %273 : vector<24x1024xf32>
    %c32_i32_180 = arith.constant 32 : i32
    %275 = tpu.dynamic_rotate %270 by %c32_i32_180 dim 1 : vector<24x1024xf32>, i32 -> vector<24x1024xf32>
    %c1_181 = arith.constant 1 : index
    %c0_182 = arith.constant 0 : index
    %276 = vector.load %arg7[%c1_181, %c0_182] : memref<9x1024xf32, #tpu.memory_space<vmem>>, vector<1x1024xf32>
    %277 = vector.broadcast %276 : vector<1x1024xf32> to vector<24x1024xf32>
    %278 = arith.mulf %275, %277 : vector<24x1024xf32>
    %c31_i32_183 = arith.constant 31 : i32
    %279 = tpu.dynamic_rotate %270 by %c31_i32_183 dim 1 : vector<24x1024xf32>, i32 -> vector<24x1024xf32>
    %c2_184 = arith.constant 2 : index
    %c0_185 = arith.constant 0 : index
    %280 = vector.load %arg7[%c2_184, %c0_185] : memref<9x1024xf32, #tpu.memory_space<vmem>>, vector<1x1024xf32>
    %281 = vector.broadcast %280 : vector<1x1024xf32> to vector<24x1024xf32>
    %282 = arith.mulf %279, %281 : vector<24x1024xf32>
    %c1_i32_186 = arith.constant 1 : i32
    %283 = tpu.dynamic_rotate %270 by %c1_i32_186 dim 1 : vector<24x1024xf32>, i32 -> vector<24x1024xf32>
    %c3_187 = arith.constant 3 : index
    %c0_188 = arith.constant 0 : index
    %284 = vector.load %arg7[%c3_187, %c0_188] : memref<9x1024xf32, #tpu.memory_space<vmem>>, vector<1x1024xf32>
    %285 = vector.broadcast %284 : vector<1x1024xf32> to vector<24x1024xf32>
    %286 = arith.mulf %283, %285 : vector<24x1024xf32>
    %c1023_i32_189 = arith.constant 1023 : i32
    %287 = tpu.dynamic_rotate %270 by %c1023_i32_189 dim 1 : vector<24x1024xf32>, i32 -> vector<24x1024xf32>
    %c5_190 = arith.constant 5 : index
    %c0_191 = arith.constant 0 : index
    %288 = vector.load %arg7[%c5_190, %c0_191] : memref<9x1024xf32, #tpu.memory_space<vmem>>, vector<1x1024xf32>
    %289 = vector.broadcast %288 : vector<1x1024xf32> to vector<24x1024xf32>
    %290 = arith.mulf %287, %289 : vector<24x1024xf32>
    %c993_i32_192 = arith.constant 993 : i32
    %291 = tpu.dynamic_rotate %270 by %c993_i32_192 dim 1 : vector<24x1024xf32>, i32 -> vector<24x1024xf32>
    %c6_193 = arith.constant 6 : index
    %c0_194 = arith.constant 0 : index
    %292 = vector.load %arg7[%c6_193, %c0_194] : memref<9x1024xf32, #tpu.memory_space<vmem>>, vector<1x1024xf32>
    %293 = vector.broadcast %292 : vector<1x1024xf32> to vector<24x1024xf32>
    %294 = arith.mulf %291, %293 : vector<24x1024xf32>
    %c992_i32_195 = arith.constant 992 : i32
    %295 = tpu.dynamic_rotate %270 by %c992_i32_195 dim 1 : vector<24x1024xf32>, i32 -> vector<24x1024xf32>
    %c7_196 = arith.constant 7 : index
    %c0_197 = arith.constant 0 : index
    %296 = vector.load %arg7[%c7_196, %c0_197] : memref<9x1024xf32, #tpu.memory_space<vmem>>, vector<1x1024xf32>
    %297 = vector.broadcast %296 : vector<1x1024xf32> to vector<24x1024xf32>
    %298 = arith.mulf %295, %297 : vector<24x1024xf32>
    %c991_i32_198 = arith.constant 991 : i32
    %299 = tpu.dynamic_rotate %270 by %c991_i32_198 dim 1 : vector<24x1024xf32>, i32 -> vector<24x1024xf32>
    %c8_199 = arith.constant 8 : index
    %c0_200 = arith.constant 0 : index
    %300 = vector.load %arg7[%c8_199, %c0_200] : memref<9x1024xf32, #tpu.memory_space<vmem>>, vector<1x1024xf32>
    %301 = vector.broadcast %300 : vector<1x1024xf32> to vector<24x1024xf32>
    %302 = arith.mulf %299, %301 : vector<24x1024xf32>
    %303 = tpu.concatenate %274, %278, %282, %286, %270, %290, %294, %298, %302 in 0 : vector<24x1024xf32>, vector<24x1024xf32>, vector<24x1024xf32>, vector<24x1024xf32>, vector<24x1024xf32>, vector<24x1024xf32>, vector<24x1024xf32>, vector<24x1024xf32>, vector<24x1024xf32> -> vector<216x1024xf32>
    %304 = arith.truncf %303 : vector<216x1024xf32> to vector<216x1024xbf16>
    %c0_201 = arith.constant 0 : index
    %c0_202 = arith.constant 0 : index
    %305 = vector.load %arg20[%c0_201, %c0_202] : memref<24x216xbf16, #tpu.memory_space<vmem>>, vector<24x216xbf16>
    %cst_203 = arith.constant dense<0.000000e+00> : vector<24x1024xf32>
    %306 = tpu.matmul %305, %304, %cst_203 {dimension_numbers = #tpu.dot_dimension_numbers<[1], [0], [0], [1], [0, 0, 1, 1], [], []>} : vector<24x216xbf16>, vector<216x1024xbf16>, vector<24x1024xf32> -> vector<24x1024xf32>
    %c0_204 = arith.constant 0 : index
    %c0_205 = arith.constant 0 : index
    %307 = vector.load %arg21[%c0_204, %c0_205] : memref<24x1xf32, #tpu.memory_space<vmem>>, vector<24x1xf32>
    %308 = vector.broadcast %307 : vector<24x1xf32> to vector<24x1024xf32>
    %309 = arith.addf %306, %308 : vector<24x1024xf32>
    %cst_206 = arith.constant 0.000000e+00 : f32
    %310 = vector.broadcast %cst_206 : f32 to vector<24x1024xf32>
    %311 = arith.maximumf %309, %310 : vector<24x1024xf32>
    %c0_207 = arith.constant 0 : index
    %c0_208 = arith.constant 0 : index
    %312 = vector.load %arg22[%c0_207, %c0_208] : memref<1x24xbf16, #tpu.memory_space<vmem>>, vector<1x24xbf16>
    %313 = arith.truncf %311 : vector<24x1024xf32> to vector<24x1024xbf16>
    %cst_209 = arith.constant dense<0.000000e+00> : vector<1x1024xf32>
    %314 = tpu.matmul %312, %313, %cst_209 {dimension_numbers = #tpu.dot_dimension_numbers<[1], [0], [0], [1], [0, 0, 1, 1], [], []>} : vector<1x24xbf16>, vector<24x1024xbf16>, vector<1x1024xf32> -> vector<1x1024xf32>
    %c0_210 = arith.constant 0 : index
    %c0_211 = arith.constant 0 : index
    %315 = vector.load %arg23[%c0_210, %c0_211] : memref<1x1xf32, #tpu.memory_space<vmem>>, vector<1x1xf32>
    %316 = vector.broadcast %315 : vector<1x1xf32> to vector<1x1024xf32>
    %317 = arith.addf %314, %316 : vector<1x1024xf32>
    %c0_212 = arith.constant 0 : index
    %c0_213 = arith.constant 0 : index
    %c0_214 = arith.constant 0 : index
    %318 = vector.load %arg24[%c0_212, %c0_213, %c0_214] : memref<1x1x1024xf32, #tpu.memory_space<vmem>>, vector<1x1x1024xf32>
    %319 = vector.shape_cast %318 : vector<1x1x1024xf32> to vector<1x1024xf32>
    %320 = vector.shape_cast %317 : vector<1x1024xf32> to vector<1x1x1024xf32>
    tpu.vector_store %arg24[%c0_212, %c0_213, %c0_214], %320 {strides = array<i32>} : memref<1x1x1024xf32, #tpu.memory_space<vmem>>, vector<1x1x1024xf32>,
    return
  }
  func.func @transform_0(%arg0: i32) -> (i32, i32, i32) {
    %c0_i32 = arith.constant 0 : i32
    %c0_i32_0 = arith.constant 0 : i32
    %c0_i32_1 = arith.constant 0 : i32
    return %arg0, %c0_i32, %c0_i32_0 : i32, i32, i32
  }
  func.func @transform_1(%arg0: i32) -> (i32, i32, i32) {
    %c0_i32 = arith.constant 0 : i32
    %c0_i32_0 = arith.constant 0 : i32
    %c0_i32_1 = arith.constant 0 : i32
    return %arg0, %c0_i32, %c0_i32_0 : i32, i32, i32
  }
  func.func @transform_2(%arg0: i32) -> (i32, i32, i32) {
    %c0_i32 = arith.constant 0 : i32
    %c0_i32_0 = arith.constant 0 : i32
    %c0_i32_1 = arith.constant 0 : i32
    return %arg0, %c0_i32, %c0_i32_0 : i32, i32, i32
  }
  func.func @transform_3(%arg0: i32) -> (i32, i32) {
    %c0_i32 = arith.constant 0 : i32
    %c0_i32_0 = arith.constant 0 : i32
    %c0_i32_1 = arith.constant 0 : i32
    return %c0_i32, %c0_i32_0 : i32, i32
  }
  func.func @transform_4(%arg0: i32) -> (i32, i32) {
    %c0_i32 = arith.constant 0 : i32
    %c0_i32_0 = arith.constant 0 : i32
    %c0_i32_1 = arith.constant 0 : i32
    return %c0_i32, %c0_i32_0 : i32, i32
  }
  func.func @transform_5(%arg0: i32) -> (i32, i32) {
    %c0_i32 = arith.constant 0 : i32
    %c0_i32_0 = arith.constant 0 : i32
    %c0_i32_1 = arith.constant 0 : i32
    return %c0_i32, %c0_i32_0 : i32, i32
  }
  func.func @transform_6(%arg0: i32) -> (i32, i32) {
    %c0_i32 = arith.constant 0 : i32
    %c0_i32_0 = arith.constant 0 : i32
    %c0_i32_1 = arith.constant 0 : i32
    return %c0_i32, %c0_i32_0 : i32, i32
  }
  func.func @transform_7(%arg0: i32) -> (i32, i32) {
    %c0_i32 = arith.constant 0 : i32
    %c0_i32_0 = arith.constant 0 : i32
    %c0_i32_1 = arith.constant 0 : i32
    return %c0_i32, %c0_i32_0 : i32, i32
  }
  func.func @transform_8(%arg0: i32) -> (i32, i32) {
    %c0_i32 = arith.constant 0 : i32
    %c0_i32_0 = arith.constant 0 : i32
    %c0_i32_1 = arith.constant 0 : i32
    return %c0_i32, %c0_i32_0 : i32, i32
  }
  func.func @transform_9(%arg0: i32) -> (i32, i32) {
    %c0_i32 = arith.constant 0 : i32
    %c0_i32_0 = arith.constant 0 : i32
    %c0_i32_1 = arith.constant 0 : i32
    return %c0_i32, %c0_i32_0 : i32, i32
  }
  func.func @transform_10(%arg0: i32) -> (i32, i32) {
    %c0_i32 = arith.constant 0 : i32
    %c0_i32_0 = arith.constant 0 : i32
    %c0_i32_1 = arith.constant 0 : i32
    return %c0_i32, %c0_i32_0 : i32, i32
  }
  func.func @transform_11(%arg0: i32) -> (i32, i32) {
    %c0_i32 = arith.constant 0 : i32
    %c0_i32_0 = arith.constant 0 : i32
    %c0_i32_1 = arith.constant 0 : i32
    return %c0_i32, %c0_i32_0 : i32, i32
  }
  func.func @transform_12(%arg0: i32) -> (i32, i32) {
    %c0_i32 = arith.constant 0 : i32
    %c0_i32_0 = arith.constant 0 : i32
    %c0_i32_1 = arith.constant 0 : i32
    return %c0_i32, %c0_i32_0 : i32, i32
  }
  func.func @transform_13(%arg0: i32) -> (i32, i32) {
    %c0_i32 = arith.constant 0 : i32
    %c0_i32_0 = arith.constant 0 : i32
    %c0_i32_1 = arith.constant 0 : i32
    return %c0_i32, %c0_i32_0 : i32, i32
  }
  func.func @transform_14(%arg0: i32) -> (i32, i32) {
    %c0_i32 = arith.constant 0 : i32
    %c0_i32_0 = arith.constant 0 : i32
    %c0_i32_1 = arith.constant 0 : i32
    return %c0_i32, %c0_i32_0 : i32, i32
  }
  func.func @transform_15(%arg0: i32) -> (i32, i32) {
    %c0_i32 = arith.constant 0 : i32
    %c0_i32_0 = arith.constant 0 : i32
    %c0_i32_1 = arith.constant 0 : i32
    return %c0_i32, %c0_i32_0 : i32, i32
  }
  func.func @transform_16(%arg0: i32) -> (i32, i32) {
    %c0_i32 = arith.constant 0 : i32
    %c0_i32_0 = arith.constant 0 : i32
    %c0_i32_1 = arith.constant 0 : i32
    return %c0_i32, %c0_i32_0 : i32, i32
  }
  func.func @transform_17(%arg0: i32) -> (i32, i32) {
    %c0_i32 = arith.constant 0 : i32
    %c0_i32_0 = arith.constant 0 : i32
    %c0_i32_1 = arith.constant 0 : i32
    return %c0_i32, %c0_i32_0 : i32, i32
  }
  func.func @transform_18(%arg0: i32) -> (i32, i32) {
    %c0_i32 = arith.constant 0 : i32
    %c0_i32_0 = arith.constant 0 : i32
    %c0_i32_1 = arith.constant 0 : i32
    return %c0_i32, %c0_i32_0 : i32, i32
  }
  func.func @transform_19(%arg0: i32) -> (i32, i32) {
    %c0_i32 = arith.constant 0 : i32
    %c0_i32_0 = arith.constant 0 : i32
    %c0_i32_1 = arith.constant 0 : i32
    return %c0_i32, %c0_i32_0 : i32, i32
  }
  func.func @transform_20(%arg0: i32) -> (i32, i32) {
    %c0_i32 = arith.constant 0 : i32
    %c0_i32_0 = arith.constant 0 : i32
    %c0_i32_1 = arith.constant 0 : i32
    return %c0_i32, %c0_i32_0 : i32, i32
  }
  func.func @transform_21(%arg0: i32) -> (i32, i32) {
    %c0_i32 = arith.constant 0 : i32
    %c0_i32_0 = arith.constant 0 : i32
    %c0_i32_1 = arith.constant 0 : i32
    return %c0_i32, %c0_i32_0 : i32, i32
  }
  func.func @transform_22(%arg0: i32) -> (i32, i32) {
    %c0_i32 = arith.constant 0 : i32
    %c0_i32_0 = arith.constant 0 : i32
    %c0_i32_1 = arith.constant 0 : i32
    return %c0_i32, %c0_i32_0 : i32, i32
  }
  func.func @transform_23(%arg0: i32) -> (i32, i32, i32) {
    %c0_i32 = arith.constant 0 : i32
    %c0_i32_0 = arith.constant 0 : i32
    %c0_i32_1 = arith.constant 0 : i32
    return %arg0, %c0_i32, %c0_i32_0 : i32, i32, i32
  }
}

</mosaic_0001>

<llo_original>
// kernel: aggregation_forward.1
$region0: #{aggregation_forward.1}
  #allocation0 [shape = 'u32[]', space=smem, size = 0x4, offset = 0x4, fixed_abs, tag = 'smem constant byte address 0x4 - core index']
  #allocation1 [shape = 'u32[144,128]{1,0:T(1,128)}', space=vmem, size = 0x12000, scoped, tag = 'internal scratch']
  #allocation2 [shape = 'f32[1,1]{1,0:T(1,128)S(1)}', space=vmem, size = 0x200, scoped, tag = 'scoped memory for aggregation_forward.1']
  %s0 = inlined_call_operand.vmem [shape: f32[2,8,64], index: 0, kind: input, shape index: {}]
  %s1 = inlined_call_operand.vmem [shape: f32[2,8,256], index: 1, kind: input, shape index: {}]
  %s2 = inlined_call_operand.vmem [shape: f32[2,8,1024], index: 2, kind: input, shape index: {}]
  %s3 = inlined_call_operand.vmem [shape: bf16[64,256], index: 3, kind: input, shape index: {}]
  %s4 = inlined_call_operand.vmem [shape: bf16[256,1024], index: 4, kind: input, shape index: {}]
  %s5 = inlined_call_operand.vmem [shape: f32[9,256], index: 5, kind: input, shape index: {}]
  %s6 = inlined_call_operand.vmem [shape: f32[9,1024], index: 6, kind: input, shape index: {}]
  %s7 = inlined_call_operand.vmem [shape: bf16[16,72], index: 7, kind: input, shape index: {}]
  %s8 = inlined_call_operand.vmem [shape: f32[16,1], index: 8, kind: input, shape index: {}]
  %s9 = inlined_call_operand.vmem [shape: bf16[8,72], index: 9, kind: input, shape index: {}]
  %s10 = inlined_call_operand.vmem [shape: f32[8,1], index: 10, kind: input, shape index: {}]
  %s11 = inlined_call_operand.vmem [shape: bf16[8,72], index: 11, kind: input, shape index: {}]
  %s12 = inlined_call_operand.vmem [shape: f32[8,1], index: 12, kind: input, shape index: {}]
  %s13 = inlined_call_operand.vmem [shape: bf16[16,144], index: 13, kind: input, shape index: {}]
  %s14 = inlined_call_operand.vmem [shape: f32[16,1], index: 14, kind: input, shape index: {}]
  %s15 = inlined_call_operand.vmem [shape: bf16[16,144], index: 15, kind: input, shape index: {}]
  %s16 = inlined_call_operand.vmem [shape: f32[16,1], index: 16, kind: input, shape index: {}]
  %s17 = inlined_call_operand.vmem [shape: bf16[24,216], index: 17, kind: input, shape index: {}]
  %s18 = inlined_call_operand.vmem [shape: f32[24,1], index: 18, kind: input, shape index: {}]
  %s19 = inlined_call_operand.vmem [shape: bf16[24,216], index: 19, kind: input, shape index: {}]
  %s20 = inlined_call_operand.vmem [shape: f32[24,1], index: 20, kind: input, shape index: {}]
  %s21 = inlined_call_operand.vmem [shape: bf16[1,24], index: 21, kind: input, shape index: {}]
  %s22 = inlined_call_operand.<no memory space> [shape: f32[1,1], index: 22, kind: input, shape index: {}]
  %s23 = inlined_call_operand.vmem [shape: f32[2,1,1024], index: 23, kind: output, shape index: {}]
  %s24 = sld [smem:[#allocation0]]
  $region125: #{aggregation_forward.1} parent=0
    _
  %s26 = ssub.s32 1, %s24
  %s27 = scalar_select 0, %s26, %s24
  %v28 = vstv %s22
  %29 = vst [vmem:[#allocation2] sm:$0x1] %v28
  loop: start=0, step=1, limit=4
  $region2: #{aggregation_forward.1} parent=0 // loop_pre_header
    _
  $region3: #{aggregation_forward.1} parent=0 // loop_header
    %s31 = sphi 0, %s35
    %p32 = scmp.ge.s32.totalorder %s31, 4
    %s41 = sphi 0, %s43
    %s44 = sphi 0, %s41
    %s45 = sphi 0, %s44
    %s61 = sphi 0, %s45
    %s67 = sphi 0, %s69
    %s70 = sphi 0, %s67
    %s71 = sphi 0, %s70
    %s87 = sphi 0, %s71
    %s93 = sphi 0, %s95
    %s96 = sphi 0, %s93
    %s97 = sphi 0, %s96
    %s113 = sphi 0, %s97
    %s117 = sphi 0, %s117
    %s119 = sphi 0, %s117
    %s120 = sphi 0, %s119
    %s134 = sphi 0, %s120
    %s138 = sphi 0, %s138
    %s140 = sphi 0, %s138
    %s141 = sphi 0, %s140
    %s155 = sphi 0, %s141
    %s159 = sphi 0, %s159
    %s161 = sphi 0, %s159
    %s162 = sphi 0, %s161
    %s176 = sphi 0, %s162
    %s180 = sphi 0, %s180
    %s182 = sphi 0, %s180
    %s183 = sphi 0, %s182
    %s197 = sphi 0, %s183
    %s201 = sphi 0, %s201
    %s203 = sphi 0, %s201
    %s204 = sphi 0, %s203
    %s218 = sphi 0, %s204
    %s222 = sphi 0, %s222
    %s224 = sphi 0, %s222
    %s225 = sphi 0, %s224
    %s239 = sphi 0, %s225
    %s243 = sphi 0, %s243
    %s245 = sphi 0, %s243
    %s246 = sphi 0, %s245
    %s260 = sphi 0, %s246
    %s264 = sphi 0, %s264
    %s266 = sphi 0, %s264
    %s267 = sphi 0, %s266
    %s281 = sphi 0, %s267
    %s285 = sphi 0, %s285
    %s287 = sphi 0, %s285
    %s288 = sphi 0, %s287
    %s302 = sphi 0, %s288
    %s306 = sphi 0, %s306
    %s308 = sphi 0, %s306
    %s309 = sphi 0, %s308
    %s323 = sphi 0, %s309
    %s327 = sphi 0, %s327
    %s329 = sphi 0, %s327
    %s330 = sphi 0, %s329
    %s344 = sphi 0, %s330
    %s348 = sphi 0, %s348
    %s350 = sphi 0, %s348
    %s351 = sphi 0, %s350
    %s365 = sphi 0, %s351
    %s369 = sphi 0, %s369
    %s371 = sphi 0, %s369
    %s372 = sphi 0, %s371
    %s386 = sphi 0, %s372
    %s390 = sphi 0, %s390
    %s392 = sphi 0, %s390
    %s393 = sphi 0, %s392
    %s407 = sphi 0, %s393
    %s411 = sphi 0, %s411
    %s413 = sphi 0, %s411
    %s414 = sphi 0, %s413
    %s428 = sphi 0, %s414
    %s432 = sphi 0, %s432
    %s434 = sphi 0, %s432
    %s435 = sphi 0, %s434
    %s449 = sphi 0, %s435
    %s453 = sphi 0, %s453
    %s455 = sphi 0, %s453
    %s456 = sphi 0, %s455
    %s470 = sphi 0, %s456
    %s474 = sphi 0, %s474
    %s476 = sphi 0, %s474
    %s477 = sphi 0, %s476
    %s491 = sphi 0, %s477
    %s495 = sphi 0, %s495
    %s497 = sphi 0, %s495
    %s498 = sphi 0, %s497
    %s512 = sphi 0, %s498
    %s516 = sphi 0, %s516
    %s518 = sphi 0, %s516
    %s519 = sphi 0, %s518
    %s533 = sphi 0, %s519
    %s539 = sphi 0, %s541
    %s542 = sphi 0, %s539
    %s543 = sphi 0, %s542
    %s559 = sphi 0, %s543
  $region4: #{aggregation_forward.1} parent=0 // loop_header_branch
    %34 = sbr.rel (%p32) target = $region8
  $region5: #{aggregation_forward.1} parent=0 // loop_body
    %s36 = ssub.s32 %s31, 1
    %s37 = ssub.s32 %s31, 2
    %s38 = sadd.s32 %s31, 1
    %s39 = ssub.s32 %s31, %s38
    %p40 = scmp.eq.s32.totalorder %s39, 0
    %s42 = sadd.s32 %s41, 1
    %s43 = scalar_select %p40, %s41, %s42
    %p46 = pneg %p40
    %p47 = scmp.eq.s32.totalorder %s31, 1
    %p48 = por %p46, %p47
    %p49 = scmp.ne.s32.totalorder %s41, %s44
    %p50 = scmp.eq.s32.totalorder %s31, 0
    %p51 = por %p49, %p50
    %p52 = scmp.ne.s32.totalorder %s41, %s44
    %p53 = scmp.eq.s32.totalorder %s36, 1
    %p54 = por %p52, %p53
    %p55 = scmp.ne.s32.totalorder %s44, %s45
    %p56 = scmp.eq.s32.totalorder %s36, 0
    %p57 = por %p55, %p56
    %p58 = scmp.ne.s32.totalorder %s44, %s45
    %p59 = scmp.eq.s32.totalorder %s37, 1
    %p60 = por %p58, %p59
    %p62 = scmp.ne.s32.totalorder %s45, %s61
    %p63 = scmp.eq.s32.totalorder %s37, 0
    %p64 = por %p62, %p63
    %s65 = ssub.s32 %s31, %s38
    %p66 = scmp.eq.s32.totalorder %s65, 0
    %s68 = sadd.s32 %s67, 1
    %s69 = scalar_select %p66, %s67, %s68
    %p72 = pneg %p66
    %p73 = scmp.eq.s32.totalorder %s31, 1
    %p74 = por %p72, %p73
    %p75 = scmp.ne.s32.totalorder %s67, %s70
    %p76 = scmp.eq.s32.totalorder %s31, 0
    %p77 = por %p75, %p76
    %p78 = scmp.ne.s32.totalorder %s67, %s70
    %p79 = scmp.eq.s32.totalorder %s36, 1
    %p80 = por %p78, %p79
    %p81 = scmp.ne.s32.totalorder %s70, %s71
    %p82 = scmp.eq.s32.totalorder %s36, 0
    %p83 = por %p81, %p82
    %p84 = scmp.ne.s32.totalorder %s70, %s71
    %p85 = scmp.eq.s32.totalorder %s37, 1
    %p86 = por %p84, %p85
    %p88 = scmp.ne.s32.totalorder %s71, %s87
    %p89 = scmp.eq.s32.totalorder %s37, 0
    %p90 = por %p88, %p89
    %s91 = ssub.s32 %s31, %s38
    %p92 = scmp.eq.s32.totalorder %s91, 0
    %s94 = sadd.s32 %s93, 1
    %s95 = scalar_select %p92, %s93, %s94
    %p98 = pneg %p92
    %p99 = scmp.eq.s32.totalorder %s31, 1
    %p100 = por %p98, %p99
    %p101 = scmp.ne.s32.totalorder %s93, %s96
    %p102 = scmp.eq.s32.totalorder %s31, 0
    %p103 = por %p101, %p102
    %p104 = scmp.ne.s32.totalorder %s93, %s96
    %p105 = scmp.eq.s32.totalorder %s36, 1
    %p106 = por %p104, %p105
    %p107 = scmp.ne.s32.totalorder %s96, %s97
    %p108 = scmp.eq.s32.totalorder %s36, 0
    %p109 = por %p107, %p108
    %p110 = scmp.ne.s32.totalorder %s96, %s97
    %p111 = scmp.eq.s32.totalorder %s37, 1
    %p112 = por %p110, %p111
    %p114 = scmp.ne.s32.totalorder %s97, %s113
    %p115 = scmp.eq.s32.totalorder %s37, 0
    %p116 = por %p114, %p115
    %s118 = sadd.s32 %s117, 1
    %p121 = scmp.eq.s32.totalorder %s31, 1
    %p122 = scmp.ne.s32.totalorder %s117, %s119
    %p123 = scmp.eq.s32.totalorder %s31, 0
    %p124 = por %p122, %p123
    %p125 = scmp.ne.s32.totalorder %s117, %s119
    %p126 = scmp.eq.s32.totalorder %s36, 1
    %p127 = por %p125, %p126
    %p128 = scmp.ne.s32.totalorder %s119, %s120
    %p129 = scmp.eq.s32.totalorder %s36, 0
    %p130 = por %p128, %p129
    %p131 = scmp.ne.s32.totalorder %s119, %s120
    %p132 = scmp.eq.s32.totalorder %s37, 1
    %p133 = por %p131, %p132
    %p135 = scmp.ne.s32.totalorder %s120, %s134
    %p136 = scmp.eq.s32.totalorder %s37, 0
    %p137 = por %p135, %p136
    %s139 = sadd.s32 %s138, 1
    %p142 = scmp.eq.s32.totalorder %s31, 1
    %p143 = scmp.ne.s32.totalorder %s138, %s140
    %p144 = scmp.eq.s32.totalorder %s31, 0
    %p145 = por %p143, %p144
    %p146 = scmp.ne.s32.totalorder %s138, %s140
    %p147 = scmp.eq.s32.totalorder %s36, 1
    %p148 = por %p146, %p147
    %p149 = scmp.ne.s32.totalorder %s140, %s141
    %p150 = scmp.eq.s32.totalorder %s36, 0
    %p151 = por %p149, %p150
    %p152 = scmp.ne.s32.totalorder %s140, %s141
    %p153 = scmp.eq.s32.totalorder %s37, 1
    %p154 = por %p152, %p153
    %p156 = scmp.ne.s32.totalorder %s141, %s155
    %p157 = scmp.eq.s32.totalorder %s37, 0
    %p158 = por %p156, %p157
    %s160 = sadd.s32 %s159, 1
    %p163 = scmp.eq.s32.totalorder %s31, 1
    %p164 = scmp.ne.s32.totalorder %s159, %s161
    %p165 = scmp.eq.s32.totalorder %s31, 0
    %p166 = por %p164, %p165
    %p167 = scmp.ne.s32.totalorder %s159, %s161
    %p168 = scmp.eq.s32.totalorder %s36, 1
    %p169 = por %p167, %p168
    %p170 = scmp.ne.s32.totalorder %s161, %s162
    %p171 = scmp.eq.s32.totalorder %s36, 0
    %p172 = por %p170, %p171
    %p173 = scmp.ne.s32.totalorder %s161, %s162
    %p174 = scmp.eq.s32.totalorder %s37, 1
    %p175 = por %p173, %p174
    %p177 = scmp.ne.s32.totalorder %s162, %s176
    %p178 = scmp.eq.s32.totalorder %s37, 0
    %p179 = por %p177, %p178
    %s181 = sadd.s32 %s180, 1
    %p184 = scmp.eq.s32.totalorder %s31, 1
    %p185 = scmp.ne.s32.totalorder %s180, %s182
    %p186 = scmp.eq.s32.totalorder %s31, 0
    %p187 = por %p185, %p186
    %p188 = scmp.ne.s32.totalorder %s180, %s182
    %p189 = scmp.eq.s32.totalorder %s36, 1
    %p190 = por %p188, %p189
    %p191 = scmp.ne.s32.totalorder %s182, %s183
    %p192 = scmp.eq.s32.totalorder %s36, 0
    %p193 = por %p191, %p192
    %p194 = scmp.ne.s32.totalorder %s182, %s183
    %p195 = scmp.eq.s32.totalorder %s37, 1
    %p196 = por %p194, %p195
    %p198 = scmp.ne.s32.totalorder %s183, %s197
    %p199 = scmp.eq.s32.totalorder %s37, 0
    %p200 = por %p198, %p199
    %s202 = sadd.s32 %s201, 1
    %p205 = scmp.eq.s32.totalorder %s31, 1
    %p206 = scmp.ne.s32.totalorder %s201, %s203
    %p207 = scmp.eq.s32.totalorder %s31, 0
    %p208 = por %p206, %p207
    %p209 = scmp.ne.s32.totalorder %s201, %s203
    %p210 = scmp.eq.s32.totalorder %s36, 1
    %p211 = por %p209, %p210
    %p212 = scmp.ne.s32.totalorder %s203, %s204
    %p213 = scmp.eq.s32.totalorder %s36, 0
    %p214 = por %p212, %p213
    %p215 = scmp.ne.s32.totalorder %s203, %s204
    %p216 = scmp.eq.s32.totalorder %s37, 1
    %p217 = por %p215, %p216
    %p219 = scmp.ne.s32.totalorder %s204, %s218
    %p220 = scmp.eq.s32.totalorder %s37, 0
    %p221 = por %p219, %p220
    %s223 = sadd.s32 %s222, 1
    %p226 = scmp.eq.s32.totalorder %s31, 1
    %p227 = scmp.ne.s32.totalorder %s222, %s224
    %p228 = scmp.eq.s32.totalorder %s31, 0
    %p229 = por %p227, %p228
    %p230 = scmp.ne.s32.totalorder %s222, %s224
    %p231 = scmp.eq.s32.totalorder %s36, 1
    %p232 = por %p230, %p231
    %p233 = scmp.ne.s32.totalorder %s224, %s225
    %p234 = scmp.eq.s32.totalorder %s36, 0
    %p235 = por %p233, %p234
    %p236 = scmp.ne.s32.totalorder %s224, %s225
    %p237 = scmp.eq.s32.totalorder %s37, 1
    %p238 = por %p236, %p237
    %p240 = scmp.ne.s32.totalorder %s225, %s239
    %p241 = scmp.eq.s32.totalorder %s37, 0
    %p242 = por %p240, %p241
    %s244 = sadd.s32 %s243, 1
    %p247 = scmp.eq.s32.totalorder %s31, 1
    %p248 = scmp.ne.s32.totalorder %s243, %s245
    %p249 = scmp.eq.s32.totalorder %s31, 0
    %p250 = por %p248, %p249
    %p251 = scmp.ne.s32.totalorder %s243, %s245
    %p252 = scmp.eq.s32.totalorder %s36, 1
    %p253 = por %p251, %p252
    %p254 = scmp.ne.s32.totalorder %s245, %s246
    %p255 = scmp.eq.s32.totalorder %s36, 0
    %p256 = por %p254, %p255
    %p257 = scmp.ne.s32.totalorder %s245, %s246
    %p258 = scmp.eq.s32.totalorder %s37, 1
    %p259 = por %p257, %p258
    %p261 = scmp.ne.s32.totalorder %s246, %s260
    %p262 = scmp.eq.s32.totalorder %s37, 0
    %p263 = por %p261, %p262
    %s265 = sadd.s32 %s264, 1
    %p268 = scmp.eq.s32.totalorder %s31, 1
    %p269 = scmp.ne.s32.totalorder %s264, %s266
    %p270 = scmp.eq.s32.totalorder %s31, 0
    %p271 = por %p269, %p270
    %p272 = scmp.ne.s32.totalorder %s264, %s266
    %p273 = scmp.eq.s32.totalorder %s36, 1
    %p274 = por %p272, %p273
    %p275 = scmp.ne.s32.totalorder %s266, %s267
    %p276 = scmp.eq.s32.totalorder %s36, 0
    %p277 = por %p275, %p276
    %p278 = scmp.ne.s32.totalorder %s266, %s267
    %p279 = scmp.eq.s32.totalorder %s37, 1
    %p280 = por %p278, %p279
    %p282 = scmp.ne.s32.totalorder %s267, %s281
    %p283 = scmp.eq.s32.totalorder %s37, 0
    %p284 = por %p282, %p283
    %s286 = sadd.s32 %s285, 1
    %p289 = scmp.eq.s32.totalorder %s31, 1
    %p290 = scmp.ne.s32.totalorder %s285, %s287
    %p291 = scmp.eq.s32.totalorder %s31, 0
    %p292 = por %p290, %p291
    %p293 = scmp.ne.s32.totalorder %s285, %s287
    %p294 = scmp.eq.s32.totalorder %s36, 1
    %p295 = por %p293, %p294
    %p296 = scmp.ne.s32.totalorder %s287, %s288
    %p297 = scmp.eq.s32.totalorder %s36, 0
    %p298 = por %p296, %p297
    %p299 = scmp.ne.s32.totalorder %s287, %s288
    %p300 = scmp.eq.s32.totalorder %s37, 1
    %p301 = por %p299, %p300
    %p303 = scmp.ne.s32.totalorder %s288, %s302
    %p304 = scmp.eq.s32.totalorder %s37, 0
    %p305 = por %p303, %p304
    %s307 = sadd.s32 %s306, 1
    %p310 = scmp.eq.s32.totalorder %s31, 1
    %p311 = scmp.ne.s32.totalorder %s306, %s308
    %p312 = scmp.eq.s32.totalorder %s31, 0
    %p313 = por %p311, %p312
    %p314 = scmp.ne.s32.totalorder %s306, %s308
    %p315 = scmp.eq.s32.totalorder %s36, 1
    %p316 = por %p314, %p315
    %p317 = scmp.ne.s32.totalorder %s308, %s309
    %p318 = scmp.eq.s32.totalorder %s36, 0
    %p319 = por %p317, %p318
    %p320 = scmp.ne.s32.totalorder %s308, %s309
    %p321 = scmp.eq.s32.totalorder %s37, 1
    %p322 = por %p320, %p321
    %p324 = scmp.ne.s32.totalorder %s309, %s323
    %p325 = scmp.eq.s32.totalorder %s37, 0
    %p326 = por %p324, %p325
    %s328 = sadd.s32 %s327, 1
    %p331 = scmp.eq.s32.totalorder %s31, 1
    %p332 = scmp.ne.s32.totalorder %s327, %s329
    %p333 = scmp.eq.s32.totalorder %s31, 0
    %p334 = por %p332, %p333
    %p335 = scmp.ne.s32.totalorder %s327, %s329
    %p336 = scmp.eq.s32.totalorder %s36, 1
    %p337 = por %p335, %p336
    %p338 = scmp.ne.s32.totalorder %s329, %s330
    %p339 = scmp.eq.s32.totalorder %s36, 0
    %p340 = por %p338, %p339
    %p341 = scmp.ne.s32.totalorder %s329, %s330
    %p342 = scmp.eq.s32.totalorder %s37, 1
    %p343 = por %p341, %p342
    %p345 = scmp.ne.s32.totalorder %s330, %s344
    %p346 = scmp.eq.s32.totalorder %s37, 0
    %p347 = por %p345, %p346
    %s349 = sadd.s32 %s348, 1
    %p352 = scmp.eq.s32.totalorder %s31, 1
    %p353 = scmp.ne.s32.totalorder %s348, %s350
    %p354 = scmp.eq.s32.totalorder %s31, 0
    %p355 = por %p353, %p354
    %p356 = scmp.ne.s32.totalorder %s348, %s350
    %p357 = scmp.eq.s32.totalorder %s36, 1
    %p358 = por %p356, %p357
    %p359 = scmp.ne.s32.totalorder %s350, %s351
    %p360 = scmp.eq.s32.totalorder %s36, 0
    %p361 = por %p359, %p360
    %p362 = scmp.ne.s32.totalorder %s350, %s351
    %p363 = scmp.eq.s32.totalorder %s37, 1
    %p364 = por %p362, %p363
    %p366 = scmp.ne.s32.totalorder %s351, %s365
    %p367 = scmp.eq.s32.totalorder %s37, 0
    %p368 = por %p366, %p367
    %s370 = sadd.s32 %s369, 1
    %p373 = scmp.eq.s32.totalorder %s31, 1
    %p374 = scmp.ne.s32.totalorder %s369, %s371
    %p375 = scmp.eq.s32.totalorder %s31, 0
    %p376 = por %p374, %p375
    %p377 = scmp.ne.s32.totalorder %s369, %s371
    %p378 = scmp.eq.s32.totalorder %s36, 1
    %p379 = por %p377, %p378
    %p380 = scmp.ne.s32.totalorder %s371, %s372
    %p381 = scmp.eq.s32.totalorder %s36, 0
    %p382 = por %p380, %p381
    %p383 = scmp.ne.s32.totalorder %s371, %s372
    %p384 = scmp.eq.s32.totalorder %s37, 1
    %p385 = por %p383, %p384
    %p387 = scmp.ne.s32.totalorder %s372, %s386
    %p388 = scmp.eq.s32.totalorder %s37, 0
    %p389 = por %p387, %p388
    %s391 = sadd.s32 %s390, 1
    %p394 = scmp.eq.s32.totalorder %s31, 1
    %p395 = scmp.ne.s32.totalorder %s390, %s392
    %p396 = scmp.eq.s32.totalorder %s31, 0
    %p397 = por %p395, %p396
    %p398 = scmp.ne.s32.totalorder %s390, %s392
    %p399 = scmp.eq.s32.totalorder %s36, 1
    %p400 = por %p398, %p399
    %p401 = scmp.ne.s32.totalorder %s392, %s393
    %p402 = scmp.eq.s32.totalorder %s36, 0
    %p403 = por %p401, %p402
    %p404 = scmp.ne.s32.totalorder %s392, %s393
    %p405 = scmp.eq.s32.totalorder %s37, 1
    %p406 = por %p404, %p405
    %p408 = scmp.ne.s32.totalorder %s393, %s407
    %p409 = scmp.eq.s32.totalorder %s37, 0
    %p410 = por %p408, %p409
    %s412 = sadd.s32 %s411, 1
    %p415 = scmp.eq.s32.totalorder %s31, 1
    %p416 = scmp.ne.s32.totalorder %s411, %s413
    %p417 = scmp.eq.s32.totalorder %s31, 0
    %p418 = por %p416, %p417
    %p419 = scmp.ne.s32.totalorder %s411, %s413
    %p420 = scmp.eq.s32.totalorder %s36, 1
    %p421 = por %p419, %p420
    %p422 = scmp.ne.s32.totalorder %s413, %s414
    %p423 = scmp.eq.s32.totalorder %s36, 0
    %p424 = por %p422, %p423
    %p425 = scmp.ne.s32.totalorder %s413, %s414
    %p426 = scmp.eq.s32.totalorder %s37, 1
    %p427 = por %p425, %p426
    %p429 = scmp.ne.s32.totalorder %s414, %s428
    %p430 = scmp.eq.s32.totalorder %s37, 0
    %p431 = por %p429, %p430
    %s433 = sadd.s32 %s432, 1
    %p436 = scmp.eq.s32.totalorder %s31, 1
    %p437 = scmp.ne.s32.totalorder %s432, %s434
    %p438 = scmp.eq.s32.totalorder %s31, 0
    %p439 = por %p437, %p438
    %p440 = scmp.ne.s32.totalorder %s432, %s434
    %p441 = scmp.eq.s32.totalorder %s36, 1
    %p442 = por %p440, %p441
    %p443 = scmp.ne.s32.totalorder %s434, %s435
    %p444 = scmp.eq.s32.totalorder %s36, 0
    %p445 = por %p443, %p444
    %p446 = scmp.ne.s32.totalorder %s434, %s435
    %p447 = scmp.eq.s32.totalorder %s37, 1
    %p448 = por %p446, %p447
    %p450 = scmp.ne.s32.totalorder %s435, %s449
    %p451 = scmp.eq.s32.totalorder %s37, 0
    %p452 = por %p450, %p451
    %s454 = sadd.s32 %s453, 1
    %p457 = scmp.eq.s32.totalorder %s31, 1
    %p458 = scmp.ne.s32.totalorder %s453, %s455
    %p459 = scmp.eq.s32.totalorder %s31, 0
    %p460 = por %p458, %p459
    %p461 = scmp.ne.s32.totalorder %s453, %s455
    %p462 = scmp.eq.s32.totalorder %s36, 1
    %p463 = por %p461, %p462
    %p464 = scmp.ne.s32.totalorder %s455, %s456
    %p465 = scmp.eq.s32.totalorder %s36, 0
    %p466 = por %p464, %p465
    %p467 = scmp.ne.s32.totalorder %s455, %s456
    %p468 = scmp.eq.s32.totalorder %s37, 1
    %p469 = por %p467, %p468
    %p471 = scmp.ne.s32.totalorder %s456, %s470
    %p472 = scmp.eq.s32.totalorder %s37, 0
    %p473 = por %p471, %p472
    %s475 = sadd.s32 %s474, 1
    %p478 = scmp.eq.s32.totalorder %s31, 1
    %p479 = scmp.ne.s32.totalorder %s474, %s476
    %p480 = scmp.eq.s32.totalorder %s31, 0
    %p481 = por %p479, %p480
    %p482 = scmp.ne.s32.totalorder %s474, %s476
    %p483 = scmp.eq.s32.totalorder %s36, 1
    %p484 = por %p482, %p483
    %p485 = scmp.ne.s32.totalorder %s476, %s477
    %p486 = scmp.eq.s32.totalorder %s36, 0
    %p487 = por %p485, %p486
    %p488 = scmp.ne.s32.totalorder %s476, %s477
    %p489 = scmp.eq.s32.totalorder %s37, 1
    %p490 = por %p488, %p489
    %p492 = scmp.ne.s32.totalorder %s477, %s491
    %p493 = scmp.eq.s32.totalorder %s37, 0
    %p494 = por %p492, %p493
    %s496 = sadd.s32 %s495, 1
    %p499 = scmp.eq.s32.totalorder %s31, 1
    %p500 = scmp.ne.s32.totalorder %s495, %s497
    %p501 = scmp.eq.s32.totalorder %s31, 0
    %p502 = por %p500, %p501
    %p503 = scmp.ne.s32.totalorder %s495, %s497
    %p504 = scmp.eq.s32.totalorder %s36, 1
    %p505 = por %p503, %p504
    %p506 = scmp.ne.s32.totalorder %s497, %s498
    %p507 = scmp.eq.s32.totalorder %s36, 0
    %p508 = por %p506, %p507
    %p509 = scmp.ne.s32.totalorder %s497, %s498
    %p510 = scmp.eq.s32.totalorder %s37, 1
    %p511 = por %p509, %p510
    %p513 = scmp.ne.s32.totalorder %s498, %s512
    %p514 = scmp.eq.s32.totalorder %s37, 0
    %p515 = por %p513, %p514
    %s517 = sadd.s32 %s516, 1
    %p520 = scmp.eq.s32.totalorder %s31, 1
    %p521 = scmp.ne.s32.totalorder %s516, %s518
    %p522 = scmp.eq.s32.totalorder %s31, 0
    %p523 = por %p521, %p522
    %p524 = scmp.ne.s32.totalorder %s516, %s518
    %p525 = scmp.eq.s32.totalorder %s36, 1
    %p526 = por %p524, %p525
    %p527 = scmp.ne.s32.totalorder %s518, %s519
    %p528 = scmp.eq.s32.totalorder %s36, 0
    %p529 = por %p527, %p528
    %p530 = scmp.ne.s32.totalorder %s518, %s519
    %p531 = scmp.eq.s32.totalorder %s37, 1
    %p532 = por %p530, %p531
    %p534 = scmp.ne.s32.totalorder %s519, %s533
    %p535 = scmp.eq.s32.totalorder %s37, 0
    %p536 = por %p534, %p535
    %s537 = ssub.s32 %s31, %s38
    %p538 = scmp.eq.s32.totalorder %s537, 0
    %s540 = sadd.s32 %s539, 1
    %s541 = scalar_select %p538, %s539, %s540
    %p544 = pneg %p538
    %p545 = scmp.eq.s32.totalorder %s31, 1
    %p546 = por %p544, %p545
    %p547 = scmp.ne.s32.totalorder %s539, %s542
    %p548 = scmp.eq.s32.totalorder %s31, 0
    %p549 = por %p547, %p548
    %p550 = scmp.ne.s32.totalorder %s539, %s542
    %p551 = scmp.eq.s32.totalorder %s36, 1
    %p552 = por %p550, %p551
    %p553 = scmp.ne.s32.totalorder %s542, %s543
    %p554 = scmp.eq.s32.totalorder %s36, 0
    %p555 = por %p553, %p554
    %p556 = scmp.ne.s32.totalorder %s542, %s543
    %p557 = scmp.eq.s32.totalorder %s37, 1
    %p558 = por %p556, %p557
    %p560 = scmp.ne.s32.totalorder %s543, %s559
    %p561 = scmp.eq.s32.totalorder %s37, 0
    %p562 = por %p560, %p561
    %p563 = scmp.le.s32.totalorder 1, %s31
    %p564 = scmp.lt.s32.totalorder %s31, 3
    %p565 = pnand %p563, %p564
    %p566 = pneg %p565
    // Predicated region
    $region9: #{aggregation_forward.1} parent=5 // pred_check
      _
    $region10: #{aggregation_forward.1} parent=5 // pred_check_branch
      %568 = sbr.rel (%p565) target = $region12
    $region11: #{aggregation_forward.1} parent=5 // pred_region
      %s569 = ssub.s32 %s31, 1
      // Predicated region
      $region13: #{aggregation_forward.1} parent=11 // pred_check
        %p570 = pneg %p130
      $region14: #{aggregation_forward.1} parent=11 // pred_check_branch
        %572 = sbr.rel (%p570) target = $region16
      $region15: #{aggregation_forward.1} parent=11 // pred_region
        _
      $region16: #{aggregation_forward.1} parent=11 // pred_fallthru
        _
      // Predicated region
      $region17: #{aggregation_forward.1} parent=11 // pred_check
        %p573 = pneg %p151
      $region18: #{aggregation_forward.1} parent=11 // pred_check_branch
        %575 = sbr.rel (%p573) target = $region20
      $region19: #{aggregation_forward.1} parent=11 // pred_region
        _
      $region20: #{aggregation_forward.1} parent=11 // pred_fallthru
        _
      // Predicated region
      $region21: #{aggregation_forward.1} parent=11 // pred_check
        %p576 = pneg %p172
      $region22: #{aggregation_forward.1} parent=11 // pred_check_branch
        %578 = sbr.rel (%p576) target = $region24
      $region23: #{aggregation_forward.1} parent=11 // pred_region
        _
      $region24: #{aggregation_forward.1} parent=11 // pred_fallthru
        _
      // Predicated region
      $region25: #{aggregation_forward.1} parent=11 // pred_check
        %p579 = pneg %p193
      $region26: #{aggregation_forward.1} parent=11 // pred_check_branch
        %581 = sbr.rel (%p579) target = $region28
      $region27: #{aggregation_forward.1} parent=11 // pred_region
        _
      $region28: #{aggregation_forward.1} parent=11 // pred_fallthru
        _
      // Predicated region
      $region29: #{aggregation_forward.1} parent=11 // pred_check
        %p582 = pneg %p214
      $region30: #{aggregation_forward.1} parent=11 // pred_check_branch
        %584 = sbr.rel (%p582) target = $region32
      $region31: #{aggregation_forward.1} parent=11 // pred_region
        _
      $region32: #{aggregation_forward.1} parent=11 // pred_fallthru
        _
      // Predicated region
      $region33: #{aggregation_forward.1} parent=11 // pred_check
        %p585 = pneg %p235
      $region34: #{aggregation_forward.1} parent=11 // pred_check_branch
        %587 = sbr.rel (%p585) target = $region36
      $region35: #{aggregation_forward.1} parent=11 // pred_region
        _
      $region36: #{aggregation_forward.1} parent=11 // pred_fallthru
        _
      // Predicated region
      $region37: #{aggregation_forward.1} parent=11 // pred_check
        %p588 = pneg %p256
      $region38: #{aggregation_forward.1} parent=11 // pred_check_branch
        %590 = sbr.rel (%p588) target = $region40
      $region39: #{aggregation_forward.1} parent=11 // pred_region
        _
      $region40: #{aggregation_forward.1} parent=11 // pred_fallthru
        _
      // Predicated region
      $region41: #{aggregation_forward.1} parent=11 // pred_check
        %p591 = pneg %p277
      $region42: #{aggregation_forward.1} parent=11 // pred_check_branch
        %593 = sbr.rel (%p591) target = $region44
      $region43: #{aggregation_forward.1} parent=11 // pred_region
        _
      $region44: #{aggregation_forward.1} parent=11 // pred_fallthru
        _
      // Predicated region
      $region45: #{aggregation_forward.1} parent=11 // pred_check
        %p594 = pneg %p298
      $region46: #{aggregation_forward.1} parent=11 // pred_check_branch
        %596 = sbr.rel (%p594) target = $region48
      $region47: #{aggregation_forward.1} parent=11 // pred_region
        _
      $region48: #{aggregation_forward.1} parent=11 // pred_fallthru
        _
      // Predicated region
      $region49: #{aggregation_forward.1} parent=11 // pred_check
        %p597 = pneg %p319
      $region50: #{aggregation_forward.1} parent=11 // pred_check_branch
        %599 = sbr.rel (%p597) target = $region52
      $region51: #{aggregation_forward.1} parent=11 // pred_region
        _
      $region52: #{aggregation_forward.1} parent=11 // pred_fallthru
        _
      // Predicated region
      $region53: #{aggregation_forward.1} parent=11 // pred_check
        %p600 = pneg %p340
      $region54: #{aggregation_forward.1} parent=11 // pred_check_branch
        %602 = sbr.rel (%p600) target = $region56
      $region55: #{aggregation_forward.1} parent=11 // pred_region
        _
      $region56: #{aggregation_forward.1} parent=11 // pred_fallthru
        _
      // Predicated region
      $region57: #{aggregation_forward.1} parent=11 // pred_check
        %p603 = pneg %p361
      $region58: #{aggregation_forward.1} parent=11 // pred_check_branch
        %605 = sbr.rel (%p603) target = $region60
      $region59: #{aggregation_forward.1} parent=11 // pred_region
        _
      $region60: #{aggregation_forward.1} parent=11 // pred_fallthru
        _
      // Predicated region
      $region61: #{aggregation_forward.1} parent=11 // pred_check
        %p606 = pneg %p382
      $region62: #{aggregation_forward.1} parent=11 // pred_check_branch
        %608 = sbr.rel (%p606) target = $region64
      $region63: #{aggregation_forward.1} parent=11 // pred_region
        _
      $region64: #{aggregation_forward.1} parent=11 // pred_fallthru
        _
      // Predicated region
      $region65: #{aggregation_forward.1} parent=11 // pred_check
        %p609 = pneg %p403
      $region66: #{aggregation_forward.1} parent=11 // pred_check_branch
        %611 = sbr.rel (%p609) target = $region68
      $region67: #{aggregation_forward.1} parent=11 // pred_region
        _
      $region68: #{aggregation_forward.1} parent=11 // pred_fallthru
        _
      // Predicated region
      $region69: #{aggregation_forward.1} parent=11 // pred_check
        %p612 = pneg %p424
      $region70: #{aggregation_forward.1} parent=11 // pred_check_branch
        %614 = sbr.rel (%p612) target = $region72
      $region71: #{aggregation_forward.1} parent=11 // pred_region
        _
      $region72: #{aggregation_forward.1} parent=11 // pred_fallthru
        _
      // Predicated region
      $region73: #{aggregation_forward.1} parent=11 // pred_check
        %p615 = pneg %p445
      $region74: #{aggregation_forward.1} parent=11 // pred_check_branch
        %617 = sbr.rel (%p615) target = $region76
      $region75: #{aggregation_forward.1} parent=11 // pred_region
        _
      $region76: #{aggregation_forward.1} parent=11 // pred_fallthru
        _
      // Predicated region
      $region77: #{aggregation_forward.1} parent=11 // pred_check
        %p618 = pneg %p466
      $region78: #{aggregation_forward.1} parent=11 // pred_check_branch
        %620 = sbr.rel (%p618) target = $region80
      $region79: #{aggregation_forward.1} parent=11 // pred_region
        _
      $region80: #{aggregation_forward.1} parent=11 // pred_fallthru
        _
      // Predicated region
      $region81: #{aggregation_forward.1} parent=11 // pred_check
        %p621 = pneg %p487
      $region82: #{aggregation_forward.1} parent=11 // pred_check_branch
        %623 = sbr.rel (%p621) target = $region84
      $region83: #{aggregation_forward.1} parent=11 // pred_region
        _
      $region84: #{aggregation_forward.1} parent=11 // pred_fallthru
        _
      // Predicated region
      $region85: #{aggregation_forward.1} parent=11 // pred_check
        %p624 = pneg %p508
      $region86: #{aggregation_forward.1} parent=11 // pred_check_branch
        %626 = sbr.rel (%p624) target = $region88
      $region87: #{aggregation_forward.1} parent=11 // pred_region
        _
      $region88: #{aggregation_forward.1} parent=11 // pred_fallthru
        _
      // Predicated region
      $region89: #{aggregation_forward.1} parent=11 // pred_check
        %p627 = pneg %p529
      $region90: #{aggregation_forward.1} parent=11 // pred_check_branch
        %629 = sbr.rel (%p627) target = $region92
      $region91: #{aggregation_forward.1} parent=11 // pred_region
        _
      $region92: #{aggregation_forward.1} parent=11 // pred_fallthru
        _
    $region12: #{aggregation_forward.1} parent=5 // pred_fallthru
      _
    %p630 = scmp.lt.s32.totalorder %s31, 2
    // Predicated region
    $region93: #{aggregation_forward.1} parent=5 // pred_check
      %p631 = pneg %p630
    $region94: #{aggregation_forward.1} parent=5 // pred_check_branch
      %633 = sbr.rel (%p631) target = $region96
    $region95: #{aggregation_forward.1} parent=5 // pred_region
      // Predicated region
      $region97: #{aggregation_forward.1} parent=95 // pred_check
        %p634 = pneg %p51
      $region98: #{aggregation_forward.1} parent=95 // pred_check_branch
        %636 = sbr.rel (%p634) target = $region100
      $region99: #{aggregation_forward.1} parent=95 // pred_region
        %p637 = scmp.lt.s32.totalorder %s31, 1
        %s638 = scalar_select %p637, %s31, 1
        %s639 = smul.addr %s638, 8
        %s640 = scalar_lea.vmem %s0, %s639
      $region100: #{aggregation_forward.1} parent=95 // pred_fallthru
        _
      // Predicated region
      $region101: #{aggregation_forward.1} parent=95 // pred_check
        %p641 = pneg %p77
      $region102: #{aggregation_forward.1} parent=95 // pred_check_branch
        %643 = sbr.rel (%p641) target = $region104
      $region103: #{aggregation_forward.1} parent=95 // pred_region
        %p644 = scmp.lt.s32.totalorder %s31, 1
        %s645 = scalar_select %p644, %s31, 1
        %s646 = smul.addr %s645, 2
        %s647 = smul.addr %s646, 8
        %s648 = scalar_lea.vmem %s1, %s647
      $region104: #{aggregation_forward.1} parent=95 // pred_fallthru
        _
      // Predicated region
      $region105: #{aggregation_forward.1} parent=95 // pred_check
        %p649 = pneg %p103
      $region106: #{aggregation_forward.1} parent=95 // pred_check_branch
        %651 = sbr.rel (%p649) target = $region108
      $region107: #{aggregation_forward.1} parent=95 // pred_region
        %p652 = scmp.lt.s32.totalorder %s31, 1
        %s653 = scalar_select %p652, %s31, 1
        %s654 = smul.addr %s653, 8
        %s655 = smul.addr %s654, 8
        %s656 = scalar_lea.vmem %s2, %s655
      $region108: #{aggregation_forward.1} parent=95 // pred_fallthru
        _
    $region96: #{aggregation_forward.1} parent=5 // pred_fallthru
      _
    %p657 = scmp.le.s32.totalorder 1, %s31
    %p658 = scmp.lt.s32.totalorder %s31, 3
    %p659 = pnand %p657, %p658
    %p660 = pneg %p659
    // Predicated region
    $region109: #{aggregation_forward.1} parent=5 // pred_check
      _
    $region110: #{aggregation_forward.1} parent=5 // pred_check_branch
      %662 = sbr.rel (%p659) target = $region112
    $region111: #{aggregation_forward.1} parent=5 // pred_region
      %s663 = ssub.s32 %s31, 1
      %p664 = scmp.lt.s32.totalorder %s36, 1
      %s665 = scalar_select %p664, %s36, 1
      %s666 = smul.addr %s665, 8
      %s667 = scalar_lea.vmem %s0, %s666
      %p668 = pneg %p57
      %p669 = pneg %p54
      %p670 = scmp.lt.s32.totalorder %s36, 1
      %s671 = scalar_select %p670, %s36, 1
      %s672 = smul.addr %s671, 2
      %s673 = smul.addr %s672, 8
      %s674 = scalar_lea.vmem %s1, %s673
      %p675 = pneg %p83
      %p676 = pneg %p80
      %p677 = scmp.lt.s32.totalorder %s36, 1
      %s678 = scalar_select %p677, %s36, 1
      %s679 = smul.addr %s678, 8
      %s680 = smul.addr %s679, 8
      %s681 = scalar_lea.vmem %s2, %s680
      %p682 = pneg %p109
      %p683 = pneg %p106
      %p684 = pneg %p130
      %p685 = pneg %p127
      %p686 = pneg %p151
      %p687 = pneg %p148
      %p688 = pneg %p172
      %p689 = pneg %p169
      %p690 = pneg %p193
      %p691 = pneg %p190
      %p692 = pneg %p214
      %p693 = pneg %p211
      %p694 = pneg %p235
      %p695 = pneg %p232
      %p696 = pneg %p256
      %p697 = pneg %p253
      %p698 = pneg %p277
      %p699 = pneg %p274
      %p700 = pneg %p298
      %p701 = pneg %p295
      %p702 = pneg %p319
      %p703 = pneg %p316
      %p704 = pneg %p340
      %p705 = pneg %p337
      %p706 = pneg %p361
      %p707 = pneg %p358
      %p708 = pneg %p382
      %p709 = pneg %p379
      %p710 = pneg %p403
      %p711 = pneg %p400
      %p712 = pneg %p424
      %p713 = pneg %p421
      %p714 = pneg %p445
      %p715 = pneg %p442
      %p716 = pneg %p466
      %p717 = pneg %p463
      %p718 = pneg %p487
      %p719 = pneg %p484
      %p720 = pneg %p508
      %p721 = pneg %p505
      %p722 = pneg %p529
      %p723 = pneg %p526
      %p724 = pneg %p555
      %p725 = pneg %p552
      %p726 = scmp.lt.s32.totalorder %s36, 1
      %s727 = scalar_select %p726, %s36, 1
      %s728 = smul.addr %s727, 8
      %s729 = scalar_lea.vmem %s23, %s728
      %p730 = scmp.lt.s32.totalorder %s36, 1
      %s731 = scalar_select %p730, %s36, 1
      %s732 = smul.addr %s731, 8
      %s733 = scalar_lea.vmem %s0, %s732
      %p734 = scmp.lt.s32.totalorder %s36, 1
      %s735 = scalar_select %p734, %s36, 1
      %s736 = smul.addr %s735, 2
      %s737 = smul.addr %s736, 8
      %s738 = scalar_lea.vmem %s1, %s737
      %p739 = scmp.lt.s32.totalorder %s36, 1
      %s740 = scalar_select %p739, %s36, 1
      %s741 = smul.addr %s740, 8
      %s742 = smul.addr %s741, 8
      %s743 = scalar_lea.vmem %s2, %s742
      %p744 = scmp.lt.s32.totalorder %s36, 1
      %s745 = scalar_select %p744, %s36, 1
      %s746 = smul.addr %s745, 8
      %s747 = scalar_lea.vmem %s23, %s746
      %v749 = vld [vmem:[%s733] sm:$0xff]
      %v750 = vld [vmem:[%s738] sm:$0xff]
      %v751 = vld [vmem:[%s738 + $0x8] sm:$0xff]
      %v752 = vld [vmem:[%s743] sm:$0xff]
      %v753 = vld [vmem:[%s743 + $0x8] sm:$0xff]
      %v754 = vld [vmem:[%s743 + $0x10] sm:$0xff]
      %v755 = vld [vmem:[%s743 + $0x18] sm:$0xff]
      %v756 = vld [vmem:[%s743 + $0x20] sm:$0xff]
      %v757 = vld [vmem:[%s743 + $0x28] sm:$0xff]
      %v758 = vld [vmem:[%s743 + $0x30] sm:$0xff]
      %v759 = vld [vmem:[%s743 + $0x38] sm:$0xff]
      %v760 = vpack.c.bf16 %v749, %v749
      %v761 = vld [vmem:[%s3] sm:$0xff]
      %v762 = vld [vmem:[%s3 + $0x8] sm:$0xff]
      %v763 = vld [vmem:[%s3 + $0x10] sm:$0xff]
      %v764 = vld [vmem:[%s3 + $0x18] sm:$0xff]
      %v765 = vld [vmem:[%s3 + $0x20] sm:$0xff]
      %v766 = vld [vmem:[%s3 + $0x28] sm:$0xff]
      %v767 = vld [vmem:[%s3 + $0x30] sm:$0xff]
      %v768 = vld [vmem:[%s3 + $0x38] sm:$0xff]
      %v777 = vunpack.c.l.b16 %v761
      %v778 = vunpack.c.h.b16 %v761
      %v779 = vunpack.c.l.b16 %v762
      %v780 = vunpack.c.h.b16 %v762
      %v781 = vunpack.c.l.b16 %v763
      %v782 = vunpack.c.h.b16 %v763
      %v783 = vunpack.c.l.b16 %v764
      %v784 = vunpack.c.h.b16 %v764
      %v785 = vunpack.c.l.b16 %v765
      %v786 = vunpack.c.h.b16 %v765
      %v787 = vunpack.c.l.b16 %v766
      %v788 = vunpack.c.h.b16 %v766
      %v789 = vunpack.c.l.b16 %v767
      %v790 = vunpack.c.h.b16 %v767
      %v791 = vunpack.c.l.b16 %v768
      %v792 = vunpack.c.h.b16 %v768
      %v793 = vpack.c.b16 %v779, %v777
      %v794 = vpack.c.b16 %v780, %v778
      %v795 = vpack.c.b16 %v783, %v781
      %v796 = vpack.c.b16 %v784, %v782
      %v797 = vpack.c.b16 %v787, %v785
      %v798 = vpack.c.b16 %v788, %v786
      %v799 = vpack.c.b16 %v791, %v789
      %v800 = vpack.c.b16 %v792, %v790
      %vm809 = vcmask 523264
      %v811 = vsel %vm809, %v760, 0
      %813 = vmatprep.subr.bf16.mxu0 %v794
      %814 = vmatpush1.bf16.msra.mxu0 %v793
      %815 = vmatprep.subr.bf16.mxu0 %v796
      %816 = vmatpush1.bf16.msra.mxu0 %v795
      %817 = vmatprep.subr.bf16.mxu0 %v798
      %818 = vmatpush1.bf16.msra.mxu0 %v797
      %819 = vmatprep.subr.bf16.mxu0 %v800
      %820 = vmatpush1.bf16.msra.mxu0 %v799
      %821 = vmatprep.subr.bf16.mxu0 0
      %822 = vmatpush1.bf16.msra.mxu0 0
      %823 = vmatprep.subr.bf16.mxu0 0
      %824 = vmatpush1.bf16.msra.mxu0 0
      %825 = vmatprep.subr.bf16.mxu0 0
      %826 = vmatpush1.bf16.msra.mxu0 0
      %827 = vmatprep.subr.bf16.mxu0 0
      %828 = vmatpush1.bf16.msra.mxu0 0
      %829 = vmatprep.subr.bf16.mxu0 0
      %830 = vmatpush1.bf16.msra.mxu0 0
      %831 = vmatprep.subr.bf16.mxu0 0
      %832 = vmatpush1.bf16.msra.mxu0 0
      %833 = vmatprep.subr.bf16.mxu0 0
      %834 = vmatpush1.bf16.msra.mxu0 0
      %835 = vmatprep.subr.bf16.mxu0 0
      %836 = vmatpush1.bf16.msra.mxu0 0
      %837 = vmatprep.subr.bf16.mxu0 0
      %838 = vmatpush1.bf16.msra.mxu0 0
      %839 = vmatprep.subr.bf16.mxu0 0
      %840 = vmatpush1.bf16.msra.mxu0 0
      %841 = vmatprep.subr.bf16.mxu0 0
      %842 = vmatpush1.bf16.msra.mxu0 0
      %843 = vmatprep.subr.bf16.mxu0 0
      %844 = vmatpush1.bf16.msra.mxu0 0
      %845 = vmatprep.mubr.bf16.mxu0 0
      %846 = vmatmul.mubr.bf16.gmra.mrb[0].mxu0 %v811
      %v847 = vpop.f32.mrb[0].mxu0
      %v848 = vadd.f32 0.0, %v847
      %v849 = vpop.f32.mrb[0].mxu0
      %v850 = vadd.f32 0.0, %v849
      %v851 = vpop.f32.mrb[0].mxu0
      %v852 = vpop.f32.mrb[0].mxu0
      %853 = vdwg.mxu0
      %v854 = vpack.c.bf16 %v848, %v848
      %v855 = vpack.c.bf16 %v850, %v850
      %v856 = vld [vmem:[%s4] sm:$0xff]
      %v857 = vld [vmem:[%s4 + $0x8] sm:$0xff]
      %v858 = vld [vmem:[%s4 + $0x10] sm:$0xff]
      %v859 = vld [vmem:[%s4 + $0x18] sm:$0xff]
      %v860 = vld [vmem:[%s4 + $0x20] sm:$0xff]
      %v861 = vld [vmem:[%s4 + $0x28] sm:$0xff]
      %v862 = vld [vmem:[%s4 + $0x30] sm:$0xff]
      %v863 = vld [vmem:[%s4 + $0x38] sm:$0xff]
      %v864 = vld [vmem:[%s4 + $0x40] sm:$0xff]
      %v865 = vld [vmem:[%s4 + $0x48] sm:$0xff]
      %v866 = vld [vmem:[%s4 + $0x50] sm:$0xff]
      %v867 = vld [vmem:[%s4 + $0x58] sm:$0xff]
      %v868 = vld [vmem:[%s4 + $0x60] sm:$0xff]
      %v869 = vld [vmem:[%s4 + $0x68] sm:$0xff]
      %v870 = vld [vmem:[%s4 + $0x70] sm:$0xff]
      %v871 = vld [vmem:[%s4 + $0x78] sm:$0xff]
      %v872 = vld [vmem:[%s4 + $0x80] sm:$0xff]
      %v873 = vld [vmem:[%s4 + $0x88] sm:$0xff]
      %v874 = vld [vmem:[%s4 + $0x90] sm:$0xff]
      %v875 = vld [vmem:[%s4 + $0x98] sm:$0xff]
      %v876 = vld [vmem:[%s4 + $0xa0] sm:$0xff]
      %v877 = vld [vmem:[%s4 + $0xa8] sm:$0xff]
      %v878 = vld [vmem:[%s4 + $0xb0] sm:$0xff]
      %v879 = vld [vmem:[%s4 + $0xb8] sm:$0xff]
      %v880 = vld [vmem:[%s4 + $0xc0] sm:$0xff]
      %v881 = vld [vmem:[%s4 + $0xc8] sm:$0xff]
      %v882 = vld [vmem:[%s4 + $0xd0] sm:$0xff]
      %v883 = vld [vmem:[%s4 + $0xd8] sm:$0xff]
      %v884 = vld [vmem:[%s4 + $0xe0] sm:$0xff]
      %v885 = vld [vmem:[%s4 + $0xe8] sm:$0xff]
      %v886 = vld [vmem:[%s4 + $0xf0] sm:$0xff]
      %v887 = vld [vmem:[%s4 + $0xf8] sm:$0xff]
      %v888 = vld [vmem:[%s4 + $0x100] sm:$0xff]
      %v889 = vld [vmem:[%s4 + $0x108] sm:$0xff]
      %v890 = vld [vmem:[%s4 + $0x110] sm:$0xff]
      %v891 = vld [vmem:[%s4 + $0x118] sm:$0xff]
      %v892 = vld [vmem:[%s4 + $0x120] sm:$0xff]
      %v893 = vld [vmem:[%s4 + $0x128] sm:$0xff]
      %v894 = vld [vmem:[%s4 + $0x130] sm:$0xff]
      %v895 = vld [vmem:[%s4 + $0x138] sm:$0xff]
      %v896 = vld [vmem:[%s4 + $0x140] sm:$0xff]
      %v897 = vld [vmem:[%s4 + $0x148] sm:$0xff]
      %v898 = vld [vmem:[%s4 + $0x150] sm:$0xff]
      %v899 = vld [vmem:[%s4 + $0x158] sm:$0xff]
      %v900 = vld [vmem:[%s4 + $0x160] sm:$0xff]
      %v901 = vld [vmem:[%s4 + $0x168] sm:$0xff]
      %v902 = vld [vmem:[%s4 + $0x170] sm:$0xff]
      %v903 = vld [vmem:[%s4 + $0x178] sm:$0xff]
      %v904 = vld [vmem:[%s4 + $0x180] sm:$0xff]
      %v905 = vld [vmem:[%s4 + $0x188] sm:$0xff]
      %v906 = vld [vmem:[%s4 + $0x190] sm:$0xff]
      %v907 = vld [vmem:[%s4 + $0x198] sm:$0xff]
      %v908 = vld [vmem:[%s4 + $0x1a0] sm:$0xff]
      %v909 = vld [vmem:[%s4 + $0x1a8] sm:$0xff]
      %v910 = vld [vmem:[%s4 + $0x1b0] sm:$0xff]
      %v911 = vld [vmem:[%s4 + $0x1b8] sm:$0xff]
      %v912 = vld [vmem:[%s4 + $0x1c0] sm:$0xff]
      %v913 = vld [vmem:[%s4 + $0x1c8] sm:$0xff]
      %v914 = vld [vmem:[%s4 + $0x1d0] sm:$0xff]
      %v915 = vld [vmem:[%s4 + $0x1d8] sm:$0xff]
      %v916 = vld [vmem:[%s4 + $0x1e0] sm:$0xff]
      %v917 = vld [vmem:[%s4 + $0x1e8] sm:$0xff]
      %v918 = vld [vmem:[%s4 + $0x1f0] sm:$0xff]
      %v919 = vld [vmem:[%s4 + $0x1f8] sm:$0xff]
      %v920 = vld [vmem:[%s4 + $0x200] sm:$0xff]
      %v921 = vld [vmem:[%s4 + $0x208] sm:$0xff]
      %v922 = vld [vmem:[%s4 + $0x210] sm:$0xff]
      %v923 = vld [vmem:[%s4 + $0x218] sm:$0xff]
      %v924 = vld [vmem:[%s4 + $0x220] sm:$0xff]
      %v925 = vld [vmem:[%s4 + $0x228] sm:$0xff]
      %v926 = vld [vmem:[%s4 + $0x230] sm:$0xff]
      %v927 = vld [vmem:[%s4 + $0x238] sm:$0xff]
      %v928 = vld [vmem:[%s4 + $0x240] sm:$0xff]
      %v929 = vld [vmem:[%s4 + $0x248] sm:$0xff]
      %v930 = vld [vmem:[%s4 + $0x250] sm:$0xff]
      %v931 = vld [vmem:[%s4 + $0x258] sm:$0xff]
      %v932 = vld [vmem:[%s4 + $0x260] sm:$0xff]
      %v933 = vld [vmem:[%s4 + $0x268] sm:$0xff]
      %v934 = vld [vmem:[%s4 + $0x270] sm:$0xff]
      %v935 = vld [vmem:[%s4 + $0x278] sm:$0xff]
      %v936 = vld [vmem:[%s4 + $0x280] sm:$0xff]
      %v937 = vld [vmem:[%s4 + $0x288] sm:$0xff]
      %v938 = vld [vmem:[%s4 + $0x290] sm:$0xff]
      %v939 = vld [vmem:[%s4 + $0x298] sm:$0xff]
      %v940 = vld [vmem:[%s4 + $0x2a0] sm:$0xff]
      %v941 = vld [vmem:[%s4 + $0x2a8] sm:$0xff]
      %v942 = vld [vmem:[%s4 + $0x2b0] sm:$0xff]
      %v943 = vld [vmem:[%s4 + $0x2b8] sm:$0xff]
      %v944 = vld [vmem:[%s4 + $0x2c0] sm:$0xff]
      %v945 = vld [vmem:[%s4 + $0x2c8] sm:$0xff]
      %v946 = vld [vmem:[%s4 + $0x2d0] sm:$0xff]
      %v947 = vld [vmem:[%s4 + $0x2d8] sm:$0xff]
      %v948 = vld [vmem:[%s4 + $0x2e0] sm:$0xff]
      %v949 = vld [vmem:[%s4 + $0x2e8] sm:$0xff]
      %v950 = vld [vmem:[%s4 + $0x2f0] sm:$0xff]
      %v951 = vld [vmem:[%s4 + $0x2f8] sm:$0xff]
      %v952 = vld [vmem:[%s4 + $0x300] sm:$0xff]
      %v953 = vld [vmem:[%s4 + $0x308] sm:$0xff]
      %v954 = vld [vmem:[%s4 + $0x310] sm:$0xff]
      %v955 = vld [vmem:[%s4 + $0x318] sm:$0xff]
      %v956 = vld [vmem:[%s4 + $0x320] sm:$0xff]
      %v957 = vld [vmem:[%s4 + $0x328] sm:$0xff]
      %v958 = vld [vmem:[%s4 + $0x330] sm:$0xff]
      %v959 = vld [vmem:[%s4 + $0x338] sm:$0xff]
      %v960 = vld [vmem:[%s4 + $0x340] sm:$0xff]
      %v961 = vld [vmem:[%s4 + $0x348] sm:$0xff]
      %v962 = vld [vmem:[%s4 + $0x350] sm:$0xff]
      %v963 = vld [vmem:[%s4 + $0x358] sm:$0xff]
      %v964 = vld [vmem:[%s4 + $0x360] sm:$0xff]
      %v965 = vld [vmem:[%s4 + $0x368] sm:$0xff]
      %v966 = vld [vmem:[%s4 + $0x370] sm:$0xff]
      %v967 = vld [vmem:[%s4 + $0x378] sm:$0xff]
      %v968 = vld [vmem:[%s4 + $0x380] sm:$0xff]
      %v969 = vld [vmem:[%s4 + $0x388] sm:$0xff]
      %v970 = vld [vmem:[%s4 + $0x390] sm:$0xff]
      %v971 = vld [vmem:[%s4 + $0x398] sm:$0xff]
      %v972 = vld [vmem:[%s4 + $0x3a0] sm:$0xff]
      %v973 = vld [vmem:[%s4 + $0x3a8] sm:$0xff]
      %v974 = vld [vmem:[%s4 + $0x3b0] sm:$0xff]
      %v975 = vld [vmem:[%s4 + $0x3b8] sm:$0xff]
      %v976 = vld [vmem:[%s4 + $0x3c0] sm:$0xff]
      %v977 = vld [vmem:[%s4 + $0x3c8] sm:$0xff]
      %v978 = vld [vmem:[%s4 + $0x3d0] sm:$0xff]
      %v979 = vld [vmem:[%s4 + $0x3d8] sm:$0xff]
      %v980 = vld [vmem:[%s4 + $0x3e0] sm:$0xff]
      %v981 = vld [vmem:[%s4 + $0x3e8] sm:$0xff]
      %v982 = vld [vmem:[%s4 + $0x3f0] sm:$0xff]
      %v983 = vld [vmem:[%s4 + $0x3f8] sm:$0xff]
      %v1112 = vunpack.c.l.b16 %v856
      %v1113 = vunpack.c.h.b16 %v856
      %v1114 = vunpack.c.l.b16 %v857
      %v1115 = vunpack.c.h.b16 %v857
      %v1116 = vunpack.c.l.b16 %v858
      %v1117 = vunpack.c.h.b16 %v858
      %v1118 = vunpack.c.l.b16 %v859
      %v1119 = vunpack.c.h.b16 %v859
      %v1120 = vunpack.c.l.b16 %v860
      %v1121 = vunpack.c.h.b16 %v860
      %v1122 = vunpack.c.l.b16 %v861
      %v1123 = vunpack.c.h.b16 %v861
      %v1124 = vunpack.c.l.b16 %v862
      %v1125 = vunpack.c.h.b16 %v862
      %v1126 = vunpack.c.l.b16 %v863
      %v1127 = vunpack.c.h.b16 %v863
      %v1128 = vunpack.c.l.b16 %v864
      %v1129 = vunpack.c.h.b16 %v864
      %v1130 = vunpack.c.l.b16 %v865
      %v1131 = vunpack.c.h.b16 %v865
      %v1132 = vunpack.c.l.b16 %v866
      %v1133 = vunpack.c.h.b16 %v866
      %v1134 = vunpack.c.l.b16 %v867
      %v1135 = vunpack.c.h.b16 %v867
      %v1136 = vunpack.c.l.b16 %v868
      %v1137 = vunpack.c.h.b16 %v868
      %v1138 = vunpack.c.l.b16 %v869
      %v1139 = vunpack.c.h.b16 %v869
      %v1140 = vunpack.c.l.b16 %v870
      %v1141 = vunpack.c.h.b16 %v870
      %v1142 = vunpack.c.l.b16 %v871
      %v1143 = vunpack.c.h.b16 %v871
      %v1144 = vunpack.c.l.b16 %v872
      %v1145 = vunpack.c.h.b16 %v872
      %v1146 = vunpack.c.l.b16 %v873
      %v1147 = vunpack.c.h.b16 %v873
      %v1148 = vunpack.c.l.b16 %v874
      %v1149 = vunpack.c.h.b16 %v874
      %v1150 = vunpack.c.l.b16 %v875
      %v1151 = vunpack.c.h.b16 %v875
      %v1152 = vunpack.c.l.b16 %v876
      %v1153 = vunpack.c.h.b16 %v876
      %v1154 = vunpack.c.l.b16 %v877
      %v1155 = vunpack.c.h.b16 %v877
      %v1156 = vunpack.c.l.b16 %v878
      %v1157 = vunpack.c.h.b16 %v878
      %v1158 = vunpack.c.l.b16 %v879
      %v1159 = vunpack.c.h.b16 %v879
      %v1160 = vunpack.c.l.b16 %v880
      %v1161 = vunpack.c.h.b16 %v880
      %v1162 = vunpack.c.l.b16 %v881
      %v1163 = vunpack.c.h.b16 %v881
      %v1164 = vunpack.c.l.b16 %v882
      %v1165 = vunpack.c.h.b16 %v882
      %v1166 = vunpack.c.l.b16 %v883
      %v1167 = vunpack.c.h.b16 %v883
      %v1168 = vunpack.c.l.b16 %v884
      %v1169 = vunpack.c.h.b16 %v884
      %v1170 = vunpack.c.l.b16 %v885
      %v1171 = vunpack.c.h.b16 %v885
      %v1172 = vunpack.c.l.b16 %v886
      %v1173 = vunpack.c.h.b16 %v886
      %v1174 = vunpack.c.l.b16 %v887
      %v1175 = vunpack.c.h.b16 %v887
      %v1176 = vunpack.c.l.b16 %v888
      %v1177 = vunpack.c.h.b16 %v888
      %v1178 = vunpack.c.l.b16 %v889
      %v1179 = vunpack.c.h.b16 %v889
      %v1180 = vunpack.c.l.b16 %v890
      %v1181 = vunpack.c.h.b16 %v890
      %v1182 = vunpack.c.l.b16 %v891
      %v1183 = vunpack.c.h.b16 %v891
      %v1184 = vunpack.c.l.b16 %v892
      %v1185 = vunpack.c.h.b16 %v892
      %v1186 = vunpack.c.l.b16 %v893
      %v1187 = vunpack.c.h.b16 %v893
      %v1188 = vunpack.c.l.b16 %v894
      %v1189 = vunpack.c.h.b16 %v894
      %v1190 = vunpack.c.l.b16 %v895
      %v1191 = vunpack.c.h.b16 %v895
      %v1192 = vunpack.c.l.b16 %v896
      %v1193 = vunpack.c.h.b16 %v896
      %v1194 = vunpack.c.l.b16 %v897
      %v1195 = vunpack.c.h.b16 %v897
      %v1196 = vunpack.c.l.b16 %v898
      %v1197 = vunpack.c.h.b16 %v898
      %v1198 = vunpack.c.l.b16 %v899
      %v1199 = vunpack.c.h.b16 %v899
      %v1200 = vunpack.c.l.b16 %v900
      %v1201 = vunpack.c.h.b16 %v900
      %v1202 = vunpack.c.l.b16 %v901
      %v1203 = vunpack.c.h.b16 %v901
      %v1204 = vunpack.c.l.b16 %v902
      %v1205 = vunpack.c.h.b16 %v902
      %v1206 = vunpack.c.l.b16 %v903
      %v1207 = vunpack.c.h.b16 %v903
      %v1208 = vunpack.c.l.b16 %v904
      %v1209 = vunpack.c.h.b16 %v904
      %v1210 = vunpack.c.l.b16 %v905
      %v1211 = vunpack.c.h.b16 %v905
      %v1212 = vunpack.c.l.b16 %v906
      %v1213 = vunpack.c.h.b16 %v906
      %v1214 = vunpack.c.l.b16 %v907
      %v1215 = vunpack.c.h.b16 %v907
      %v1216 = vunpack.c.l.b16 %v908
      %v1217 = vunpack.c.h.b16 %v908
      %v1218 = vunpack.c.l.b16 %v909
      %v1219 = vunpack.c.h.b16 %v909
      %v1220 = vunpack.c.l.b16 %v910
      %v1221 = vunpack.c.h.b16 %v910
      %v1222 = vunpack.c.l.b16 %v911
      %v1223 = vunpack.c.h.b16 %v911
      %v1224 = vunpack.c.l.b16 %v912
      %v1225 = vunpack.c.h.b16 %v912
      %v1226 = vunpack.c.l.b16 %v913
      %v1227 = vunpack.c.h.b16 %v913
      %v1228 = vunpack.c.l.b16 %v914
      %v1229 = vunpack.c.h.b16 %v914
      %v1230 = vunpack.c.l.b16 %v915
      %v1231 = vunpack.c.h.b16 %v915
      %v1232 = vunpack.c.l.b16 %v916
      %v1233 = vunpack.c.h.b16 %v916
      %v1234 = vunpack.c.l.b16 %v917
      %v1235 = vunpack.c.h.b16 %v917
      %v1236 = vunpack.c.l.b16 %v918
      %v1237 = vunpack.c.h.b16 %v918
      %v1238 = vunpack.c.l.b16 %v919
      %v1239 = vunpack.c.h.b16 %v919
      %v1240 = vunpack.c.l.b16 %v920
      %v1241 = vunpack.c.h.b16 %v920
      %v1242 = vunpack.c.l.b16 %v921
      %v1243 = vunpack.c.h.b16 %v921
      %v1244 = vunpack.c.l.b16 %v922
      %v1245 = vunpack.c.h.b16 %v922
      %v1246 = vunpack.c.l.b16 %v923
      %v1247 = vunpack.c.h.b16 %v923
      %v1248 = vunpack.c.l.b16 %v924
      %v1249 = vunpack.c.h.b16 %v924
      %v1250 = vunpack.c.l.b16 %v925
      %v1251 = vunpack.c.h.b16 %v925
      %v1252 = vunpack.c.l.b16 %v926
      %v1253 = vunpack.c.h.b16 %v926
      %v1254 = vunpack.c.l.b16 %v927
      %v1255 = vunpack.c.h.b16 %v927
      %v1256 = vunpack.c.l.b16 %v928
      %v1257 = vunpack.c.h.b16 %v928
      %v1258 = vunpack.c.l.b16 %v929
      %v1259 = vunpack.c.h.b16 %v929
      %v1260 = vunpack.c.l.b16 %v930
      %v1261 = vunpack.c.h.b16 %v930
      %v1262 = vunpack.c.l.b16 %v931
      %v1263 = vunpack.c.h.b16 %v931
      %v1264 = vunpack.c.l.b16 %v932
      %v1265 = vunpack.c.h.b16 %v932
      %v1266 = vunpack.c.l.b16 %v933
      %v1267 = vunpack.c.h.b16 %v933
      %v1268 = vunpack.c.l.b16 %v934
      %v1269 = vunpack.c.h.b16 %v934
      %v1270 = vunpack.c.l.b16 %v935
      %v1271 = vunpack.c.h.b16 %v935
      %v1272 = vunpack.c.l.b16 %v936
      %v1273 = vunpack.c.h.b16 %v936
      %v1274 = vunpack.c.l.b16 %v937
      %v1275 = vunpack.c.h.b16 %v937
      %v1276 = vunpack.c.l.b16 %v938
      %v1277 = vunpack.c.h.b16 %v938
      %v1278 = vunpack.c.l.b16 %v939
      %v1279 = vunpack.c.h.b16 %v939
      %v1280 = vunpack.c.l.b16 %v940
      %v1281 = vunpack.c.h.b16 %v940
      %v1282 = vunpack.c.l.b16 %v941
      %v1283 = vunpack.c.h.b16 %v941
      %v1284 = vunpack.c.l.b16 %v942
      %v1285 = vunpack.c.h.b16 %v942
      %v1286 = vunpack.c.l.b16 %v943
      %v1287 = vunpack.c.h.b16 %v943
      %v1288 = vunpack.c.l.b16 %v944
      %v1289 = vunpack.c.h.b16 %v944
      %v1290 = vunpack.c.l.b16 %v945
      %v1291 = vunpack.c.h.b16 %v945
      %v1292 = vunpack.c.l.b16 %v946
      %v1293 = vunpack.c.h.b16 %v946
      %v1294 = vunpack.c.l.b16 %v947
      %v1295 = vunpack.c.h.b16 %v947
      %v1296 = vunpack.c.l.b16 %v948
      %v1297 = vunpack.c.h.b16 %v948
      %v1298 = vunpack.c.l.b16 %v949
      %v1299 = vunpack.c.h.b16 %v949
      %v1300 = vunpack.c.l.b16 %v950
      %v1301 = vunpack.c.h.b16 %v950
      %v1302 = vunpack.c.l.b16 %v951
      %v1303 = vunpack.c.h.b16 %v951
      %v1304 = vunpack.c.l.b16 %v952
      %v1305 = vunpack.c.h.b16 %v952
      %v1306 = vunpack.c.l.b16 %v953
      %v1307 = vunpack.c.h.b16 %v953
      %v1308 = vunpack.c.l.b16 %v954
      %v1309 = vunpack.c.h.b16 %v954
      %v1310 = vunpack.c.l.b16 %v955
      %v1311 = vunpack.c.h.b16 %v955
      %v1312 = vunpack.c.l.b16 %v956
      %v1313 = vunpack.c.h.b16 %v956
      %v1314 = vunpack.c.l.b16 %v957
      %v1315 = vunpack.c.h.b16 %v957
      %v1316 = vunpack.c.l.b16 %v958
      %v1317 = vunpack.c.h.b16 %v958
      %v1318 = vunpack.c.l.b16 %v959
      %v1319 = vunpack.c.h.b16 %v959
      %v1320 = vunpack.c.l.b16 %v960
      %v1321 = vunpack.c.h.b16 %v960
      %v1322 = vunpack.c.l.b16 %v961
      %v1323 = vunpack.c.h.b16 %v961
      %v1324 = vunpack.c.l.b16 %v962
      %v1325 = vunpack.c.h.b16 %v962
      %v1326 = vunpack.c.l.b16 %v963
      %v1327 = vunpack.c.h.b16 %v963
      %v1328 = vunpack.c.l.b16 %v964
      %v1329 = vunpack.c.h.b16 %v964
      %v1330 = vunpack.c.l.b16 %v965
      %v1331 = vunpack.c.h.b16 %v965
      %v1332 = vunpack.c.l.b16 %v966
      %v1333 = vunpack.c.h.b16 %v966
      %v1334 = vunpack.c.l.b16 %v967
      %v1335 = vunpack.c.h.b16 %v967
      %v1336 = vunpack.c.l.b16 %v968
      %v1337 = vunpack.c.h.b16 %v968
      %v1338 = vunpack.c.l.b16 %v969
      %v1339 = vunpack.c.h.b16 %v969
      %v1340 = vunpack.c.l.b16 %v970
      %v1341 = vunpack.c.h.b16 %v970
      %v1342 = vunpack.c.l.b16 %v971
      %v1343 = vunpack.c.h.b16 %v971
      %v1344 = vunpack.c.l.b16 %v972
      %v1345 = vunpack.c.h.b16 %v972
      %v1346 = vunpack.c.l.b16 %v973
      %v1347 = vunpack.c.h.b16 %v973
      %v1348 = vunpack.c.l.b16 %v974
      %v1349 = vunpack.c.h.b16 %v974
      %v1350 = vunpack.c.l.b16 %v975
      %v1351 = vunpack.c.h.b16 %v975
      %v1352 = vunpack.c.l.b16 %v976
      %v1353 = vunpack.c.h.b16 %v976
      %v1354 = vunpack.c.l.b16 %v977
      %v1355 = vunpack.c.h.b16 %v977
      %v1356 = vunpack.c.l.b16 %v978
      %v1357 = vunpack.c.h.b16 %v978
      %v1358 = vunpack.c.l.b16 %v979
      %v1359 = vunpack.c.h.b16 %v979
      %v1360 = vunpack.c.l.b16 %v980
      %v1361 = vunpack.c.h.b16 %v980
      %v1362 = vunpack.c.l.b16 %v981
      %v1363 = vunpack.c.h.b16 %v981
      %v1364 = vunpack.c.l.b16 %v982
      %v1365 = vunpack.c.h.b16 %v982
      %v1366 = vunpack.c.l.b16 %v983
      %v1367 = vunpack.c.h.b16 %v983
      %v1368 = vpack.c.b16 %v1120, %v1112
      %v1369 = vpack.c.b16 %v1121, %v1113
      %v1370 = vpack.c.b16 %v1122, %v1114
      %v1371 = vpack.c.b16 %v1123, %v1115
      %v1372 = vpack.c.b16 %v1124, %v1116
      %v1373 = vpack.c.b16 %v1125, %v1117
      %v1374 = vpack.c.b16 %v1126, %v1118
      %v1375 = vpack.c.b16 %v1127, %v1119
      %v1376 = vpack.c.b16 %v1136, %v1128
      %v1377 = vpack.c.b16 %v1137, %v1129
      %v1378 = vpack.c.b16 %v1138, %v1130
      %v1379 = vpack.c.b16 %v1139, %v1131
      %v1380 = vpack.c.b16 %v1140, %v1132
      %v1381 = vpack.c.b16 %v1141, %v1133
      %v1382 = vpack.c.b16 %v1142, %v1134
      %v1383 = vpack.c.b16 %v1143, %v1135
      %v1384 = vpack.c.b16 %v1152, %v1144
      %v1385 = vpack.c.b16 %v1153, %v1145
      %v1386 = vpack.c.b16 %v1154, %v1146
      %v1387 = vpack.c.b16 %v1155, %v1147
      %v1388 = vpack.c.b16 %v1156, %v1148
      %v1389 = vpack.c.b16 %v1157, %v1149
      %v1390 = vpack.c.b16 %v1158, %v1150
      %v1391 = vpack.c.b16 %v1159, %v1151
      %v1392 = vpack.c.b16 %v1168, %v1160
      %v1393 = vpack.c.b16 %v1169, %v1161
      %v1394 = vpack.c.b16 %v1170, %v1162
      %v1395 = vpack.c.b16 %v1171, %v1163
      %v1396 = vpack.c.b16 %v1172, %v1164
      %v1397 = vpack.c.b16 %v1173, %v1165
      %v1398 = vpack.c.b16 %v1174, %v1166
      %v1399 = vpack.c.b16 %v1175, %v1167
      %v1400 = vpack.c.b16 %v1184, %v1176
      %v1401 = vpack.c.b16 %v1185, %v1177
      %v1402 = vpack.c.b16 %v1186, %v1178
      %v1403 = vpack.c.b16 %v1187, %v1179
      %v1404 = vpack.c.b16 %v1188, %v1180
      %v1405 = vpack.c.b16 %v1189, %v1181
      %v1406 = vpack.c.b16 %v1190, %v1182
      %v1407 = vpack.c.b16 %v1191, %v1183
      %v1408 = vpack.c.b16 %v1200, %v1192
      %v1409 = vpack.c.b16 %v1201, %v1193
      %v1410 = vpack.c.b16 %v1202, %v1194
      %v1411 = vpack.c.b16 %v1203, %v1195
      %v1412 = vpack.c.b16 %v1204, %v1196
      %v1413 = vpack.c.b16 %v1205, %v1197
      %v1414 = vpack.c.b16 %v1206, %v1198
      %v1415 = vpack.c.b16 %v1207, %v1199
      %v1416 = vpack.c.b16 %v1216, %v1208
      %v1417 = vpack.c.b16 %v1217, %v1209
      %v1418 = vpack.c.b16 %v1218, %v1210
      %v1419 = vpack.c.b16 %v1219, %v1211
      %v1420 = vpack.c.b16 %v1220, %v1212
      %v1421 = vpack.c.b16 %v1221, %v1213
      %v1422 = vpack.c.b16 %v1222, %v1214
      %v1423 = vpack.c.b16 %v1223, %v1215
      %v1424 = vpack.c.b16 %v1232, %v1224
      %v1425 = vpack.c.b16 %v1233, %v1225
      %v1426 = vpack.c.b16 %v1234, %v1226
      %v1427 = vpack.c.b16 %v1235, %v1227
      %v1428 = vpack.c.b16 %v1236, %v1228
      %v1429 = vpack.c.b16 %v1237, %v1229
      %v1430 = vpack.c.b16 %v1238, %v1230
      %v1431 = vpack.c.b16 %v1239, %v1231
      %v1432 = vpack.c.b16 %v1248, %v1240
      %v1433 = vpack.c.b16 %v1249, %v1241
      %v1434 = vpack.c.b16 %v1250, %v1242
      %v1435 = vpack.c.b16 %v1251, %v1243
      %v1436 = vpack.c.b16 %v1252, %v1244
      %v1437 = vpack.c.b16 %v1253, %v1245
      %v1438 = vpack.c.b16 %v1254, %v1246
      %v1439 = vpack.c.b16 %v1255, %v1247
      %v1440 = vpack.c.b16 %v1264, %v1256
      %v1441 = vpack.c.b16 %v1265, %v1257
      %v1442 = vpack.c.b16 %v1266, %v1258
      %v1443 = vpack.c.b16 %v1267, %v1259
      %v1444 = vpack.c.b16 %v1268, %v1260
      %v1445 = vpack.c.b16 %v1269, %v1261
      %v1446 = vpack.c.b16 %v1270, %v1262
      %v1447 = vpack.c.b16 %v1271, %v1263
      %v1448 = vpack.c.b16 %v1280, %v1272
      %v1449 = vpack.c.b16 %v1281, %v1273
      %v1450 = vpack.c.b16 %v1282, %v1274
      %v1451 = vpack.c.b16 %v1283, %v1275
      %v1452 = vpack.c.b16 %v1284, %v1276
      %v1453 = vpack.c.b16 %v1285, %v1277
      %v1454 = vpack.c.b16 %v1286, %v1278
      %v1455 = vpack.c.b16 %v1287, %v1279
      %v1456 = vpack.c.b16 %v1296, %v1288
      %v1457 = vpack.c.b16 %v1297, %v1289
      %v1458 = vpack.c.b16 %v1298, %v1290
      %v1459 = vpack.c.b16 %v1299, %v1291
      %v1460 = vpack.c.b16 %v1300, %v1292
      %v1461 = vpack.c.b16 %v1301, %v1293
      %v1462 = vpack.c.b16 %v1302, %v1294
      %v1463 = vpack.c.b16 %v1303, %v1295
      %v1464 = vpack.c.b16 %v1312, %v1304
      %v1465 = vpack.c.b16 %v1313, %v1305
      %v1466 = vpack.c.b16 %v1314, %v1306
      %v1467 = vpack.c.b16 %v1315, %v1307
      %v1468 = vpack.c.b16 %v1316, %v1308
      %v1469 = vpack.c.b16 %v1317, %v1309
      %v1470 = vpack.c.b16 %v1318, %v1310
      %v1471 = vpack.c.b16 %v1319, %v1311
      %v1472 = vpack.c.b16 %v1328, %v1320
      %v1473 = vpack.c.b16 %v1329, %v1321
      %v1474 = vpack.c.b16 %v1330, %v1322
      %v1475 = vpack.c.b16 %v1331, %v1323
      %v1476 = vpack.c.b16 %v1332, %v1324
      %v1477 = vpack.c.b16 %v1333, %v1325
      %v1478 = vpack.c.b16 %v1334, %v1326
      %v1479 = vpack.c.b16 %v1335, %v1327
      %v1480 = vpack.c.b16 %v1344, %v1336
      %v1481 = vpack.c.b16 %v1345, %v1337
      %v1482 = vpack.c.b16 %v1346, %v1338
      %v1483 = vpack.c.b16 %v1347, %v1339
      %v1484 = vpack.c.b16 %v1348, %v1340
      %v1485 = vpack.c.b16 %v1349, %v1341
      %v1486 = vpack.c.b16 %v1350, %v1342
      %v1487 = vpack.c.b16 %v1351, %v1343
      %v1488 = vpack.c.b16 %v1360, %v1352
      %v1489 = vpack.c.b16 %v1361, %v1353
      %v1490 = vpack.c.b16 %v1362, %v1354
      %v1491 = vpack.c.b16 %v1363, %v1355
      %v1492 = vpack.c.b16 %v1364, %v1356
      %v1493 = vpack.c.b16 %v1365, %v1357
      %v1494 = vpack.c.b16 %v1366, %v1358
      %v1495 = vpack.c.b16 %v1367, %v1359
      %1624 = vmatprep.subr.bf16.mxu0 %v1369
      %1625 = vmatpush1.bf16.msra.mxu0 %v1368
      %1626 = vmatprep.subr.bf16.mxu0 %v1377
      %1627 = vmatpush1.bf16.msra.mxu0 %v1376
      %1628 = vmatprep.subr.bf16.mxu0 %v1385
      %1629 = vmatpush1.bf16.msra.mxu0 %v1384
      %1630 = vmatprep.subr.bf16.mxu0 %v1393
      %1631 = vmatpush1.bf16.msra.mxu0 %v1392
      %1632 = vmatprep.subr.bf16.mxu0 %v1401
      %1633 = vmatpush1.bf16.msra.mxu0 %v1400
      %1634 = vmatprep.subr.bf16.mxu0 %v1409
      %1635 = vmatpush1.bf16.msra.mxu0 %v1408
      %1636 = vmatprep.subr.bf16.mxu0 %v1417
      %1637 = vmatpush1.bf16.msra.mxu0 %v1416
      %1638 = vmatprep.subr.bf16.mxu0 %v1425
      %1639 = vmatpush1.bf16.msra.mxu0 %v1424
      %1640 = vmatprep.subr.bf16.mxu0 %v1433
      %1641 = vmatpush1.bf16.msra.mxu0 %v1432
      %1642 = vmatprep.subr.bf16.mxu0 %v1441
      %1643 = vmatpush1.bf16.msra.mxu0 %v1440
      %1644 = vmatprep.subr.bf16.mxu0 %v1449
      %1645 = vmatpush1.bf16.msra.mxu0 %v1448
      %1646 = vmatprep.subr.bf16.mxu0 %v1457
      %1647 = vmatpush1.bf16.msra.mxu0 %v1456
      %1648 = vmatprep.subr.bf16.mxu0 %v1465
      %1649 = vmatpush1.bf16.msra.mxu0 %v1464
      %1650 = vmatprep.subr.bf16.mxu0 %v1473
      %1651 = vmatpush1.bf16.msra.mxu0 %v1472
      %1652 = vmatprep.subr.bf16.mxu0 %v1481
      %1653 = vmatpush1.bf16.msra.mxu0 %v1480
      %1654 = vmatprep.subr.bf16.mxu0 %v1489
      %1655 = vmatpush1.bf16.msra.mxu0 %v1488
      %1656 = vmatprep.mubr.bf16.mxu0 %v855
      %1657 = vmatmul.mubr.bf16.gmra.mrb[0].mxu0 %v854
      %v1658 = vpop.f32.mrb[0].mxu0
      %v1659 = vadd.f32 0.0, %v1658
      %v1660 = vpop.f32.mrb[0].mxu0
      %v1661 = vadd.f32 0.0, %v1660
      %v1662 = vpop.f32.mrb[0].mxu0
      %v1663 = vpop.f32.mrb[0].mxu0
      %1664 = vdwg.mxu0
      %1665 = vmatprep.subr.bf16.mxu0 %v1371
      %1666 = vmatpush1.bf16.msra.mxu0 %v1370
      %1667 = vmatprep.subr.bf16.mxu0 %v1379
      %1668 = vmatpush1.bf16.msra.mxu0 %v1378
      %1669 = vmatprep.subr.bf16.mxu0 %v1387
      %1670 = vmatpush1.bf16.msra.mxu0 %v1386
      %1671 = vmatprep.subr.bf16.mxu0 %v1395
      %1672 = vmatpush1.bf16.msra.mxu0 %v1394
      %1673 = vmatprep.subr.bf16.mxu0 %v1403
      %1674 = vmatpush1.bf16.msra.mxu0 %v1402
      %1675 = vmatprep.subr.bf16.mxu0 %v1411
      %1676 = vmatpush1.bf16.msra.mxu0 %v1410
      %1677 = vmatprep.subr.bf16.mxu0 %v1419
      %1678 = vmatpush1.bf16.msra.mxu0 %v1418
      %1679 = vmatprep.subr.bf16.mxu0 %v1427
      %1680 = vmatpush1.bf16.msra.mxu0 %v1426
      %1681 = vmatprep.subr.bf16.mxu0 %v1435
      %1682 = vmatpush1.bf16.msra.mxu0 %v1434
      %1683 = vmatprep.subr.bf16.mxu0 %v1443
      %1684 = vmatpush1.bf16.msra.mxu0 %v1442
      %1685 = vmatprep.subr.bf16.mxu0 %v1451
      %1686 = vmatpush1.bf16.msra.mxu0 %v1450
      %1687 = vmatprep.subr.bf16.mxu0 %v1459
      %1688 = vmatpush1.bf16.msra.mxu0 %v1458
      %1689 = vmatprep.subr.bf16.mxu0 %v1467
      %1690 = vmatpush1.bf16.msra.mxu0 %v1466
      %1691 = vmatprep.subr.bf16.mxu0 %v1475
      %1692 = vmatpush1.bf16.msra.mxu0 %v1474
      %1693 = vmatprep.subr.bf16.mxu0 %v1483
      %1694 = vmatpush1.bf16.msra.mxu0 %v1482
      %1695 = vmatprep.subr.bf16.mxu0 %v1491
      %1696 = vmatpush1.bf16.msra.mxu0 %v1490
      %1697 = vmatprep.mubr.bf16.mxu0 %v855
      %1698 = vmatmul.mubr.bf16.gmra.mrb[0].mxu0 %v854
      %v1699 = vpop.f32.mrb[0].mxu0
      %v1700 = vadd.f32 0.0, %v1699
      %v1701 = vpop.f32.mrb[0].mxu0
      %v1702 = vadd.f32 0.0, %v1701
      %v1703 = vpop.f32.mrb[0].mxu0
      %v1704 = vpop.f32.mrb[0].mxu0
      %1705 = vdwg.mxu0
      %1706 = vmatprep.subr.bf16.mxu0 %v1373
      %1707 = vmatpush1.bf16.msra.mxu0 %v1372
      %1708 = vmatprep.subr.bf16.mxu0 %v1381
      %1709 = vmatpush1.bf16.msra.mxu0 %v1380
      %1710 = vmatprep.subr.bf16.mxu0 %v1389
      %1711 = vmatpush1.bf16.msra.mxu0 %v1388
      %1712 = vmatprep.subr.bf16.mxu0 %v1397
      %1713 = vmatpush1.bf16.msra.mxu0 %v1396
      %1714 = vmatprep.subr.bf16.mxu0 %v1405
      %1715 = vmatpush1.bf16.msra.mxu0 %v1404
      %1716 = vmatprep.subr.bf16.mxu0 %v1413
      %1717 = vmatpush1.bf16.msra.mxu0 %v1412
      %1718 = vmatprep.subr.bf16.mxu0 %v1421
      %1719 = vmatpush1.bf16.msra.mxu0 %v1420
      %1720 = vmatprep.subr.bf16.mxu0 %v1429
      %1721 = vmatpush1.bf16.msra.mxu0 %v1428
      %1722 = vmatprep.subr.bf16.mxu0 %v1437
      %1723 = vmatpush1.bf16.msra.mxu0 %v1436
      %1724 = vmatprep.subr.bf16.mxu0 %v1445
      %1725 = vmatpush1.bf16.msra.mxu0 %v1444
      %1726 = vmatprep.subr.bf16.mxu0 %v1453
      %1727 = vmatpush1.bf16.msra.mxu0 %v1452
      %1728 = vmatprep.subr.bf16.mxu0 %v1461
      %1729 = vmatpush1.bf16.msra.mxu0 %v1460
      %1730 = vmatprep.subr.bf16.mxu0 %v1469
      %1731 = vmatpush1.bf16.msra.mxu0 %v1468
      %1732 = vmatprep.subr.bf16.mxu0 %v1477
      %1733 = vmatpush1.bf16.msra.mxu0 %v1476
      %1734 = vmatprep.subr.bf16.mxu0 %v1485
      %1735 = vmatpush1.bf16.msra.mxu0 %v1484
      %1736 = vmatprep.subr.bf16.mxu0 %v1493
      %1737 = vmatpush1.bf16.msra.mxu0 %v1492
      %1738 = vmatprep.mubr.bf16.mxu0 %v855
      %1739 = vmatmul.mubr.bf16.gmra.mrb[0].mxu0 %v854
      %v1740 = vpop.f32.mrb[0].mxu0
      %v1741 = vadd.f32 0.0, %v1740
      %v1742 = vpop.f32.mrb[0].mxu0
      %v1743 = vadd.f32 0.0, %v1742
      %v1744 = vpop.f32.mrb[0].mxu0
      %v1745 = vpop.f32.mrb[0].mxu0
      %1746 = vdwg.mxu0
      %1747 = vmatprep.subr.bf16.mxu0 %v1375
      %1748 = vmatpush1.bf16.msra.mxu0 %v1374
      %1749 = vmatprep.subr.bf16.mxu0 %v1383
      %1750 = vmatpush1.bf16.msra.mxu0 %v1382
      %1751 = vmatprep.subr.bf16.mxu0 %v1391
      %1752 = vmatpush1.bf16.msra.mxu0 %v1390
      %1753 = vmatprep.subr.bf16.mxu0 %v1399
      %1754 = vmatpush1.bf16.msra.mxu0 %v1398
      %1755 = vmatprep.subr.bf16.mxu0 %v1407
      %1756 = vmatpush1.bf16.msra.mxu0 %v1406
      %1757 = vmatprep.subr.bf16.mxu0 %v1415
      %1758 = vmatpush1.bf16.msra.mxu0 %v1414
      %1759 = vmatprep.subr.bf16.mxu0 %v1423
      %1760 = vmatpush1.bf16.msra.mxu0 %v1422
      %1761 = vmatprep.subr.bf16.mxu0 %v1431
      %1762 = vmatpush1.bf16.msra.mxu0 %v1430
      %1763 = vmatprep.subr.bf16.mxu0 %v1439
      %1764 = vmatpush1.bf16.msra.mxu0 %v1438
      %1765 = vmatprep.subr.bf16.mxu0 %v1447
      %1766 = vmatpush1.bf16.msra.mxu0 %v1446
      %1767 = vmatprep.subr.bf16.mxu0 %v1455
      %1768 = vmatpush1.bf16.msra.mxu0 %v1454
      %1769 = vmatprep.subr.bf16.mxu0 %v1463
      %1770 = vmatpush1.bf16.msra.mxu0 %v1462
      %1771 = vmatprep.subr.bf16.mxu0 %v1471
      %1772 = vmatpush1.bf16.msra.mxu0 %v1470
      %1773 = vmatprep.subr.bf16.mxu0 %v1479
      %1774 = vmatpush1.bf16.msra.mxu0 %v1478
      %1775 = vmatprep.subr.bf16.mxu0 %v1487
      %1776 = vmatpush1.bf16.msra.mxu0 %v1486
      %1777 = vmatprep.subr.bf16.mxu0 %v1495
      %1778 = vmatpush1.bf16.msra.mxu0 %v1494
      %1779 = vmatprep.mubr.bf16.mxu0 %v855
      %1780 = vmatmul.mubr.bf16.gmra.mrb[0].mxu0 %v854
      %v1781 = vpop.f32.mrb[0].mxu0
      %v1782 = vadd.f32 0.0, %v1781
      %v1783 = vpop.f32.mrb[0].mxu0
      %v1784 = vadd.f32 0.0, %v1783
      %v1785 = vpop.f32.mrb[0].mxu0
      %v1786 = vpop.f32.mrb[0].mxu0
      %1787 = vdwg.mxu0
      %v1788 = vpack.c.bf16 %v750, %v750
      %v1789 = vpack.c.bf16 %v751, %v751
      %1790 = vmatprep.subr.bf16.mxu0 %v1369
      %1791 = vmatpush1.bf16.msra.mxu0 %v1368
      %1792 = vmatprep.subr.bf16.mxu0 %v1377
      %1793 = vmatpush1.bf16.msra.mxu0 %v1376
      %1794 = vmatprep.subr.bf16.mxu0 %v1385
      %1795 = vmatpush1.bf16.msra.mxu0 %v1384
      %1796 = vmatprep.subr.bf16.mxu0 %v1393
      %1797 = vmatpush1.bf16.msra.mxu0 %v1392
      %1798 = vmatprep.subr.bf16.mxu0 %v1401
      %1799 = vmatpush1.bf16.msra.mxu0 %v1400
      %1800 = vmatprep.subr.bf16.mxu0 %v1409
      %1801 = vmatpush1.bf16.msra.mxu0 %v1408
      %1802 = vmatprep.subr.bf16.mxu0 %v1417
      %1803 = vmatpush1.bf16.msra.mxu0 %v1416
      %1804 = vmatprep.subr.bf16.mxu0 %v1425
      %1805 = vmatpush1.bf16.msra.mxu0 %v1424
      %1806 = vmatprep.subr.bf16.mxu0 %v1433
      %1807 = vmatpush1.bf16.msra.mxu0 %v1432
      %1808 = vmatprep.subr.bf16.mxu0 %v1441
      %1809 = vmatpush1.bf16.msra.mxu0 %v1440
      %1810 = vmatprep.subr.bf16.mxu0 %v1449
      %1811 = vmatpush1.bf16.msra.mxu0 %v1448
      %1812 = vmatprep.subr.bf16.mxu0 %v1457
      %1813 = vmatpush1.bf16.msra.mxu0 %v1456
      %1814 = vmatprep.subr.bf16.mxu0 %v1465
      %1815 = vmatpush1.bf16.msra.mxu0 %v1464
      %1816 = vmatprep.subr.bf16.mxu0 %v1473
      %1817 = vmatpush1.bf16.msra.mxu0 %v1472
      %1818 = vmatprep.subr.bf16.mxu0 %v1481
      %1819 = vmatpush1.bf16.msra.mxu0 %v1480
      %1820 = vmatprep.subr.bf16.mxu0 %v1489
      %1821 = vmatpush1.bf16.msra.mxu0 %v1488
      %1822 = vmatprep.mubr.bf16.mxu0 %v1789
      %1823 = vmatmul.mubr.bf16.gmra.mrb[0].mxu0 %v1788
      %v1824 = vpop.f32.mrb[0].mxu0
      %v1825 = vadd.f32 0.0, %v1824
      %v1826 = vpop.f32.mrb[0].mxu0
      %v1827 = vadd.f32 0.0, %v1826
      %v1828 = vpop.f32.mrb[0].mxu0
      %v1829 = vpop.f32.mrb[0].mxu0
      %1830 = vdwg.mxu0
      %1831 = vmatprep.subr.bf16.mxu0 %v1371
      %1832 = vmatpush1.bf16.msra.mxu0 %v1370
      %1833 = vmatprep.subr.bf16.mxu0 %v1379
      %1834 = vmatpush1.bf16.msra.mxu0 %v1378
      %1835 = vmatprep.subr.bf16.mxu0 %v1387
      %1836 = vmatpush1.bf16.msra.mxu0 %v1386
      %1837 = vmatprep.subr.bf16.mxu0 %v1395
      %1838 = vmatpush1.bf16.msra.mxu0 %v1394
      %1839 = vmatprep.subr.bf16.mxu0 %v1403
      %1840 = vmatpush1.bf16.msra.mxu0 %v1402
      %1841 = vmatprep.subr.bf16.mxu0 %v1411
      %1842 = vmatpush1.bf16.msra.mxu0 %v1410
      %1843 = vmatprep.subr.bf16.mxu0 %v1419
      %1844 = vmatpush1.bf16.msra.mxu0 %v1418
      %1845 = vmatprep.subr.bf16.mxu0 %v1427
      %1846 = vmatpush1.bf16.msra.mxu0 %v1426
      %1847 = vmatprep.subr.bf16.mxu0 %v1435
      %1848 = vmatpush1.bf16.msra.mxu0 %v1434
      %1849 = vmatprep.subr.bf16.mxu0 %v1443
      %1850 = vmatpush1.bf16.msra.mxu0 %v1442
      %1851 = vmatprep.subr.bf16.mxu0 %v1451
      %1852 = vmatpush1.bf16.msra.mxu0 %v1450
      %1853 = vmatprep.subr.bf16.mxu0 %v1459
      %1854 = vmatpush1.bf16.msra.mxu0 %v1458
      %1855 = vmatprep.subr.bf16.mxu0 %v1467
      %1856 = vmatpush1.bf16.msra.mxu0 %v1466
      %1857 = vmatprep.subr.bf16.mxu0 %v1475
      %1858 = vmatpush1.bf16.msra.mxu0 %v1474
      %1859 = vmatprep.subr.bf16.mxu0 %v1483
      %1860 = vmatpush1.bf16.msra.mxu0 %v1482
      %1861 = vmatprep.subr.bf16.mxu0 %v1491
      %1862 = vmatpush1.bf16.msra.mxu0 %v1490
      %1863 = vmatprep.mubr.bf16.mxu0 %v1789
      %1864 = vmatmul.mubr.bf16.gmra.mrb[0].mxu0 %v1788
      %v1865 = vpop.f32.mrb[0].mxu0
      %v1866 = vadd.f32 0.0, %v1865
      %v1867 = vpop.f32.mrb[0].mxu0
      %v1868 = vadd.f32 0.0, %v1867
      %v1869 = vpop.f32.mrb[0].mxu0
      %v1870 = vpop.f32.mrb[0].mxu0
      %1871 = vdwg.mxu0
      %1872 = vmatprep.subr.bf16.mxu0 %v1373
      %1873 = vmatpush1.bf16.msra.mxu0 %v1372
      %1874 = vmatprep.subr.bf16.mxu0 %v1381
      %1875 = vmatpush1.bf16.msra.mxu0 %v1380
      %1876 = vmatprep.subr.bf16.mxu0 %v1389
      %1877 = vmatpush1.bf16.msra.mxu0 %v1388
      %1878 = vmatprep.subr.bf16.mxu0 %v1397
      %1879 = vmatpush1.bf16.msra.mxu0 %v1396
      %1880 = vmatprep.subr.bf16.mxu0 %v1405
      %1881 = vmatpush1.bf16.msra.mxu0 %v1404
      %1882 = vmatprep.subr.bf16.mxu0 %v1413
      %1883 = vmatpush1.bf16.msra.mxu0 %v1412
      %1884 = vmatprep.subr.bf16.mxu0 %v1421
      %1885 = vmatpush1.bf16.msra.mxu0 %v1420
      %1886 = vmatprep.subr.bf16.mxu0 %v1429
      %1887 = vmatpush1.bf16.msra.mxu0 %v1428
      %1888 = vmatprep.subr.bf16.mxu0 %v1437
      %1889 = vmatpush1.bf16.msra.mxu0 %v1436
      %1890 = vmatprep.subr.bf16.mxu0 %v1445
      %1891 = vmatpush1.bf16.msra.mxu0 %v1444
      %1892 = vmatprep.subr.bf16.mxu0 %v1453
      %1893 = vmatpush1.bf16.msra.mxu0 %v1452
      %1894 = vmatprep.subr.bf16.mxu0 %v1461
      %1895 = vmatpush1.bf16.msra.mxu0 %v1460
      %1896 = vmatprep.subr.bf16.mxu0 %v1469
      %1897 = vmatpush1.bf16.msra.mxu0 %v1468
      %1898 = vmatprep.subr.bf16.mxu0 %v1477
      %1899 = vmatpush1.bf16.msra.mxu0 %v1476
      %1900 = vmatprep.subr.bf16.mxu0 %v1485
      %1901 = vmatpush1.bf16.msra.mxu0 %v1484
      %1902 = vmatprep.subr.bf16.mxu0 %v1493
      %1903 = vmatpush1.bf16.msra.mxu0 %v1492
      %1904 = vmatprep.mubr.bf16.mxu0 %v1789
      %1905 = vmatmul.mubr.bf16.gmra.mrb[0].mxu0 %v1788
      %v1906 = vpop.f32.mrb[0].mxu0
      %v1907 = vadd.f32 0.0, %v1906
      %v1908 = vpop.f32.mrb[0].mxu0
      %v1909 = vadd.f32 0.0, %v1908
      %v1910 = vpop.f32.mrb[0].mxu0
      %v1911 = vpop.f32.mrb[0].mxu0
      %1912 = vdwg.mxu0
      %1913 = vmatprep.subr.bf16.mxu0 %v1375
      %1914 = vmatpush1.bf16.msra.mxu0 %v1374
      %1915 = vmatprep.subr.bf16.mxu0 %v1383
      %1916 = vmatpush1.bf16.msra.mxu0 %v1382
      %1917 = vmatprep.subr.bf16.mxu0 %v1391
      %1918 = vmatpush1.bf16.msra.mxu0 %v1390
      %1919 = vmatprep.subr.bf16.mxu0 %v1399
      %1920 = vmatpush1.bf16.msra.mxu0 %v1398
      %1921 = vmatprep.subr.bf16.mxu0 %v1407
      %1922 = vmatpush1.bf16.msra.mxu0 %v1406
      %1923 = vmatprep.subr.bf16.mxu0 %v1415
      %1924 = vmatpush1.bf16.msra.mxu0 %v1414
      %1925 = vmatprep.subr.bf16.mxu0 %v1423
      %1926 = vmatpush1.bf16.msra.mxu0 %v1422
      %1927 = vmatprep.subr.bf16.mxu0 %v1431
      %1928 = vmatpush1.bf16.msra.mxu0 %v1430
      %1929 = vmatprep.subr.bf16.mxu0 %v1439
      %1930 = vmatpush1.bf16.msra.mxu0 %v1438
      %1931 = vmatprep.subr.bf16.mxu0 %v1447
      %1932 = vmatpush1.bf16.msra.mxu0 %v1446
      %1933 = vmatprep.subr.bf16.mxu0 %v1455
      %1934 = vmatpush1.bf16.msra.mxu0 %v1454
      %1935 = vmatprep.subr.bf16.mxu0 %v1463
      %1936 = vmatpush1.bf16.msra.mxu0 %v1462
      %1937 = vmatprep.subr.bf16.mxu0 %v1471
      %1938 = vmatpush1.bf16.msra.mxu0 %v1470
      %1939 = vmatprep.subr.bf16.mxu0 %v1479
      %1940 = vmatpush1.bf16.msra.mxu0 %v1478
      %1941 = vmatprep.subr.bf16.mxu0 %v1487
      %1942 = vmatpush1.bf16.msra.mxu0 %v1486
      %1943 = vmatprep.subr.bf16.mxu0 %v1495
      %1944 = vmatpush1.bf16.msra.mxu0 %v1494
      %1945 = vmatprep.mubr.bf16.mxu0 %v1789
      %1946 = vmatmul.mubr.bf16.gmra.mrb[0].mxu0 %v1788
      %v1947 = vpop.f32.mrb[0].mxu0
      %v1948 = vadd.f32 0.0, %v1947
      %v1949 = vpop.f32.mrb[0].mxu0
      %v1950 = vadd.f32 0.0, %v1949
      %v1951 = vpop.f32.mrb[0].mxu0
      %v1952 = vpop.f32.mrb[0].mxu0
      %1953 = vdwg.mxu0
      %1954 = vrot.lane.b32.xlu0 %v848, 17
      %v1955 = vpop.permute.xlu0 %1954
      %1956 = vrot.lane.b32.xlu0 %v850, 17
      %v1957 = vpop.permute.xlu0 %1956
      %v1958 = vlaneseq
      %v1959 = vand.u32 %v1958, 127
      %vm1960 = vcmp.lt.s32.totalorder %v1959, 17
      %v1961 = vsel %vm1960, %v1955, %v1957
      %v1962 = vsel %vm1960, %v1957, %v1955
      %v1963 = vld [vmem:[%s5] ss:$8 sm:$0x3]
      %v1965 = vlaneseq
      %v1966 = vshrl.u32 %v1965, 7
      %v1967 = vsub.s32 0, %v1966
      %v1968 = vrot.slane %v1963, %v1967
      %v1969 = vlaneseq
      %v1970 = vshrl.u32 %v1969, 7
      %v1971 = vsub.s32 1, %v1970
      %v1972 = vrot.slane %v1963, %v1971
      %v1975 = vmul.f32 %v1962, %v1968
      %v1976 = vmul.f32 %v1961, %v1972
      %1977 = vrot.lane.b32.xlu0 %v848, 16
      %v1978 = vpop.permute.xlu0 %1977
      %1979 = vrot.lane.b32.xlu0 %v850, 16
      %v1980 = vpop.permute.xlu0 %1979
      %vm1981 = vcmp.lt.s32.totalorder %v1959, 16
      %v1982 = vsel %vm1981, %v1978, %v1980
      %v1983 = vsel %vm1981, %v1980, %v1978
      %s1984 = scalar_lea.vmem %s5, 1
      %v1985 = vld [vmem:[%s1984] ss:$8 sm:$0x3]
      %v1987 = vlaneseq
      %v1988 = vshrl.u32 %v1987, 7
      %v1989 = vsub.s32 0, %v1988
      %v1990 = vrot.slane %v1985, %v1989
      %v1991 = vlaneseq
      %v1992 = vshrl.u32 %v1991, 7
      %v1993 = vsub.s32 1, %v1992
      %v1994 = vrot.slane %v1985, %v1993
      %v1997 = vmul.f32 %v1983, %v1990
      %v1998 = vmul.f32 %v1982, %v1994
      %1999 = vrot.lane.b32.xlu0 %v848, 15
      %v2000 = vpop.permute.xlu0 %1999
      %2001 = vrot.lane.b32.xlu0 %v850, 15
      %v2002 = vpop.permute.xlu0 %2001
      %vm2003 = vcmp.lt.s32.totalorder %v1959, 15
      %v2004 = vsel %vm2003, %v2000, %v2002
      %v2005 = vsel %vm2003, %v2002, %v2000
      %s2006 = scalar_lea.vmem %s5, 2
      %v2007 = vld [vmem:[%s2006] ss:$8 sm:$0x3]
      %v2009 = vlaneseq
      %v2010 = vshrl.u32 %v2009, 7
      %v2011 = vsub.s32 0, %v2010
      %v2012 = vrot.slane %v2007, %v2011
      %v2013 = vlaneseq
      %v2014 = vshrl.u32 %v2013, 7
      %v2015 = vsub.s32 1, %v2014
      %v2016 = vrot.slane %v2007, %v2015
      %v2019 = vmul.f32 %v2005, %v2012
      %v2020 = vmul.f32 %v2004, %v2016
      %2021 = vrot.lane.b32.xlu0 %v848, 1
      %v2022 = vpop.permute.xlu0 %2021
      %2023 = vrot.lane.b32.xlu0 %v850, 1
      %v2024 = vpop.permute.xlu0 %2023
      %vm2025 = vcmp.lt.s32.totalorder %v1959, 1
      %v2026 = vsel %vm2025, %v2022, %v2024
      %v2027 = vsel %vm2025, %v2024, %v2022
      %s2028 = scalar_lea.vmem %s5, 3
      %v2029 = vld [vmem:[%s2028] ss:$8 sm:$0x3]
      %v2031 = vlaneseq
      %v2032 = vshrl.u32 %v2031, 7
      %v2033 = vsub.s32 0, %v2032
      %v2034 = vrot.slane %v2029, %v2033
      %v2035 = vlaneseq
      %v2036 = vshrl.u32 %v2035, 7
      %v2037 = vsub.s32 1, %v2036
      %v2038 = vrot.slane %v2029, %v2037
      %v2041 = vmul.f32 %v2027, %v2034
      %v2042 = vmul.f32 %v2026, %v2038
      %2043 = vrot.lane.b32.xlu0 %v848, 127
      %v2044 = vpop.permute.xlu0 %2043
      %2045 = vrot.lane.b32.xlu0 %v850, 127
      %v2046 = vpop.permute.xlu0 %2045
      %vm2047 = vcmp.lt.s32.totalorder %v1959, 127
      %v2048 = vsel %vm2047, %v2044, %v2046
      %v2049 = vsel %vm2047, %v2046, %v2044
      %s2050 = scalar_lea.vmem %s5, 5
      %v2051 = vld [vmem:[%s2050] ss:$8 sm:$0x3]
      %v2053 = vlaneseq
      %v2054 = vshrl.u32 %v2053, 7
      %v2055 = vsub.s32 0, %v2054
      %v2056 = vrot.slane %v2051, %v2055
      %v2057 = vlaneseq
      %v2058 = vshrl.u32 %v2057, 7
      %v2059 = vsub.s32 1, %v2058
      %v2060 = vrot.slane %v2051, %v2059
      %v2063 = vmul.f32 %v2048, %v2056
      %v2064 = vmul.f32 %v2049, %v2060
      %2065 = vrot.lane.b32.xlu0 %v848, 113
      %v2066 = vpop.permute.xlu0 %2065
      %2067 = vrot.lane.b32.xlu0 %v850, 113
      %v2068 = vpop.permute.xlu0 %2067
      %vm2069 = vcmp.lt.s32.totalorder %v1959, 113
      %v2070 = vsel %vm2069, %v2066, %v2068
      %v2071 = vsel %vm2069, %v2068, %v2066
      %s2072 = scalar_lea.vmem %s5, 6
      %v2073 = vld [vmem:[%s2072] ss:$8 sm:$0x3]
      %v2075 = vlaneseq
      %v2076 = vshrl.u32 %v2075, 7
      %v2077 = vsub.s32 0, %v2076
      %v2078 = vrot.slane %v2073, %v2077
      %v2079 = vlaneseq
      %v2080 = vshrl.u32 %v2079, 7
      %v2081 = vsub.s32 1, %v2080
      %v2082 = vrot.slane %v2073, %v2081
      %v2085 = vmul.f32 %v2070, %v2078
      %v2086 = vmul.f32 %v2071, %v2082
      %2087 = vrot.lane.b32.xlu0 %v848, 112
      %v2088 = vpop.permute.xlu0 %2087
      %2089 = vrot.lane.b32.xlu0 %v850, 112
      %v2090 = vpop.permute.xlu0 %2089
      %vm2091 = vcmp.lt.s32.totalorder %v1959, 112
      %v2092 = vsel %vm2091, %v2088, %v2090
      %v2093 = vsel %vm2091, %v2090, %v2088
      %s2094 = scalar_lea.vmem %s5, 7
      %v2095 = vld [vmem:[%s2094] ss:$8 sm:$0x3]
      %v2097 = vlaneseq
      %v2098 = vshrl.u32 %v2097, 7
      %v2099 = vsub.s32 0, %v2098
      %v2100 = vrot.slane %v2095, %v2099
      %v2101 = vlaneseq
      %v2102 = vshrl.u32 %v2101, 7
      %v2103 = vsub.s32 1, %v2102
      %v2104 = vrot.slane %v2095, %v2103
      %v2107 = vmul.f32 %v2092, %v2100
      %v2108 = vmul.f32 %v2093, %v2104
      %2109 = vrot.lane.b32.xlu0 %v848, 111
      %v2110 = vpop.permute.xlu0 %2109
      %2111 = vrot.lane.b32.xlu0 %v850, 111
      %v2112 = vpop.permute.xlu0 %2111
      %vm2113 = vcmp.lt.s32.totalorder %v1959, 111
      %v2114 = vsel %vm2113, %v2110, %v2112
      %v2115 = vsel %vm2113, %v2112, %v2110
      %s2116 = scalar_lea.vmem %s5, 16
      %v2117 = vld [vmem:[%s2116] ss:$8 sm:$0x3]
      %v2119 = vlaneseq
      %v2120 = vshrl.u32 %v2119, 7
      %v2121 = vsub.s32 0, %v2120
      %v2122 = vrot.slane %v2117, %v2121
      %v2123 = vlaneseq
      %v2124 = vshrl.u32 %v2123, 7
      %v2125 = vsub.s32 1, %v2124
      %v2126 = vrot.slane %v2117, %v2125
      %v2129 = vmul.f32 %v2114, %v2122
      %v2130 = vmul.f32 %v2115, %v2126
      %v2131 = vpack.c.bf16 %v1997, %v1975
      %v2132 = vpack.c.bf16 %v1998, %v1976
      %v2133 = vpack.c.bf16 %v2041, %v2019
      %v2134 = vpack.c.bf16 %v2042, %v2020
      %v2135 = vpack.c.bf16 %v2063, %v848
      %v2136 = vpack.c.bf16 %v2064, %v850
      %v2137 = vpack.c.bf16 %v2107, %v2085
      %v2138 = vpack.c.bf16 %v2108, %v2086
      %v2139 = vpack.c.bf16 %v2129, %v2129
      %v2140 = vpack.c.bf16 %v2130, %v2130
      %v2141 = vld [vmem:[%s7] sm:$0xf]
      %v2142 = vld [vmem:[%s7 + $0x4] sm:$0xf]
      %v2143 = vld [vmem:[%s8] sm:$0xff]
      %v2144 = vld [vmem:[%s8 + $0x8] sm:$0xff]
      %2146 = vset.pattern.permute.xlu0 0
      %2147 = vperm.xlu0 %2146, %v2143
      %v2148 = vpop.permute.xlu0 %2147
      %2151 = vset.pattern.permute.xlu0 0
      %2152 = vperm.xlu0 %2151, %v2144
      %v2153 = vpop.permute.xlu0 %2152
      %v2157 = vunpack.c.l.b16 %v2141
      %v2158 = vunpack.c.l.b16 %v2142
      %v2159 = vpack.c.b16 %v2158, %v2157
      %vm2160 = vcmask 588800
      %v2162 = vsel %vm2160, %v2159, 0
      %vm2164 = vcmask 1043456
      %v2166 = vsel %vm2164, %v2139, 0
      %v2169 = vsel %vm2164, %v2140, 0
      %2171 = vmatprep.subr.bf16.mxu0 %v2132
      %2172 = vmatpush1.bf16.msra.mxu0 %v2131
      %2173 = vmatprep.subr.bf16.mxu0 %v2134
      %2174 = vmatpush1.bf16.msra.mxu0 %v2133
      %2175 = vmatprep.subr.bf16.mxu0 %v2136
      %2176 = vmatpush1.bf16.msra.mxu0 %v2135
      %2177 = vmatprep.subr.bf16.mxu0 %v2138
      %2178 = vmatpush1.bf16.msra.mxu0 %v2137
      %2179 = vmatprep.subr.bf16.mxu0 %v2169
      %2180 = vmatpush1.bf16.msra.mxu0 %v2166
      %2181 = vmatprep.subr.bf16.mxu0 0
      %2182 = vmatpush1.bf16.msra.mxu0 0
      %2183 = vmatprep.subr.bf16.mxu0 0
      %2184 = vmatpush1.bf16.msra.mxu0 0
      %2185 = vmatprep.subr.bf16.mxu0 0
      %2186 = vmatpush1.bf16.msra.mxu0 0
      %2187 = vmatprep.subr.bf16.mxu0 0
      %2188 = vmatpush1.bf16.msra.mxu0 0
      %2189 = vmatprep.subr.bf16.mxu0 0
      %2190 = vmatpush1.bf16.msra.mxu0 0
      %2191 = vmatprep.subr.bf16.mxu0 0
      %2192 = vmatpush1.bf16.msra.mxu0 0
      %2193 = vmatprep.subr.bf16.mxu0 0
      %2194 = vmatpush1.bf16.msra.mxu0 0
      %2195 = vmatprep.subr.bf16.mxu0 0
      %2196 = vmatpush1.bf16.msra.mxu0 0
      %2197 = vmatprep.subr.bf16.mxu0 0
      %2198 = vmatpush1.bf16.msra.mxu0 0
      %2199 = vmatprep.subr.bf16.mxu0 0
      %2200 = vmatpush1.bf16.msra.mxu0 0
      %2201 = vmatprep.subr.bf16.mxu0 0
      %2202 = vmatpush1.bf16.msra.mxu0 0
      %2203 = vmatprep.mubr.bf16.mxu0 0
      %2204 = vmatmul.mubr.bf16.gmra.mrb[0].mxu0 %v2162
      %v2205 = vpop.f32.mrb[0].mxu0
      %v2206 = vadd.f32 %v2148, %v2205
      %v2207 = vpop.f32.mrb[0].mxu0
      %v2208 = vadd.f32 %v2148, %v2207
      %v2209 = vpop.f32.mrb[0].mxu0
      %v2210 = vadd.f32 %v2153, %v2209
      %v2211 = vpop.f32.mrb[0].mxu0
      %v2212 = vadd.f32 %v2153, %v2211
      %2213 = vdwg.mxu0
      %v2214 = vmax.f32 %v2206, 0.0
      %v2215 = vmax.f32 %v2208, 0.0
      %v2216 = vmax.f32 %v2210, 0.0
      %v2217 = vmax.f32 %v2212, 0.0
      %v2218 = vmul.f32 %v2214, %v750
      %v2219 = vmul.f32 %v2215, %v751
      %2220 = vrot.lane.b32.xlu0 %v1659, 33
      %v2221 = vpop.permute.xlu0 %2220
      %2222 = vrot.lane.b32.xlu0 %v1661, 33
      %v2223 = vpop.permute.xlu0 %2222
      %2224 = vrot.lane.b32.xlu0 %v1700, 33
      %v2225 = vpop.permute.xlu0 %2224
      %2226 = vrot.lane.b32.xlu0 %v1702, 33
      %v2227 = vpop.permute.xlu0 %2226
      %2228 = vrot.lane.b32.xlu0 %v1741, 33
      %v2229 = vpop.permute.xlu0 %2228
      %2230 = vrot.lane.b32.xlu0 %v1743, 33
      %v2231 = vpop.permute.xlu0 %2230
      %2232 = vrot.lane.b32.xlu0 %v1782, 33
      %v2233 = vpop.permute.xlu0 %2232
      %2234 = vrot.lane.b32.xlu0 %v1784, 33
      %v2235 = vpop.permute.xlu0 %2234
      %vm2236 = vcmp.lt.s32.totalorder %v1959, 33
      %v2237 = vsel %vm2236, %v2233, %v2235
      %v2238 = vsel %vm2236, %v2231, %v2233
      %v2239 = vsel %vm2236, %v2229, %v2231
      %v2240 = vsel %vm2236, %v2227, %v2229
      %v2241 = vsel %vm2236, %v2225, %v2227
      %v2242 = vsel %vm2236, %v2223, %v2225
      %v2243 = vsel %vm2236, %v2221, %v2223
      %v2244 = vsel %vm2236, %v2235, %v2221
      %v2245 = vld [vmem:[%s6] ss:$8 sm:$0xf]
      %v2246 = vld [vmem:[%s6] ss:$8 sm:$0xf0]
      %v2247 = vor.u32 %v2245, %v2246
      %v2249 = vlaneseq
      %v2250 = vshrl.u32 %v2249, 7
      %v2251 = vsub.s32 0, %v2250
      %v2252 = vrot.slane %v2247, %v2251
      %v2253 = vlaneseq
      %v2254 = vshrl.u32 %v2253, 7
      %v2255 = vsub.s32 1, %v2254
      %v2256 = vrot.slane %v2247, %v2255
      %v2257 = vlaneseq
      %v2258 = vshrl.u32 %v2257, 7
      %v2259 = vsub.s32 2, %v2258
      %v2260 = vrot.slane %v2247, %v2259
      %v2261 = vlaneseq
      %v2262 = vshrl.u32 %v2261, 7
      %v2263 = vsub.s32 3, %v2262
      %v2264 = vrot.slane %v2247, %v2263
      %v2265 = vlaneseq
      %v2266 = vshrl.u32 %v2265, 7
      %v2267 = vsub.s32 4, %v2266
      %v2268 = vrot.slane %v2247, %v2267
      %v2269 = vlaneseq
      %v2270 = vshrl.u32 %v2269, 7
      %v2271 = vsub.s32 5, %v2270
      %v2272 = vrot.slane %v2247, %v2271
      %v2273 = vlaneseq
      %v2274 = vshrl.u32 %v2273, 7
      %v2275 = vsub.s32 6, %v2274
      %v2276 = vrot.slane %v2247, %v2275
      %v2277 = vlaneseq
      %v2278 = vshrl.u32 %v2277, 7
      %v2279 = vsub.s32 7, %v2278
      %v2280 = vrot.slane %v2247, %v2279
      %v2289 = vmul.f32 %v2244, %v2252
      %v2290 = vmul.f32 %v2243, %v2256
      %v2291 = vmul.f32 %v2242, %v2260
      %v2292 = vmul.f32 %v2241, %v2264
      %v2293 = vmul.f32 %v2240, %v2268
      %v2294 = vmul.f32 %v2239, %v2272
      %v2295 = vmul.f32 %v2238, %v2276
      %v2296 = vmul.f32 %v2237, %v2280
      %2297 = vrot.lane.b32.xlu0 %v1659, 32
      %v2298 = vpop.permute.xlu0 %2297
      %2299 = vrot.lane.b32.xlu0 %v1661, 32
      %v2300 = vpop.permute.xlu0 %2299
      %2301 = vrot.lane.b32.xlu0 %v1700, 32
      %v2302 = vpop.permute.xlu0 %2301
      %2303 = vrot.lane.b32.xlu0 %v1702, 32
      %v2304 = vpop.permute.xlu0 %2303
      %2305 = vrot.lane.b32.xlu0 %v1741, 32
      %v2306 = vpop.permute.xlu0 %2305
      %2307 = vrot.lane.b32.xlu0 %v1743, 32
      %v2308 = vpop.permute.xlu0 %2307
      %2309 = vrot.lane.b32.xlu0 %v1782, 32
      %v2310 = vpop.permute.xlu0 %2309
      %2311 = vrot.lane.b32.xlu0 %v1784, 32
      %v2312 = vpop.permute.xlu0 %2311
      %vm2313 = vcmp.lt.s32.totalorder %v1959, 32
      %v2314 = vsel %vm2313, %v2310, %v2312
      %v2315 = vsel %vm2313, %v2308, %v2310
      %v2316 = vsel %vm2313, %v2306, %v2308
      %v2317 = vsel %vm2313, %v2304, %v2306
      %v2318 = vsel %vm2313, %v2302, %v2304
      %v2319 = vsel %vm2313, %v2300, %v2302
      %v2320 = vsel %vm2313, %v2298, %v2300
      %v2321 = vsel %vm2313, %v2312, %v2298
      %s2322 = scalar_lea.vmem %s6, 1
      %v2323 = vld [vmem:[%s2322] ss:$8 sm:$0xf]
      %v2324 = vld [vmem:[%s2322] ss:$8 sm:$0xf0]
      %v2325 = vor.u32 %v2323, %v2324
      %v2327 = vlaneseq
      %v2328 = vshrl.u32 %v2327, 7
      %v2329 = vsub.s32 0, %v2328
      %v2330 = vrot.slane %v2325, %v2329
      %v2331 = vlaneseq
      %v2332 = vshrl.u32 %v2331, 7
      %v2333 = vsub.s32 1, %v2332
      %v2334 = vrot.slane %v2325, %v2333
      %v2335 = vlaneseq
      %v2336 = vshrl.u32 %v2335, 7
      %v2337 = vsub.s32 2, %v2336
      %v2338 = vrot.slane %v2325, %v2337
      %v2339 = vlaneseq
      %v2340 = vshrl.u32 %v2339, 7
      %v2341 = vsub.s32 3, %v2340
      %v2342 = vrot.slane %v2325, %v2341
      %v2343 = vlaneseq
      %v2344 = vshrl.u32 %v2343, 7
      %v2345 = vsub.s32 4, %v2344
      %v2346 = vrot.slane %v2325, %v2345
      %v2347 = vlaneseq
      %v2348 = vshrl.u32 %v2347, 7
      %v2349 = vsub.s32 5, %v2348
      %v2350 = vrot.slane %v2325, %v2349
      %v2351 = vlaneseq
      %v2352 = vshrl.u32 %v2351, 7
      %v2353 = vsub.s32 6, %v2352
      %v2354 = vrot.slane %v2325, %v2353
      %v2355 = vlaneseq
      %v2356 = vshrl.u32 %v2355, 7
      %v2357 = vsub.s32 7, %v2356
      %v2358 = vrot.slane %v2325, %v2357
      %v2367 = vmul.f32 %v2321, %v2330
      %v2368 = vmul.f32 %v2320, %v2334
      %v2369 = vmul.f32 %v2319, %v2338
      %v2370 = vmul.f32 %v2318, %v2342
      %v2371 = vmul.f32 %v2317, %v2346
      %v2372 = vmul.f32 %v2316, %v2350
      %v2373 = vmul.f32 %v2315, %v2354
      %v2374 = vmul.f32 %v2314, %v2358
      %2375 = vrot.lane.b32.xlu0 %v1659, 31
      %v2376 = vpop.permute.xlu0 %2375
      %2377 = vrot.lane.b32.xlu0 %v1661, 31
      %v2378 = vpop.permute.xlu0 %2377
      %2379 = vrot.lane.b32.xlu0 %v1700, 31
      %v2380 = vpop.permute.xlu0 %2379
      %2381 = vrot.lane.b32.xlu0 %v1702, 31
      %v2382 = vpop.permute.xlu0 %2381
      %2383 = vrot.lane.b32.xlu0 %v1741, 31
      %v2384 = vpop.permute.xlu0 %2383
      %2385 = vrot.lane.b32.xlu0 %v1743, 31
      %v2386 = vpop.permute.xlu0 %2385
      %2387 = vrot.lane.b32.xlu0 %v1782, 31
      %v2388 = vpop.permute.xlu0 %2387
      %2389 = vrot.lane.b32.xlu0 %v1784, 31
      %v2390 = vpop.permute.xlu0 %2389
      %vm2391 = vcmp.lt.s32.totalorder %v1959, 31
      %v2392 = vsel %vm2391, %v2388, %v2390
      %v2393 = vsel %vm2391, %v2386, %v2388
      %v2394 = vsel %vm2391, %v2384, %v2386
      %v2395 = vsel %vm2391, %v2382, %v2384
      %v2396 = vsel %vm2391, %v2380, %v2382
      %v2397 = vsel %vm2391, %v2378, %v2380
      %v2398 = vsel %vm2391, %v2376, %v2378
      %v2399 = vsel %vm2391, %v2390, %v2376
      %s2400 = scalar_lea.vmem %s6, 2
      %v2401 = vld [vmem:[%s2400] ss:$8 sm:$0xf]
      %v2402 = vld [vmem:[%s2400] ss:$8 sm:$0xf0]
      %v2403 = vor.u32 %v2401, %v2402
      %v2405 = vlaneseq
      %v2406 = vshrl.u32 %v2405, 7
      %v2407 = vsub.s32 0, %v2406
      %v2408 = vrot.slane %v2403, %v2407
      %v2409 = vlaneseq
      %v2410 = vshrl.u32 %v2409, 7
      %v2411 = vsub.s32 1, %v2410
      %v2412 = vrot.slane %v2403, %v2411
      %v2413 = vlaneseq
      %v2414 = vshrl.u32 %v2413, 7
      %v2415 = vsub.s32 2, %v2414
      %v2416 = vrot.slane %v2403, %v2415
      %v2417 = vlaneseq
      %v2418 = vshrl.u32 %v2417, 7
      %v2419 = vsub.s32 3, %v2418
      %v2420 = vrot.slane %v2403, %v2419
      %v2421 = vlaneseq
      %v2422 = vshrl.u32 %v2421, 7
      %v2423 = vsub.s32 4, %v2422
      %v2424 = vrot.slane %v2403, %v2423
      %v2425 = vlaneseq
      %v2426 = vshrl.u32 %v2425, 7
      %v2427 = vsub.s32 5, %v2426
      %v2428 = vrot.slane %v2403, %v2427
      %v2429 = vlaneseq
      %v2430 = vshrl.u32 %v2429, 7
      %v2431 = vsub.s32 6, %v2430
      %v2432 = vrot.slane %v2403, %v2431
      %v2433 = vlaneseq
      %v2434 = vshrl.u32 %v2433, 7
      %v2435 = vsub.s32 7, %v2434
      %v2436 = vrot.slane %v2403, %v2435
      %v2445 = vmul.f32 %v2399, %v2408
      %v2446 = vmul.f32 %v2398, %v2412
      %v2447 = vmul.f32 %v2397, %v2416
      %v2448 = vmul.f32 %v2396, %v2420
      %v2449 = vmul.f32 %v2395, %v2424
      %v2450 = vmul.f32 %v2394, %v2428
      %v2451 = vmul.f32 %v2393, %v2432
      %v2452 = vmul.f32 %v2392, %v2436
      %2453 = vrot.lane.b32.xlu0 %v1659, 1
      %v2454 = vpop.permute.xlu0 %2453
      %2455 = vrot.lane.b32.xlu0 %v1661, 1
      %v2456 = vpop.permute.xlu0 %2455
      %2457 = vrot.lane.b32.xlu0 %v1700, 1
      %v2458 = vpop.permute.xlu0 %2457
      %2459 = vrot.lane.b32.xlu0 %v1702, 1
      %v2460 = vpop.permute.xlu0 %2459
      %2461 = vrot.lane.b32.xlu0 %v1741, 1
      %v2462 = vpop.permute.xlu0 %2461
      %2463 = vrot.lane.b32.xlu0 %v1743, 1
      %v2464 = vpop.permute.xlu0 %2463
      %2465 = vrot.lane.b32.xlu0 %v1782, 1
      %v2466 = vpop.permute.xlu0 %2465
      %2467 = vrot.lane.b32.xlu0 %v1784, 1
      %v2468 = vpop.permute.xlu0 %2467
      %v2469 = vsel %vm2025, %v2466, %v2468
      %v2470 = vsel %vm2025, %v2464, %v2466
      %v2471 = vsel %vm2025, %v2462, %v2464
      %v2472 = vsel %vm2025, %v2460, %v2462
      %v2473 = vsel %vm2025, %v2458, %v2460
      %v2474 = vsel %vm2025, %v2456, %v2458
      %v2475 = vsel %vm2025, %v2454, %v2456
      %v2476 = vsel %vm2025, %v2468, %v2454
      %s2477 = scalar_lea.vmem %s6, 3
      %v2478 = vld [vmem:[%s2477] ss:$8 sm:$0xf]
      %v2479 = vld [vmem:[%s2477] ss:$8 sm:$0xf0]
      %v2480 = vor.u32 %v2478, %v2479
      %v2482 = vlaneseq
      %v2483 = vshrl.u32 %v2482, 7
      %v2484 = vsub.s32 0, %v2483
      %v2485 = vrot.slane %v2480, %v2484
      %v2486 = vlaneseq
      %v2487 = vshrl.u32 %v2486, 7
      %v2488 = vsub.s32 1, %v2487
      %v2489 = vrot.slane %v2480, %v2488
      %v2490 = vlaneseq
      %v2491 = vshrl.u32 %v2490, 7
      %v2492 = vsub.s32 2, %v2491
      %v2493 = vrot.slane %v2480, %v2492
      %v2494 = vlaneseq
      %v2495 = vshrl.u32 %v2494, 7
      %v2496 = vsub.s32 3, %v2495
      %v2497 = vrot.slane %v2480, %v2496
      %v2498 = vlaneseq
      %v2499 = vshrl.u32 %v2498, 7
      %v2500 = vsub.s32 4, %v2499
      %v2501 = vrot.slane %v2480, %v2500
      %v2502 = vlaneseq
      %v2503 = vshrl.u32 %v2502, 7
      %v2504 = vsub.s32 5, %v2503
      %v2505 = vrot.slane %v2480, %v2504
      %v2506 = vlaneseq
      %v2507 = vshrl.u32 %v2506, 7
      %v2508 = vsub.s32 6, %v2507
      %v2509 = vrot.slane %v2480, %v2508
      %v2510 = vlaneseq
      %v2511 = vshrl.u32 %v2510, 7
      %v2512 = vsub.s32 7, %v2511
      %v2513 = vrot.slane %v2480, %v2512
      %v2522 = vmul.f32 %v2476, %v2485
      %v2523 = vmul.f32 %v2475, %v2489
      %v2524 = vmul.f32 %v2474, %v2493
      %v2525 = vmul.f32 %v2473, %v2497
      %v2526 = vmul.f32 %v2472, %v2501
      %v2527 = vmul.f32 %v2471, %v2505
      %v2528 = vmul.f32 %v2470, %v2509
      %v2529 = vmul.f32 %v2469, %v2513
      %2530 = vrot.lane.b32.xlu0 %v1659, 127
      %v2531 = vpop.permute.xlu0 %2530
      %2532 = vrot.lane.b32.xlu0 %v1661, 127
      %v2533 = vpop.permute.xlu0 %2532
      %2534 = vrot.lane.b32.xlu0 %v1700, 127
      %v2535 = vpop.permute.xlu0 %2534
      %2536 = vrot.lane.b32.xlu0 %v1702, 127
      %v2537 = vpop.permute.xlu0 %2536
      %2538 = vrot.lane.b32.xlu0 %v1741, 127
      %v2539 = vpop.permute.xlu0 %2538
      %2540 = vrot.lane.b32.xlu0 %v1743, 127
      %v2541 = vpop.permute.xlu0 %2540
      %2542 = vrot.lane.b32.xlu0 %v1782, 127
      %v2543 = vpop.permute.xlu0 %2542
      %2544 = vrot.lane.b32.xlu0 %v1784, 127
      %v2545 = vpop.permute.xlu0 %2544
      %v2546 = vsel %vm2047, %v2543, %v2545
      %v2547 = vsel %vm2047, %v2541, %v2543
      %v2548 = vsel %vm2047, %v2539, %v2541
      %v2549 = vsel %vm2047, %v2537, %v2539
      %v2550 = vsel %vm2047, %v2535, %v2537
      %v2551 = vsel %vm2047, %v2533, %v2535
      %v2552 = vsel %vm2047, %v2531, %v2533
      %v2553 = vsel %vm2047, %v2545, %v2531
      %s2554 = scalar_lea.vmem %s6, 5
      %v2555 = vld [vmem:[%s2554] ss:$8 sm:$0xf]
      %v2556 = vld [vmem:[%s2554] ss:$8 sm:$0xf0]
      %v2557 = vor.u32 %v2555, %v2556
      %v2559 = vlaneseq
      %v2560 = vshrl.u32 %v2559, 7
      %v2561 = vsub.s32 0, %v2560
      %v2562 = vrot.slane %v2557, %v2561
      %v2563 = vlaneseq
      %v2564 = vshrl.u32 %v2563, 7
      %v2565 = vsub.s32 1, %v2564
      %v2566 = vrot.slane %v2557, %v2565
      %v2567 = vlaneseq
      %v2568 = vshrl.u32 %v2567, 7
      %v2569 = vsub.s32 2, %v2568
      %v2570 = vrot.slane %v2557, %v2569
      %v2571 = vlaneseq
      %v2572 = vshrl.u32 %v2571, 7
      %v2573 = vsub.s32 3, %v2572
      %v2574 = vrot.slane %v2557, %v2573
      %v2575 = vlaneseq
      %v2576 = vshrl.u32 %v2575, 7
      %v2577 = vsub.s32 4, %v2576
      %v2578 = vrot.slane %v2557, %v2577
      %v2579 = vlaneseq
      %v2580 = vshrl.u32 %v2579, 7
      %v2581 = vsub.s32 5, %v2580
      %v2582 = vrot.slane %v2557, %v2581
      %v2583 = vlaneseq
      %v2584 = vshrl.u32 %v2583, 7
      %v2585 = vsub.s32 6, %v2584
      %v2586 = vrot.slane %v2557, %v2585
      %v2587 = vlaneseq
      %v2588 = vshrl.u32 %v2587, 7
      %v2589 = vsub.s32 7, %v2588
      %v2590 = vrot.slane %v2557, %v2589
      %v2599 = vmul.f32 %v2552, %v2562
      %v2600 = vmul.f32 %v2551, %v2566
      %v2601 = vmul.f32 %v2550, %v2570
      %v2602 = vmul.f32 %v2549, %v2574
      %v2603 = vmul.f32 %v2548, %v2578
      %v2604 = vmul.f32 %v2547, %v2582
      %v2605 = vmul.f32 %v2546, %v2586
      %v2606 = vmul.f32 %v2553, %v2590
      %2607 = vrot.lane.b32.xlu0 %v1659, 97
      %v2608 = vpop.permute.xlu0 %2607
      %2609 = vrot.lane.b32.xlu0 %v1661, 97
      %v2610 = vpop.permute.xlu0 %2609
      %2611 = vrot.lane.b32.xlu0 %v1700, 97
      %v2612 = vpop.permute.xlu0 %2611
      %2613 = vrot.lane.b32.xlu0 %v1702, 97
      %v2614 = vpop.permute.xlu0 %2613
      %2615 = vrot.lane.b32.xlu0 %v1741, 97
      %v2616 = vpop.permute.xlu0 %2615
      %2617 = vrot.lane.b32.xlu0 %v1743, 97
      %v2618 = vpop.permute.xlu0 %2617
      %2619 = vrot.lane.b32.xlu0 %v1782, 97
      %v2620 = vpop.permute.xlu0 %2619
      %2621 = vrot.lane.b32.xlu0 %v1784, 97
      %v2622 = vpop.permute.xlu0 %2621
      %vm2623 = vcmp.lt.s32.totalorder %v1959, 97
      %v2624 = vsel %vm2623, %v2620, %v2622
      %v2625 = vsel %vm2623, %v2618, %v2620
      %v2626 = vsel %vm2623, %v2616, %v2618
      %v2627 = vsel %vm2623, %v2614, %v2616
      %v2628 = vsel %vm2623, %v2612, %v2614
      %v2629 = vsel %vm2623, %v2610, %v2612
      %v2630 = vsel %vm2623, %v2608, %v2610
      %v2631 = vsel %vm2623, %v2622, %v2608
      %s2632 = scalar_lea.vmem %s6, 6
      %v2633 = vld [vmem:[%s2632] ss:$8 sm:$0xf]
      %v2634 = vld [vmem:[%s2632] ss:$8 sm:$0xf0]
      %v2635 = vor.u32 %v2633, %v2634
      %v2637 = vlaneseq
      %v2638 = vshrl.u32 %v2637, 7
      %v2639 = vsub.s32 0, %v2638
      %v2640 = vrot.slane %v2635, %v2639
      %v2641 = vlaneseq
      %v2642 = vshrl.u32 %v2641, 7
      %v2643 = vsub.s32 1, %v2642
      %v2644 = vrot.slane %v2635, %v2643
      %v2645 = vlaneseq
      %v2646 = vshrl.u32 %v2645, 7
      %v2647 = vsub.s32 2, %v2646
      %v2648 = vrot.slane %v2635, %v2647
      %v2649 = vlaneseq
      %v2650 = vshrl.u32 %v2649, 7
      %v2651 = vsub.s32 3, %v2650
      %v2652 = vrot.slane %v2635, %v2651
      %v2653 = vlaneseq
      %v2654 = vshrl.u32 %v2653, 7
      %v2655 = vsub.s32 4, %v2654
      %v2656 = vrot.slane %v2635, %v2655
      %v2657 = vlaneseq
      %v2658 = vshrl.u32 %v2657, 7
      %v2659 = vsub.s32 5, %v2658
      %v2660 = vrot.slane %v2635, %v2659
      %v2661 = vlaneseq
      %v2662 = vshrl.u32 %v2661, 7
      %v2663 = vsub.s32 6, %v2662
      %v2664 = vrot.slane %v2635, %v2663
      %v2665 = vlaneseq
      %v2666 = vshrl.u32 %v2665, 7
      %v2667 = vsub.s32 7, %v2666
      %v2668 = vrot.slane %v2635, %v2667
      %v2677 = vmul.f32 %v2630, %v2640
      %v2678 = vmul.f32 %v2629, %v2644
      %v2679 = vmul.f32 %v2628, %v2648
      %v2680 = vmul.f32 %v2627, %v2652
      %v2681 = vmul.f32 %v2626, %v2656
      %v2682 = vmul.f32 %v2625, %v2660
      %v2683 = vmul.f32 %v2624, %v2664
      %v2684 = vmul.f32 %v2631, %v2668
      %2685 = vrot.lane.b32.xlu0 %v1659, 96
      %v2686 = vpop.permute.xlu0 %2685
      %2687 = vrot.lane.b32.xlu0 %v1661, 96
      %v2688 = vpop.permute.xlu0 %2687
      %2689 = vrot.lane.b32.xlu0 %v1700, 96
      %v2690 = vpop.permute.xlu0 %2689
      %2691 = vrot.lane.b32.xlu0 %v1702, 96
      %v2692 = vpop.permute.xlu0 %2691
      %2693 = vrot.lane.b32.xlu0 %v1741, 96
      %v2694 = vpop.permute.xlu0 %2693
      %2695 = vrot.lane.b32.xlu0 %v1743, 96
      %v2696 = vpop.permute.xlu0 %2695
      %2697 = vrot.lane.b32.xlu0 %v1782, 96
      %v2698 = vpop.permute.xlu0 %2697
      %2699 = vrot.lane.b32.xlu0 %v1784, 96
      %v2700 = vpop.permute.xlu0 %2699
      %vm2701 = vcmp.lt.s32.totalorder %v1959, 96
      %v2702 = vsel %vm2701, %v2698, %v2700
      %v2703 = vsel %vm2701, %v2696, %v2698
      %v2704 = vsel %vm2701, %v2694, %v2696
      %v2705 = vsel %vm2701, %v2692, %v2694
      %v2706 = vsel %vm2701, %v2690, %v2692
      %v2707 = vsel %vm2701, %v2688, %v2690
      %v2708 = vsel %vm2701, %v2686, %v2688
      %v2709 = vsel %vm2701, %v2700, %v2686
      %s2710 = scalar_lea.vmem %s6, 7
      %v2711 = vld [vmem:[%s2710] ss:$8 sm:$0xf]
      %v2712 = vld [vmem:[%s2710] ss:$8 sm:$0xf0]
      %v2713 = vor.u32 %v2711, %v2712
      %v2715 = vlaneseq
      %v2716 = vshrl.u32 %v2715, 7
      %v2717 = vsub.s32 0, %v2716
      %v2718 = vrot.slane %v2713, %v2717
      %v2719 = vlaneseq
      %v2720 = vshrl.u32 %v2719, 7
      %v2721 = vsub.s32 1, %v2720
      %v2722 = vrot.slane %v2713, %v2721
      %v2723 = vlaneseq
      %v2724 = vshrl.u32 %v2723, 7
      %v2725 = vsub.s32 2, %v2724
      %v2726 = vrot.slane %v2713, %v2725
      %v2727 = vlaneseq
      %v2728 = vshrl.u32 %v2727, 7
      %v2729 = vsub.s32 3, %v2728
      %v2730 = vrot.slane %v2713, %v2729
      %v2731 = vlaneseq
      %v2732 = vshrl.u32 %v2731, 7
      %v2733 = vsub.s32 4, %v2732
      %v2734 = vrot.slane %v2713, %v2733
      %v2735 = vlaneseq
      %v2736 = vshrl.u32 %v2735, 7
      %v2737 = vsub.s32 5, %v2736
      %v2738 = vrot.slane %v2713, %v2737
      %v2739 = vlaneseq
      %v2740 = vshrl.u32 %v2739, 7
      %v2741 = vsub.s32 6, %v2740
      %v2742 = vrot.slane %v2713, %v2741
      %v2743 = vlaneseq
      %v2744 = vshrl.u32 %v2743, 7
      %v2745 = vsub.s32 7, %v2744
      %v2746 = vrot.slane %v2713, %v2745
      %v2755 = vmul.f32 %v2708, %v2718
      %v2756 = vmul.f32 %v2707, %v2722
      %v2757 = vmul.f32 %v2706, %v2726
      %v2758 = vmul.f32 %v2705, %v2730
      %v2759 = vmul.f32 %v2704, %v2734
      %v2760 = vmul.f32 %v2703, %v2738
      %v2761 = vmul.f32 %v2702, %v2742
      %v2762 = vmul.f32 %v2709, %v2746
      %2763 = vrot.lane.b32.xlu0 %v1659, 95
      %v2764 = vpop.permute.xlu0 %2763
      %2765 = vrot.lane.b32.xlu0 %v1661, 95
      %v2766 = vpop.permute.xlu0 %2765
      %2767 = vrot.lane.b32.xlu0 %v1700, 95
      %v2768 = vpop.permute.xlu0 %2767
      %2769 = vrot.lane.b32.xlu0 %v1702, 95
      %v2770 = vpop.permute.xlu0 %2769
      %2771 = vrot.lane.b32.xlu0 %v1741, 95
      %v2772 = vpop.permute.xlu0 %2771
      %2773 = vrot.lane.b32.xlu0 %v1743, 95
      %v2774 = vpop.permute.xlu0 %2773
      %2775 = vrot.lane.b32.xlu0 %v1782, 95
      %v2776 = vpop.permute.xlu0 %2775
      %2777 = vrot.lane.b32.xlu0 %v1784, 95
      %v2778 = vpop.permute.xlu0 %2777
      %vm2779 = vcmp.lt.s32.totalorder %v1959, 95
      %v2780 = vsel %vm2779, %v2776, %v2778
      %v2781 = vsel %vm2779, %v2774, %v2776
      %v2782 = vsel %vm2779, %v2772, %v2774
      %v2783 = vsel %vm2779, %v2770, %v2772
      %v2784 = vsel %vm2779, %v2768, %v2770
      %v2785 = vsel %vm2779, %v2766, %v2768
      %v2786 = vsel %vm2779, %v2764, %v2766
      %v2787 = vsel %vm2779, %v2778, %v2764
      %s2788 = scalar_lea.vmem %s6, 64
      %v2789 = vld [vmem:[%s2788] ss:$8 sm:$0xf]
      %v2790 = vld [vmem:[%s2788] ss:$8 sm:$0xf0]
      %v2791 = vor.u32 %v2789, %v2790
      %v2793 = vlaneseq
      %v2794 = vshrl.u32 %v2793, 7
      %v2795 = vsub.s32 0, %v2794
      %v2796 = vrot.slane %v2791, %v2795
      %v2797 = vlaneseq
      %v2798 = vshrl.u32 %v2797, 7
      %v2799 = vsub.s32 1, %v2798
      %v2800 = vrot.slane %v2791, %v2799
      %v2801 = vlaneseq
      %v2802 = vshrl.u32 %v2801, 7
      %v2803 = vsub.s32 2, %v2802
      %v2804 = vrot.slane %v2791, %v2803
      %v2805 = vlaneseq
      %v2806 = vshrl.u32 %v2805, 7
      %v2807 = vsub.s32 3, %v2806
      %v2808 = vrot.slane %v2791, %v2807
      %v2809 = vlaneseq
      %v2810 = vshrl.u32 %v2809, 7
      %v2811 = vsub.s32 4, %v2810
      %v2812 = vrot.slane %v2791, %v2811
      %v2813 = vlaneseq
      %v2814 = vshrl.u32 %v2813, 7
      %v2815 = vsub.s32 5, %v2814
      %v2816 = vrot.slane %v2791, %v2815
      %v2817 = vlaneseq
      %v2818 = vshrl.u32 %v2817, 7
      %v2819 = vsub.s32 6, %v2818
      %v2820 = vrot.slane %v2791, %v2819
      %v2821 = vlaneseq
      %v2822 = vshrl.u32 %v2821, 7
      %v2823 = vsub.s32 7, %v2822
      %v2824 = vrot.slane %v2791, %v2823
      %v2833 = vmul.f32 %v2786, %v2796
      %v2834 = vmul.f32 %v2785, %v2800
      %v2835 = vmul.f32 %v2784, %v2804
      %v2836 = vmul.f32 %v2783, %v2808
      %v2837 = vmul.f32 %v2782, %v2812
      %v2838 = vmul.f32 %v2781, %v2816
      %v2839 = vmul.f32 %v2780, %v2820
      %v2840 = vmul.f32 %v2787, %v2824
      %v2841 = vpack.c.bf16 %v2367, %v2289
      %v2842 = vpack.c.bf16 %v2368, %v2290
      %v2843 = vpack.c.bf16 %v2369, %v2291
      %v2844 = vpack.c.bf16 %v2370, %v2292
      %v2845 = vpack.c.bf16 %v2371, %v2293
      %v2846 = vpack.c.bf16 %v2372, %v2294
      %v2847 = vpack.c.bf16 %v2373, %v2295
      %v2848 = vpack.c.bf16 %v2374, %v2296
      %v2849 = vpack.c.bf16 %v2522, %v2445
      %v2850 = vpack.c.bf16 %v2523, %v2446
      %v2851 = vpack.c.bf16 %v2524, %v2447
      %v2852 = vpack.c.bf16 %v2525, %v2448
      %v2853 = vpack.c.bf16 %v2526, %v2449
      %v2854 = vpack.c.bf16 %v2527, %v2450
      %v2855 = vpack.c.bf16 %v2528, %v2451
      %v2856 = vpack.c.bf16 %v2529, %v2452
      %v2857 = vpack.c.bf16 %v2599, %v1659
      %v2858 = vpack.c.bf16 %v2600, %v1661
      %v2859 = vpack.c.bf16 %v2601, %v1700
      %v2860 = vpack.c.bf16 %v2602, %v1702
      %v2861 = vpack.c.bf16 %v2603, %v1741
      %v2862 = vpack.c.bf16 %v2604, %v1743
      %v2863 = vpack.c.bf16 %v2605, %v1782
      %v2864 = vpack.c.bf16 %v2606, %v1784
      %v2865 = vpack.c.bf16 %v2755, %v2677
      %v2866 = vpack.c.bf16 %v2756, %v2678
      %v2867 = vpack.c.bf16 %v2757, %v2679
      %v2868 = vpack.c.bf16 %v2758, %v2680
      %v2869 = vpack.c.bf16 %v2759, %v2681
      %v2870 = vpack.c.bf16 %v2760, %v2682
      %v2871 = vpack.c.bf16 %v2761, %v2683
      %v2872 = vpack.c.bf16 %v2762, %v2684
      %v2873 = vpack.c.bf16 %v2833, %v2833
      %v2874 = vpack.c.bf16 %v2834, %v2834
      %v2875 = vpack.c.bf16 %v2835, %v2835
      %v2876 = vpack.c.bf16 %v2836, %v2836
      %v2877 = vpack.c.bf16 %v2837, %v2837
      %v2878 = vpack.c.bf16 %v2838, %v2838
      %v2879 = vpack.c.bf16 %v2839, %v2839
      %v2880 = vpack.c.bf16 %v2840, %v2840
      %v2881 = vld [vmem:[%s9] sm:$0xf]
      %v2882 = vld [vmem:[%s10] sm:$0xff]
      %2884 = vset.pattern.permute.xlu0 0
      %2885 = vperm.xlu0 %2884, %v2882
      %v2886 = vpop.permute.xlu0 %2885
      %v2889 = vsel %vm2160, %v2881, 0
      %v2892 = vsel %vm2164, %v2873, 0
      %v2895 = vsel %vm2164, %v2874, 0
      %v2898 = vsel %vm2164, %v2875, 0
      %v2901 = vsel %vm2164, %v2876, 0
      %v2904 = vsel %vm2164, %v2877, 0
      %v2907 = vsel %vm2164, %v2878, 0
      %v2910 = vsel %vm2164, %v2879, 0
      %v2913 = vsel %vm2164, %v2880, 0
      %2915 = vmatprep.subr.bf16.mxu0 %v2842
      %2916 = vmatpush1.bf16.msra.mxu0 %v2841
      %2917 = vmatprep.subr.bf16.mxu0 %v2850
      %2918 = vmatpush1.bf16.msra.mxu0 %v2849
      %2919 = vmatprep.subr.bf16.mxu0 %v2858
      %2920 = vmatpush1.bf16.msra.mxu0 %v2857
      %2921 = vmatprep.subr.bf16.mxu0 %v2866
      %2922 = vmatpush1.bf16.msra.mxu0 %v2865
      %2923 = vmatprep.subr.bf16.mxu0 %v2895
      %2924 = vmatpush1.bf16.msra.mxu0 %v2892
      %2925 = vmatprep.subr.bf16.mxu0 0
      %2926 = vmatpush1.bf16.msra.mxu0 0
      %2927 = vmatprep.subr.bf16.mxu0 0
      %2928 = vmatpush1.bf16.msra.mxu0 0
      %2929 = vmatprep.subr.bf16.mxu0 0
      %2930 = vmatpush1.bf16.msra.mxu0 0
      %2931 = vmatprep.subr.bf16.mxu0 0
      %2932 = vmatpush1.bf16.msra.mxu0 0
      %2933 = vmatprep.subr.bf16.mxu0 0
      %2934 = vmatpush1.bf16.msra.mxu0 0
      %2935 = vmatprep.subr.bf16.mxu0 0
      %2936 = vmatpush1.bf16.msra.mxu0 0
      %2937 = vmatprep.subr.bf16.mxu0 0
      %2938 = vmatpush1.bf16.msra.mxu0 0
      %2939 = vmatprep.subr.bf16.mxu0 0
      %2940 = vmatpush1.bf16.msra.mxu0 0
      %2941 = vmatprep.subr.bf16.mxu0 0
      %2942 = vmatpush1.bf16.msra.mxu0 0
      %2943 = vmatprep.subr.bf16.mxu0 0
      %2944 = vmatpush1.bf16.msra.mxu0 0
      %2945 = vmatprep.subr.bf16.mxu0 0
      %2946 = vmatpush1.bf16.msra.mxu0 0
      %2947 = vmatprep.mubr.bf16.mxu0 0
      %2948 = vmatmul.mubr.bf16.gmra.mrb[0].mxu0 %v2889
      %v2949 = vpop.f32.mrb[0].mxu0
      %v2950 = vadd.f32 %v2886, %v2949
      %v2951 = vpop.f32.mrb[0].mxu0
      %v2952 = vadd.f32 %v2886, %v2951
      %v2953 = vpop.f32.mrb[0].mxu0
      %v2954 = vpop.f32.mrb[0].mxu0
      %2955 = vdwg.mxu0
      %2956 = vmatprep.subr.bf16.mxu0 %v2844
      %2957 = vmatpush1.bf16.msra.mxu0 %v2843
      %2958 = vmatprep.subr.bf16.mxu0 %v2852
      %2959 = vmatpush1.bf16.msra.mxu0 %v2851
      %2960 = vmatprep.subr.bf16.mxu0 %v2860
      %2961 = vmatpush1.bf16.msra.mxu0 %v2859
      %2962 = vmatprep.subr.bf16.mxu0 %v2868
      %2963 = vmatpush1.bf16.msra.mxu0 %v2867
      %2964 = vmatprep.subr.bf16.mxu0 %v2901
      %2965 = vmatpush1.bf16.msra.mxu0 %v2898
      %2966 = vmatprep.subr.bf16.mxu0 0
      %2967 = vmatpush1.bf16.msra.mxu0 0
      %2968 = vmatprep.subr.bf16.mxu0 0
      %2969 = vmatpush1.bf16.msra.mxu0 0
      %2970 = vmatprep.subr.bf16.mxu0 0
      %2971 = vmatpush1.bf16.msra.mxu0 0
      %2972 = vmatprep.subr.bf16.mxu0 0
      %2973 = vmatpush1.bf16.msra.mxu0 0
      %2974 = vmatprep.subr.bf16.mxu0 0
      %2975 = vmatpush1.bf16.msra.mxu0 0
      %2976 = vmatprep.subr.bf16.mxu0 0
      %2977 = vmatpush1.bf16.msra.mxu0 0
      %2978 = vmatprep.subr.bf16.mxu0 0
      %2979 = vmatpush1.bf16.msra.mxu0 0
      %2980 = vmatprep.subr.bf16.mxu0 0
      %2981 = vmatpush1.bf16.msra.mxu0 0
      %2982 = vmatprep.subr.bf16.mxu0 0
      %2983 = vmatpush1.bf16.msra.mxu0 0
      %2984 = vmatprep.subr.bf16.mxu0 0
      %2985 = vmatpush1.bf16.msra.mxu0 0
      %2986 = vmatprep.subr.bf16.mxu0 0
      %2987 = vmatpush1.bf16.msra.mxu0 0
      %2988 = vmatprep.mubr.bf16.mxu0 0
      %2989 = vmatmul.mubr.bf16.gmra.mrb[0].mxu0 %v2889
      %v2990 = vpop.f32.mrb[0].mxu0
      %v2991 = vadd.f32 %v2886, %v2990
      %v2992 = vpop.f32.mrb[0].mxu0
      %v2993 = vadd.f32 %v2886, %v2992
      %v2994 = vpop.f32.mrb[0].mxu0
      %v2995 = vpop.f32.mrb[0].mxu0
      %2996 = vdwg.mxu0
      %2997 = vmatprep.subr.bf16.mxu0 %v2846
      %2998 = vmatpush1.bf16.msra.mxu0 %v2845
      %2999 = vmatprep.subr.bf16.mxu0 %v2854
      %3000 = vmatpush1.bf16.msra.mxu0 %v2853
      %3001 = vmatprep.subr.bf16.mxu0 %v2862
      %3002 = vmatpush1.bf16.msra.mxu0 %v2861
      %3003 = vmatprep.subr.bf16.mxu0 %v2870
      %3004 = vmatpush1.bf16.msra.mxu0 %v2869
      %3005 = vmatprep.subr.bf16.mxu0 %v2907
      %3006 = vmatpush1.bf16.msra.mxu0 %v2904
      %3007 = vmatprep.subr.bf16.mxu0 0
      %3008 = vmatpush1.bf16.msra.mxu0 0
      %3009 = vmatprep.subr.bf16.mxu0 0
      %3010 = vmatpush1.bf16.msra.mxu0 0
      %3011 = vmatprep.subr.bf16.mxu0 0
      %3012 = vmatpush1.bf16.msra.mxu0 0
      %3013 = vmatprep.subr.bf16.mxu0 0
      %3014 = vmatpush1.bf16.msra.mxu0 0
      %3015 = vmatprep.subr.bf16.mxu0 0
      %3016 = vmatpush1.bf16.msra.mxu0 0
      %3017 = vmatprep.subr.bf16.mxu0 0
      %3018 = vmatpush1.bf16.msra.mxu0 0
      %3019 = vmatprep.subr.bf16.mxu0 0
      %3020 = vmatpush1.bf16.msra.mxu0 0
      %3021 = vmatprep.subr.bf16.mxu0 0
      %3022 = vmatpush1.bf16.msra.mxu0 0
      %3023 = vmatprep.subr.bf16.mxu0 0
      %3024 = vmatpush1.bf16.msra.mxu0 0
      %3025 = vmatprep.subr.bf16.mxu0 0
      %3026 = vmatpush1.bf16.msra.mxu0 0
      %3027 = vmatprep.subr.bf16.mxu0 0
      %3028 = vmatpush1.bf16.msra.mxu0 0
      %3029 = vmatprep.mubr.bf16.mxu0 0
      %3030 = vmatmul.mubr.bf16.gmra.mrb[0].mxu0 %v2889
      %v3031 = vpop.f32.mrb[0].mxu0
      %v3032 = vadd.f32 %v2886, %v3031
      %v3033 = vpop.f32.mrb[0].mxu0
      %v3034 = vadd.f32 %v2886, %v3033
      %v3035 = vpop.f32.mrb[0].mxu0
      %v3036 = vpop.f32.mrb[0].mxu0
      %3037 = vdwg.mxu0
      %3038 = vmatprep.subr.bf16.mxu0 %v2848
      %3039 = vmatpush1.bf16.msra.mxu0 %v2847
      %3040 = vmatprep.subr.bf16.mxu0 %v2856
      %3041 = vmatpush1.bf16.msra.mxu0 %v2855
      %3042 = vmatprep.subr.bf16.mxu0 %v2864
      %3043 = vmatpush1.bf16.msra.mxu0 %v2863
      %3044 = vmatprep.subr.bf16.mxu0 %v2872
      %3045 = vmatpush1.bf16.msra.mxu0 %v2871
      %3046 = vmatprep.subr.bf16.mxu0 %v2913
      %3047 = vmatpush1.bf16.msra.mxu0 %v2910
      %3048 = vmatprep.subr.bf16.mxu0 0
      %3049 = vmatpush1.bf16.msra.mxu0 0
      %3050 = vmatprep.subr.bf16.mxu0 0
      %3051 = vmatpush1.bf16.msra.mxu0 0
      %3052 = vmatprep.subr.bf16.mxu0 0
      %3053 = vmatpush1.bf16.msra.mxu0 0
      %3054 = vmatprep.subr.bf16.mxu0 0
      %3055 = vmatpush1.bf16.msra.mxu0 0
      %3056 = vmatprep.subr.bf16.mxu0 0
      %3057 = vmatpush1.bf16.msra.mxu0 0
      %3058 = vmatprep.subr.bf16.mxu0 0
      %3059 = vmatpush1.bf16.msra.mxu0 0
      %3060 = vmatprep.subr.bf16.mxu0 0
      %3061 = vmatpush1.bf16.msra.mxu0 0
      %3062 = vmatprep.subr.bf16.mxu0 0
      %3063 = vmatpush1.bf16.msra.mxu0 0
      %3064 = vmatprep.subr.bf16.mxu0 0
      %3065 = vmatpush1.bf16.msra.mxu0 0
      %3066 = vmatprep.subr.bf16.mxu0 0
      %3067 = vmatpush1.bf16.msra.mxu0 0
      %3068 = vmatprep.subr.bf16.mxu0 0
      %3069 = vmatpush1.bf16.msra.mxu0 0
      %3070 = vmatprep.mubr.bf16.mxu0 0
      %3071 = vmatmul.mubr.bf16.gmra.mrb[0].mxu0 %v2889
      %v3072 = vpop.f32.mrb[0].mxu0
      %v3073 = vadd.f32 %v2886, %v3072
      %v3074 = vpop.f32.mrb[0].mxu0
      %v3075 = vadd.f32 %v2886, %v3074
      %v3076 = vpop.f32.mrb[0].mxu0
      %v3077 = vpop.f32.mrb[0].mxu0
      %3078 = vdwg.mxu0
      %v3079 = vmax.f32 %v2950, 0.0
      %v3080 = vmax.f32 %v2952, 0.0
      %v3081 = vmax.f32 %v2991, 0.0
      %v3082 = vmax.f32 %v2993, 0.0
      %v3083 = vmax.f32 %v3032, 0.0
      %v3084 = vmax.f32 %v3034, 0.0
      %v3085 = vmax.f32 %v3073, 0.0
      %v3086 = vmax.f32 %v3075, 0.0
      %3087 = vrot.lane.b32.xlu0 %v1825, 33
      %v3088 = vpop.permute.xlu0 %3087
      %3089 = vrot.lane.b32.xlu0 %v1827, 33
      %v3090 = vpop.permute.xlu0 %3089
      %3091 = vrot.lane.b32.xlu0 %v1866, 33
      %v3092 = vpop.permute.xlu0 %3091
      %3093 = vrot.lane.b32.xlu0 %v1868, 33
      %v3094 = vpop.permute.xlu0 %3093
      %3095 = vrot.lane.b32.xlu0 %v1907, 33
      %v3096 = vpop.permute.xlu0 %3095
      %3097 = vrot.lane.b32.xlu0 %v1909, 33
      %v3098 = vpop.permute.xlu0 %3097
      %3099 = vrot.lane.b32.xlu0 %v1948, 33
      %v3100 = vpop.permute.xlu0 %3099
      %3101 = vrot.lane.b32.xlu0 %v1950, 33
      %v3102 = vpop.permute.xlu0 %3101
      %v3103 = vsel %vm2236, %v3100, %v3102
      %v3104 = vsel %vm2236, %v3098, %v3100
      %v3105 = vsel %vm2236, %v3096, %v3098
      %v3106 = vsel %vm2236, %v3094, %v3096
      %v3107 = vsel %vm2236, %v3092, %v3094
      %v3108 = vsel %vm2236, %v3090, %v3092
      %v3109 = vsel %vm2236, %v3088, %v3090
      %v3110 = vsel %vm2236, %v3102, %v3088
      %v3111 = vmul.f32 %v3110, %v2252
      %v3112 = vmul.f32 %v3109, %v2256
      %v3113 = vmul.f32 %v3108, %v2260
      %v3114 = vmul.f32 %v3107, %v2264
      %v3115 = vmul.f32 %v3106, %v2268
      %v3116 = vmul.f32 %v3105, %v2272
      %v3117 = vmul.f32 %v3104, %v2276
      %v3118 = vmul.f32 %v3103, %v2280
      %3119 = vrot.lane.b32.xlu0 %v1825, 32
      %v3120 = vpop.permute.xlu0 %3119
      %3121 = vrot.lane.b32.xlu0 %v1827, 32
      %v3122 = vpop.permute.xlu0 %3121
      %3123 = vrot.lane.b32.xlu0 %v1866, 32
      %v3124 = vpop.permute.xlu0 %3123
      %3125 = vrot.lane.b32.xlu0 %v1868, 32
      %v3126 = vpop.permute.xlu0 %3125
      %3127 = vrot.lane.b32.xlu0 %v1907, 32
      %v3128 = vpop.permute.xlu0 %3127
      %3129 = vrot.lane.b32.xlu0 %v1909, 32
      %v3130 = vpop.permute.xlu0 %3129
      %3131 = vrot.lane.b32.xlu0 %v1948, 32
      %v3132 = vpop.permute.xlu0 %3131
      %3133 = vrot.lane.b32.xlu0 %v1950, 32
      %v3134 = vpop.permute.xlu0 %3133
      %v3135 = vsel %vm2313, %v3132, %v3134
      %v3136 = vsel %vm2313, %v3130, %v3132
      %v3137 = vsel %vm2313, %v3128, %v3130
      %v3138 = vsel %vm2313, %v3126, %v3128
      %v3139 = vsel %vm2313, %v3124, %v3126
      %v3140 = vsel %vm2313, %v3122, %v3124
      %v3141 = vsel %vm2313, %v3120, %v3122
      %v3142 = vsel %vm2313, %v3134, %v3120
      %v3143 = vmul.f32 %v3142, %v2330
      %v3144 = vmul.f32 %v3141, %v2334
      %v3145 = vmul.f32 %v3140, %v2338
      %v3146 = vmul.f32 %v3139, %v2342
      %v3147 = vmul.f32 %v3138, %v2346
      %v3148 = vmul.f32 %v3137, %v2350
      %v3149 = vmul.f32 %v3136, %v2354
      %v3150 = vmul.f32 %v3135, %v2358
      %3151 = vrot.lane.b32.xlu0 %v1825, 31
      %v3152 = vpop.permute.xlu0 %3151
      %3153 = vrot.lane.b32.xlu0 %v1827, 31
      %v3154 = vpop.permute.xlu0 %3153
      %3155 = vrot.lane.b32.xlu0 %v1866, 31
      %v3156 = vpop.permute.xlu0 %3155
      %3157 = vrot.lane.b32.xlu0 %v1868, 31
      %v3158 = vpop.permute.xlu0 %3157
      %3159 = vrot.lane.b32.xlu0 %v1907, 31
      %v3160 = vpop.permute.xlu0 %3159
      %3161 = vrot.lane.b32.xlu0 %v1909, 31
      %v3162 = vpop.permute.xlu0 %3161
      %3163 = vrot.lane.b32.xlu0 %v1948, 31
      %v3164 = vpop.permute.xlu0 %3163
      %3165 = vrot.lane.b32.xlu0 %v1950, 31
      %v3166 = vpop.permute.xlu0 %3165
      %v3167 = vsel %vm2391, %v3164, %v3166
      %v3168 = vsel %vm2391, %v3162, %v3164
      %v3169 = vsel %vm2391, %v3160, %v3162
      %v3170 = vsel %vm2391, %v3158, %v3160
      %v3171 = vsel %vm2391, %v3156, %v3158
      %v3172 = vsel %vm2391, %v3154, %v3156
      %v3173 = vsel %vm2391, %v3152, %v3154
      %v3174 = vsel %vm2391, %v3166, %v3152
      %v3175 = vmul.f32 %v3174, %v2408
      %v3176 = vmul.f32 %v3173, %v2412
      %v3177 = vmul.f32 %v3172, %v2416
      %v3178 = vmul.f32 %v3171, %v2420
      %v3179 = vmul.f32 %v3170, %v2424
      %v3180 = vmul.f32 %v3169, %v2428
      %v3181 = vmul.f32 %v3168, %v2432
      %v3182 = vmul.f32 %v3167, %v2436
      %3183 = vrot.lane.b32.xlu0 %v1825, 1
      %v3184 = vpop.permute.xlu0 %3183
      %3185 = vrot.lane.b32.xlu0 %v1827, 1
      %v3186 = vpop.permute.xlu0 %3185
      %3187 = vrot.lane.b32.xlu0 %v1866, 1
      %v3188 = vpop.permute.xlu0 %3187
      %3189 = vrot.lane.b32.xlu0 %v1868, 1
      %v3190 = vpop.permute.xlu0 %3189
      %3191 = vrot.lane.b32.xlu0 %v1907, 1
      %v3192 = vpop.permute.xlu0 %3191
      %3193 = vrot.lane.b32.xlu0 %v1909, 1
      %v3194 = vpop.permute.xlu0 %3193
      %3195 = vrot.lane.b32.xlu0 %v1948, 1
      %v3196 = vpop.permute.xlu0 %3195
      %3197 = vrot.lane.b32.xlu0 %v1950, 1
      %v3198 = vpop.permute.xlu0 %3197
      %v3199 = vsel %vm2025, %v3196, %v3198
      %v3200 = vsel %vm2025, %v3194, %v3196
      %v3201 = vsel %vm2025, %v3192, %v3194
      %v3202 = vsel %vm2025, %v3190, %v3192
      %v3203 = vsel %vm2025, %v3188, %v3190
      %v3204 = vsel %vm2025, %v3186, %v3188
      %v3205 = vsel %vm2025, %v3184, %v3186
      %v3206 = vsel %vm2025, %v3198, %v3184
      %v3207 = vmul.f32 %v3206, %v2485
      %v3208 = vmul.f32 %v3205, %v2489
      %v3209 = vmul.f32 %v3204, %v2493
      %v3210 = vmul.f32 %v3203, %v2497
      %v3211 = vmul.f32 %v3202, %v2501
      %v3212 = vmul.f32 %v3201, %v2505
      %v3213 = vmul.f32 %v3200, %v2509
      %v3214 = vmul.f32 %v3199, %v2513
      %3215 = vrot.lane.b32.xlu0 %v1825, 127
      %v3216 = vpop.permute.xlu0 %3215
      %3217 = vrot.lane.b32.xlu0 %v1827, 127
      %v3218 = vpop.permute.xlu0 %3217
      %3219 = vrot.lane.b32.xlu0 %v1866, 127
      %v3220 = vpop.permute.xlu0 %3219
      %3221 = vrot.lane.b32.xlu0 %v1868, 127
      %v3222 = vpop.permute.xlu0 %3221
      %3223 = vrot.lane.b32.xlu0 %v1907, 127
      %v3224 = vpop.permute.xlu0 %3223
      %3225 = vrot.lane.b32.xlu0 %v1909, 127
      %v3226 = vpop.permute.xlu0 %3225
      %3227 = vrot.lane.b32.xlu0 %v1948, 127
      %v3228 = vpop.permute.xlu0 %3227
      %3229 = vrot.lane.b32.xlu0 %v1950, 127
      %v3230 = vpop.permute.xlu0 %3229
      %v3231 = vsel %vm2047, %v3228, %v3230
      %v3232 = vsel %vm2047, %v3226, %v3228
      %v3233 = vsel %vm2047, %v3224, %v3226
      %v3234 = vsel %vm2047, %v3222, %v3224
      %v3235 = vsel %vm2047, %v3220, %v3222
      %v3236 = vsel %vm2047, %v3218, %v3220
      %v3237 = vsel %vm2047, %v3216, %v3218
      %v3238 = vsel %vm2047, %v3230, %v3216
      %v3239 = vmul.f32 %v3237, %v2562
      %v3240 = vmul.f32 %v3236, %v2566
      %v3241 = vmul.f32 %v3235, %v2570
      %v3242 = vmul.f32 %v3234, %v2574
      %v3243 = vmul.f32 %v3233, %v2578
      %v3244 = vmul.f32 %v3232, %v2582
      %v3245 = vmul.f32 %v3231, %v2586
      %v3246 = vmul.f32 %v3238, %v2590
      %3247 = vrot.lane.b32.xlu0 %v1825, 97
      %v3248 = vpop.permute.xlu0 %3247
      %3249 = vrot.lane.b32.xlu0 %v1827, 97
      %v3250 = vpop.permute.xlu0 %3249
      %3251 = vrot.lane.b32.xlu0 %v1866, 97
      %v3252 = vpop.permute.xlu0 %3251
      %3253 = vrot.lane.b32.xlu0 %v1868, 97
      %v3254 = vpop.permute.xlu0 %3253
      %3255 = vrot.lane.b32.xlu0 %v1907, 97
      %v3256 = vpop.permute.xlu0 %3255
      %3257 = vrot.lane.b32.xlu0 %v1909, 97
      %v3258 = vpop.permute.xlu0 %3257
      %3259 = vrot.lane.b32.xlu0 %v1948, 97
      %v3260 = vpop.permute.xlu0 %3259
      %3261 = vrot.lane.b32.xlu0 %v1950, 97
      %v3262 = vpop.permute.xlu0 %3261
      %v3263 = vsel %vm2623, %v3260, %v3262
      %v3264 = vsel %vm2623, %v3258, %v3260
      %v3265 = vsel %vm2623, %v3256, %v3258
      %v3266 = vsel %vm2623, %v3254, %v3256
      %v3267 = vsel %vm2623, %v3252, %v3254
      %v3268 = vsel %vm2623, %v3250, %v3252
      %v3269 = vsel %vm2623, %v3248, %v3250
      %v3270 = vsel %vm2623, %v3262, %v3248
      %v3271 = vmul.f32 %v3269, %v2640
      %v3272 = vmul.f32 %v3268, %v2644
      %v3273 = vmul.f32 %v3267, %v2648
      %v3274 = vmul.f32 %v3266, %v2652
      %v3275 = vmul.f32 %v3265, %v2656
      %v3276 = vmul.f32 %v3264, %v2660
      %v3277 = vmul.f32 %v3263, %v2664
      %v3278 = vmul.f32 %v3270, %v2668
      %3279 = vrot.lane.b32.xlu0 %v1825, 96
      %v3280 = vpop.permute.xlu0 %3279
      %3281 = vrot.lane.b32.xlu0 %v1827, 96
      %v3282 = vpop.permute.xlu0 %3281
      %3283 = vrot.lane.b32.xlu0 %v1866, 96
      %v3284 = vpop.permute.xlu0 %3283
      %3285 = vrot.lane.b32.xlu0 %v1868, 96
      %v3286 = vpop.permute.xlu0 %3285
      %3287 = vrot.lane.b32.xlu0 %v1907, 96
      %v3288 = vpop.permute.xlu0 %3287
      %3289 = vrot.lane.b32.xlu0 %v1909, 96
      %v3290 = vpop.permute.xlu0 %3289
      %3291 = vrot.lane.b32.xlu0 %v1948, 96
      %v3292 = vpop.permute.xlu0 %3291
      %3293 = vrot.lane.b32.xlu0 %v1950, 96
      %v3294 = vpop.permute.xlu0 %3293
      %v3295 = vsel %vm2701, %v3292, %v3294
      %v3296 = vsel %vm2701, %v3290, %v3292
      %v3297 = vsel %vm2701, %v3288, %v3290
      %v3298 = vsel %vm2701, %v3286, %v3288
      %v3299 = vsel %vm2701, %v3284, %v3286
      %v3300 = vsel %vm2701, %v3282, %v3284
      %v3301 = vsel %vm2701, %v3280, %v3282
      %v3302 = vsel %vm2701, %v3294, %v3280
      %v3303 = vmul.f32 %v3301, %v2718
      %v3304 = vmul.f32 %v3300, %v2722
      %v3305 = vmul.f32 %v3299, %v2726
      %v3306 = vmul.f32 %v3298, %v2730
      %v3307 = vmul.f32 %v3297, %v2734
      %v3308 = vmul.f32 %v3296, %v2738
      %v3309 = vmul.f32 %v3295, %v2742
      %v3310 = vmul.f32 %v3302, %v2746
      %3311 = vrot.lane.b32.xlu0 %v1825, 95
      %v3312 = vpop.permute.xlu0 %3311
      %3313 = vrot.lane.b32.xlu0 %v1827, 95
      %v3314 = vpop.permute.xlu0 %3313
      %3315 = vrot.lane.b32.xlu0 %v1866, 95
      %v3316 = vpop.permute.xlu0 %3315
      %3317 = vrot.lane.b32.xlu0 %v1868, 95
      %v3318 = vpop.permute.xlu0 %3317
      %3319 = vrot.lane.b32.xlu0 %v1907, 95
      %v3320 = vpop.permute.xlu0 %3319
      %3321 = vrot.lane.b32.xlu0 %v1909, 95
      %v3322 = vpop.permute.xlu0 %3321
      %3323 = vrot.lane.b32.xlu0 %v1948, 95
      %v3324 = vpop.permute.xlu0 %3323
      %3325 = vrot.lane.b32.xlu0 %v1950, 95
      %v3326 = vpop.permute.xlu0 %3325
      %v3327 = vsel %vm2779, %v3324, %v3326
      %v3328 = vsel %vm2779, %v3322, %v3324
      %v3329 = vsel %vm2779, %v3320, %v3322
      %v3330 = vsel %vm2779, %v3318, %v3320
      %v3331 = vsel %vm2779, %v3316, %v3318
      %v3332 = vsel %vm2779, %v3314, %v3316
      %v3333 = vsel %vm2779, %v3312, %v3314
      %v3334 = vsel %vm2779, %v3326, %v3312
      %v3335 = vmul.f32 %v3333, %v2796
      %v3336 = vmul.f32 %v3332, %v2800
      %v3337 = vmul.f32 %v3331, %v2804
      %v3338 = vmul.f32 %v3330, %v2808
      %v3339 = vmul.f32 %v3329, %v2812
      %v3340 = vmul.f32 %v3328, %v2816
      %v3341 = vmul.f32 %v3327, %v2820
      %v3342 = vmul.f32 %v3334, %v2824
      %v3343 = vpack.c.bf16 %v3143, %v3111
      %v3344 = vpack.c.bf16 %v3144, %v3112
      %v3345 = vpack.c.bf16 %v3145, %v3113
      %v3346 = vpack.c.bf16 %v3146, %v3114
      %v3347 = vpack.c.bf16 %v3147, %v3115
      %v3348 = vpack.c.bf16 %v3148, %v3116
      %v3349 = vpack.c.bf16 %v3149, %v3117
      %v3350 = vpack.c.bf16 %v3150, %v3118
      %v3351 = vpack.c.bf16 %v3207, %v3175
      %v3352 = vpack.c.bf16 %v3208, %v3176
      %v3353 = vpack.c.bf16 %v3209, %v3177
      %v3354 = vpack.c.bf16 %v3210, %v3178
      %v3355 = vpack.c.bf16 %v3211, %v3179
      %v3356 = vpack.c.bf16 %v3212, %v3180
      %v3357 = vpack.c.bf16 %v3213, %v3181
      %v3358 = vpack.c.bf16 %v3214, %v3182
      %v3359 = vpack.c.bf16 %v3239, %v1825
      %v3360 = vpack.c.bf16 %v3240, %v1827
      %v3361 = vpack.c.bf16 %v3241, %v1866
      %v3362 = vpack.c.bf16 %v3242, %v1868
      %v3363 = vpack.c.bf16 %v3243, %v1907
      %v3364 = vpack.c.bf16 %v3244, %v1909
      %v3365 = vpack.c.bf16 %v3245, %v1948
      %v3366 = vpack.c.bf16 %v3246, %v1950
      %v3367 = vpack.c.bf16 %v3303, %v3271
      %v3368 = vpack.c.bf16 %v3304, %v3272
      %v3369 = vpack.c.bf16 %v3305, %v3273
      %v3370 = vpack.c.bf16 %v3306, %v3274
      %v3371 = vpack.c.bf16 %v3307, %v3275
      %v3372 = vpack.c.bf16 %v3308, %v3276
      %v3373 = vpack.c.bf16 %v3309, %v3277
      %v3374 = vpack.c.bf16 %v3310, %v3278
      %v3375 = vpack.c.bf16 %v3335, %v3335
      %v3376 = vpack.c.bf16 %v3336, %v3336
      %v3377 = vpack.c.bf16 %v3337, %v3337
      %v3378 = vpack.c.bf16 %v3338, %v3338
      %v3379 = vpack.c.bf16 %v3339, %v3339
      %v3380 = vpack.c.bf16 %v3340, %v3340
      %v3381 = vpack.c.bf16 %v3341, %v3341
      %v3382 = vpack.c.bf16 %v3342, %v3342
      %v3383 = vld [vmem:[%s11] sm:$0xf]
      %v3384 = vld [vmem:[%s12] sm:$0xff]
      %3386 = vset.pattern.permute.xlu0 0
      %3387 = vperm.xlu0 %3386, %v3384
      %v3388 = vpop.permute.xlu0 %3387
      %v3391 = vsel %vm2160, %v3383, 0
      %v3394 = vsel %vm2164, %v3375, 0
      %v3397 = vsel %vm2164, %v3376, 0
      %v3400 = vsel %vm2164, %v3377, 0
      %v3403 = vsel %vm2164, %v3378, 0
      %v3406 = vsel %vm2164, %v3379, 0
      %v3409 = vsel %vm2164, %v3380, 0
      %v3412 = vsel %vm2164, %v3381, 0
      %v3415 = vsel %vm2164, %v3382, 0
      %3417 = vmatprep.subr.bf16.mxu0 %v3344
      %3418 = vmatpush1.bf16.msra.mxu0 %v3343
      %3419 = vmatprep.subr.bf16.mxu0 %v3352
      %3420 = vmatpush1.bf16.msra.mxu0 %v3351
      %3421 = vmatprep.subr.bf16.mxu0 %v3360
      %3422 = vmatpush1.bf16.msra.mxu0 %v3359
      %3423 = vmatprep.subr.bf16.mxu0 %v3368
      %3424 = vmatpush1.bf16.msra.mxu0 %v3367
      %3425 = vmatprep.subr.bf16.mxu0 %v3397
      %3426 = vmatpush1.bf16.msra.mxu0 %v3394
      %3427 = vmatprep.subr.bf16.mxu0 0
      %3428 = vmatpush1.bf16.msra.mxu0 0
      %3429 = vmatprep.subr.bf16.mxu0 0
      %3430 = vmatpush1.bf16.msra.mxu0 0
      %3431 = vmatprep.subr.bf16.mxu0 0
      %3432 = vmatpush1.bf16.msra.mxu0 0
      %3433 = vmatprep.subr.bf16.mxu0 0
      %3434 = vmatpush1.bf16.msra.mxu0 0
      %3435 = vmatprep.subr.bf16.mxu0 0
      %3436 = vmatpush1.bf16.msra.mxu0 0
      %3437 = vmatprep.subr.bf16.mxu0 0
      %3438 = vmatpush1.bf16.msra.mxu0 0
      %3439 = vmatprep.subr.bf16.mxu0 0
      %3440 = vmatpush1.bf16.msra.mxu0 0
      %3441 = vmatprep.subr.bf16.mxu0 0
      %3442 = vmatpush1.bf16.msra.mxu0 0
      %3443 = vmatprep.subr.bf16.mxu0 0
      %3444 = vmatpush1.bf16.msra.mxu0 0
      %3445 = vmatprep.subr.bf16.mxu0 0
      %3446 = vmatpush1.bf16.msra.mxu0 0
      %3447 = vmatprep.subr.bf16.mxu0 0
      %3448 = vmatpush1.bf16.msra.mxu0 0
      %3449 = vmatprep.mubr.bf16.mxu0 0
      %3450 = vmatmul.mubr.bf16.gmra.mrb[0].mxu0 %v3391
      %v3451 = vpop.f32.mrb[0].mxu0
      %v3452 = vadd.f32 %v3388, %v3451
      %v3453 = vpop.f32.mrb[0].mxu0
      %v3454 = vadd.f32 %v3388, %v3453
      %v3455 = vpop.f32.mrb[0].mxu0
      %v3456 = vpop.f32.mrb[0].mxu0
      %3457 = vdwg.mxu0
      %3458 = vmatprep.subr.bf16.mxu0 %v3346
      %3459 = vmatpush1.bf16.msra.mxu0 %v3345
      %3460 = vmatprep.subr.bf16.mxu0 %v3354
      %3461 = vmatpush1.bf16.msra.mxu0 %v3353
      %3462 = vmatprep.subr.bf16.mxu0 %v3362
      %3463 = vmatpush1.bf16.msra.mxu0 %v3361
      %3464 = vmatprep.subr.bf16.mxu0 %v3370
      %3465 = vmatpush1.bf16.msra.mxu0 %v3369
      %3466 = vmatprep.subr.bf16.mxu0 %v3403
      %3467 = vmatpush1.bf16.msra.mxu0 %v3400
      %3468 = vmatprep.subr.bf16.mxu0 0
      %3469 = vmatpush1.bf16.msra.mxu0 0
      %3470 = vmatprep.subr.bf16.mxu0 0
      %3471 = vmatpush1.bf16.msra.mxu0 0
      %3472 = vmatprep.subr.bf16.mxu0 0
      %3473 = vmatpush1.bf16.msra.mxu0 0
      %3474 = vmatprep.subr.bf16.mxu0 0
      %3475 = vmatpush1.bf16.msra.mxu0 0
      %3476 = vmatprep.subr.bf16.mxu0 0
      %3477 = vmatpush1.bf16.msra.mxu0 0
      %3478 = vmatprep.subr.bf16.mxu0 0
      %3479 = vmatpush1.bf16.msra.mxu0 0
      %3480 = vmatprep.subr.bf16.mxu0 0
      %3481 = vmatpush1.bf16.msra.mxu0 0
      %3482 = vmatprep.subr.bf16.mxu0 0
      %3483 = vmatpush1.bf16.msra.mxu0 0
      %3484 = vmatprep.subr.bf16.mxu0 0
      %3485 = vmatpush1.bf16.msra.mxu0 0
      %3486 = vmatprep.subr.bf16.mxu0 0
      %3487 = vmatpush1.bf16.msra.mxu0 0
      %3488 = vmatprep.subr.bf16.mxu0 0
      %3489 = vmatpush1.bf16.msra.mxu0 0
      %3490 = vmatprep.mubr.bf16.mxu0 0
      %3491 = vmatmul.mubr.bf16.gmra.mrb[0].mxu0 %v3391
      %v3492 = vpop.f32.mrb[0].mxu0
      %v3493 = vadd.f32 %v3388, %v3492
      %v3494 = vpop.f32.mrb[0].mxu0
      %v3495 = vadd.f32 %v3388, %v3494
      %v3496 = vpop.f32.mrb[0].mxu0
      %v3497 = vpop.f32.mrb[0].mxu0
      %3498 = vdwg.mxu0
      %3499 = vmatprep.subr.bf16.mxu0 %v3348
      %3500 = vmatpush1.bf16.msra.mxu0 %v3347
      %3501 = vmatprep.subr.bf16.mxu0 %v3356
      %3502 = vmatpush1.bf16.msra.mxu0 %v3355
      %3503 = vmatprep.subr.bf16.mxu0 %v3364
      %3504 = vmatpush1.bf16.msra.mxu0 %v3363
      %3505 = vmatprep.subr.bf16.mxu0 %v3372
      %3506 = vmatpush1.bf16.msra.mxu0 %v3371
      %3507 = vmatprep.subr.bf16.mxu0 %v3409
      %3508 = vmatpush1.bf16.msra.mxu0 %v3406
      %3509 = vmatprep.subr.bf16.mxu0 0
      %3510 = vmatpush1.bf16.msra.mxu0 0
      %3511 = vmatprep.subr.bf16.mxu0 0
      %3512 = vmatpush1.bf16.msra.mxu0 0
      %3513 = vmatprep.subr.bf16.mxu0 0
      %3514 = vmatpush1.bf16.msra.mxu0 0
      %3515 = vmatprep.subr.bf16.mxu0 0
      %3516 = vmatpush1.bf16.msra.mxu0 0
      %3517 = vmatprep.subr.bf16.mxu0 0
      %3518 = vmatpush1.bf16.msra.mxu0 0
      %3519 = vmatprep.subr.bf16.mxu0 0
      %3520 = vmatpush1.bf16.msra.mxu0 0
      %3521 = vmatprep.subr.bf16.mxu0 0
      %3522 = vmatpush1.bf16.msra.mxu0 0
      %3523 = vmatprep.subr.bf16.mxu0 0
      %3524 = vmatpush1.bf16.msra.mxu0 0
      %3525 = vmatprep.subr.bf16.mxu0 0
      %3526 = vmatpush1.bf16.msra.mxu0 0
      %3527 = vmatprep.subr.bf16.mxu0 0
      %3528 = vmatpush1.bf16.msra.mxu0 0
      %3529 = vmatprep.subr.bf16.mxu0 0
      %3530 = vmatpush1.bf16.msra.mxu0 0
      %3531 = vmatprep.mubr.bf16.mxu0 0
      %3532 = vmatmul.mubr.bf16.gmra.mrb[0].mxu0 %v3391
      %v3533 = vpop.f32.mrb[0].mxu0
      %v3534 = vadd.f32 %v3388, %v3533
      %v3535 = vpop.f32.mrb[0].mxu0
      %v3536 = vadd.f32 %v3388, %v3535
      %v3537 = vpop.f32.mrb[0].mxu0
      %v3538 = vpop.f32.mrb[0].mxu0
      %3539 = vdwg.mxu0
      %3540 = vmatprep.subr.bf16.mxu0 %v3350
      %3541 = vmatpush1.bf16.msra.mxu0 %v3349
      %3542 = vmatprep.subr.bf16.mxu0 %v3358
      %3543 = vmatpush1.bf16.msra.mxu0 %v3357
      %3544 = vmatprep.subr.bf16.mxu0 %v3366
      %3545 = vmatpush1.bf16.msra.mxu0 %v3365
      %3546 = vmatprep.subr.bf16.mxu0 %v3374
      %3547 = vmatpush1.bf16.msra.mxu0 %v3373
      %3548 = vmatprep.subr.bf16.mxu0 %v3415
      %3549 = vmatpush1.bf16.msra.mxu0 %v3412
      %3550 = vmatprep.subr.bf16.mxu0 0
      %3551 = vmatpush1.bf16.msra.mxu0 0
      %3552 = vmatprep.subr.bf16.mxu0 0
      %3553 = vmatpush1.bf16.msra.mxu0 0
      %3554 = vmatprep.subr.bf16.mxu0 0
      %3555 = vmatpush1.bf16.msra.mxu0 0
      %3556 = vmatprep.subr.bf16.mxu0 0
      %3557 = vmatpush1.bf16.msra.mxu0 0
      %3558 = vmatprep.subr.bf16.mxu0 0
      %3559 = vmatpush1.bf16.msra.mxu0 0
      %3560 = vmatprep.subr.bf16.mxu0 0
      %3561 = vmatpush1.bf16.msra.mxu0 0
      %3562 = vmatprep.subr.bf16.mxu0 0
      %3563 = vmatpush1.bf16.msra.mxu0 0
      %3564 = vmatprep.subr.bf16.mxu0 0
      %3565 = vmatpush1.bf16.msra.mxu0 0
      %3566 = vmatprep.subr.bf16.mxu0 0
      %3567 = vmatpush1.bf16.msra.mxu0 0
      %3568 = vmatprep.subr.bf16.mxu0 0
      %3569 = vmatpush1.bf16.msra.mxu0 0
      %3570 = vmatprep.subr.bf16.mxu0 0
      %3571 = vmatpush1.bf16.msra.mxu0 0
      %3572 = vmatprep.mubr.bf16.mxu0 0
      %3573 = vmatmul.mubr.bf16.gmra.mrb[0].mxu0 %v3391
      %v3574 = vpop.f32.mrb[0].mxu0
      %v3575 = vadd.f32 %v3388, %v3574
      %v3576 = vpop.f32.mrb[0].mxu0
      %v3577 = vadd.f32 %v3388, %v3576
      %v3578 = vpop.f32.mrb[0].mxu0
      %v3579 = vpop.f32.mrb[0].mxu0
      %3580 = vdwg.mxu0
      %v3581 = vmax.f32 %v3452, 0.0
      %v3582 = vmax.f32 %v3454, 0.0
      %v3583 = vmax.f32 %v3493, 0.0
      %v3584 = vmax.f32 %v3495, 0.0
      %v3585 = vmax.f32 %v3534, 0.0
      %v3586 = vmax.f32 %v3536, 0.0
      %v3587 = vmax.f32 %v3575, 0.0
      %v3588 = vmax.f32 %v3577, 0.0
      %v3589 = vmul.f32 %v3079, %v3581
      %v3590 = vmul.f32 %v3080, %v3582
      %v3591 = vmul.f32 %v3081, %v3583
      %v3592 = vmul.f32 %v3082, %v3584
      %v3593 = vmul.f32 %v3083, %v3585
      %v3594 = vmul.f32 %v3084, %v3586
      %v3595 = vmul.f32 %v3085, %v3587
      %v3596 = vmul.f32 %v3086, %v3588
      %v3597 = vmul.f32 %v3589, %v752
      %v3598 = vmul.f32 %v3590, %v753
      %v3599 = vmul.f32 %v3591, %v754
      %v3600 = vmul.f32 %v3592, %v755
      %v3601 = vmul.f32 %v3593, %v756
      %v3602 = vmul.f32 %v3594, %v757
      %v3603 = vmul.f32 %v3595, %v758
      %v3604 = vmul.f32 %v3596, %v759
      %3605 = vrot.lane.b32.xlu0 %v2218, 17
      %v3606 = vpop.permute.xlu0 %3605
      %3607 = vrot.lane.b32.xlu0 %v2216, 17
      %v3608 = vpop.permute.xlu0 %3607
      %3609 = vrot.lane.b32.xlu0 %v2219, 17
      %v3610 = vpop.permute.xlu0 %3609
      %3611 = vrot.lane.b32.xlu0 %v2217, 17
      %v3612 = vpop.permute.xlu0 %3611
      %v3613 = vsel %vm1960, %v3606, %v3610
      %v3614 = vsel %vm1960, %v3608, %v3612
      %v3615 = vsel %vm1960, %v3610, %v3606
      %v3616 = vsel %vm1960, %v3612, %v3608
      %v3617 = vmul.f32 %v3615, %v1968
      %v3618 = vmul.f32 %v3613, %v1972
      %v3619 = vmul.f32 %v3616, %v1968
      %v3620 = vmul.f32 %v3614, %v1972
      %3621 = vrot.lane.b32.xlu0 %v2218, 16
      %v3622 = vpop.permute.xlu0 %3621
      %3623 = vrot.lane.b32.xlu0 %v2216, 16
      %v3624 = vpop.permute.xlu0 %3623
      %3625 = vrot.lane.b32.xlu0 %v2219, 16
      %v3626 = vpop.permute.xlu0 %3625
      %3627 = vrot.lane.b32.xlu0 %v2217, 16
      %v3628 = vpop.permute.xlu0 %3627
      %v3629 = vsel %vm1981, %v3622, %v3626
      %v3630 = vsel %vm1981, %v3624, %v3628
      %v3631 = vsel %vm1981, %v3626, %v3622
      %v3632 = vsel %vm1981, %v3628, %v3624
      %v3633 = vmul.f32 %v3631, %v1990
      %v3634 = vmul.f32 %v3629, %v1994
      %v3635 = vmul.f32 %v3632, %v1990
      %v3636 = vmul.f32 %v3630, %v1994
      %3637 = vrot.lane.b32.xlu0 %v2218, 15
      %v3638 = vpop.permute.xlu0 %3637
      %3639 = vrot.lane.b32.xlu0 %v2216, 15
      %v3640 = vpop.permute.xlu0 %3639
      %3641 = vrot.lane.b32.xlu0 %v2219, 15
      %v3642 = vpop.permute.xlu0 %3641
      %3643 = vrot.lane.b32.xlu0 %v2217, 15
      %v3644 = vpop.permute.xlu0 %3643
      %v3645 = vsel %vm2003, %v3638, %v3642
      %v3646 = vsel %vm2003, %v3640, %v3644
      %v3647 = vsel %vm2003, %v3642, %v3638
      %v3648 = vsel %vm2003, %v3644, %v3640
      %v3649 = vmul.f32 %v3647, %v2012
      %v3650 = vmul.f32 %v3645, %v2016
      %v3651 = vmul.f32 %v3648, %v2012
      %v3652 = vmul.f32 %v3646, %v2016
      %3653 = vrot.lane.b32.xlu0 %v2218, 1
      %v3654 = vpop.permute.xlu0 %3653
      %3655 = vrot.lane.b32.xlu0 %v2216, 1
      %v3656 = vpop.permute.xlu0 %3655
      %3657 = vrot.lane.b32.xlu0 %v2219, 1
      %v3658 = vpop.permute.xlu0 %3657
      %3659 = vrot.lane.b32.xlu0 %v2217, 1
      %v3660 = vpop.permute.xlu0 %3659
      %v3661 = vsel %vm2025, %v3654, %v3658
      %v3662 = vsel %vm2025, %v3656, %v3660
      %v3663 = vsel %vm2025, %v3658, %v3654
      %v3664 = vsel %vm2025, %v3660, %v3656
      %v3665 = vmul.f32 %v3663, %v2034
      %v3666 = vmul.f32 %v3661, %v2038
      %v3667 = vmul.f32 %v3664, %v2034
      %v3668 = vmul.f32 %v3662, %v2038
      %3669 = vrot.lane.b32.xlu0 %v2218, 127
      %v3670 = vpop.permute.xlu0 %3669
      %3671 = vrot.lane.b32.xlu0 %v2216, 127
      %v3672 = vpop.permute.xlu0 %3671
      %3673 = vrot.lane.b32.xlu0 %v2219, 127
      %v3674 = vpop.permute.xlu0 %3673
      %3675 = vrot.lane.b32.xlu0 %v2217, 127
      %v3676 = vpop.permute.xlu0 %3675
      %v3677 = vsel %vm2047, %v3670, %v3674
      %v3678 = vsel %vm2047, %v3672, %v3676
      %v3679 = vsel %vm2047, %v3674, %v3670
      %v3680 = vsel %vm2047, %v3676, %v3672
      %v3681 = vmul.f32 %v3677, %v2056
      %v3682 = vmul.f32 %v3679, %v2060
      %v3683 = vmul.f32 %v3678, %v2056
      %v3684 = vmul.f32 %v3680, %v2060
      %3685 = vrot.lane.b32.xlu0 %v2218, 113
      %v3686 = vpop.permute.xlu0 %3685
      %3687 = vrot.lane.b32.xlu0 %v2216, 113
      %v3688 = vpop.permute.xlu0 %3687
      %3689 = vrot.lane.b32.xlu0 %v2219, 113
      %v3690 = vpop.permute.xlu0 %3689
      %3691 = vrot.lane.b32.xlu0 %v2217, 113
      %v3692 = vpop.permute.xlu0 %3691
      %v3693 = vsel %vm2069, %v3686, %v3690
      %v3694 = vsel %vm2069, %v3688, %v3692
      %v3695 = vsel %vm2069, %v3690, %v3686
      %v3696 = vsel %vm2069, %v3692, %v3688
      %v3697 = vmul.f32 %v3693, %v2078
      %v3698 = vmul.f32 %v3695, %v2082
      %v3699 = vmul.f32 %v3694, %v2078
      %v3700 = vmul.f32 %v3696, %v2082
      %3701 = vrot.lane.b32.xlu0 %v2218, 112
      %v3702 = vpop.permute.xlu0 %3701
      %3703 = vrot.lane.b32.xlu0 %v2216, 112
      %v3704 = vpop.permute.xlu0 %3703
      %3705 = vrot.lane.b32.xlu0 %v2219, 112
      %v3706 = vpop.permute.xlu0 %3705
      %3707 = vrot.lane.b32.xlu0 %v2217, 112
      %v3708 = vpop.permute.xlu0 %3707
      %v3709 = vsel %vm2091, %v3702, %v3706
      %v3710 = vsel %vm2091, %v3704, %v3708
      %v3711 = vsel %vm2091, %v3706, %v3702
      %v3712 = vsel %vm2091, %v3708, %v3704
      %v3713 = vmul.f32 %v3709, %v2100
      %v3714 = vmul.f32 %v3711, %v2104
      %v3715 = vmul.f32 %v3710, %v2100
      %v3716 = vmul.f32 %v3712, %v2104
      %3717 = vrot.lane.b32.xlu0 %v2218, 111
      %v3718 = vpop.permute.xlu0 %3717
      %3719 = vrot.lane.b32.xlu0 %v2216, 111
      %v3720 = vpop.permute.xlu0 %3719
      %3721 = vrot.lane.b32.xlu0 %v2219, 111
      %v3722 = vpop.permute.xlu0 %3721
      %3723 = vrot.lane.b32.xlu0 %v2217, 111
      %v3724 = vpop.permute.xlu0 %3723
      %v3725 = vsel %vm2113, %v3718, %v3722
      %v3726 = vsel %vm2113, %v3720, %v3724
      %v3727 = vsel %vm2113, %v3722, %v3718
      %v3728 = vsel %vm2113, %v3724, %v3720
      %v3729 = vmul.f32 %v3725, %v2122
      %v3730 = vmul.f32 %v3727, %v2126
      %v3731 = vmul.f32 %v3726, %v2122
      %v3732 = vmul.f32 %v3728, %v2126
      %v3733 = vpack.c.bf16 %v3619, %v3617
      %v3734 = vpack.c.bf16 %v3620, %v3618
      %v3735 = vpack.c.bf16 %v3635, %v3633
      %v3736 = vpack.c.bf16 %v3636, %v3634
      %v3737 = vpack.c.bf16 %v3651, %v3649
      %v3738 = vpack.c.bf16 %v3652, %v3650
      %v3739 = vpack.c.bf16 %v3667, %v3665
      %v3740 = vpack.c.bf16 %v3668, %v3666
      %v3741 = vpack.c.bf16 %v2216, %v2218
      %v3742 = vpack.c.bf16 %v2217, %v2219
      %v3743 = vpack.c.bf16 %v3683, %v3681
      %v3744 = vpack.c.bf16 %v3684, %v3682
      %v3745 = vpack.c.bf16 %v3699, %v3697
      %v3746 = vpack.c.bf16 %v3700, %v3698
      %v3747 = vpack.c.bf16 %v3715, %v3713
      %v3748 = vpack.c.bf16 %v3716, %v3714
      %v3749 = vpack.c.bf16 %v3731, %v3729
      %v3750 = vpack.c.bf16 %v3732, %v3730
      %v3751 = vld [vmem:[%s13] sm:$0xff]
      %v3752 = vld [vmem:[%s13 + $0x8] sm:$0xff]
      %v3753 = vld [vmem:[%s14] sm:$0xff]
      %v3754 = vld [vmem:[%s14 + $0x8] sm:$0xff]
      %3756 = vset.pattern.permute.xlu0 0
      %3757 = vperm.xlu0 %3756, %v3753
      %v3758 = vpop.permute.xlu0 %3757
      %3761 = vset.pattern.permute.xlu0 0
      %3762 = vperm.xlu0 %3761, %v3754
      %v3763 = vpop.permute.xlu0 %3762
      %v3767 = vunpack.c.l.b16 %v3751
      %v3768 = vunpack.c.h.b16 %v3751
      %v3769 = vunpack.c.l.b16 %v3752
      %v3770 = vunpack.c.h.b16 %v3752
      %v3771 = vpack.c.b16 %v3769, %v3767
      %v3772 = vpack.c.b16 %v3770, %v3768
      %vm3774 = vcmask 130048
      %v3776 = vsel %vm3774, %v3772, 0
      %3778 = vmatprep.subr.bf16.mxu0 %v3734
      %3779 = vmatpush1.bf16.msra.mxu0 %v3733
      %3780 = vmatprep.subr.bf16.mxu0 %v3736
      %3781 = vmatpush1.bf16.msra.mxu0 %v3735
      %3782 = vmatprep.subr.bf16.mxu0 %v3738
      %3783 = vmatpush1.bf16.msra.mxu0 %v3737
      %3784 = vmatprep.subr.bf16.mxu0 %v3740
      %3785 = vmatpush1.bf16.msra.mxu0 %v3739
      %3786 = vmatprep.subr.bf16.mxu0 %v3742
      %3787 = vmatpush1.bf16.msra.mxu0 %v3741
      %3788 = vmatprep.subr.bf16.mxu0 %v3744
      %3789 = vmatpush1.bf16.msra.mxu0 %v3743
      %3790 = vmatprep.subr.bf16.mxu0 %v3746
      %3791 = vmatpush1.bf16.msra.mxu0 %v3745
      %3792 = vmatprep.subr.bf16.mxu0 %v3748
      %3793 = vmatpush1.bf16.msra.mxu0 %v3747
      %3794 = vmatprep.subr.bf16.mxu0 %v3750
      %3795 = vmatpush1.bf16.msra.mxu0 %v3749
      %3796 = vmatprep.subr.bf16.mxu0 0
      %3797 = vmatpush1.bf16.msra.mxu0 0
      %3798 = vmatprep.subr.bf16.mxu0 0
      %3799 = vmatpush1.bf16.msra.mxu0 0
      %3800 = vmatprep.subr.bf16.mxu0 0
      %3801 = vmatpush1.bf16.msra.mxu0 0
      %3802 = vmatprep.subr.bf16.mxu0 0
      %3803 = vmatpush1.bf16.msra.mxu0 0
      %3804 = vmatprep.subr.bf16.mxu0 0
      %3805 = vmatpush1.bf16.msra.mxu0 0
      %3806 = vmatprep.subr.bf16.mxu0 0
      %3807 = vmatpush1.bf16.msra.mxu0 0
      %3808 = vmatprep.subr.bf16.mxu0 0
      %3809 = vmatpush1.bf16.msra.mxu0 0
      %3810 = vmatprep.mubr.bf16.mxu0 %v3776
      %3811 = vmatmul.mubr.bf16.gmra.mrb[0].mxu0 %v3771
      %v3812 = vpop.f32.mrb[0].mxu0
      %v3813 = vadd.f32 %v3758, %v3812
      %v3814 = vpop.f32.mrb[0].mxu0
      %v3815 = vadd.f32 %v3758, %v3814
      %v3816 = vpop.f32.mrb[0].mxu0
      %v3817 = vadd.f32 %v3763, %v3816
      %v3818 = vpop.f32.mrb[0].mxu0
      %v3819 = vadd.f32 %v3763, %v3818
      %3820 = vdwg.mxu0
      %v3821 = vmax.f32 %v3813, 0.0
      %v3822 = vmax.f32 %v3815, 0.0
      %v3823 = vmax.f32 %v3817, 0.0
      %v3824 = vmax.f32 %v3819, 0.0
      %v3825 = vpack.c.bf16 %v3823, %v3821
      %v3826 = vpack.c.bf16 %v3824, %v3822
      %3827 = vmatprep.subr.bf16.mxu0 %v1369
      %3828 = vmatpush1.bf16.msra.mxu0 %v1368
      %3829 = vmatprep.subr.bf16.mxu0 %v1377
      %3830 = vmatpush1.bf16.msra.mxu0 %v1376
      %3831 = vmatprep.subr.bf16.mxu0 %v1385
      %3832 = vmatpush1.bf16.msra.mxu0 %v1384
      %3833 = vmatprep.subr.bf16.mxu0 %v1393
      %3834 = vmatpush1.bf16.msra.mxu0 %v1392
      %3835 = vmatprep.subr.bf16.mxu0 %v1401
      %3836 = vmatpush1.bf16.msra.mxu0 %v1400
      %3837 = vmatprep.subr.bf16.mxu0 %v1409
      %3838 = vmatpush1.bf16.msra.mxu0 %v1408
      %3839 = vmatprep.subr.bf16.mxu0 %v1417
      %3840 = vmatpush1.bf16.msra.mxu0 %v1416
      %3841 = vmatprep.subr.bf16.mxu0 %v1425
      %3842 = vmatpush1.bf16.msra.mxu0 %v1424
      %3843 = vmatprep.subr.bf16.mxu0 %v1433
      %3844 = vmatpush1.bf16.msra.mxu0 %v1432
      %3845 = vmatprep.subr.bf16.mxu0 %v1441
      %3846 = vmatpush1.bf16.msra.mxu0 %v1440
      %3847 = vmatprep.subr.bf16.mxu0 %v1449
      %3848 = vmatpush1.bf16.msra.mxu0 %v1448
      %3849 = vmatprep.subr.bf16.mxu0 %v1457
      %3850 = vmatpush1.bf16.msra.mxu0 %v1456
      %3851 = vmatprep.subr.bf16.mxu0 %v1465
      %3852 = vmatpush1.bf16.msra.mxu0 %v1464
      %3853 = vmatprep.subr.bf16.mxu0 %v1473
      %3854 = vmatpush1.bf16.msra.mxu0 %v1472
      %3855 = vmatprep.subr.bf16.mxu0 %v1481
      %3856 = vmatpush1.bf16.msra.mxu0 %v1480
      %3857 = vmatprep.subr.bf16.mxu0 %v1489
      %3858 = vmatpush1.bf16.msra.mxu0 %v1488
      %3859 = vmatprep.mubr.bf16.mxu0 %v3826
      %3860 = vmatmul.mubr.bf16.gmra.mrb[0].mxu0 %v3825
      %v3861 = vpop.f32.mrb[0].mxu0
      %v3862 = vadd.f32 0.0, %v3861
      %v3863 = vpop.f32.mrb[0].mxu0
      %v3864 = vadd.f32 0.0, %v3863
      %v3865 = vpop.f32.mrb[0].mxu0
      %v3866 = vadd.f32 0.0, %v3865
      %v3867 = vpop.f32.mrb[0].mxu0
      %v3868 = vadd.f32 0.0, %v3867
      %3869 = vdwg.mxu0
      %3870 = vmatprep.subr.bf16.mxu0 %v1371
      %3871 = vmatpush1.bf16.msra.mxu0 %v1370
      %3872 = vmatprep.subr.bf16.mxu0 %v1379
      %3873 = vmatpush1.bf16.msra.mxu0 %v1378
      %3874 = vmatprep.subr.bf16.mxu0 %v1387
      %3875 = vmatpush1.bf16.msra.mxu0 %v1386
      %3876 = vmatprep.subr.bf16.mxu0 %v1395
      %3877 = vmatpush1.bf16.msra.mxu0 %v1394
      %3878 = vmatprep.subr.bf16.mxu0 %v1403
      %3879 = vmatpush1.bf16.msra.mxu0 %v1402
      %3880 = vmatprep.subr.bf16.mxu0 %v1411
      %3881 = vmatpush1.bf16.msra.mxu0 %v1410
      %3882 = vmatprep.subr.bf16.mxu0 %v1419
      %3883 = vmatpush1.bf16.msra.mxu0 %v1418
      %3884 = vmatprep.subr.bf16.mxu0 %v1427
      %3885 = vmatpush1.bf16.msra.mxu0 %v1426
      %3886 = vmatprep.subr.bf16.mxu0 %v1435
      %3887 = vmatpush1.bf16.msra.mxu0 %v1434
      %3888 = vmatprep.subr.bf16.mxu0 %v1443
      %3889 = vmatpush1.bf16.msra.mxu0 %v1442
      %3890 = vmatprep.subr.bf16.mxu0 %v1451
      %3891 = vmatpush1.bf16.msra.mxu0 %v1450
      %3892 = vmatprep.subr.bf16.mxu0 %v1459
      %3893 = vmatpush1.bf16.msra.mxu0 %v1458
      %3894 = vmatprep.subr.bf16.mxu0 %v1467
      %3895 = vmatpush1.bf16.msra.mxu0 %v1466
      %3896 = vmatprep.subr.bf16.mxu0 %v1475
      %3897 = vmatpush1.bf16.msra.mxu0 %v1474
      %3898 = vmatprep.subr.bf16.mxu0 %v1483
      %3899 = vmatpush1.bf16.msra.mxu0 %v1482
      %3900 = vmatprep.subr.bf16.mxu0 %v1491
      %3901 = vmatpush1.bf16.msra.mxu0 %v1490
      %3902 = vmatprep.mubr.bf16.mxu0 %v3826
      %3903 = vmatmul.mubr.bf16.gmra.mrb[0].mxu0 %v3825
      %v3904 = vpop.f32.mrb[0].mxu0
      %v3905 = vadd.f32 0.0, %v3904
      %v3906 = vpop.f32.mrb[0].mxu0
      %v3907 = vadd.f32 0.0, %v3906
      %v3908 = vpop.f32.mrb[0].mxu0
      %v3909 = vadd.f32 0.0, %v3908
      %v3910 = vpop.f32.mrb[0].mxu0
      %v3911 = vadd.f32 0.0, %v3910
      %3912 = vdwg.mxu0
      %3913 = vmatprep.subr.bf16.mxu0 %v1373
      %3914 = vmatpush1.bf16.msra.mxu0 %v1372
      %3915 = vmatprep.subr.bf16.mxu0 %v1381
      %3916 = vmatpush1.bf16.msra.mxu0 %v1380
      %3917 = vmatprep.subr.bf16.mxu0 %v1389
      %3918 = vmatpush1.bf16.msra.mxu0 %v1388
      %3919 = vmatprep.subr.bf16.mxu0 %v1397
      %3920 = vmatpush1.bf16.msra.mxu0 %v1396
      %3921 = vmatprep.subr.bf16.mxu0 %v1405
      %3922 = vmatpush1.bf16.msra.mxu0 %v1404
      %3923 = vmatprep.subr.bf16.mxu0 %v1413
      %3924 = vmatpush1.bf16.msra.mxu0 %v1412
      %3925 = vmatprep.subr.bf16.mxu0 %v1421
      %3926 = vmatpush1.bf16.msra.mxu0 %v1420
      %3927 = vmatprep.subr.bf16.mxu0 %v1429
      %3928 = vmatpush1.bf16.msra.mxu0 %v1428
      %3929 = vmatprep.subr.bf16.mxu0 %v1437
      %3930 = vmatpush1.bf16.msra.mxu0 %v1436
      %3931 = vmatprep.subr.bf16.mxu0 %v1445
      %3932 = vmatpush1.bf16.msra.mxu0 %v1444
      %3933 = vmatprep.subr.bf16.mxu0 %v1453
      %3934 = vmatpush1.bf16.msra.mxu0 %v1452
      %3935 = vmatprep.subr.bf16.mxu0 %v1461
      %3936 = vmatpush1.bf16.msra.mxu0 %v1460
      %3937 = vmatprep.subr.bf16.mxu0 %v1469
      %3938 = vmatpush1.bf16.msra.mxu0 %v1468
      %3939 = vmatprep.subr.bf16.mxu0 %v1477
      %3940 = vmatpush1.bf16.msra.mxu0 %v1476
      %3941 = vmatprep.subr.bf16.mxu0 %v1485
      %3942 = vmatpush1.bf16.msra.mxu0 %v1484
      %3943 = vmatprep.subr.bf16.mxu0 %v1493
      %3944 = vmatpush1.bf16.msra.mxu0 %v1492
      %3945 = vmatprep.mubr.bf16.mxu0 %v3826
      %3946 = vmatmul.mubr.bf16.gmra.mrb[0].mxu0 %v3825
      %v3947 = vpop.f32.mrb[0].mxu0
      %v3948 = vadd.f32 0.0, %v3947
      %v3949 = vpop.f32.mrb[0].mxu0
      %v3950 = vadd.f32 0.0, %v3949
      %v3951 = vpop.f32.mrb[0].mxu0
      %v3952 = vadd.f32 0.0, %v3951
      %v3953 = vpop.f32.mrb[0].mxu0
      %v3954 = vadd.f32 0.0, %v3953
      %3955 = vdwg.mxu0
      %3956 = vmatprep.subr.bf16.mxu0 %v1375
      %3957 = vmatpush1.bf16.msra.mxu0 %v1374
      %3958 = vmatprep.subr.bf16.mxu0 %v1383
      %3959 = vmatpush1.bf16.msra.mxu0 %v1382
      %3960 = vmatprep.subr.bf16.mxu0 %v1391
      %3961 = vmatpush1.bf16.msra.mxu0 %v1390
      %3962 = vmatprep.subr.bf16.mxu0 %v1399
      %3963 = vmatpush1.bf16.msra.mxu0 %v1398
      %3964 = vmatprep.subr.bf16.mxu0 %v1407
      %3965 = vmatpush1.bf16.msra.mxu0 %v1406
      %3966 = vmatprep.subr.bf16.mxu0 %v1415
      %3967 = vmatpush1.bf16.msra.mxu0 %v1414
      %3968 = vmatprep.subr.bf16.mxu0 %v1423
      %3969 = vmatpush1.bf16.msra.mxu0 %v1422
      %3970 = vmatprep.subr.bf16.mxu0 %v1431
      %3971 = vmatpush1.bf16.msra.mxu0 %v1430
      %3972 = vmatprep.subr.bf16.mxu0 %v1439
      %3973 = vmatpush1.bf16.msra.mxu0 %v1438
      %3974 = vmatprep.subr.bf16.mxu0 %v1447
      %3975 = vmatpush1.bf16.msra.mxu0 %v1446
      %3976 = vmatprep.subr.bf16.mxu0 %v1455
      %3977 = vmatpush1.bf16.msra.mxu0 %v1454
      %3978 = vmatprep.subr.bf16.mxu0 %v1463
      %3979 = vmatpush1.bf16.msra.mxu0 %v1462
      %3980 = vmatprep.subr.bf16.mxu0 %v1471
      %3981 = vmatpush1.bf16.msra.mxu0 %v1470
      %3982 = vmatprep.subr.bf16.mxu0 %v1479
      %3983 = vmatpush1.bf16.msra.mxu0 %v1478
      %3984 = vmatprep.subr.bf16.mxu0 %v1487
      %3985 = vmatpush1.bf16.msra.mxu0 %v1486
      %3986 = vmatprep.subr.bf16.mxu0 %v1495
      %3987 = vmatpush1.bf16.msra.mxu0 %v1494
      %3988 = vmatprep.mubr.bf16.mxu0 %v3826
      %3989 = vmatmul.mubr.bf16.gmra.mrb[0].mxu0 %v3825
      %v3990 = vpop.f32.mrb[0].mxu0
      %v3991 = vadd.f32 0.0, %v3990
      %v3992 = vpop.f32.mrb[0].mxu0
      %v3993 = vadd.f32 0.0, %v3992
      %v3994 = vpop.f32.mrb[0].mxu0
      %v3995 = vadd.f32 0.0, %v3994
      %v3996 = vpop.f32.mrb[0].mxu0
      %v3997 = vadd.f32 0.0, %v3996
      %3998 = vdwg.mxu0
      %3999 = vrot.lane.b32.xlu0 %v3862, 33
      %v4000 = vpop.permute.xlu0 %3999
      %4001 = vrot.lane.b32.xlu0 %v3866, 33
      %v4002 = vpop.permute.xlu0 %4001
      %4003 = vrot.lane.b32.xlu0 %v3864, 33
      %v4004 = vpop.permute.xlu0 %4003
      %4005 = vrot.lane.b32.xlu0 %v3868, 33
      %v4006 = vpop.permute.xlu0 %4005
      %4007 = vrot.lane.b32.xlu0 %v3905, 33
      %v4008 = vpop.permute.xlu0 %4007
      %4009 = vrot.lane.b32.xlu0 %v3909, 33
      %v4010 = vpop.permute.xlu0 %4009
      %4011 = vrot.lane.b32.xlu0 %v3907, 33
      %v4012 = vpop.permute.xlu0 %4011
      %4013 = vrot.lane.b32.xlu0 %v3911, 33
      %v4014 = vpop.permute.xlu0 %4013
      %4015 = vrot.lane.b32.xlu0 %v3948, 33
      %v4016 = vpop.permute.xlu0 %4015
      %4017 = vrot.lane.b32.xlu0 %v3952, 33
      %v4018 = vpop.permute.xlu0 %4017
      %4019 = vrot.lane.b32.xlu0 %v3950, 33
      %v4020 = vpop.permute.xlu0 %4019
      %4021 = vrot.lane.b32.xlu0 %v3954, 33
      %v4022 = vpop.permute.xlu0 %4021
      %4023 = vrot.lane.b32.xlu0 %v3991, 33
      %v4024 = vpop.permute.xlu0 %4023
      %4025 = vrot.lane.b32.xlu0 %v3995, 33
      %v4026 = vpop.permute.xlu0 %4025
      %4027 = vrot.lane.b32.xlu0 %v3993, 33
      %v4028 = vpop.permute.xlu0 %4027
      %4029 = vrot.lane.b32.xlu0 %v3997, 33
      %v4030 = vpop.permute.xlu0 %4029
      %v4031 = vsel %vm2236, %v4024, %v4028
      %v4032 = vsel %vm2236, %v4026, %v4030
      %v4033 = vsel %vm2236, %v4020, %v4024
      %v4034 = vsel %vm2236, %v4022, %v4026
      %v4035 = vsel %vm2236, %v4016, %v4020
      %v4036 = vsel %vm2236, %v4018, %v4022
      %v4037 = vsel %vm2236, %v4012, %v4016
      %v4038 = vsel %vm2236, %v4014, %v4018
      %v4039 = vsel %vm2236, %v4008, %v4012
      %v4040 = vsel %vm2236, %v4010, %v4014
      %v4041 = vsel %vm2236, %v4004, %v4008
      %v4042 = vsel %vm2236, %v4006, %v4010
      %v4043 = vsel %vm2236, %v4000, %v4004
      %v4044 = vsel %vm2236, %v4002, %v4006
      %v4045 = vsel %vm2236, %v4028, %v4000
      %v4046 = vsel %vm2236, %v4030, %v4002
      %v4047 = vmul.f32 %v4045, %v2252
      %v4048 = vmul.f32 %v4043, %v2256
      %v4049 = vmul.f32 %v4041, %v2260
      %v4050 = vmul.f32 %v4039, %v2264
      %v4051 = vmul.f32 %v4037, %v2268
      %v4052 = vmul.f32 %v4035, %v2272
      %v4053 = vmul.f32 %v4033, %v2276
      %v4054 = vmul.f32 %v4031, %v2280
      %v4055 = vmul.f32 %v4046, %v2252
      %v4056 = vmul.f32 %v4044, %v2256
      %v4057 = vmul.f32 %v4042, %v2260
      %v4058 = vmul.f32 %v4040, %v2264
      %v4059 = vmul.f32 %v4038, %v2268
      %v4060 = vmul.f32 %v4036, %v2272
      %v4061 = vmul.f32 %v4034, %v2276
      %v4062 = vmul.f32 %v4032, %v2280
      %4063 = vrot.lane.b32.xlu0 %v3862, 32
      %v4064 = vpop.permute.xlu0 %4063
      %4065 = vrot.lane.b32.xlu0 %v3866, 32
      %v4066 = vpop.permute.xlu0 %4065
      %4067 = vrot.lane.b32.xlu0 %v3864, 32
      %v4068 = vpop.permute.xlu0 %4067
      %4069 = vrot.lane.b32.xlu0 %v3868, 32
      %v4070 = vpop.permute.xlu0 %4069
      %4071 = vrot.lane.b32.xlu0 %v3905, 32
      %v4072 = vpop.permute.xlu0 %4071
      %4073 = vrot.lane.b32.xlu0 %v3909, 32
      %v4074 = vpop.permute.xlu0 %4073
      %4075 = vrot.lane.b32.xlu0 %v3907, 32
      %v4076 = vpop.permute.xlu0 %4075
      %4077 = vrot.lane.b32.xlu0 %v3911, 32
      %v4078 = vpop.permute.xlu0 %4077
      %4079 = vrot.lane.b32.xlu0 %v3948, 32
      %v4080 = vpop.permute.xlu0 %4079
      %4081 = vrot.lane.b32.xlu0 %v3952, 32
      %v4082 = vpop.permute.xlu0 %4081
      %4083 = vrot.lane.b32.xlu0 %v3950, 32
      %v4084 = vpop.permute.xlu0 %4083
      %4085 = vrot.lane.b32.xlu0 %v3954, 32
      %v4086 = vpop.permute.xlu0 %4085
      %4087 = vrot.lane.b32.xlu0 %v3991, 32
      %v4088 = vpop.permute.xlu0 %4087
      %4089 = vrot.lane.b32.xlu0 %v3995, 32
      %v4090 = vpop.permute.xlu0 %4089
      %4091 = vrot.lane.b32.xlu0 %v3993, 32
      %v4092 = vpop.permute.xlu0 %4091
      %4093 = vrot.lane.b32.xlu0 %v3997, 32
      %v4094 = vpop.permute.xlu0 %4093
      %v4095 = vsel %vm2313, %v4088, %v4092
      %v4096 = vsel %vm2313, %v4090, %v4094
      %v4097 = vsel %vm2313, %v4084, %v4088
      %v4098 = vsel %vm2313, %v4086, %v4090
      %v4099 = vsel %vm2313, %v4080, %v4084
      %v4100 = vsel %vm2313, %v4082, %v4086
      %v4101 = vsel %vm2313, %v4076, %v4080
      %v4102 = vsel %vm2313, %v4078, %v4082
      %v4103 = vsel %vm2313, %v4072, %v4076
      %v4104 = vsel %vm2313, %v4074, %v4078
      %v4105 = vsel %vm2313, %v4068, %v4072
      %v4106 = vsel %vm2313, %v4070, %v4074
      %v4107 = vsel %vm2313, %v4064, %v4068
      %v4108 = vsel %vm2313, %v4066, %v4070
      %v4109 = vsel %vm2313, %v4092, %v4064
      %v4110 = vsel %vm2313, %v4094, %v4066
      %v4111 = vmul.f32 %v4109, %v2330
      %v4112 = vmul.f32 %v4107, %v2334
      %v4113 = vmul.f32 %v4105, %v2338
      %v4114 = vmul.f32 %v4103, %v2342
      %v4115 = vmul.f32 %v4101, %v2346
      %v4116 = vmul.f32 %v4099, %v2350
      %v4117 = vmul.f32 %v4097, %v2354
      %v4118 = vmul.f32 %v4095, %v2358
      %v4119 = vmul.f32 %v4110, %v2330
      %v4120 = vmul.f32 %v4108, %v2334
      %v4121 = vmul.f32 %v4106, %v2338
      %v4122 = vmul.f32 %v4104, %v2342
      %v4123 = vmul.f32 %v4102, %v2346
      %v4124 = vmul.f32 %v4100, %v2350
      %v4125 = vmul.f32 %v4098, %v2354
      %v4126 = vmul.f32 %v4096, %v2358
      %4127 = vrot.lane.b32.xlu0 %v3862, 31
      %v4128 = vpop.permute.xlu0 %4127
      %4129 = vrot.lane.b32.xlu0 %v3866, 31
      %v4130 = vpop.permute.xlu0 %4129
      %4131 = vrot.lane.b32.xlu0 %v3864, 31
      %v4132 = vpop.permute.xlu0 %4131
      %4133 = vrot.lane.b32.xlu0 %v3868, 31
      %v4134 = vpop.permute.xlu0 %4133
      %4135 = vrot.lane.b32.xlu0 %v3905, 31
      %v4136 = vpop.permute.xlu0 %4135
      %4137 = vrot.lane.b32.xlu0 %v3909, 31
      %v4138 = vpop.permute.xlu0 %4137
      %4139 = vrot.lane.b32.xlu0 %v3907, 31
      %v4140 = vpop.permute.xlu0 %4139
      %4141 = vrot.lane.b32.xlu0 %v3911, 31
      %v4142 = vpop.permute.xlu0 %4141
      %4143 = vrot.lane.b32.xlu0 %v3948, 31
      %v4144 = vpop.permute.xlu0 %4143
      %4145 = vrot.lane.b32.xlu0 %v3952, 31
      %v4146 = vpop.permute.xlu0 %4145
      %4147 = vrot.lane.b32.xlu0 %v3950, 31
      %v4148 = vpop.permute.xlu0 %4147
      %4149 = vrot.lane.b32.xlu0 %v3954, 31
      %v4150 = vpop.permute.xlu0 %4149
      %4151 = vrot.lane.b32.xlu0 %v3991, 31
      %v4152 = vpop.permute.xlu0 %4151
      %4153 = vrot.lane.b32.xlu0 %v3995, 31
      %v4154 = vpop.permute.xlu0 %4153
      %4155 = vrot.lane.b32.xlu0 %v3993, 31
      %v4156 = vpop.permute.xlu0 %4155
      %4157 = vrot.lane.b32.xlu0 %v3997, 31
      %v4158 = vpop.permute.xlu0 %4157
      %v4159 = vsel %vm2391, %v4152, %v4156
      %v4160 = vsel %vm2391, %v4154, %v4158
      %v4161 = vsel %vm2391, %v4148, %v4152
      %v4162 = vsel %vm2391, %v4150, %v4154
      %v4163 = vsel %vm2391, %v4144, %v4148
      %v4164 = vsel %vm2391, %v4146, %v4150
      %v4165 = vsel %vm2391, %v4140, %v4144
      %v4166 = vsel %vm2391, %v4142, %v4146
      %v4167 = vsel %vm2391, %v4136, %v4140
      %v4168 = vsel %vm2391, %v4138, %v4142
      %v4169 = vsel %vm2391, %v4132, %v4136
      %v4170 = vsel %vm2391, %v4134, %v4138
      %v4171 = vsel %vm2391, %v4128, %v4132
      %v4172 = vsel %vm2391, %v4130, %v4134
      %v4173 = vsel %vm2391, %v4156, %v4128
      %v4174 = vsel %vm2391, %v4158, %v4130
      %v4175 = vmul.f32 %v4173, %v2408
      %v4176 = vmul.f32 %v4171, %v2412
      %v4177 = vmul.f32 %v4169, %v2416
      %v4178 = vmul.f32 %v4167, %v2420
      %v4179 = vmul.f32 %v4165, %v2424
      %v4180 = vmul.f32 %v4163, %v2428
      %v4181 = vmul.f32 %v4161, %v2432
      %v4182 = vmul.f32 %v4159, %v2436
      %v4183 = vmul.f32 %v4174, %v2408
      %v4184 = vmul.f32 %v4172, %v2412
      %v4185 = vmul.f32 %v4170, %v2416
      %v4186 = vmul.f32 %v4168, %v2420
      %v4187 = vmul.f32 %v4166, %v2424
      %v4188 = vmul.f32 %v4164, %v2428
      %v4189 = vmul.f32 %v4162, %v2432
      %v4190 = vmul.f32 %v4160, %v2436
      %4191 = vrot.lane.b32.xlu0 %v3862, 1
      %v4192 = vpop.permute.xlu0 %4191
      %4193 = vrot.lane.b32.xlu0 %v3866, 1
      %v4194 = vpop.permute.xlu0 %4193
      %4195 = vrot.lane.b32.xlu0 %v3864, 1
      %v4196 = vpop.permute.xlu0 %4195
      %4197 = vrot.lane.b32.xlu0 %v3868, 1
      %v4198 = vpop.permute.xlu0 %4197
      %4199 = vrot.lane.b32.xlu0 %v3905, 1
      %v4200 = vpop.permute.xlu0 %4199
      %4201 = vrot.lane.b32.xlu0 %v3909, 1
      %v4202 = vpop.permute.xlu0 %4201
      %4203 = vrot.lane.b32.xlu0 %v3907, 1
      %v4204 = vpop.permute.xlu0 %4203
      %4205 = vrot.lane.b32.xlu0 %v3911, 1
      %v4206 = vpop.permute.xlu0 %4205
      %4207 = vrot.lane.b32.xlu0 %v3948, 1
      %v4208 = vpop.permute.xlu0 %4207
      %4209 = vrot.lane.b32.xlu0 %v3952, 1
      %v4210 = vpop.permute.xlu0 %4209
      %4211 = vrot.lane.b32.xlu0 %v3950, 1
      %v4212 = vpop.permute.xlu0 %4211
      %4213 = vrot.lane.b32.xlu0 %v3954, 1
      %v4214 = vpop.permute.xlu0 %4213
      %4215 = vrot.lane.b32.xlu0 %v3991, 1
      %v4216 = vpop.permute.xlu0 %4215
      %4217 = vrot.lane.b32.xlu0 %v3995, 1
      %v4218 = vpop.permute.xlu0 %4217
      %4219 = vrot.lane.b32.xlu0 %v3993, 1
      %v4220 = vpop.permute.xlu0 %4219
      %4221 = vrot.lane.b32.xlu0 %v3997, 1
      %v4222 = vpop.permute.xlu0 %4221
      %v4223 = vsel %vm2025, %v4216, %v4220
      %v4224 = vsel %vm2025, %v4218, %v4222
      %v4225 = vsel %vm2025, %v4212, %v4216
      %v4226 = vsel %vm2025, %v4214, %v4218
      %v4227 = vsel %vm2025, %v4208, %v4212
      %v4228 = vsel %vm2025, %v4210, %v4214
      %v4229 = vsel %vm2025, %v4204, %v4208
      %v4230 = vsel %vm2025, %v4206, %v4210
      %v4231 = vsel %vm2025, %v4200, %v4204
      %v4232 = vsel %vm2025, %v4202, %v4206
      %v4233 = vsel %vm2025, %v4196, %v4200
      %v4234 = vsel %vm2025, %v4198, %v4202
      %v4235 = vsel %vm2025, %v4192, %v4196
      %v4236 = vsel %vm2025, %v4194, %v4198
      %v4237 = vsel %vm2025, %v4220, %v4192
      %v4238 = vsel %vm2025, %v4222, %v4194
      %v4239 = vmul.f32 %v4237, %v2485
      %v4240 = vmul.f32 %v4235, %v2489
      %v4241 = vmul.f32 %v4233, %v2493
      %v4242 = vmul.f32 %v4231, %v2497
      %v4243 = vmul.f32 %v4229, %v2501
      %v4244 = vmul.f32 %v4227, %v2505
      %v4245 = vmul.f32 %v4225, %v2509
      %v4246 = vmul.f32 %v4223, %v2513
      %v4247 = vmul.f32 %v4238, %v2485
      %v4248 = vmul.f32 %v4236, %v2489
      %v4249 = vmul.f32 %v4234, %v2493
      %v4250 = vmul.f32 %v4232, %v2497
      %v4251 = vmul.f32 %v4230, %v2501
      %v4252 = vmul.f32 %v4228, %v2505
      %v4253 = vmul.f32 %v4226, %v2509
      %v4254 = vmul.f32 %v4224, %v2513
      %4255 = vrot.lane.b32.xlu0 %v3862, 127
      %v4256 = vpop.permute.xlu0 %4255
      %4257 = vrot.lane.b32.xlu0 %v3866, 127
      %v4258 = vpop.permute.xlu0 %4257
      %4259 = vrot.lane.b32.xlu0 %v3864, 127
      %v4260 = vpop.permute.xlu0 %4259
      %4261 = vrot.lane.b32.xlu0 %v3868, 127
      %v4262 = vpop.permute.xlu0 %4261
      %4263 = vrot.lane.b32.xlu0 %v3905, 127
      %v4264 = vpop.permute.xlu0 %4263
      %4265 = vrot.lane.b32.xlu0 %v3909, 127
      %v4266 = vpop.permute.xlu0 %4265
      %4267 = vrot.lane.b32.xlu0 %v3907, 127
      %v4268 = vpop.permute.xlu0 %4267
      %4269 = vrot.lane.b32.xlu0 %v3911, 127
      %v4270 = vpop.permute.xlu0 %4269
      %4271 = vrot.lane.b32.xlu0 %v3948, 127
      %v4272 = vpop.permute.xlu0 %4271
      %4273 = vrot.lane.b32.xlu0 %v3952, 127
      %v4274 = vpop.permute.xlu0 %4273
      %4275 = vrot.lane.b32.xlu0 %v3950, 127
      %v4276 = vpop.permute.xlu0 %4275
      %4277 = vrot.lane.b32.xlu0 %v3954, 127
      %v4278 = vpop.permute.xlu0 %4277
      %4279 = vrot.lane.b32.xlu0 %v3991, 127
      %v4280 = vpop.permute.xlu0 %4279
      %4281 = vrot.lane.b32.xlu0 %v3995, 127
      %v4282 = vpop.permute.xlu0 %4281
      %4283 = vrot.lane.b32.xlu0 %v3993, 127
      %v4284 = vpop.permute.xlu0 %4283
      %4285 = vrot.lane.b32.xlu0 %v3997, 127
      %v4286 = vpop.permute.xlu0 %4285
      %v4287 = vsel %vm2047, %v4280, %v4284
      %v4288 = vsel %vm2047, %v4282, %v4286
      %v4289 = vsel %vm2047, %v4276, %v4280
      %v4290 = vsel %vm2047, %v4278, %v4282
      %v4291 = vsel %vm2047, %v4272, %v4276
      %v4292 = vsel %vm2047, %v4274, %v4278
      %v4293 = vsel %vm2047, %v4268, %v4272
      %v4294 = vsel %vm2047, %v4270, %v4274
      %v4295 = vsel %vm2047, %v4264, %v4268
      %v4296 = vsel %vm2047, %v4266, %v4270
      %v4297 = vsel %vm2047, %v4260, %v4264
      %v4298 = vsel %vm2047, %v4262, %v4266
      %v4299 = vsel %vm2047, %v4256, %v4260
      %v4300 = vsel %vm2047, %v4258, %v4262
      %v4301 = vsel %vm2047, %v4284, %v4256
      %v4302 = vsel %vm2047, %v4286, %v4258
      %v4303 = vmul.f32 %v4299, %v2562
      %v4304 = vmul.f32 %v4297, %v2566
      %v4305 = vmul.f32 %v4295, %v2570
      %v4306 = vmul.f32 %v4293, %v2574
      %v4307 = vmul.f32 %v4291, %v2578
      %v4308 = vmul.f32 %v4289, %v2582
      %v4309 = vmul.f32 %v4287, %v2586
      %v4310 = vmul.f32 %v4301, %v2590
      %v4311 = vmul.f32 %v4300, %v2562
      %v4312 = vmul.f32 %v4298, %v2566
      %v4313 = vmul.f32 %v4296, %v2570
      %v4314 = vmul.f32 %v4294, %v2574
      %v4315 = vmul.f32 %v4292, %v2578
      %v4316 = vmul.f32 %v4290, %v2582
      %v4317 = vmul.f32 %v4288, %v2586
      %v4318 = vmul.f32 %v4302, %v2590
      %4319 = vrot.lane.b32.xlu0 %v3862, 97
      %v4320 = vpop.permute.xlu0 %4319
      %4321 = vrot.lane.b32.xlu0 %v3866, 97
      %v4322 = vpop.permute.xlu0 %4321
      %4323 = vrot.lane.b32.xlu0 %v3864, 97
      %v4324 = vpop.permute.xlu0 %4323
      %4325 = vrot.lane.b32.xlu0 %v3868, 97
      %v4326 = vpop.permute.xlu0 %4325
      %4327 = vrot.lane.b32.xlu0 %v3905, 97
      %v4328 = vpop.permute.xlu0 %4327
      %4329 = vrot.lane.b32.xlu0 %v3909, 97
      %v4330 = vpop.permute.xlu0 %4329
      %4331 = vrot.lane.b32.xlu0 %v3907, 97
      %v4332 = vpop.permute.xlu0 %4331
      %4333 = vrot.lane.b32.xlu0 %v3911, 97
      %v4334 = vpop.permute.xlu0 %4333
      %4335 = vrot.lane.b32.xlu0 %v3948, 97
      %v4336 = vpop.permute.xlu0 %4335
      %4337 = vrot.lane.b32.xlu0 %v3952, 97
      %v4338 = vpop.permute.xlu0 %4337
      %4339 = vrot.lane.b32.xlu0 %v3950, 97
      %v4340 = vpop.permute.xlu0 %4339
      %4341 = vrot.lane.b32.xlu0 %v3954, 97
      %v4342 = vpop.permute.xlu0 %4341
      %4343 = vrot.lane.b32.xlu0 %v3991, 97
      %v4344 = vpop.permute.xlu0 %4343
      %4345 = vrot.lane.b32.xlu0 %v3995, 97
      %v4346 = vpop.permute.xlu0 %4345
      %4347 = vrot.lane.b32.xlu0 %v3993, 97
      %v4348 = vpop.permute.xlu0 %4347
      %4349 = vrot.lane.b32.xlu0 %v3997, 97
      %v4350 = vpop.permute.xlu0 %4349
      %v4351 = vsel %vm2623, %v4344, %v4348
      %v4352 = vsel %vm2623, %v4346, %v4350
      %v4353 = vsel %vm2623, %v4340, %v4344
      %v4354 = vsel %vm2623, %v4342, %v4346
      %v4355 = vsel %vm2623, %v4336, %v4340
      %v4356 = vsel %vm2623, %v4338, %v4342
      %v4357 = vsel %vm2623, %v4332, %v4336
      %v4358 = vsel %vm2623, %v4334, %v4338
      %v4359 = vsel %vm2623, %v4328, %v4332
      %v4360 = vsel %vm2623, %v4330, %v4334
      %v4361 = vsel %vm2623, %v4324, %v4328
      %v4362 = vsel %vm2623, %v4326, %v4330
      %v4363 = vsel %vm2623, %v4320, %v4324
      %v4364 = vsel %vm2623, %v4322, %v4326
      %v4365 = vsel %vm2623, %v4348, %v4320
      %v4366 = vsel %vm2623, %v4350, %v4322
      %v4367 = vmul.f32 %v4363, %v2640
      %v4368 = vmul.f32 %v4361, %v2644
      %v4369 = vmul.f32 %v4359, %v2648
      %v4370 = vmul.f32 %v4357, %v2652
      %v4371 = vmul.f32 %v4355, %v2656
      %v4372 = vmul.f32 %v4353, %v2660
      %v4373 = vmul.f32 %v4351, %v2664
      %v4374 = vmul.f32 %v4365, %v2668
      %v4375 = vmul.f32 %v4364, %v2640
      %v4376 = vmul.f32 %v4362, %v2644
      %v4377 = vmul.f32 %v4360, %v2648
      %v4378 = vmul.f32 %v4358, %v2652
      %v4379 = vmul.f32 %v4356, %v2656
      %v4380 = vmul.f32 %v4354, %v2660
      %v4381 = vmul.f32 %v4352, %v2664
      %v4382 = vmul.f32 %v4366, %v2668
      %4383 = vrot.lane.b32.xlu0 %v3862, 96
      %v4384 = vpop.permute.xlu0 %4383
      %4385 = vrot.lane.b32.xlu0 %v3866, 96
      %v4386 = vpop.permute.xlu0 %4385
      %4387 = vrot.lane.b32.xlu0 %v3864, 96
      %v4388 = vpop.permute.xlu0 %4387
      %4389 = vrot.lane.b32.xlu0 %v3868, 96
      %v4390 = vpop.permute.xlu0 %4389
      %4391 = vrot.lane.b32.xlu0 %v3905, 96
      %v4392 = vpop.permute.xlu0 %4391
      %4393 = vrot.lane.b32.xlu0 %v3909, 96
      %v4394 = vpop.permute.xlu0 %4393
      %4395 = vrot.lane.b32.xlu0 %v3907, 96
      %v4396 = vpop.permute.xlu0 %4395
      %4397 = vrot.lane.b32.xlu0 %v3911, 96
      %v4398 = vpop.permute.xlu0 %4397
      %4399 = vrot.lane.b32.xlu0 %v3948, 96
      %v4400 = vpop.permute.xlu0 %4399
      %4401 = vrot.lane.b32.xlu0 %v3952, 96
      %v4402 = vpop.permute.xlu0 %4401
      %4403 = vrot.lane.b32.xlu0 %v3950, 96
      %v4404 = vpop.permute.xlu0 %4403
      %4405 = vrot.lane.b32.xlu0 %v3954, 96
      %v4406 = vpop.permute.xlu0 %4405
      %4407 = vrot.lane.b32.xlu0 %v3991, 96
      %v4408 = vpop.permute.xlu0 %4407
      %4409 = vrot.lane.b32.xlu0 %v3995, 96
      %v4410 = vpop.permute.xlu0 %4409
      %4411 = vrot.lane.b32.xlu0 %v3993, 96
      %v4412 = vpop.permute.xlu0 %4411
      %4413 = vrot.lane.b32.xlu0 %v3997, 96
      %v4414 = vpop.permute.xlu0 %4413
      %v4415 = vsel %vm2701, %v4408, %v4412
      %v4416 = vsel %vm2701, %v4410, %v4414
      %v4417 = vsel %vm2701, %v4404, %v4408
      %v4418 = vsel %vm2701, %v4406, %v4410
      %v4419 = vsel %vm2701, %v4400, %v4404
      %v4420 = vsel %vm2701, %v4402, %v4406
      %v4421 = vsel %vm2701, %v4396, %v4400
      %v4422 = vsel %vm2701, %v4398, %v4402
      %v4423 = vsel %vm2701, %v4392, %v4396
      %v4424 = vsel %vm2701, %v4394, %v4398
      %v4425 = vsel %vm2701, %v4388, %v4392
      %v4426 = vsel %vm2701, %v4390, %v4394
      %v4427 = vsel %vm2701, %v4384, %v4388
      %v4428 = vsel %vm2701, %v4386, %v4390
      %v4429 = vsel %vm2701, %v4412, %v4384
      %v4430 = vsel %vm2701, %v4414, %v4386
      %v4431 = vmul.f32 %v4427, %v2718
      %v4432 = vmul.f32 %v4425, %v2722
      %v4433 = vmul.f32 %v4423, %v2726
      %v4434 = vmul.f32 %v4421, %v2730
      %v4435 = vmul.f32 %v4419, %v2734
      %v4436 = vmul.f32 %v4417, %v2738
      %v4437 = vmul.f32 %v4415, %v2742
      %v4438 = vmul.f32 %v4429, %v2746
      %v4439 = vmul.f32 %v4428, %v2718
      %v4440 = vmul.f32 %v4426, %v2722
      %v4441 = vmul.f32 %v4424, %v2726
      %v4442 = vmul.f32 %v4422, %v2730
      %v4443 = vmul.f32 %v4420, %v2734
      %v4444 = vmul.f32 %v4418, %v2738
      %v4445 = vmul.f32 %v4416, %v2742
      %v4446 = vmul.f32 %v4430, %v2746
      %4447 = vrot.lane.b32.xlu0 %v3862, 95
      %v4448 = vpop.permute.xlu0 %4447
      %4449 = vrot.lane.b32.xlu0 %v3866, 95
      %v4450 = vpop.permute.xlu0 %4449
      %4451 = vrot.lane.b32.xlu0 %v3864, 95
      %v4452 = vpop.permute.xlu0 %4451
      %4453 = vrot.lane.b32.xlu0 %v3868, 95
      %v4454 = vpop.permute.xlu0 %4453
      %4455 = vrot.lane.b32.xlu0 %v3905, 95
      %v4456 = vpop.permute.xlu0 %4455
      %4457 = vrot.lane.b32.xlu0 %v3909, 95
      %v4458 = vpop.permute.xlu0 %4457
      %4459 = vrot.lane.b32.xlu0 %v3907, 95
      %v4460 = vpop.permute.xlu0 %4459
      %4461 = vrot.lane.b32.xlu0 %v3911, 95
      %v4462 = vpop.permute.xlu0 %4461
      %4463 = vrot.lane.b32.xlu0 %v3948, 95
      %v4464 = vpop.permute.xlu0 %4463
      %4465 = vrot.lane.b32.xlu0 %v3952, 95
      %v4466 = vpop.permute.xlu0 %4465
      %4467 = vrot.lane.b32.xlu0 %v3950, 95
      %v4468 = vpop.permute.xlu0 %4467
      %4469 = vrot.lane.b32.xlu0 %v3954, 95
      %v4470 = vpop.permute.xlu0 %4469
      %4471 = vrot.lane.b32.xlu0 %v3991, 95
      %v4472 = vpop.permute.xlu0 %4471
      %4473 = vrot.lane.b32.xlu0 %v3995, 95
      %v4474 = vpop.permute.xlu0 %4473
      %4475 = vrot.lane.b32.xlu0 %v3993, 95
      %v4476 = vpop.permute.xlu0 %4475
      %4477 = vrot.lane.b32.xlu0 %v3997, 95
      %v4478 = vpop.permute.xlu0 %4477
      %v4479 = vsel %vm2779, %v4472, %v4476
      %v4480 = vsel %vm2779, %v4474, %v4478
      %v4481 = vsel %vm2779, %v4468, %v4472
      %v4482 = vsel %vm2779, %v4470, %v4474
      %v4483 = vsel %vm2779, %v4464, %v4468
      %v4484 = vsel %vm2779, %v4466, %v4470
      %v4485 = vsel %vm2779, %v4460, %v4464
      %v4486 = vsel %vm2779, %v4462, %v4466
      %v4487 = vsel %vm2779, %v4456, %v4460
      %v4488 = vsel %vm2779, %v4458, %v4462
      %v4489 = vsel %vm2779, %v4452, %v4456
      %v4490 = vsel %vm2779, %v4454, %v4458
      %v4491 = vsel %vm2779, %v4448, %v4452
      %v4492 = vsel %vm2779, %v4450, %v4454
      %v4493 = vsel %vm2779, %v4476, %v4448
      %v4494 = vsel %vm2779, %v4478, %v4450
      %v4495 = vmul.f32 %v4491, %v2796
      %v4496 = vmul.f32 %v4489, %v2800
      %v4497 = vmul.f32 %v4487, %v2804
      %v4498 = vmul.f32 %v4485, %v2808
      %v4499 = vmul.f32 %v4483, %v2812
      %v4500 = vmul.f32 %v4481, %v2816
      %v4501 = vmul.f32 %v4479, %v2820
      %v4502 = vmul.f32 %v4493, %v2824
      %v4503 = vmul.f32 %v4492, %v2796
      %v4504 = vmul.f32 %v4490, %v2800
      %v4505 = vmul.f32 %v4488, %v2804
      %v4506 = vmul.f32 %v4486, %v2808
      %v4507 = vmul.f32 %v4484, %v2812
      %v4508 = vmul.f32 %v4482, %v2816
      %v4509 = vmul.f32 %v4480, %v2820
      %v4510 = vmul.f32 %v4494, %v2824
      %v4511 = vpack.c.bf16 %v4055, %v4047
      %v4512 = vpack.c.bf16 %v4056, %v4048
      %v4513 = vpack.c.bf16 %v4057, %v4049
      %v4514 = vpack.c.bf16 %v4058, %v4050
      %v4515 = vpack.c.bf16 %v4059, %v4051
      %v4516 = vpack.c.bf16 %v4060, %v4052
      %v4517 = vpack.c.bf16 %v4061, %v4053
      %v4518 = vpack.c.bf16 %v4062, %v4054
      %v4519 = vpack.c.bf16 %v4119, %v4111
      %v4520 = vpack.c.bf16 %v4120, %v4112
      %v4521 = vpack.c.bf16 %v4121, %v4113
      %v4522 = vpack.c.bf16 %v4122, %v4114
      %v4523 = vpack.c.bf16 %v4123, %v4115
      %v4524 = vpack.c.bf16 %v4124, %v4116
      %v4525 = vpack.c.bf16 %v4125, %v4117
      %v4526 = vpack.c.bf16 %v4126, %v4118
      %v4527 = vpack.c.bf16 %v4183, %v4175
      %v4528 = vpack.c.bf16 %v4184, %v4176
      %v4529 = vpack.c.bf16 %v4185, %v4177
      %v4530 = vpack.c.bf16 %v4186, %v4178
      %v4531 = vpack.c.bf16 %v4187, %v4179
      %v4532 = vpack.c.bf16 %v4188, %v4180
      %v4533 = vpack.c.bf16 %v4189, %v4181
      %v4534 = vpack.c.bf16 %v4190, %v4182
      %v4535 = vpack.c.bf16 %v4247, %v4239
      %v4536 = vpack.c.bf16 %v4248, %v4240
      %v4537 = vpack.c.bf16 %v4249, %v4241
      %v4538 = vpack.c.bf16 %v4250, %v4242
      %v4539 = vpack.c.bf16 %v4251, %v4243
      %v4540 = vpack.c.bf16 %v4252, %v4244
      %v4541 = vpack.c.bf16 %v4253, %v4245
      %v4542 = vpack.c.bf16 %v4254, %v4246
      %v4543 = vpack.c.bf16 %v3866, %v3862
      %v4544 = vpack.c.bf16 %v3868, %v3864
      %v4545 = vpack.c.bf16 %v3909, %v3905
      %v4546 = vpack.c.bf16 %v3911, %v3907
      %v4547 = vpack.c.bf16 %v3952, %v3948
      %v4548 = vpack.c.bf16 %v3954, %v3950
      %v4549 = vpack.c.bf16 %v3995, %v3991
      %v4550 = vpack.c.bf16 %v3997, %v3993
      %v4551 = vpack.c.bf16 %v4311, %v4303
      %v4552 = vpack.c.bf16 %v4312, %v4304
      %v4553 = vpack.c.bf16 %v4313, %v4305
      %v4554 = vpack.c.bf16 %v4314, %v4306
      %v4555 = vpack.c.bf16 %v4315, %v4307
      %v4556 = vpack.c.bf16 %v4316, %v4308
      %v4557 = vpack.c.bf16 %v4317, %v4309
      %v4558 = vpack.c.bf16 %v4318, %v4310
      %v4559 = vpack.c.bf16 %v4375, %v4367
      %v4560 = vpack.c.bf16 %v4376, %v4368
      %v4561 = vpack.c.bf16 %v4377, %v4369
      %v4562 = vpack.c.bf16 %v4378, %v4370
      %v4563 = vpack.c.bf16 %v4379, %v4371
      %v4564 = vpack.c.bf16 %v4380, %v4372
      %v4565 = vpack.c.bf16 %v4381, %v4373
      %v4566 = vpack.c.bf16 %v4382, %v4374
      %v4567 = vpack.c.bf16 %v4439, %v4431
      %v4568 = vpack.c.bf16 %v4440, %v4432
      %v4569 = vpack.c.bf16 %v4441, %v4433
      %v4570 = vpack.c.bf16 %v4442, %v4434
      %v4571 = vpack.c.bf16 %v4443, %v4435
      %v4572 = vpack.c.bf16 %v4444, %v4436
      %v4573 = vpack.c.bf16 %v4445, %v4437
      %v4574 = vpack.c.bf16 %v4446, %v4438
      %v4575 = vpack.c.bf16 %v4503, %v4495
      %v4576 = vpack.c.bf16 %v4504, %v4496
      %v4577 = vpack.c.bf16 %v4505, %v4497
      %v4578 = vpack.c.bf16 %v4506, %v4498
      %v4579 = vpack.c.bf16 %v4507, %v4499
      %v4580 = vpack.c.bf16 %v4508, %v4500
      %v4581 = vpack.c.bf16 %v4509, %v4501
      %v4582 = vpack.c.bf16 %v4510, %v4502
      %v4583 = vld [vmem:[%s15] sm:$0xff]
      %v4584 = vld [vmem:[%s15 + $0x8] sm:$0xff]
      %v4585 = vld [vmem:[%s16] sm:$0xff]
      %v4586 = vld [vmem:[%s16 + $0x8] sm:$0xff]
      %4588 = vset.pattern.permute.xlu0 0
      %4589 = vperm.xlu0 %4588, %v4585
      %v4590 = vpop.permute.xlu0 %4589
      %4593 = vset.pattern.permute.xlu0 0
      %4594 = vperm.xlu0 %4593, %v4586
      %v4595 = vpop.permute.xlu0 %4594
      %v4599 = vunpack.c.l.b16 %v4583
      %v4600 = vunpack.c.h.b16 %v4583
      %v4601 = vunpack.c.l.b16 %v4584
      %v4602 = vunpack.c.h.b16 %v4584
      %v4603 = vpack.c.b16 %v4601, %v4599
      %v4604 = vpack.c.b16 %v4602, %v4600
      %v4607 = vsel %vm3774, %v4604, 0
      %4609 = vmatprep.subr.bf16.mxu0 %v4512
      %4610 = vmatpush1.bf16.msra.mxu0 %v4511
      %4611 = vmatprep.subr.bf16.mxu0 %v4520
      %4612 = vmatpush1.bf16.msra.mxu0 %v4519
      %4613 = vmatprep.subr.bf16.mxu0 %v4528
      %4614 = vmatpush1.bf16.msra.mxu0 %v4527
      %4615 = vmatprep.subr.bf16.mxu0 %v4536
      %4616 = vmatpush1.bf16.msra.mxu0 %v4535
      %4617 = vmatprep.subr.bf16.mxu0 %v4544
      %4618 = vmatpush1.bf16.msra.mxu0 %v4543
      %4619 = vmatprep.subr.bf16.mxu0 %v4552
      %4620 = vmatpush1.bf16.msra.mxu0 %v4551
      %4621 = vmatprep.subr.bf16.mxu0 %v4560
      %4622 = vmatpush1.bf16.msra.mxu0 %v4559
      %4623 = vmatprep.subr.bf16.mxu0 %v4568
      %4624 = vmatpush1.bf16.msra.mxu0 %v4567
      %4625 = vmatprep.subr.bf16.mxu0 %v4576
      %4626 = vmatpush1.bf16.msra.mxu0 %v4575
      %4627 = vmatprep.subr.bf16.mxu0 0
      %4628 = vmatpush1.bf16.msra.mxu0 0
      %4629 = vmatprep.subr.bf16.mxu0 0
      %4630 = vmatpush1.bf16.msra.mxu0 0
      %4631 = vmatprep.subr.bf16.mxu0 0
      %4632 = vmatpush1.bf16.msra.mxu0 0
      %4633 = vmatprep.subr.bf16.mxu0 0
      %4634 = vmatpush1.bf16.msra.mxu0 0
      %4635 = vmatprep.subr.bf16.mxu0 0
      %4636 = vmatpush1.bf16.msra.mxu0 0
      %4637 = vmatprep.subr.bf16.mxu0 0
      %4638 = vmatpush1.bf16.msra.mxu0 0
      %4639 = vmatprep.subr.bf16.mxu0 0
      %4640 = vmatpush1.bf16.msra.mxu0 0
      %4641 = vmatprep.mubr.bf16.mxu0 %v4607
      %4642 = vmatmul.mubr.bf16.gmra.mrb[0].mxu0 %v4603
      %v4643 = vpop.f32.mrb[0].mxu0
      %v4644 = vadd.f32 %v4590, %v4643
      %v4645 = vpop.f32.mrb[0].mxu0
      %v4646 = vadd.f32 %v4590, %v4645
      %v4647 = vpop.f32.mrb[0].mxu0
      %v4648 = vadd.f32 %v4595, %v4647
      %v4649 = vpop.f32.mrb[0].mxu0
      %v4650 = vadd.f32 %v4595, %v4649
      %4651 = vdwg.mxu0
      %4652 = vmatprep.subr.bf16.mxu0 %v4514
      %4653 = vmatpush1.bf16.msra.mxu0 %v4513
      %4654 = vmatprep.subr.bf16.mxu0 %v4522
      %4655 = vmatpush1.bf16.msra.mxu0 %v4521
      %4656 = vmatprep.subr.bf16.mxu0 %v4530
      %4657 = vmatpush1.bf16.msra.mxu0 %v4529
      %4658 = vmatprep.subr.bf16.mxu0 %v4538
      %4659 = vmatpush1.bf16.msra.mxu0 %v4537
      %4660 = vmatprep.subr.bf16.mxu0 %v4546
      %4661 = vmatpush1.bf16.msra.mxu0 %v4545
      %4662 = vmatprep.subr.bf16.mxu0 %v4554
      %4663 = vmatpush1.bf16.msra.mxu0 %v4553
      %4664 = vmatprep.subr.bf16.mxu0 %v4562
      %4665 = vmatpush1.bf16.msra.mxu0 %v4561
      %4666 = vmatprep.subr.bf16.mxu0 %v4570
      %4667 = vmatpush1.bf16.msra.mxu0 %v4569
      %4668 = vmatprep.subr.bf16.mxu0 %v4578
      %4669 = vmatpush1.bf16.msra.mxu0 %v4577
      %4670 = vmatprep.subr.bf16.mxu0 0
      %4671 = vmatpush1.bf16.msra.mxu0 0
      %4672 = vmatprep.subr.bf16.mxu0 0
      %4673 = vmatpush1.bf16.msra.mxu0 0
      %4674 = vmatprep.subr.bf16.mxu0 0
      %4675 = vmatpush1.bf16.msra.mxu0 0
      %4676 = vmatprep.subr.bf16.mxu0 0
      %4677 = vmatpush1.bf16.msra.mxu0 0
      %4678 = vmatprep.subr.bf16.mxu0 0
      %4679 = vmatpush1.bf16.msra.mxu0 0
      %4680 = vmatprep.subr.bf16.mxu0 0
      %4681 = vmatpush1.bf16.msra.mxu0 0
      %4682 = vmatprep.subr.bf16.mxu0 0
      %4683 = vmatpush1.bf16.msra.mxu0 0
      %4684 = vmatprep.mubr.bf16.mxu0 %v4607
      %4685 = vmatmul.mubr.bf16.gmra.mrb[0].mxu0 %v4603
      %v4686 = vpop.f32.mrb[0].mxu0
      %v4687 = vadd.f32 %v4590, %v4686
      %v4688 = vpop.f32.mrb[0].mxu0
      %v4689 = vadd.f32 %v4590, %v4688
      %v4690 = vpop.f32.mrb[0].mxu0
      %v4691 = vadd.f32 %v4595, %v4690
      %v4692 = vpop.f32.mrb[0].mxu0
      %v4693 = vadd.f32 %v4595, %v4692
      %4694 = vdwg.mxu0
      %4695 = vmatprep.subr.bf16.mxu0 %v4516
      %4696 = vmatpush1.bf16.msra.mxu0 %v4515
      %4697 = vmatprep.subr.bf16.mxu0 %v4524
      %4698 = vmatpush1.bf16.msra.mxu0 %v4523
      %4699 = vmatprep.subr.bf16.mxu0 %v4532
      %4700 = vmatpush1.bf16.msra.mxu0 %v4531
      %4701 = vmatprep.subr.bf16.mxu0 %v4540
      %4702 = vmatpush1.bf16.msra.mxu0 %v4539
      %4703 = vmatprep.subr.bf16.mxu0 %v4548
      %4704 = vmatpush1.bf16.msra.mxu0 %v4547
      %4705 = vmatprep.subr.bf16.mxu0 %v4556
      %4706 = vmatpush1.bf16.msra.mxu0 %v4555
      %4707 = vmatprep.subr.bf16.mxu0 %v4564
      %4708 = vmatpush1.bf16.msra.mxu0 %v4563
      %4709 = vmatprep.subr.bf16.mxu0 %v4572
      %4710 = vmatpush1.bf16.msra.mxu0 %v4571
      %4711 = vmatprep.subr.bf16.mxu0 %v4580
      %4712 = vmatpush1.bf16.msra.mxu0 %v4579
      %4713 = vmatprep.subr.bf16.mxu0 0
      %4714 = vmatpush1.bf16.msra.mxu0 0
      %4715 = vmatprep.subr.bf16.mxu0 0
      %4716 = vmatpush1.bf16.msra.mxu0 0
      %4717 = vmatprep.subr.bf16.mxu0 0
      %4718 = vmatpush1.bf16.msra.mxu0 0
      %4719 = vmatprep.subr.bf16.mxu0 0
      %4720 = vmatpush1.bf16.msra.mxu0 0
      %4721 = vmatprep.subr.bf16.mxu0 0
      %4722 = vmatpush1.bf16.msra.mxu0 0
      %4723 = vmatprep.subr.bf16.mxu0 0
      %4724 = vmatpush1.bf16.msra.mxu0 0
      %4725 = vmatprep.subr.bf16.mxu0 0
      %4726 = vmatpush1.bf16.msra.mxu0 0
      %4727 = vmatprep.mubr.bf16.mxu0 %v4607
      %4728 = vmatmul.mubr.bf16.gmra.mrb[0].mxu0 %v4603
      %v4729 = vpop.f32.mrb[0].mxu0
      %v4730 = vadd.f32 %v4590, %v4729
      %v4731 = vpop.f32.mrb[0].mxu0
      %v4732 = vadd.f32 %v4590, %v4731
      %v4733 = vpop.f32.mrb[0].mxu0
      %v4734 = vadd.f32 %v4595, %v4733
      %v4735 = vpop.f32.mrb[0].mxu0
      %v4736 = vadd.f32 %v4595, %v4735
      %4737 = vdwg.mxu0
      %4738 = vmatprep.subr.bf16.mxu0 %v4518
      %4739 = vmatpush1.bf16.msra.mxu0 %v4517
      %4740 = vmatprep.subr.bf16.mxu0 %v4526
      %4741 = vmatpush1.bf16.msra.mxu0 %v4525
      %4742 = vmatprep.subr.bf16.mxu0 %v4534
      %4743 = vmatpush1.bf16.msra.mxu0 %v4533
      %4744 = vmatprep.subr.bf16.mxu0 %v4542
      %4745 = vmatpush1.bf16.msra.mxu0 %v4541
      %4746 = vmatprep.subr.bf16.mxu0 %v4550
      %4747 = vmatpush1.bf16.msra.mxu0 %v4549
      %4748 = vmatprep.subr.bf16.mxu0 %v4558
      %4749 = vmatpush1.bf16.msra.mxu0 %v4557
      %4750 = vmatprep.subr.bf16.mxu0 %v4566
      %4751 = vmatpush1.bf16.msra.mxu0 %v4565
      %4752 = vmatprep.subr.bf16.mxu0 %v4574
      %4753 = vmatpush1.bf16.msra.mxu0 %v4573
      %4754 = vmatprep.subr.bf16.mxu0 %v4582
      %4755 = vmatpush1.bf16.msra.mxu0 %v4581
      %4756 = vmatprep.subr.bf16.mxu0 0
      %4757 = vmatpush1.bf16.msra.mxu0 0
      %4758 = vmatprep.subr.bf16.mxu0 0
      %4759 = vmatpush1.bf16.msra.mxu0 0
      %4760 = vmatprep.subr.bf16.mxu0 0
      %4761 = vmatpush1.bf16.msra.mxu0 0
      %4762 = vmatprep.subr.bf16.mxu0 0
      %4763 = vmatpush1.bf16.msra.mxu0 0
      %4764 = vmatprep.subr.bf16.mxu0 0
      %4765 = vmatpush1.bf16.msra.mxu0 0
      %4766 = vmatprep.subr.bf16.mxu0 0
      %4767 = vmatpush1.bf16.msra.mxu0 0
      %4768 = vmatprep.subr.bf16.mxu0 0
      %4769 = vmatpush1.bf16.msra.mxu0 0
      %4770 = vmatprep.mubr.bf16.mxu0 %v4607
      %4771 = vmatmul.mubr.bf16.gmra.mrb[0].mxu0 %v4603
      %v4772 = vpop.f32.mrb[0].mxu0
      %v4773 = vadd.f32 %v4590, %v4772
      %v4774 = vpop.f32.mrb[0].mxu0
      %v4775 = vadd.f32 %v4590, %v4774
      %v4776 = vpop.f32.mrb[0].mxu0
      %v4777 = vadd.f32 %v4595, %v4776
      %v4778 = vpop.f32.mrb[0].mxu0
      %v4779 = vadd.f32 %v4595, %v4778
      %4780 = vdwg.mxu0
      %v4781 = vmax.f32 %v4644, 0.0
      %v4782 = vmax.f32 %v4646, 0.0
      %v4783 = vmax.f32 %v4687, 0.0
      %v4784 = vmax.f32 %v4689, 0.0
      %v4785 = vmax.f32 %v4730, 0.0
      %v4786 = vmax.f32 %v4732, 0.0
      %v4787 = vmax.f32 %v4773, 0.0
      %v4788 = vmax.f32 %v4775, 0.0
      %v4789 = vmax.f32 %v4648, 0.0
      %v4790 = vmax.f32 %v4650, 0.0
      %v4791 = vmax.f32 %v4691, 0.0
      %v4792 = vmax.f32 %v4693, 0.0
      %v4793 = vmax.f32 %v4734, 0.0
      %v4794 = vmax.f32 %v4736, 0.0
      %v4795 = vmax.f32 %v4777, 0.0
      %v4796 = vmax.f32 %v4779, 0.0
      %4797 = vrot.lane.b32.xlu0 %v3597, 33
      %v4798 = vpop.permute.xlu0 %4797
      %4799 = vrot.lane.b32.xlu0 %v4781, 33
      %v4800 = vpop.permute.xlu0 %4799
      %4801 = vrot.lane.b32.xlu0 %v4789, 33
      %v4802 = vpop.permute.xlu0 %4801
      %4803 = vrot.lane.b32.xlu0 %v3598, 33
      %v4804 = vpop.permute.xlu0 %4803
      %4805 = vrot.lane.b32.xlu0 %v4782, 33
      %v4806 = vpop.permute.xlu0 %4805
      %4807 = vrot.lane.b32.xlu0 %v4790, 33
      %v4808 = vpop.permute.xlu0 %4807
      %4809 = vrot.lane.b32.xlu0 %v3599, 33
      %v4810 = vpop.permute.xlu0 %4809
      %4811 = vrot.lane.b32.xlu0 %v4783, 33
      %v4812 = vpop.permute.xlu0 %4811
      %4813 = vrot.lane.b32.xlu0 %v4791, 33
      %v4814 = vpop.permute.xlu0 %4813
      %4815 = vrot.lane.b32.xlu0 %v3600, 33
      %v4816 = vpop.permute.xlu0 %4815
      %4817 = vrot.lane.b32.xlu0 %v4784, 33
      %v4818 = vpop.permute.xlu0 %4817
      %4819 = vrot.lane.b32.xlu0 %v4792, 33
      %v4820 = vpop.permute.xlu0 %4819
      %4821 = vrot.lane.b32.xlu0 %v3601, 33
      %v4822 = vpop.permute.xlu0 %4821
      %4823 = vrot.lane.b32.xlu0 %v4785, 33
      %v4824 = vpop.permute.xlu0 %4823
      %4825 = vrot.lane.b32.xlu0 %v4793, 33
      %v4826 = vpop.permute.xlu0 %4825
      %4827 = vrot.lane.b32.xlu0 %v3602, 33
      %v4828 = vpop.permute.xlu0 %4827
      %4829 = vrot.lane.b32.xlu0 %v4786, 33
      %v4830 = vpop.permute.xlu0 %4829
      %4831 = vrot.lane.b32.xlu0 %v4794, 33
      %v4832 = vpop.permute.xlu0 %4831
      %4833 = vrot.lane.b32.xlu0 %v3603, 33
      %v4834 = vpop.permute.xlu0 %4833
      %4835 = vrot.lane.b32.xlu0 %v4787, 33
      %v4836 = vpop.permute.xlu0 %4835
      %4837 = vrot.lane.b32.xlu0 %v4795, 33
      %v4838 = vpop.permute.xlu0 %4837
      %4839 = vrot.lane.b32.xlu0 %v3604, 33
      %v4840 = vpop.permute.xlu0 %4839
      %4841 = vrot.lane.b32.xlu0 %v4788, 33
      %v4842 = vpop.permute.xlu0 %4841
      %4843 = vrot.lane.b32.xlu0 %v4796, 33
      %v4844 = vpop.permute.xlu0 %4843
      %v4845 = vsel %vm2236, %v4834, %v4840
      %v4846 = vsel %vm2236, %v4836, %v4842
      %v4847 = vsel %vm2236, %v4838, %v4844
      %v4848 = vsel %vm2236, %v4828, %v4834
      %v4849 = vsel %vm2236, %v4830, %v4836
      %v4850 = vsel %vm2236, %v4832, %v4838
      %v4851 = vsel %vm2236, %v4822, %v4828
      %v4852 = vsel %vm2236, %v4824, %v4830
      %v4853 = vsel %vm2236, %v4826, %v4832
      %v4854 = vsel %vm2236, %v4816, %v4822
      %v4855 = vsel %vm2236, %v4818, %v4824
      %v4856 = vsel %vm2236, %v4820, %v4826
      %v4857 = vsel %vm2236, %v4810, %v4816
      %v4858 = vsel %vm2236, %v4812, %v4818
      %v4859 = vsel %vm2236, %v4814, %v4820
      %v4860 = vsel %vm2236, %v4804, %v4810
      %v4861 = vsel %vm2236, %v4806, %v4812
      %v4862 = vsel %vm2236, %v4808, %v4814
      %v4863 = vsel %vm2236, %v4798, %v4804
      %v4864 = vsel %vm2236, %v4800, %v4806
      %v4865 = vsel %vm2236, %v4802, %v4808
      %v4866 = vsel %vm2236, %v4840, %v4798
      %v4867 = vsel %vm2236, %v4842, %v4800
      %v4868 = vsel %vm2236, %v4844, %v4802
      %v4869 = vmul.f32 %v4866, %v2252
      %v4870 = vmul.f32 %v4863, %v2256
      %v4871 = vmul.f32 %v4860, %v2260
      %v4872 = vmul.f32 %v4857, %v2264
      %v4873 = vmul.f32 %v4854, %v2268
      %v4874 = vmul.f32 %v4851, %v2272
      %v4875 = vmul.f32 %v4848, %v2276
      %v4876 = vmul.f32 %v4845, %v2280
      %v4877 = vmul.f32 %v4867, %v2252
      %v4878 = vmul.f32 %v4864, %v2256
      %v4879 = vmul.f32 %v4861, %v2260
      %v4880 = vmul.f32 %v4858, %v2264
      %v4881 = vmul.f32 %v4855, %v2268
      %v4882 = vmul.f32 %v4852, %v2272
      %v4883 = vmul.f32 %v4849, %v2276
      %v4884 = vmul.f32 %v4846, %v2280
      %v4885 = vmul.f32 %v4868, %v2252
      %v4886 = vmul.f32 %v4865, %v2256
      %v4887 = vmul.f32 %v4862, %v2260
      %v4888 = vmul.f32 %v4859, %v2264
      %v4889 = vmul.f32 %v4856, %v2268
      %v4890 = vmul.f32 %v4853, %v2272
      %v4891 = vmul.f32 %v4850, %v2276
      %v4892 = vmul.f32 %v4847, %v2280
      %4893 = vrot.lane.b32.xlu0 %v3597, 32
      %v4894 = vpop.permute.xlu0 %4893
      %4895 = vrot.lane.b32.xlu0 %v4781, 32
      %v4896 = vpop.permute.xlu0 %4895
      %4897 = vrot.lane.b32.xlu0 %v4789, 32
      %v4898 = vpop.permute.xlu0 %4897
      %4899 = vrot.lane.b32.xlu0 %v3598, 32
      %v4900 = vpop.permute.xlu0 %4899
      %4901 = vrot.lane.b32.xlu0 %v4782, 32
      %v4902 = vpop.permute.xlu0 %4901
      %4903 = vrot.lane.b32.xlu0 %v4790, 32
      %v4904 = vpop.permute.xlu0 %4903
      %4905 = vrot.lane.b32.xlu0 %v3599, 32
      %v4906 = vpop.permute.xlu0 %4905
      %4907 = vrot.lane.b32.xlu0 %v4783, 32
      %v4908 = vpop.permute.xlu0 %4907
      %4909 = vrot.lane.b32.xlu0 %v4791, 32
      %v4910 = vpop.permute.xlu0 %4909
      %4911 = vrot.lane.b32.xlu0 %v3600, 32
      %v4912 = vpop.permute.xlu0 %4911
      %4913 = vrot.lane.b32.xlu0 %v4784, 32
      %v4914 = vpop.permute.xlu0 %4913
      %4915 = vrot.lane.b32.xlu0 %v4792, 32
      %v4916 = vpop.permute.xlu0 %4915
      %4917 = vrot.lane.b32.xlu0 %v3601, 32
      %v4918 = vpop.permute.xlu0 %4917
      %4919 = vrot.lane.b32.xlu0 %v4785, 32
      %v4920 = vpop.permute.xlu0 %4919
      %4921 = vrot.lane.b32.xlu0 %v4793, 32
      %v4922 = vpop.permute.xlu0 %4921
      %4923 = vrot.lane.b32.xlu0 %v3602, 32
      %v4924 = vpop.permute.xlu0 %4923
      %4925 = vrot.lane.b32.xlu0 %v4786, 32
      %v4926 = vpop.permute.xlu0 %4925
      %4927 = vrot.lane.b32.xlu0 %v4794, 32
      %v4928 = vpop.permute.xlu0 %4927
      %4929 = vrot.lane.b32.xlu0 %v3603, 32
      %v4930 = vpop.permute.xlu0 %4929
      %4931 = vrot.lane.b32.xlu0 %v4787, 32
      %v4932 = vpop.permute.xlu0 %4931
      %4933 = vrot.lane.b32.xlu0 %v4795, 32
      %v4934 = vpop.permute.xlu0 %4933
      %4935 = vrot.lane.b32.xlu0 %v3604, 32
      %v4936 = vpop.permute.xlu0 %4935
      %4937 = vrot.lane.b32.xlu0 %v4788, 32
      %v4938 = vpop.permute.xlu0 %4937
      %4939 = vrot.lane.b32.xlu0 %v4796, 32
      %v4940 = vpop.permute.xlu0 %4939
      %v4941 = vsel %vm2313, %v4930, %v4936
      %v4942 = vsel %vm2313, %v4932, %v4938
      %v4943 = vsel %vm2313, %v4934, %v4940
      %v4944 = vsel %vm2313, %v4924, %v4930
      %v4945 = vsel %vm2313, %v4926, %v4932
      %v4946 = vsel %vm2313, %v4928, %v4934
      %v4947 = vsel %vm2313, %v4918, %v4924
      %v4948 = vsel %vm2313, %v4920, %v4926
      %v4949 = vsel %vm2313, %v4922, %v4928
      %v4950 = vsel %vm2313, %v4912, %v4918
      %v4951 = vsel %vm2313, %v4914, %v4920
      %v4952 = vsel %vm2313, %v4916, %v4922
      %v4953 = vsel %vm2313, %v4906, %v4912
      %v4954 = vsel %vm2313, %v4908, %v4914
      %v4955 = vsel %vm2313, %v4910, %v4916
      %v4956 = vsel %vm2313, %v4900, %v4906
      %v4957 = vsel %vm2313, %v4902, %v4908
      %v4958 = vsel %vm2313, %v4904, %v4910
      %v4959 = vsel %vm2313, %v4894, %v4900
      %v4960 = vsel %vm2313, %v4896, %v4902
      %v4961 = vsel %vm2313, %v4898, %v4904
      %v4962 = vsel %vm2313, %v4936, %v4894
      %v4963 = vsel %vm2313, %v4938, %v4896
      %v4964 = vsel %vm2313, %v4940, %v4898
      %v4965 = vmul.f32 %v4962, %v2330
      %v4966 = vmul.f32 %v4959, %v2334
      %v4967 = vmul.f32 %v4956, %v2338
      %v4968 = vmul.f32 %v4953, %v2342
      %v4969 = vmul.f32 %v4950, %v2346
      %v4970 = vmul.f32 %v4947, %v2350
      %v4971 = vmul.f32 %v4944, %v2354
      %v4972 = vmul.f32 %v4941, %v2358
      %v4973 = vmul.f32 %v4963, %v2330
      %v4974 = vmul.f32 %v4960, %v2334
      %v4975 = vmul.f32 %v4957, %v2338
      %v4976 = vmul.f32 %v4954, %v2342
      %v4977 = vmul.f32 %v4951, %v2346
      %v4978 = vmul.f32 %v4948, %v2350
      %v4979 = vmul.f32 %v4945, %v2354
      %v4980 = vmul.f32 %v4942, %v2358
      %v4981 = vmul.f32 %v4964, %v2330
      %v4982 = vmul.f32 %v4961, %v2334
      %v4983 = vmul.f32 %v4958, %v2338
      %v4984 = vmul.f32 %v4955, %v2342
      %v4985 = vmul.f32 %v4952, %v2346
      %v4986 = vmul.f32 %v4949, %v2350
      %v4987 = vmul.f32 %v4946, %v2354
      %v4988 = vmul.f32 %v4943, %v2358
      %4989 = vrot.lane.b32.xlu0 %v3597, 31
      %v4990 = vpop.permute.xlu0 %4989
      %4991 = vrot.lane.b32.xlu0 %v4781, 31
      %v4992 = vpop.permute.xlu0 %4991
      %4993 = vrot.lane.b32.xlu0 %v4789, 31
      %v4994 = vpop.permute.xlu0 %4993
      %4995 = vrot.lane.b32.xlu0 %v3598, 31
      %v4996 = vpop.permute.xlu0 %4995
      %4997 = vrot.lane.b32.xlu0 %v4782, 31
      %v4998 = vpop.permute.xlu0 %4997
      %4999 = vrot.lane.b32.xlu0 %v4790, 31
      %v5000 = vpop.permute.xlu0 %4999
      %5001 = vrot.lane.b32.xlu0 %v3599, 31
      %v5002 = vpop.permute.xlu0 %5001
      %5003 = vrot.lane.b32.xlu0 %v4783, 31
      %v5004 = vpop.permute.xlu0 %5003
      %5005 = vrot.lane.b32.xlu0 %v4791, 31
      %v5006 = vpop.permute.xlu0 %5005
      %5007 = vrot.lane.b32.xlu0 %v3600, 31
      %v5008 = vpop.permute.xlu0 %5007
      %5009 = vrot.lane.b32.xlu0 %v4784, 31
      %v5010 = vpop.permute.xlu0 %5009
      %5011 = vrot.lane.b32.xlu0 %v4792, 31
      %v5012 = vpop.permute.xlu0 %5011
      %5013 = vrot.lane.b32.xlu0 %v3601, 31
      %v5014 = vpop.permute.xlu0 %5013
      %5015 = vrot.lane.b32.xlu0 %v4785, 31
      %v5016 = vpop.permute.xlu0 %5015
      %5017 = vrot.lane.b32.xlu0 %v4793, 31
      %v5018 = vpop.permute.xlu0 %5017
      %5019 = vrot.lane.b32.xlu0 %v3602, 31
      %v5020 = vpop.permute.xlu0 %5019
      %5021 = vrot.lane.b32.xlu0 %v4786, 31
      %v5022 = vpop.permute.xlu0 %5021
      %5023 = vrot.lane.b32.xlu0 %v4794, 31
      %v5024 = vpop.permute.xlu0 %5023
      %5025 = vrot.lane.b32.xlu0 %v3603, 31
      %v5026 = vpop.permute.xlu0 %5025
      %5027 = vrot.lane.b32.xlu0 %v4787, 31
      %v5028 = vpop.permute.xlu0 %5027
      %5029 = vrot.lane.b32.xlu0 %v4795, 31
      %v5030 = vpop.permute.xlu0 %5029
      %5031 = vrot.lane.b32.xlu0 %v3604, 31
      %v5032 = vpop.permute.xlu0 %5031
      %5033 = vrot.lane.b32.xlu0 %v4788, 31
      %v5034 = vpop.permute.xlu0 %5033
      %5035 = vrot.lane.b32.xlu0 %v4796, 31
      %v5036 = vpop.permute.xlu0 %5035
      %v5037 = vsel %vm2391, %v5026, %v5032
      %v5038 = vsel %vm2391, %v5028, %v5034
      %v5039 = vsel %vm2391, %v5030, %v5036
      %v5040 = vsel %vm2391, %v5020, %v5026
      %v5041 = vsel %vm2391, %v5022, %v5028
      %v5042 = vsel %vm2391, %v5024, %v5030
      %v5043 = vsel %vm2391, %v5014, %v5020
      %v5044 = vsel %vm2391, %v5016, %v5022
      %v5045 = vsel %vm2391, %v5018, %v5024
      %v5046 = vsel %vm2391, %v5008, %v5014
      %v5047 = vsel %vm2391, %v5010, %v5016
      %v5048 = vsel %vm2391, %v5012, %v5018
      %v5049 = vsel %vm2391, %v5002, %v5008
      %v5050 = vsel %vm2391, %v5004, %v5010
      %v5051 = vsel %vm2391, %v5006, %v5012
      %v5052 = vsel %vm2391, %v4996, %v5002
      %v5053 = vsel %vm2391, %v4998, %v5004
      %v5054 = vsel %vm2391, %v5000, %v5006
      %v5055 = vsel %vm2391, %v4990, %v4996
      %v5056 = vsel %vm2391, %v4992, %v4998
      %v5057 = vsel %vm2391, %v4994, %v5000
      %v5058 = vsel %vm2391, %v5032, %v4990
      %v5059 = vsel %vm2391, %v5034, %v4992
      %v5060 = vsel %vm2391, %v5036, %v4994
      %v5061 = vmul.f32 %v5058, %v2408
      %v5062 = vmul.f32 %v5055, %v2412
      %v5063 = vmul.f32 %v5052, %v2416
      %v5064 = vmul.f32 %v5049, %v2420
      %v5065 = vmul.f32 %v5046, %v2424
      %v5066 = vmul.f32 %v5043, %v2428
      %v5067 = vmul.f32 %v5040, %v2432
      %v5068 = vmul.f32 %v5037, %v2436
      %v5069 = vmul.f32 %v5059, %v2408
      %v5070 = vmul.f32 %v5056, %v2412
      %v5071 = vmul.f32 %v5053, %v2416
      %v5072 = vmul.f32 %v5050, %v2420
      %v5073 = vmul.f32 %v5047, %v2424
      %v5074 = vmul.f32 %v5044, %v2428
      %v5075 = vmul.f32 %v5041, %v2432
      %v5076 = vmul.f32 %v5038, %v2436
      %v5077 = vmul.f32 %v5060, %v2408
      %v5078 = vmul.f32 %v5057, %v2412
      %v5079 = vmul.f32 %v5054, %v2416
      %v5080 = vmul.f32 %v5051, %v2420
      %v5081 = vmul.f32 %v5048, %v2424
      %v5082 = vmul.f32 %v5045, %v2428
      %v5083 = vmul.f32 %v5042, %v2432
      %v5084 = vmul.f32 %v5039, %v2436
      %5085 = vrot.lane.b32.xlu0 %v3597, 1
      %v5086 = vpop.permute.xlu0 %5085
      %5087 = vrot.lane.b32.xlu0 %v4781, 1
      %v5088 = vpop.permute.xlu0 %5087
      %5089 = vrot.lane.b32.xlu0 %v4789, 1
      %v5090 = vpop.permute.xlu0 %5089
      %5091 = vrot.lane.b32.xlu0 %v3598, 1
      %v5092 = vpop.permute.xlu0 %5091
      %5093 = vrot.lane.b32.xlu0 %v4782, 1
      %v5094 = vpop.permute.xlu0 %5093
      %5095 = vrot.lane.b32.xlu0 %v4790, 1
      %v5096 = vpop.permute.xlu0 %5095
      %5097 = vrot.lane.b32.xlu0 %v3599, 1
      %v5098 = vpop.permute.xlu0 %5097
      %5099 = vrot.lane.b32.xlu0 %v4783, 1
      %v5100 = vpop.permute.xlu0 %5099
      %5101 = vrot.lane.b32.xlu0 %v4791, 1
      %v5102 = vpop.permute.xlu0 %5101
      %5103 = vrot.lane.b32.xlu0 %v3600, 1
      %v5104 = vpop.permute.xlu0 %5103
      %5105 = vrot.lane.b32.xlu0 %v4784, 1
      %v5106 = vpop.permute.xlu0 %5105
      %5107 = vrot.lane.b32.xlu0 %v4792, 1
      %v5108 = vpop.permute.xlu0 %5107
      %5109 = vrot.lane.b32.xlu0 %v3601, 1
      %v5110 = vpop.permute.xlu0 %5109
      %5111 = vrot.lane.b32.xlu0 %v4785, 1
      %v5112 = vpop.permute.xlu0 %5111
      %5113 = vrot.lane.b32.xlu0 %v4793, 1
      %v5114 = vpop.permute.xlu0 %5113
      %5115 = vrot.lane.b32.xlu0 %v3602, 1
      %v5116 = vpop.permute.xlu0 %5115
      %5117 = vrot.lane.b32.xlu0 %v4786, 1
      %v5118 = vpop.permute.xlu0 %5117
      %5119 = vrot.lane.b32.xlu0 %v4794, 1
      %v5120 = vpop.permute.xlu0 %5119
      %5121 = vrot.lane.b32.xlu0 %v3603, 1
      %v5122 = vpop.permute.xlu0 %5121
      %5123 = vrot.lane.b32.xlu0 %v4787, 1
      %v5124 = vpop.permute.xlu0 %5123
      %5125 = vrot.lane.b32.xlu0 %v4795, 1
      %v5126 = vpop.permute.xlu0 %5125
      %5127 = vrot.lane.b32.xlu0 %v3604, 1
      %v5128 = vpop.permute.xlu0 %5127
      %5129 = vrot.lane.b32.xlu0 %v4788, 1
      %v5130 = vpop.permute.xlu0 %5129
      %5131 = vrot.lane.b32.xlu0 %v4796, 1
      %v5132 = vpop.permute.xlu0 %5131
      %v5133 = vsel %vm2025, %v5122, %v5128
      %v5134 = vsel %vm2025, %v5124, %v5130
      %v5135 = vsel %vm2025, %v5126, %v5132
      %v5136 = vsel %vm2025, %v5116, %v5122
      %v5137 = vsel %vm2025, %v5118, %v5124
      %v5138 = vsel %vm2025, %v5120, %v5126
      %v5139 = vsel %vm2025, %v5110, %v5116
      %v5140 = vsel %vm2025, %v5112, %v5118
      %v5141 = vsel %vm2025, %v5114, %v5120
      %v5142 = vsel %vm2025, %v5104, %v5110
      %v5143 = vsel %vm2025, %v5106, %v5112
      %v5144 = vsel %vm2025, %v5108, %v5114
      %v5145 = vsel %vm2025, %v5098, %v5104
      %v5146 = vsel %vm2025, %v5100, %v5106
      %v5147 = vsel %vm2025, %v5102, %v5108
      %v5148 = vsel %vm2025, %v5092, %v5098
      %v5149 = vsel %vm2025, %v5094, %v5100
      %v5150 = vsel %vm2025, %v5096, %v5102
      %v5151 = vsel %vm2025, %v5086, %v5092
      %v5152 = vsel %vm2025, %v5088, %v5094
      %v5153 = vsel %vm2025, %v5090, %v5096
      %v5154 = vsel %vm2025, %v5128, %v5086
      %v5155 = vsel %vm2025, %v5130, %v5088
      %v5156 = vsel %vm2025, %v5132, %v5090
      %v5157 = vmul.f32 %v5154, %v2485
      %v5158 = vmul.f32 %v5151, %v2489
      %v5159 = vmul.f32 %v5148, %v2493
      %v5160 = vmul.f32 %v5145, %v2497
      %v5161 = vmul.f32 %v5142, %v2501
      %v5162 = vmul.f32 %v5139, %v2505
      %v5163 = vmul.f32 %v5136, %v2509
      %v5164 = vmul.f32 %v5133, %v2513
      %v5165 = vmul.f32 %v5155, %v2485
      %v5166 = vmul.f32 %v5152, %v2489
      %v5167 = vmul.f32 %v5149, %v2493
      %v5168 = vmul.f32 %v5146, %v2497
      %v5169 = vmul.f32 %v5143, %v2501
      %v5170 = vmul.f32 %v5140, %v2505
      %v5171 = vmul.f32 %v5137, %v2509
      %v5172 = vmul.f32 %v5134, %v2513
      %v5173 = vmul.f32 %v5156, %v2485
      %v5174 = vmul.f32 %v5153, %v2489
      %v5175 = vmul.f32 %v5150, %v2493
      %v5176 = vmul.f32 %v5147, %v2497
      %v5177 = vmul.f32 %v5144, %v2501
      %v5178 = vmul.f32 %v5141, %v2505
      %v5179 = vmul.f32 %v5138, %v2509
      %v5180 = vmul.f32 %v5135, %v2513
      %5181 = vrot.lane.b32.xlu0 %v3597, 127
      %v5182 = vpop.permute.xlu0 %5181
      %5183 = vrot.lane.b32.xlu0 %v4781, 127
      %v5184 = vpop.permute.xlu0 %5183
      %5185 = vrot.lane.b32.xlu0 %v4789, 127
      %v5186 = vpop.permute.xlu0 %5185
      %5187 = vrot.lane.b32.xlu0 %v3598, 127
      %v5188 = vpop.permute.xlu0 %5187
      %5189 = vrot.lane.b32.xlu0 %v4782, 127
      %v5190 = vpop.permute.xlu0 %5189
      %5191 = vrot.lane.b32.xlu0 %v4790, 127
      %v5192 = vpop.permute.xlu0 %5191
      %5193 = vrot.lane.b32.xlu0 %v3599, 127
      %v5194 = vpop.permute.xlu0 %5193
      %5195 = vrot.lane.b32.xlu0 %v4783, 127
      %v5196 = vpop.permute.xlu0 %5195
      %5197 = vrot.lane.b32.xlu0 %v4791, 127
      %v5198 = vpop.permute.xlu0 %5197
      %5199 = vrot.lane.b32.xlu0 %v3600, 127
      %v5200 = vpop.permute.xlu0 %5199
      %5201 = vrot.lane.b32.xlu0 %v4784, 127
      %v5202 = vpop.permute.xlu0 %5201
      %5203 = vrot.lane.b32.xlu0 %v4792, 127
      %v5204 = vpop.permute.xlu0 %5203
      %5205 = vrot.lane.b32.xlu0 %v3601, 127
      %v5206 = vpop.permute.xlu0 %5205
      %5207 = vrot.lane.b32.xlu0 %v4785, 127
      %v5208 = vpop.permute.xlu0 %5207
      %5209 = vrot.lane.b32.xlu0 %v4793, 127
      %v5210 = vpop.permute.xlu0 %5209
      %5211 = vrot.lane.b32.xlu0 %v3602, 127
      %v5212 = vpop.permute.xlu0 %5211
      %5213 = vrot.lane.b32.xlu0 %v4786, 127
      %v5214 = vpop.permute.xlu0 %5213
      %5215 = vrot.lane.b32.xlu0 %v4794, 127
      %v5216 = vpop.permute.xlu0 %5215
      %5217 = vrot.lane.b32.xlu0 %v3603, 127
      %v5218 = vpop.permute.xlu0 %5217
      %5219 = vrot.lane.b32.xlu0 %v4787, 127
      %v5220 = vpop.permute.xlu0 %5219
      %5221 = vrot.lane.b32.xlu0 %v4795, 127
      %v5222 = vpop.permute.xlu0 %5221
      %5223 = vrot.lane.b32.xlu0 %v3604, 127
      %v5224 = vpop.permute.xlu0 %5223
      %5225 = vrot.lane.b32.xlu0 %v4788, 127
      %v5226 = vpop.permute.xlu0 %5225
      %5227 = vrot.lane.b32.xlu0 %v4796, 127
      %v5228 = vpop.permute.xlu0 %5227
      %v5229 = vsel %vm2047, %v5218, %v5224
      %v5230 = vsel %vm2047, %v5220, %v5226
      %v5231 = vsel %vm2047, %v5222, %v5228
      %v5232 = vsel %vm2047, %v5212, %v5218
      %v5233 = vsel %vm2047, %v5214, %v5220
      %v5234 = vsel %vm2047, %v5216, %v5222
      %v5235 = vsel %vm2047, %v5206, %v5212
      %v5236 = vsel %vm2047, %v5208, %v5214
      %v5237 = vsel %vm2047, %v5210, %v5216
      %v5238 = vsel %vm2047, %v5200, %v5206
      %v5239 = vsel %vm2047, %v5202, %v5208
      %v5240 = vsel %vm2047, %v5204, %v5210
      %v5241 = vsel %vm2047, %v5194, %v5200
      %v5242 = vsel %vm2047, %v5196, %v5202
      %v5243 = vsel %vm2047, %v5198, %v5204
      %v5244 = vsel %vm2047, %v5188, %v5194
      %v5245 = vsel %vm2047, %v5190, %v5196
      %v5246 = vsel %vm2047, %v5192, %v5198
      %v5247 = vsel %vm2047, %v5182, %v5188
      %v5248 = vsel %vm2047, %v5184, %v5190
      %v5249 = vsel %vm2047, %v5186, %v5192
      %v5250 = vsel %vm2047, %v5224, %v5182
      %v5251 = vsel %vm2047, %v5226, %v5184
      %v5252 = vsel %vm2047, %v5228, %v5186
      %v5253 = vmul.f32 %v5247, %v2562
      %v5254 = vmul.f32 %v5244, %v2566
      %v5255 = vmul.f32 %v5241, %v2570
      %v5256 = vmul.f32 %v5238, %v2574
      %v5257 = vmul.f32 %v5235, %v2578
      %v5258 = vmul.f32 %v5232, %v2582
      %v5259 = vmul.f32 %v5229, %v2586
      %v5260 = vmul.f32 %v5250, %v2590
      %v5261 = vmul.f32 %v5248, %v2562
      %v5262 = vmul.f32 %v5245, %v2566
      %v5263 = vmul.f32 %v5242, %v2570
      %v5264 = vmul.f32 %v5239, %v2574
      %v5265 = vmul.f32 %v5236, %v2578
      %v5266 = vmul.f32 %v5233, %v2582
      %v5267 = vmul.f32 %v5230, %v2586
      %v5268 = vmul.f32 %v5251, %v2590
      %v5269 = vmul.f32 %v5249, %v2562
      %v5270 = vmul.f32 %v5246, %v2566
      %v5271 = vmul.f32 %v5243, %v2570
      %v5272 = vmul.f32 %v5240, %v2574
      %v5273 = vmul.f32 %v5237, %v2578
      %v5274 = vmul.f32 %v5234, %v2582
      %v5275 = vmul.f32 %v5231, %v2586
      %v5276 = vmul.f32 %v5252, %v2590
      %5277 = vrot.lane.b32.xlu0 %v3597, 97
      %v5278 = vpop.permute.xlu0 %5277
      %5279 = vrot.lane.b32.xlu0 %v4781, 97
      %v5280 = vpop.permute.xlu0 %5279
      %5281 = vrot.lane.b32.xlu0 %v4789, 97
      %v5282 = vpop.permute.xlu0 %5281
      %5283 = vrot.lane.b32.xlu0 %v3598, 97
      %v5284 = vpop.permute.xlu0 %5283
      %5285 = vrot.lane.b32.xlu0 %v4782, 97
      %v5286 = vpop.permute.xlu0 %5285
      %5287 = vrot.lane.b32.xlu0 %v4790, 97
      %v5288 = vpop.permute.xlu0 %5287
      %5289 = vrot.lane.b32.xlu0 %v3599, 97
      %v5290 = vpop.permute.xlu0 %5289
      %5291 = vrot.lane.b32.xlu0 %v4783, 97
      %v5292 = vpop.permute.xlu0 %5291
      %5293 = vrot.lane.b32.xlu0 %v4791, 97
      %v5294 = vpop.permute.xlu0 %5293
      %5295 = vrot.lane.b32.xlu0 %v3600, 97
      %v5296 = vpop.permute.xlu0 %5295
      %5297 = vrot.lane.b32.xlu0 %v4784, 97
      %v5298 = vpop.permute.xlu0 %5297
      %5299 = vrot.lane.b32.xlu0 %v4792, 97
      %v5300 = vpop.permute.xlu0 %5299
      %5301 = vrot.lane.b32.xlu0 %v3601, 97
      %v5302 = vpop.permute.xlu0 %5301
      %5303 = vrot.lane.b32.xlu0 %v4785, 97
      %v5304 = vpop.permute.xlu0 %5303
      %5305 = vrot.lane.b32.xlu0 %v4793, 97
      %v5306 = vpop.permute.xlu0 %5305
      %5307 = vrot.lane.b32.xlu0 %v3602, 97
      %v5308 = vpop.permute.xlu0 %5307
      %5309 = vrot.lane.b32.xlu0 %v4786, 97
      %v5310 = vpop.permute.xlu0 %5309
      %5311 = vrot.lane.b32.xlu0 %v4794, 97
      %v5312 = vpop.permute.xlu0 %5311
      %5313 = vrot.lane.b32.xlu0 %v3603, 97
      %v5314 = vpop.permute.xlu0 %5313
      %5315 = vrot.lane.b32.xlu0 %v4787, 97
      %v5316 = vpop.permute.xlu0 %5315
      %5317 = vrot.lane.b32.xlu0 %v4795, 97
      %v5318 = vpop.permute.xlu0 %5317
      %5319 = vrot.lane.b32.xlu0 %v3604, 97
      %v5320 = vpop.permute.xlu0 %5319
      %5321 = vrot.lane.b32.xlu0 %v4788, 97
      %v5322 = vpop.permute.xlu0 %5321
      %5323 = vrot.lane.b32.xlu0 %v4796, 97
      %v5324 = vpop.permute.xlu0 %5323
      %v5325 = vsel %vm2623, %v5314, %v5320
      %v5326 = vsel %vm2623, %v5316, %v5322
      %v5327 = vsel %vm2623, %v5318, %v5324
      %v5328 = vsel %vm2623, %v5308, %v5314
      %v5329 = vsel %vm2623, %v5310, %v5316
      %v5330 = vsel %vm2623, %v5312, %v5318
      %v5331 = vsel %vm2623, %v5302, %v5308
      %v5332 = vsel %vm2623, %v5304, %v5310
      %v5333 = vsel %vm2623, %v5306, %v5312
      %v5334 = vsel %vm2623, %v5296, %v5302
      %v5335 = vsel %vm2623, %v5298, %v5304
      %v5336 = vsel %vm2623, %v5300, %v5306
      %v5337 = vsel %vm2623, %v5290, %v5296
      %v5338 = vsel %vm2623, %v5292, %v5298
      %v5339 = vsel %vm2623, %v5294, %v5300
      %v5340 = vsel %vm2623, %v5284, %v5290
      %v5341 = vsel %vm2623, %v5286, %v5292
      %v5342 = vsel %vm2623, %v5288, %v5294
      %v5343 = vsel %vm2623, %v5278, %v5284
      %v5344 = vsel %vm2623, %v5280, %v5286
      %v5345 = vsel %vm2623, %v5282, %v5288
      %v5346 = vsel %vm2623, %v5320, %v5278
      %v5347 = vsel %vm2623, %v5322, %v5280
      %v5348 = vsel %vm2623, %v5324, %v5282
      %v5349 = vmul.f32 %v5343, %v2640
      %v5350 = vmul.f32 %v5340, %v2644
      %v5351 = vmul.f32 %v5337, %v2648
      %v5352 = vmul.f32 %v5334, %v2652
      %v5353 = vmul.f32 %v5331, %v2656
      %v5354 = vmul.f32 %v5328, %v2660
      %v5355 = vmul.f32 %v5325, %v2664
      %v5356 = vmul.f32 %v5346, %v2668
      %v5357 = vmul.f32 %v5344, %v2640
      %v5358 = vmul.f32 %v5341, %v2644
      %v5359 = vmul.f32 %v5338, %v2648
      %v5360 = vmul.f32 %v5335, %v2652
      %v5361 = vmul.f32 %v5332, %v2656
      %v5362 = vmul.f32 %v5329, %v2660
      %v5363 = vmul.f32 %v5326, %v2664
      %v5364 = vmul.f32 %v5347, %v2668
      %v5365 = vmul.f32 %v5345, %v2640
      %v5366 = vmul.f32 %v5342, %v2644
      %v5367 = vmul.f32 %v5339, %v2648
      %v5368 = vmul.f32 %v5336, %v2652
      %v5369 = vmul.f32 %v5333, %v2656
      %v5370 = vmul.f32 %v5330, %v2660
      %v5371 = vmul.f32 %v5327, %v2664
      %v5372 = vmul.f32 %v5348, %v2668
      %5373 = vrot.lane.b32.xlu0 %v3597, 96
      %v5374 = vpop.permute.xlu0 %5373
      %5375 = vrot.lane.b32.xlu0 %v4781, 96
      %v5376 = vpop.permute.xlu0 %5375
      %5377 = vrot.lane.b32.xlu0 %v4789, 96
      %v5378 = vpop.permute.xlu0 %5377
      %5379 = vrot.lane.b32.xlu0 %v3598, 96
      %v5380 = vpop.permute.xlu0 %5379
      %5381 = vrot.lane.b32.xlu0 %v4782, 96
      %v5382 = vpop.permute.xlu0 %5381
      %5383 = vrot.lane.b32.xlu0 %v4790, 96
      %v5384 = vpop.permute.xlu0 %5383
      %5385 = vrot.lane.b32.xlu0 %v3599, 96
      %v5386 = vpop.permute.xlu0 %5385
      %5387 = vrot.lane.b32.xlu0 %v4783, 96
      %v5388 = vpop.permute.xlu0 %5387
      %5389 = vrot.lane.b32.xlu0 %v4791, 96
      %v5390 = vpop.permute.xlu0 %5389
      %5391 = vrot.lane.b32.xlu0 %v3600, 96
      %v5392 = vpop.permute.xlu0 %5391
      %5393 = vrot.lane.b32.xlu0 %v4784, 96
      %v5394 = vpop.permute.xlu0 %5393
      %5395 = vrot.lane.b32.xlu0 %v4792, 96
      %v5396 = vpop.permute.xlu0 %5395
      %5397 = vrot.lane.b32.xlu0 %v3601, 96
      %v5398 = vpop.permute.xlu0 %5397
      %5399 = vrot.lane.b32.xlu0 %v4785, 96
      %v5400 = vpop.permute.xlu0 %5399
      %5401 = vrot.lane.b32.xlu0 %v4793, 96
      %v5402 = vpop.permute.xlu0 %5401
      %5403 = vrot.lane.b32.xlu0 %v3602, 96
      %v5404 = vpop.permute.xlu0 %5403
      %5405 = vrot.lane.b32.xlu0 %v4786, 96
      %v5406 = vpop.permute.xlu0 %5405
      %5407 = vrot.lane.b32.xlu0 %v4794, 96
      %v5408 = vpop.permute.xlu0 %5407
      %5409 = vrot.lane.b32.xlu0 %v3603, 96
      %v5410 = vpop.permute.xlu0 %5409
      %5411 = vrot.lane.b32.xlu0 %v4787, 96
      %v5412 = vpop.permute.xlu0 %5411
      %5413 = vrot.lane.b32.xlu0 %v4795, 96
      %v5414 = vpop.permute.xlu0 %5413
      %5415 = vrot.lane.b32.xlu0 %v3604, 96
      %v5416 = vpop.permute.xlu0 %5415
      %5417 = vrot.lane.b32.xlu0 %v4788, 96
      %v5418 = vpop.permute.xlu0 %5417
      %5419 = vrot.lane.b32.xlu0 %v4796, 96
      %v5420 = vpop.permute.xlu0 %5419
      %v5421 = vsel %vm2701, %v5410, %v5416
      %v5422 = vsel %vm2701, %v5412, %v5418
      %v5423 = vsel %vm2701, %v5414, %v5420
      %v5424 = vsel %vm2701, %v5404, %v5410
      %v5425 = vsel %vm2701, %v5406, %v5412
      %v5426 = vsel %vm2701, %v5408, %v5414
      %v5427 = vsel %vm2701, %v5398, %v5404
      %v5428 = vsel %vm2701, %v5400, %v5406
      %v5429 = vsel %vm2701, %v5402, %v5408
      %v5430 = vsel %vm2701, %v5392, %v5398
      %v5431 = vsel %vm2701, %v5394, %v5400
      %v5432 = vsel %vm2701, %v5396, %v5402
      %v5433 = vsel %vm2701, %v5386, %v5392
      %v5434 = vsel %vm2701, %v5388, %v5394
      %v5435 = vsel %vm2701, %v5390, %v5396
      %v5436 = vsel %vm2701, %v5380, %v5386
      %v5437 = vsel %vm2701, %v5382, %v5388
      %v5438 = vsel %vm2701, %v5384, %v5390
      %v5439 = vsel %vm2701, %v5374, %v5380
      %v5440 = vsel %vm2701, %v5376, %v5382
      %v5441 = vsel %vm2701, %v5378, %v5384
      %v5442 = vsel %vm2701, %v5416, %v5374
      %v5443 = vsel %vm2701, %v5418, %v5376
      %v5444 = vsel %vm2701, %v5420, %v5378
      %v5445 = vmul.f32 %v5439, %v2718
      %v5446 = vmul.f32 %v5436, %v2722
      %v5447 = vmul.f32 %v5433, %v2726
      %v5448 = vmul.f32 %v5430, %v2730
      %v5449 = vmul.f32 %v5427, %v2734
      %v5450 = vmul.f32 %v5424, %v2738
      %v5451 = vmul.f32 %v5421, %v2742
      %v5452 = vmul.f32 %v5442, %v2746
      %v5453 = vmul.f32 %v5440, %v2718
      %v5454 = vmul.f32 %v5437, %v2722
      %v5455 = vmul.f32 %v5434, %v2726
      %v5456 = vmul.f32 %v5431, %v2730
      %v5457 = vmul.f32 %v5428, %v2734
      %v5458 = vmul.f32 %v5425, %v2738
      %v5459 = vmul.f32 %v5422, %v2742
      %v5460 = vmul.f32 %v5443, %v2746
      %v5461 = vmul.f32 %v5441, %v2718
      %v5462 = vmul.f32 %v5438, %v2722
      %v5463 = vmul.f32 %v5435, %v2726
      %v5464 = vmul.f32 %v5432, %v2730
      %v5465 = vmul.f32 %v5429, %v2734
      %v5466 = vmul.f32 %v5426, %v2738
      %v5467 = vmul.f32 %v5423, %v2742
      %v5468 = vmul.f32 %v5444, %v2746
      %5469 = vrot.lane.b32.xlu0 %v3597, 95
      %v5470 = vpop.permute.xlu0 %5469
      %5471 = vrot.lane.b32.xlu0 %v4781, 95
      %v5472 = vpop.permute.xlu0 %5471
      %5473 = vrot.lane.b32.xlu0 %v4789, 95
      %v5474 = vpop.permute.xlu0 %5473
      %5475 = vrot.lane.b32.xlu0 %v3598, 95
      %v5476 = vpop.permute.xlu0 %5475
      %5477 = vrot.lane.b32.xlu0 %v4782, 95
      %v5478 = vpop.permute.xlu0 %5477
      %5479 = vrot.lane.b32.xlu0 %v4790, 95
      %v5480 = vpop.permute.xlu0 %5479
      %5481 = vrot.lane.b32.xlu0 %v3599, 95
      %v5482 = vpop.permute.xlu0 %5481
      %5483 = vrot.lane.b32.xlu0 %v4783, 95
      %v5484 = vpop.permute.xlu0 %5483
      %5485 = vrot.lane.b32.xlu0 %v4791, 95
      %v5486 = vpop.permute.xlu0 %5485
      %5487 = vrot.lane.b32.xlu0 %v3600, 95
      %v5488 = vpop.permute.xlu0 %5487
      %5489 = vrot.lane.b32.xlu0 %v4784, 95
      %v5490 = vpop.permute.xlu0 %5489
      %5491 = vrot.lane.b32.xlu0 %v4792, 95
      %v5492 = vpop.permute.xlu0 %5491
      %5493 = vrot.lane.b32.xlu0 %v3601, 95
      %v5494 = vpop.permute.xlu0 %5493
      %5495 = vrot.lane.b32.xlu0 %v4785, 95
      %v5496 = vpop.permute.xlu0 %5495
      %5497 = vrot.lane.b32.xlu0 %v4793, 95
      %v5498 = vpop.permute.xlu0 %5497
      %5499 = vrot.lane.b32.xlu0 %v3602, 95
      %v5500 = vpop.permute.xlu0 %5499
      %5501 = vrot.lane.b32.xlu0 %v4786, 95
      %v5502 = vpop.permute.xlu0 %5501
      %5503 = vrot.lane.b32.xlu0 %v4794, 95
      %v5504 = vpop.permute.xlu0 %5503
      %5505 = vrot.lane.b32.xlu0 %v3603, 95
      %v5506 = vpop.permute.xlu0 %5505
      %5507 = vrot.lane.b32.xlu0 %v4787, 95
      %v5508 = vpop.permute.xlu0 %5507
      %5509 = vrot.lane.b32.xlu0 %v4795, 95
      %v5510 = vpop.permute.xlu0 %5509
      %5511 = vrot.lane.b32.xlu0 %v3604, 95
      %v5512 = vpop.permute.xlu0 %5511
      %5513 = vrot.lane.b32.xlu0 %v4788, 95
      %v5514 = vpop.permute.xlu0 %5513
      %5515 = vrot.lane.b32.xlu0 %v4796, 95
      %v5516 = vpop.permute.xlu0 %5515
      %v5517 = vsel %vm2779, %v5506, %v5512
      %v5518 = vsel %vm2779, %v5508, %v5514
      %v5519 = vsel %vm2779, %v5510, %v5516
      %v5520 = vsel %vm2779, %v5500, %v5506
      %v5521 = vsel %vm2779, %v5502, %v5508
      %v5522 = vsel %vm2779, %v5504, %v5510
      %v5523 = vsel %vm2779, %v5494, %v5500
      %v5524 = vsel %vm2779, %v5496, %v5502
      %v5525 = vsel %vm2779, %v5498, %v5504
      %v5526 = vsel %vm2779, %v5488, %v5494
      %v5527 = vsel %vm2779, %v5490, %v5496
      %v5528 = vsel %vm2779, %v5492, %v5498
      %v5529 = vsel %vm2779, %v5482, %v5488
      %v5530 = vsel %vm2779, %v5484, %v5490
      %v5531 = vsel %vm2779, %v5486, %v5492
      %v5532 = vsel %vm2779, %v5476, %v5482
      %v5533 = vsel %vm2779, %v5478, %v5484
      %v5534 = vsel %vm2779, %v5480, %v5486
      %v5535 = vsel %vm2779, %v5470, %v5476
      %v5536 = vsel %vm2779, %v5472, %v5478
      %v5537 = vsel %vm2779, %v5474, %v5480
      %v5538 = vsel %vm2779, %v5512, %v5470
      %v5539 = vsel %vm2779, %v5514, %v5472
      %v5540 = vsel %vm2779, %v5516, %v5474
      %v5541 = vmul.f32 %v5535, %v2796
      %v5542 = vmul.f32 %v5532, %v2800
      %v5543 = vmul.f32 %v5529, %v2804
      %v5544 = vmul.f32 %v5526, %v2808
      %v5545 = vmul.f32 %v5523, %v2812
      %v5546 = vmul.f32 %v5520, %v2816
      %v5547 = vmul.f32 %v5517, %v2820
      %v5548 = vmul.f32 %v5538, %v2824
      %v5549 = vmul.f32 %v5536, %v2796
      %v5550 = vmul.f32 %v5533, %v2800
      %v5551 = vmul.f32 %v5530, %v2804
      %v5552 = vmul.f32 %v5527, %v2808
      %v5553 = vmul.f32 %v5524, %v2812
      %v5554 = vmul.f32 %v5521, %v2816
      %v5555 = vmul.f32 %v5518, %v2820
      %v5556 = vmul.f32 %v5539, %v2824
      %v5557 = vmul.f32 %v5537, %v2796
      %v5558 = vmul.f32 %v5534, %v2800
      %v5559 = vmul.f32 %v5531, %v2804
      %v5560 = vmul.f32 %v5528, %v2808
      %v5561 = vmul.f32 %v5525, %v2812
      %v5562 = vmul.f32 %v5522, %v2816
      %v5563 = vmul.f32 %v5519, %v2820
      %v5564 = vmul.f32 %v5540, %v2824
      %v5565 = vpack.c.bf16 %v4877, %v4869
      %v5566 = vpack.c.bf16 %v4878, %v4870
      %v5567 = vpack.c.bf16 %v4879, %v4871
      %v5568 = vpack.c.bf16 %v4880, %v4872
      %v5569 = vpack.c.bf16 %v4881, %v4873
      %v5570 = vpack.c.bf16 %v4882, %v4874
      %v5571 = vpack.c.bf16 %v4883, %v4875
      %v5572 = vpack.c.bf16 %v4884, %v4876
      %v5573 = vpack.c.bf16 %v4965, %v4885
      %v5574 = vpack.c.bf16 %v4966, %v4886
      %v5575 = vpack.c.bf16 %v4967, %v4887
      %v5576 = vpack.c.bf16 %v4968, %v4888
      %v5577 = vpack.c.bf16 %v4969, %v4889
      %v5578 = vpack.c.bf16 %v4970, %v4890
      %v5579 = vpack.c.bf16 %v4971, %v4891
      %v5580 = vpack.c.bf16 %v4972, %v4892
      %v5581 = vpack.c.bf16 %v4981, %v4973
      %v5582 = vpack.c.bf16 %v4982, %v4974
      %v5583 = vpack.c.bf16 %v4983, %v4975
      %v5584 = vpack.c.bf16 %v4984, %v4976
      %v5585 = vpack.c.bf16 %v4985, %v4977
      %v5586 = vpack.c.bf16 %v4986, %v4978
      %v5587 = vpack.c.bf16 %v4987, %v4979
      %v5588 = vpack.c.bf16 %v4988, %v4980
      %v5589 = vpack.c.bf16 %v5069, %v5061
      %v5590 = vpack.c.bf16 %v5070, %v5062
      %v5591 = vpack.c.bf16 %v5071, %v5063
      %v5592 = vpack.c.bf16 %v5072, %v5064
      %v5593 = vpack.c.bf16 %v5073, %v5065
      %v5594 = vpack.c.bf16 %v5074, %v5066
      %v5595 = vpack.c.bf16 %v5075, %v5067
      %v5596 = vpack.c.bf16 %v5076, %v5068
      %v5597 = vpack.c.bf16 %v5157, %v5077
      %v5598 = vpack.c.bf16 %v5158, %v5078
      %v5599 = vpack.c.bf16 %v5159, %v5079
      %v5600 = vpack.c.bf16 %v5160, %v5080
      %v5601 = vpack.c.bf16 %v5161, %v5081
      %v5602 = vpack.c.bf16 %v5162, %v5082
      %v5603 = vpack.c.bf16 %v5163, %v5083
      %v5604 = vpack.c.bf16 %v5164, %v5084
      %v5605 = vpack.c.bf16 %v5173, %v5165
      %v5606 = vpack.c.bf16 %v5174, %v5166
      %v5607 = vpack.c.bf16 %v5175, %v5167
      %v5608 = vpack.c.bf16 %v5176, %v5168
      %v5609 = vpack.c.bf16 %v5177, %v5169
      %v5610 = vpack.c.bf16 %v5178, %v5170
      %v5611 = vpack.c.bf16 %v5179, %v5171
      %v5612 = vpack.c.bf16 %v5180, %v5172
      %v5613 = vpack.c.bf16 %v4781, %v3597
      %v5614 = vpack.c.bf16 %v4782, %v3598
      %v5615 = vpack.c.bf16 %v4783, %v3599
      %v5616 = vpack.c.bf16 %v4784, %v3600
      %v5617 = vpack.c.bf16 %v4785, %v3601
      %v5618 = vpack.c.bf16 %v4786, %v3602
      %v5619 = vpack.c.bf16 %v4787, %v3603
      %v5620 = vpack.c.bf16 %v4788, %v3604
      %v5621 = vpack.c.bf16 %v5253, %v4789
      %v5622 = vpack.c.bf16 %v5254, %v4790
      %v5623 = vpack.c.bf16 %v5255, %v4791
      %v5624 = vpack.c.bf16 %v5256, %v4792
      %v5625 = vpack.c.bf16 %v5257, %v4793
      %v5626 = vpack.c.bf16 %v5258, %v4794
      %v5627 = vpack.c.bf16 %v5259, %v4795
      %v5628 = vpack.c.bf16 %v5260, %v4796
      %v5629 = vpack.c.bf16 %v5269, %v5261
      %v5630 = vpack.c.bf16 %v5270, %v5262
      %v5631 = vpack.c.bf16 %v5271, %v5263
      %v5632 = vpack.c.bf16 %v5272, %v5264
      %v5633 = vpack.c.bf16 %v5273, %v5265
      %v5634 = vpack.c.bf16 %v5274, %v5266
      %v5635 = vpack.c.bf16 %v5275, %v5267
      %v5636 = vpack.c.bf16 %v5276, %v5268
      %v5637 = vpack.c.bf16 %v5357, %v5349
      %v5638 = vpack.c.bf16 %v5358, %v5350
      %v5639 = vpack.c.bf16 %v5359, %v5351
      %v5640 = vpack.c.bf16 %v5360, %v5352
      %v5641 = vpack.c.bf16 %v5361, %v5353
      %v5642 = vpack.c.bf16 %v5362, %v5354
      %v5643 = vpack.c.bf16 %v5363, %v5355
      %v5644 = vpack.c.bf16 %v5364, %v5356
      %v5645 = vpack.c.bf16 %v5445, %v5365
      %v5646 = vpack.c.bf16 %v5446, %v5366
      %v5647 = vpack.c.bf16 %v5447, %v5367
      %v5648 = vpack.c.bf16 %v5448, %v5368
      %v5649 = vpack.c.bf16 %v5449, %v5369
      %v5650 = vpack.c.bf16 %v5450, %v5370
      %v5651 = vpack.c.bf16 %v5451, %v5371
      %v5652 = vpack.c.bf16 %v5452, %v5372
      %v5653 = vpack.c.bf16 %v5461, %v5453
      %v5654 = vpack.c.bf16 %v5462, %v5454
      %v5655 = vpack.c.bf16 %v5463, %v5455
      %v5656 = vpack.c.bf16 %v5464, %v5456
      %v5657 = vpack.c.bf16 %v5465, %v5457
      %v5658 = vpack.c.bf16 %v5466, %v5458
      %v5659 = vpack.c.bf16 %v5467, %v5459
      %v5660 = vpack.c.bf16 %v5468, %v5460
      %v5661 = vpack.c.bf16 %v5549, %v5541
      %v5662 = vpack.c.bf16 %v5550, %v5542
      %v5663 = vpack.c.bf16 %v5551, %v5543
      %v5664 = vpack.c.bf16 %v5552, %v5544
      %v5665 = vpack.c.bf16 %v5553, %v5545
      %v5666 = vpack.c.bf16 %v5554, %v5546
      %v5667 = vpack.c.bf16 %v5555, %v5547
      %v5668 = vpack.c.bf16 %v5556, %v5548
      %v5669 = vpack.c.bf16 %v5557, %v5557
      %v5670 = vpack.c.bf16 %v5558, %v5558
      %v5671 = vpack.c.bf16 %v5559, %v5559
      %v5672 = vpack.c.bf16 %v5560, %v5560
      %v5673 = vpack.c.bf16 %v5561, %v5561
      %v5674 = vpack.c.bf16 %v5562, %v5562
      %v5675 = vpack.c.bf16 %v5563, %v5563
      %v5676 = vpack.c.bf16 %v5564, %v5564
      %v5677 = vld [vmem:[%s17] sm:$0xff]
      %v5678 = vld [vmem:[%s17 + $0x8] sm:$0xff]
      %v5679 = vld [vmem:[%s17 + $0x10] sm:$0xff]
      %v5680 = vld [vmem:[%s18] sm:$0xff]
      %v5681 = vld [vmem:[%s18 + $0x8] sm:$0xff]
      %v5682 = vld [vmem:[%s18 + $0x10] sm:$0xff]
      %5684 = vset.pattern.permute.xlu0 0
      %5685 = vperm.xlu0 %5684, %v5680
      %v5686 = vpop.permute.xlu0 %5685
      %5689 = vset.pattern.permute.xlu0 0
      %5690 = vperm.xlu0 %5689, %v5681
      %v5691 = vpop.permute.xlu0 %5690
      %5694 = vset.pattern.permute.xlu0 0
      %5695 = vperm.xlu0 %5694, %v5682
      %v5696 = vpop.permute.xlu0 %5695
      %v5701 = vunpack.c.l.b16 %v5677
      %v5702 = vunpack.c.h.b16 %v5677
      %v5703 = vunpack.c.l.b16 %v5678
      %v5704 = vunpack.c.h.b16 %v5678
      %v5705 = vunpack.c.l.b16 %v5679
      %v5706 = vunpack.c.h.b16 %v5679
      %v5707 = vpack.c.b16 %v5703, %v5701
      %v5708 = vpack.c.b16 %v5704, %v5702
      %v5709 = vpack.c.b16 %v5705, %v5705
      %v5710 = vpack.c.b16 %v5706, %v5706
      %vm5713 = vcmask 719872
      %v5715 = vsel %vm5713, %v5708, 0
      %v5718 = vsel %vm5713, %v5710, 0
      %v5721 = vsel %vm2164, %v5669, 0
      %v5724 = vsel %vm2164, %v5670, 0
      %v5727 = vsel %vm2164, %v5671, 0
      %v5730 = vsel %vm2164, %v5672, 0
      %v5733 = vsel %vm2164, %v5673, 0
      %v5736 = vsel %vm2164, %v5674, 0
      %v5739 = vsel %vm2164, %v5675, 0
      %v5742 = vsel %vm2164, %v5676, 0
      %5744 = vmatprep.subr.bf16.mxu0 %v5566
      %5745 = vmatpush1.bf16.msra.mxu0 %v5565
      %5746 = vmatprep.subr.bf16.mxu0 %v5574
      %5747 = vmatpush1.bf16.msra.mxu0 %v5573
      %5748 = vmatprep.subr.bf16.mxu0 %v5582
      %5749 = vmatpush1.bf16.msra.mxu0 %v5581
      %5750 = vmatprep.subr.bf16.mxu0 %v5590
      %5751 = vmatpush1.bf16.msra.mxu0 %v5589
      %5752 = vmatprep.subr.bf16.mxu0 %v5598
      %5753 = vmatpush1.bf16.msra.mxu0 %v5597
      %5754 = vmatprep.subr.bf16.mxu0 %v5606
      %5755 = vmatpush1.bf16.msra.mxu0 %v5605
      %5756 = vmatprep.subr.bf16.mxu0 %v5614
      %5757 = vmatpush1.bf16.msra.mxu0 %v5613
      %5758 = vmatprep.subr.bf16.mxu0 %v5622
      %5759 = vmatpush1.bf16.msra.mxu0 %v5621
      %5760 = vmatprep.subr.bf16.mxu0 %v5630
      %5761 = vmatpush1.bf16.msra.mxu0 %v5629
      %5762 = vmatprep.subr.bf16.mxu0 %v5638
      %5763 = vmatpush1.bf16.msra.mxu0 %v5637
      %5764 = vmatprep.subr.bf16.mxu0 %v5646
      %5765 = vmatpush1.bf16.msra.mxu0 %v5645
      %5766 = vmatprep.subr.bf16.mxu0 %v5654
      %5767 = vmatpush1.bf16.msra.mxu0 %v5653
      %5768 = vmatprep.subr.bf16.mxu0 %v5662
      %5769 = vmatpush1.bf16.msra.mxu0 %v5661
      %5770 = vmatprep.subr.bf16.mxu0 %v5724
      %5771 = vmatpush1.bf16.msra.mxu0 %v5721
      %5772 = vmatprep.subr.bf16.mxu0 0
      %5773 = vmatpush1.bf16.msra.mxu0 0
      %5774 = vmatprep.subr.bf16.mxu0 0
      %5775 = vmatpush1.bf16.msra.mxu0 0
      %5776 = vmatprep.mubr.bf16.mxu0 %v5715
      %5777 = vmatmul.mubr.bf16.gmra.mrb[0].mxu0 %v5707
      %v5778 = vpop.f32.mrb[0].mxu0
      %v5779 = vadd.f32 %v5686, %v5778
      %v5780 = vpop.f32.mrb[0].mxu0
      %v5781 = vadd.f32 %v5686, %v5780
      %v5782 = vpop.f32.mrb[0].mxu0
      %v5783 = vadd.f32 %v5691, %v5782
      %v5784 = vpop.f32.mrb[0].mxu0
      %v5785 = vadd.f32 %v5691, %v5784
      %5786 = vmatprep.mubr.bf16.mxu0 %v5718
      %5787 = vmatmul.mubr.bf16.gmra.mrb[0].mxu0 %v5709
      %v5788 = vpop.f32.mrb[0].mxu0
      %v5789 = vadd.f32 %v5696, %v5788
      %v5790 = vpop.f32.mrb[0].mxu0
      %v5791 = vadd.f32 %v5696, %v5790
      %v5792 = vpop.f32.mrb[0].mxu0
      %v5793 = vpop.f32.mrb[0].mxu0
      %5794 = vdwg.mxu0
      %5795 = vmatprep.subr.bf16.mxu0 %v5568
      %5796 = vmatpush1.bf16.msra.mxu0 %v5567
      %5797 = vmatprep.subr.bf16.mxu0 %v5576
      %5798 = vmatpush1.bf16.msra.mxu0 %v5575
      %5799 = vmatprep.subr.bf16.mxu0 %v5584
      %5800 = vmatpush1.bf16.msra.mxu0 %v5583
      %5801 = vmatprep.subr.bf16.mxu0 %v5592
      %5802 = vmatpush1.bf16.msra.mxu0 %v5591
      %5803 = vmatprep.subr.bf16.mxu0 %v5600
      %5804 = vmatpush1.bf16.msra.mxu0 %v5599
      %5805 = vmatprep.subr.bf16.mxu0 %v5608
      %5806 = vmatpush1.bf16.msra.mxu0 %v5607
      %5807 = vmatprep.subr.bf16.mxu0 %v5616
      %5808 = vmatpush1.bf16.msra.mxu0 %v5615
      %5809 = vmatprep.subr.bf16.mxu0 %v5624
      %5810 = vmatpush1.bf16.msra.mxu0 %v5623
      %5811 = vmatprep.subr.bf16.mxu0 %v5632
      %5812 = vmatpush1.bf16.msra.mxu0 %v5631
      %5813 = vmatprep.subr.bf16.mxu0 %v5640
      %5814 = vmatpush1.bf16.msra.mxu0 %v5639
      %5815 = vmatprep.subr.bf16.mxu0 %v5648
      %5816 = vmatpush1.bf16.msra.mxu0 %v5647
      %5817 = vmatprep.subr.bf16.mxu0 %v5656
      %5818 = vmatpush1.bf16.msra.mxu0 %v5655
      %5819 = vmatprep.subr.bf16.mxu0 %v5664
      %5820 = vmatpush1.bf16.msra.mxu0 %v5663
      %5821 = vmatprep.subr.bf16.mxu0 %v5730
      %5822 = vmatpush1.bf16.msra.mxu0 %v5727
      %5823 = vmatprep.subr.bf16.mxu0 0
      %5824 = vmatpush1.bf16.msra.mxu0 0
      %5825 = vmatprep.subr.bf16.mxu0 0
      %5826 = vmatpush1.bf16.msra.mxu0 0
      %5827 = vmatprep.mubr.bf16.mxu0 %v5715
      %5828 = vmatmul.mubr.bf16.gmra.mrb[0].mxu0 %v5707
      %v5829 = vpop.f32.mrb[0].mxu0
      %v5830 = vadd.f32 %v5686, %v5829
      %v5831 = vpop.f32.mrb[0].mxu0
      %v5832 = vadd.f32 %v5686, %v5831
      %v5833 = vpop.f32.mrb[0].mxu0
      %v5834 = vadd.f32 %v5691, %v5833
      %v5835 = vpop.f32.mrb[0].mxu0
      %v5836 = vadd.f32 %v5691, %v5835
      %5837 = vmatprep.mubr.bf16.mxu0 %v5718
      %5838 = vmatmul.mubr.bf16.gmra.mrb[0].mxu0 %v5709
      %v5839 = vpop.f32.mrb[0].mxu0
      %v5840 = vadd.f32 %v5696, %v5839
      %v5841 = vpop.f32.mrb[0].mxu0
      %v5842 = vadd.f32 %v5696, %v5841
      %v5843 = vpop.f32.mrb[0].mxu0
      %v5844 = vpop.f32.mrb[0].mxu0
      %5845 = vdwg.mxu0
      %5846 = vmatprep.subr.bf16.mxu0 %v5570
      %5847 = vmatpush1.bf16.msra.mxu0 %v5569
      %5848 = vmatprep.subr.bf16.mxu0 %v5578
      %5849 = vmatpush1.bf16.msra.mxu0 %v5577
      %5850 = vmatprep.subr.bf16.mxu0 %v5586
      %5851 = vmatpush1.bf16.msra.mxu0 %v5585
      %5852 = vmatprep.subr.bf16.mxu0 %v5594
      %5853 = vmatpush1.bf16.msra.mxu0 %v5593
      %5854 = vmatprep.subr.bf16.mxu0 %v5602
      %5855 = vmatpush1.bf16.msra.mxu0 %v5601
      %5856 = vmatprep.subr.bf16.mxu0 %v5610
      %5857 = vmatpush1.bf16.msra.mxu0 %v5609
      %5858 = vmatprep.subr.bf16.mxu0 %v5618
      %5859 = vmatpush1.bf16.msra.mxu0 %v5617
      %5860 = vmatprep.subr.bf16.mxu0 %v5626
      %5861 = vmatpush1.bf16.msra.mxu0 %v5625
      %5862 = vmatprep.subr.bf16.mxu0 %v5634
      %5863 = vmatpush1.bf16.msra.mxu0 %v5633
      %5864 = vmatprep.subr.bf16.mxu0 %v5642
      %5865 = vmatpush1.bf16.msra.mxu0 %v5641
      %5866 = vmatprep.subr.bf16.mxu0 %v5650
      %5867 = vmatpush1.bf16.msra.mxu0 %v5649
      %5868 = vmatprep.subr.bf16.mxu0 %v5658
      %5869 = vmatpush1.bf16.msra.mxu0 %v5657
      %5870 = vmatprep.subr.bf16.mxu0 %v5666
      %5871 = vmatpush1.bf16.msra.mxu0 %v5665
      %5872 = vmatprep.subr.bf16.mxu0 %v5736
      %5873 = vmatpush1.bf16.msra.mxu0 %v5733
      %5874 = vmatprep.subr.bf16.mxu0 0
      %5875 = vmatpush1.bf16.msra.mxu0 0
      %5876 = vmatprep.subr.bf16.mxu0 0
      %5877 = vmatpush1.bf16.msra.mxu0 0
      %5878 = vmatprep.mubr.bf16.mxu0 %v5715
      %5879 = vmatmul.mubr.bf16.gmra.mrb[0].mxu0 %v5707
      %v5880 = vpop.f32.mrb[0].mxu0
      %v5881 = vadd.f32 %v5686, %v5880
      %v5882 = vpop.f32.mrb[0].mxu0
      %v5883 = vadd.f32 %v5686, %v5882
      %v5884 = vpop.f32.mrb[0].mxu0
      %v5885 = vadd.f32 %v5691, %v5884
      %v5886 = vpop.f32.mrb[0].mxu0
      %v5887 = vadd.f32 %v5691, %v5886
      %5888 = vmatprep.mubr.bf16.mxu0 %v5718
      %5889 = vmatmul.mubr.bf16.gmra.mrb[0].mxu0 %v5709
      %v5890 = vpop.f32.mrb[0].mxu0
      %v5891 = vadd.f32 %v5696, %v5890
      %v5892 = vpop.f32.mrb[0].mxu0
      %v5893 = vadd.f32 %v5696, %v5892
      %v5894 = vpop.f32.mrb[0].mxu0
      %v5895 = vpop.f32.mrb[0].mxu0
      %5896 = vdwg.mxu0
      %5897 = vmatprep.subr.bf16.mxu0 %v5572
      %5898 = vmatpush1.bf16.msra.mxu0 %v5571
      %5899 = vmatprep.subr.bf16.mxu0 %v5580
      %5900 = vmatpush1.bf16.msra.mxu0 %v5579
      %5901 = vmatprep.subr.bf16.mxu0 %v5588
      %5902 = vmatpush1.bf16.msra.mxu0 %v5587
      %5903 = vmatprep.subr.bf16.mxu0 %v5596
      %5904 = vmatpush1.bf16.msra.mxu0 %v5595
      %5905 = vmatprep.subr.bf16.mxu0 %v5604
      %5906 = vmatpush1.bf16.msra.mxu0 %v5603
      %5907 = vmatprep.subr.bf16.mxu0 %v5612
      %5908 = vmatpush1.bf16.msra.mxu0 %v5611
      %5909 = vmatprep.subr.bf16.mxu0 %v5620
      %5910 = vmatpush1.bf16.msra.mxu0 %v5619
      %5911 = vmatprep.subr.bf16.mxu0 %v5628
      %5912 = vmatpush1.bf16.msra.mxu0 %v5627
      %5913 = vmatprep.subr.bf16.mxu0 %v5636
      %5914 = vmatpush1.bf16.msra.mxu0 %v5635
      %5915 = vmatprep.subr.bf16.mxu0 %v5644
      %5916 = vmatpush1.bf16.msra.mxu0 %v5643
      %5917 = vmatprep.subr.bf16.mxu0 %v5652
      %5918 = vmatpush1.bf16.msra.mxu0 %v5651
      %5919 = vmatprep.subr.bf16.mxu0 %v5660
      %5920 = vmatpush1.bf16.msra.mxu0 %v5659
      %5921 = vmatprep.subr.bf16.mxu0 %v5668
      %5922 = vmatpush1.bf16.msra.mxu0 %v5667
      %5923 = vmatprep.subr.bf16.mxu0 %v5742
      %5924 = vmatpush1.bf16.msra.mxu0 %v5739
      %5925 = vmatprep.subr.bf16.mxu0 0
      %5926 = vmatpush1.bf16.msra.mxu0 0
      %5927 = vmatprep.subr.bf16.mxu0 0
      %5928 = vmatpush1.bf16.msra.mxu0 0
      %5929 = vmatprep.mubr.bf16.mxu0 %v5715
      %5930 = vmatmul.mubr.bf16.gmra.mrb[0].mxu0 %v5707
      %v5931 = vpop.f32.mrb[0].mxu0
      %v5932 = vadd.f32 %v5686, %v5931
      %v5933 = vpop.f32.mrb[0].mxu0
      %v5934 = vadd.f32 %v5686, %v5933
      %v5935 = vpop.f32.mrb[0].mxu0
      %v5936 = vadd.f32 %v5691, %v5935
      %v5937 = vpop.f32.mrb[0].mxu0
      %v5938 = vadd.f32 %v5691, %v5937
      %5939 = vmatprep.mubr.bf16.mxu0 %v5718
      %5940 = vmatmul.mubr.bf16.gmra.mrb[0].mxu0 %v5709
      %v5941 = vpop.f32.mrb[0].mxu0
      %v5942 = vadd.f32 %v5696, %v5941
      %v5943 = vpop.f32.mrb[0].mxu0
      %v5944 = vadd.f32 %v5696, %v5943
      %v5945 = vpop.f32.mrb[0].mxu0
      %v5946 = vpop.f32.mrb[0].mxu0
      %5947 = vdwg.mxu0
      %v5948 = vmax.f32 %v5779, 0.0
      %v5949 = vmax.f32 %v5781, 0.0
      %v5950 = vmax.f32 %v5830, 0.0
      %v5951 = vmax.f32 %v5832, 0.0
      %v5952 = vmax.f32 %v5881, 0.0
      %v5953 = vmax.f32 %v5883, 0.0
      %v5954 = vmax.f32 %v5932, 0.0
      %v5955 = vmax.f32 %v5934, 0.0
      %v5956 = vmax.f32 %v5783, 0.0
      %v5957 = vmax.f32 %v5785, 0.0
      %v5958 = vmax.f32 %v5834, 0.0
      %v5959 = vmax.f32 %v5836, 0.0
      %v5960 = vmax.f32 %v5885, 0.0
      %v5961 = vmax.f32 %v5887, 0.0
      %v5962 = vmax.f32 %v5936, 0.0
      %v5963 = vmax.f32 %v5938, 0.0
      %v5964 = vmax.f32 %v5789, 0.0
      %v5965 = vmax.f32 %v5791, 0.0
      %v5966 = vmax.f32 %v5840, 0.0
      %v5967 = vmax.f32 %v5842, 0.0
      %v5968 = vmax.f32 %v5891, 0.0
      %v5969 = vmax.f32 %v5893, 0.0
      %v5970 = vmax.f32 %v5942, 0.0
      %v5971 = vmax.f32 %v5944, 0.0
      %5972 = vrot.lane.b32.xlu0 %v5948, 33
      %v5973 = vpop.permute.xlu0 %5972
      %5974 = vrot.lane.b32.xlu0 %v5956, 33
      %v5975 = vpop.permute.xlu0 %5974
      %5976 = vrot.lane.b32.xlu0 %v5964, 33
      %v5977 = vpop.permute.xlu0 %5976
      %5978 = vrot.lane.b32.xlu0 %v5949, 33
      %v5979 = vpop.permute.xlu0 %5978
      %5980 = vrot.lane.b32.xlu0 %v5957, 33
      %v5981 = vpop.permute.xlu0 %5980
      %5982 = vrot.lane.b32.xlu0 %v5965, 33
      %v5983 = vpop.permute.xlu0 %5982
      %5984 = vrot.lane.b32.xlu0 %v5950, 33
      %v5985 = vpop.permute.xlu0 %5984
      %5986 = vrot.lane.b32.xlu0 %v5958, 33
      %v5987 = vpop.permute.xlu0 %5986
      %5988 = vrot.lane.b32.xlu0 %v5966, 33
      %v5989 = vpop.permute.xlu0 %5988
      %5990 = vrot.lane.b32.xlu0 %v5951, 33
      %v5991 = vpop.permute.xlu0 %5990
      %5992 = vrot.lane.b32.xlu0 %v5959, 33
      %v5993 = vpop.permute.xlu0 %5992
      %5994 = vrot.lane.b32.xlu0 %v5967, 33
      %v5995 = vpop.permute.xlu0 %5994
      %5996 = vrot.lane.b32.xlu0 %v5952, 33
      %v5997 = vpop.permute.xlu0 %5996
      %5998 = vrot.lane.b32.xlu0 %v5960, 33
      %v5999 = vpop.permute.xlu0 %5998
      %6000 = vrot.lane.b32.xlu0 %v5968, 33
      %v6001 = vpop.permute.xlu0 %6000
      %6002 = vrot.lane.b32.xlu0 %v5953, 33
      %v6003 = vpop.permute.xlu0 %6002
      %6004 = vrot.lane.b32.xlu0 %v5961, 33
      %v6005 = vpop.permute.xlu0 %6004
      %6006 = vrot.lane.b32.xlu0 %v5969, 33
      %v6007 = vpop.permute.xlu0 %6006
      %6008 = vrot.lane.b32.xlu0 %v5954, 33
      %v6009 = vpop.permute.xlu0 %6008
      %6010 = vrot.lane.b32.xlu0 %v5962, 33
      %v6011 = vpop.permute.xlu0 %6010
      %6012 = vrot.lane.b32.xlu0 %v5970, 33
      %v6013 = vpop.permute.xlu0 %6012
      %6014 = vrot.lane.b32.xlu0 %v5955, 33
      %v6015 = vpop.permute.xlu0 %6014
      %6016 = vrot.lane.b32.xlu0 %v5963, 33
      %v6017 = vpop.permute.xlu0 %6016
      %6018 = vrot.lane.b32.xlu0 %v5971, 33
      %v6019 = vpop.permute.xlu0 %6018
      %v6020 = vsel %vm2236, %v6009, %v6015
      %v6021 = vsel %vm2236, %v6011, %v6017
      %v6022 = vsel %vm2236, %v6013, %v6019
      %v6023 = vsel %vm2236, %v6003, %v6009
      %v6024 = vsel %vm2236, %v6005, %v6011
      %v6025 = vsel %vm2236, %v6007, %v6013
      %v6026 = vsel %vm2236, %v5997, %v6003
      %v6027 = vsel %vm2236, %v5999, %v6005
      %v6028 = vsel %vm2236, %v6001, %v6007
      %v6029 = vsel %vm2236, %v5991, %v5997
      %v6030 = vsel %vm2236, %v5993, %v5999
      %v6031 = vsel %vm2236, %v5995, %v6001
      %v6032 = vsel %vm2236, %v5985, %v5991
      %v6033 = vsel %vm2236, %v5987, %v5993
      %v6034 = vsel %vm2236, %v5989, %v5995
      %v6035 = vsel %vm2236, %v5979, %v5985
      %v6036 = vsel %vm2236, %v5981, %v5987
      %v6037 = vsel %vm2236, %v5983, %v5989
      %v6038 = vsel %vm2236, %v5973, %v5979
      %v6039 = vsel %vm2236, %v5975, %v5981
      %v6040 = vsel %vm2236, %v5977, %v5983
      %v6041 = vsel %vm2236, %v6015, %v5973
      %v6042 = vsel %vm2236, %v6017, %v5975
      %v6043 = vsel %vm2236, %v6019, %v5977
      %v6044 = vmul.f32 %v6041, %v2252
      %v6045 = vmul.f32 %v6038, %v2256
      %v6046 = vmul.f32 %v6035, %v2260
      %v6047 = vmul.f32 %v6032, %v2264
      %v6048 = vmul.f32 %v6029, %v2268
      %v6049 = vmul.f32 %v6026, %v2272
      %v6050 = vmul.f32 %v6023, %v2276
      %v6051 = vmul.f32 %v6020, %v2280
      %v6052 = vmul.f32 %v6042, %v2252
      %v6053 = vmul.f32 %v6039, %v2256
      %v6054 = vmul.f32 %v6036, %v2260
      %v6055 = vmul.f32 %v6033, %v2264
      %v6056 = vmul.f32 %v6030, %v2268
      %v6057 = vmul.f32 %v6027, %v2272
      %v6058 = vmul.f32 %v6024, %v2276
      %v6059 = vmul.f32 %v6021, %v2280
      %v6060 = vmul.f32 %v6043, %v2252
      %v6061 = vmul.f32 %v6040, %v2256
      %v6062 = vmul.f32 %v6037, %v2260
      %v6063 = vmul.f32 %v6034, %v2264
      %v6064 = vmul.f32 %v6031, %v2268
      %v6065 = vmul.f32 %v6028, %v2272
      %v6066 = vmul.f32 %v6025, %v2276
      %v6067 = vmul.f32 %v6022, %v2280
      %6068 = vrot.lane.b32.xlu0 %v5948, 32
      %v6069 = vpop.permute.xlu0 %6068
      %6070 = vrot.lane.b32.xlu0 %v5956, 32
      %v6071 = vpop.permute.xlu0 %6070
      %6072 = vrot.lane.b32.xlu0 %v5964, 32
      %v6073 = vpop.permute.xlu0 %6072
      %6074 = vrot.lane.b32.xlu0 %v5949, 32
      %v6075 = vpop.permute.xlu0 %6074
      %6076 = vrot.lane.b32.xlu0 %v5957, 32
      %v6077 = vpop.permute.xlu0 %6076
      %6078 = vrot.lane.b32.xlu0 %v5965, 32
      %v6079 = vpop.permute.xlu0 %6078
      %6080 = vrot.lane.b32.xlu0 %v5950, 32
      %v6081 = vpop.permute.xlu0 %6080
      %6082 = vrot.lane.b32.xlu0 %v5958, 32
      %v6083 = vpop.permute.xlu0 %6082
      %6084 = vrot.lane.b32.xlu0 %v5966, 32
      %v6085 = vpop.permute.xlu0 %6084
      %6086 = vrot.lane.b32.xlu0 %v5951, 32
      %v6087 = vpop.permute.xlu0 %6086
      %6088 = vrot.lane.b32.xlu0 %v5959, 32
      %v6089 = vpop.permute.xlu0 %6088
      %6090 = vrot.lane.b32.xlu0 %v5967, 32
      %v6091 = vpop.permute.xlu0 %6090
      %6092 = vrot.lane.b32.xlu0 %v5952, 32
      %v6093 = vpop.permute.xlu0 %6092
      %6094 = vrot.lane.b32.xlu0 %v5960, 32
      %v6095 = vpop.permute.xlu0 %6094
      %6096 = vrot.lane.b32.xlu0 %v5968, 32
      %v6097 = vpop.permute.xlu0 %6096
      %6098 = vrot.lane.b32.xlu0 %v5953, 32
      %v6099 = vpop.permute.xlu0 %6098
      %6100 = vrot.lane.b32.xlu0 %v5961, 32
      %v6101 = vpop.permute.xlu0 %6100
      %6102 = vrot.lane.b32.xlu0 %v5969, 32
      %v6103 = vpop.permute.xlu0 %6102
      %6104 = vrot.lane.b32.xlu0 %v5954, 32
      %v6105 = vpop.permute.xlu0 %6104
      %6106 = vrot.lane.b32.xlu0 %v5962, 32
      %v6107 = vpop.permute.xlu0 %6106
      %6108 = vrot.lane.b32.xlu0 %v5970, 32
      %v6109 = vpop.permute.xlu0 %6108
      %6110 = vrot.lane.b32.xlu0 %v5955, 32
      %v6111 = vpop.permute.xlu0 %6110
      %6112 = vrot.lane.b32.xlu0 %v5963, 32
      %v6113 = vpop.permute.xlu0 %6112
      %6114 = vrot.lane.b32.xlu0 %v5971, 32
      %v6115 = vpop.permute.xlu0 %6114
      %v6116 = vsel %vm2313, %v6105, %v6111
      %v6117 = vsel %vm2313, %v6107, %v6113
      %v6118 = vsel %vm2313, %v6109, %v6115
      %v6119 = vsel %vm2313, %v6099, %v6105
      %v6120 = vsel %vm2313, %v6101, %v6107
      %v6121 = vsel %vm2313, %v6103, %v6109
      %v6122 = vsel %vm2313, %v6093, %v6099
      %v6123 = vsel %vm2313, %v6095, %v6101
      %v6124 = vsel %vm2313, %v6097, %v6103
      %v6125 = vsel %vm2313, %v6087, %v6093
      %v6126 = vsel %vm2313, %v6089, %v6095
      %v6127 = vsel %vm2313, %v6091, %v6097
      %v6128 = vsel %vm2313, %v6081, %v6087
      %v6129 = vsel %vm2313, %v6083, %v6089
      %v6130 = vsel %vm2313, %v6085, %v6091
      %v6131 = vsel %vm2313, %v6075, %v6081
      %v6132 = vsel %vm2313, %v6077, %v6083
      %v6133 = vsel %vm2313, %v6079, %v6085
      %v6134 = vsel %vm2313, %v6069, %v6075
      %v6135 = vsel %vm2313, %v6071, %v6077
      %v6136 = vsel %vm2313, %v6073, %v6079
      %v6137 = vsel %vm2313, %v6111, %v6069
      %v6138 = vsel %vm2313, %v6113, %v6071
      %v6139 = vsel %vm2313, %v6115, %v6073
      %v6140 = vmul.f32 %v6137, %v2330
      %v6141 = vmul.f32 %v6134, %v2334
      %v6142 = vmul.f32 %v6131, %v2338
      %v6143 = vmul.f32 %v6128, %v2342
      %v6144 = vmul.f32 %v6125, %v2346
      %v6145 = vmul.f32 %v6122, %v2350
      %v6146 = vmul.f32 %v6119, %v2354
      %v6147 = vmul.f32 %v6116, %v2358
      %v6148 = vmul.f32 %v6138, %v2330
      %v6149 = vmul.f32 %v6135, %v2334
      %v6150 = vmul.f32 %v6132, %v2338
      %v6151 = vmul.f32 %v6129, %v2342
      %v6152 = vmul.f32 %v6126, %v2346
      %v6153 = vmul.f32 %v6123, %v2350
      %v6154 = vmul.f32 %v6120, %v2354
      %v6155 = vmul.f32 %v6117, %v2358
      %v6156 = vmul.f32 %v6139, %v2330
      %v6157 = vmul.f32 %v6136, %v2334
      %v6158 = vmul.f32 %v6133, %v2338
      %v6159 = vmul.f32 %v6130, %v2342
      %v6160 = vmul.f32 %v6127, %v2346
      %v6161 = vmul.f32 %v6124, %v2350
      %v6162 = vmul.f32 %v6121, %v2354
      %v6163 = vmul.f32 %v6118, %v2358
      %6164 = vrot.lane.b32.xlu0 %v5948, 31
      %v6165 = vpop.permute.xlu0 %6164
      %6166 = vrot.lane.b32.xlu0 %v5956, 31
      %v6167 = vpop.permute.xlu0 %6166
      %6168 = vrot.lane.b32.xlu0 %v5964, 31
      %v6169 = vpop.permute.xlu0 %6168
      %6170 = vrot.lane.b32.xlu0 %v5949, 31
      %v6171 = vpop.permute.xlu0 %6170
      %6172 = vrot.lane.b32.xlu0 %v5957, 31
      %v6173 = vpop.permute.xlu0 %6172
      %6174 = vrot.lane.b32.xlu0 %v5965, 31
      %v6175 = vpop.permute.xlu0 %6174
      %6176 = vrot.lane.b32.xlu0 %v5950, 31
      %v6177 = vpop.permute.xlu0 %6176
      %6178 = vrot.lane.b32.xlu0 %v5958, 31
      %v6179 = vpop.permute.xlu0 %6178
      %6180 = vrot.lane.b32.xlu0 %v5966, 31
      %v6181 = vpop.permute.xlu0 %6180
      %6182 = vrot.lane.b32.xlu0 %v5951, 31
      %v6183 = vpop.permute.xlu0 %6182
      %6184 = vrot.lane.b32.xlu0 %v5959, 31
      %v6185 = vpop.permute.xlu0 %6184
      %6186 = vrot.lane.b32.xlu0 %v5967, 31
      %v6187 = vpop.permute.xlu0 %6186
      %6188 = vrot.lane.b32.xlu0 %v5952, 31
      %v6189 = vpop.permute.xlu0 %6188
      %6190 = vrot.lane.b32.xlu0 %v5960, 31
      %v6191 = vpop.permute.xlu0 %6190
      %6192 = vrot.lane.b32.xlu0 %v5968, 31
      %v6193 = vpop.permute.xlu0 %6192
      %6194 = vrot.lane.b32.xlu0 %v5953, 31
      %v6195 = vpop.permute.xlu0 %6194
      %6196 = vrot.lane.b32.xlu0 %v5961, 31
      %v6197 = vpop.permute.xlu0 %6196
      %6198 = vrot.lane.b32.xlu0 %v5969, 31
      %v6199 = vpop.permute.xlu0 %6198
      %6200 = vrot.lane.b32.xlu0 %v5954, 31
      %v6201 = vpop.permute.xlu0 %6200
      %6202 = vrot.lane.b32.xlu0 %v5962, 31
      %v6203 = vpop.permute.xlu0 %6202
      %6204 = vrot.lane.b32.xlu0 %v5970, 31
      %v6205 = vpop.permute.xlu0 %6204
      %6206 = vrot.lane.b32.xlu0 %v5955, 31
      %v6207 = vpop.permute.xlu0 %6206
      %6208 = vrot.lane.b32.xlu0 %v5963, 31
      %v6209 = vpop.permute.xlu0 %6208
      %6210 = vrot.lane.b32.xlu0 %v5971, 31
      %v6211 = vpop.permute.xlu0 %6210
      %v6212 = vsel %vm2391, %v6201, %v6207
      %v6213 = vsel %vm2391, %v6203, %v6209
      %v6214 = vsel %vm2391, %v6205, %v6211
      %v6215 = vsel %vm2391, %v6195, %v6201
      %v6216 = vsel %vm2391, %v6197, %v6203
      %v6217 = vsel %vm2391, %v6199, %v6205
      %v6218 = vsel %vm2391, %v6189, %v6195
      %v6219 = vsel %vm2391, %v6191, %v6197
      %v6220 = vsel %vm2391, %v6193, %v6199
      %v6221 = vsel %vm2391, %v6183, %v6189
      %v6222 = vsel %vm2391, %v6185, %v6191
      %v6223 = vsel %vm2391, %v6187, %v6193
      %v6224 = vsel %vm2391, %v6177, %v6183
      %v6225 = vsel %vm2391, %v6179, %v6185
      %v6226 = vsel %vm2391, %v6181, %v6187
      %v6227 = vsel %vm2391, %v6171, %v6177
      %v6228 = vsel %vm2391, %v6173, %v6179
      %v6229 = vsel %vm2391, %v6175, %v6181
      %v6230 = vsel %vm2391, %v6165, %v6171
      %v6231 = vsel %vm2391, %v6167, %v6173
      %v6232 = vsel %vm2391, %v6169, %v6175
      %v6233 = vsel %vm2391, %v6207, %v6165
      %v6234 = vsel %vm2391, %v6209, %v6167
      %v6235 = vsel %vm2391, %v6211, %v6169
      %v6236 = vmul.f32 %v6233, %v2408
      %v6237 = vmul.f32 %v6230, %v2412
      %v6238 = vmul.f32 %v6227, %v2416
      %v6239 = vmul.f32 %v6224, %v2420
      %v6240 = vmul.f32 %v6221, %v2424
      %v6241 = vmul.f32 %v6218, %v2428
      %v6242 = vmul.f32 %v6215, %v2432
      %v6243 = vmul.f32 %v6212, %v2436
      %v6244 = vmul.f32 %v6234, %v2408
      %v6245 = vmul.f32 %v6231, %v2412
      %v6246 = vmul.f32 %v6228, %v2416
      %v6247 = vmul.f32 %v6225, %v2420
      %v6248 = vmul.f32 %v6222, %v2424
      %v6249 = vmul.f32 %v6219, %v2428
      %v6250 = vmul.f32 %v6216, %v2432
      %v6251 = vmul.f32 %v6213, %v2436
      %v6252 = vmul.f32 %v6235, %v2408
      %v6253 = vmul.f32 %v6232, %v2412
      %v6254 = vmul.f32 %v6229, %v2416
      %v6255 = vmul.f32 %v6226, %v2420
      %v6256 = vmul.f32 %v6223, %v2424
      %v6257 = vmul.f32 %v6220, %v2428
      %v6258 = vmul.f32 %v6217, %v2432
      %v6259 = vmul.f32 %v6214, %v2436
      %6260 = vrot.lane.b32.xlu0 %v5948, 1
      %v6261 = vpop.permute.xlu0 %6260
      %6262 = vrot.lane.b32.xlu0 %v5956, 1
      %v6263 = vpop.permute.xlu0 %6262
      %6264 = vrot.lane.b32.xlu0 %v5964, 1
      %v6265 = vpop.permute.xlu0 %6264
      %6266 = vrot.lane.b32.xlu0 %v5949, 1
      %v6267 = vpop.permute.xlu0 %6266
      %6268 = vrot.lane.b32.xlu0 %v5957, 1
      %v6269 = vpop.permute.xlu0 %6268
      %6270 = vrot.lane.b32.xlu0 %v5965, 1
      %v6271 = vpop.permute.xlu0 %6270
      %6272 = vrot.lane.b32.xlu0 %v5950, 1
      %v6273 = vpop.permute.xlu0 %6272
      %6274 = vrot.lane.b32.xlu0 %v5958, 1
      %v6275 = vpop.permute.xlu0 %6274
      %6276 = vrot.lane.b32.xlu0 %v5966, 1
      %v6277 = vpop.permute.xlu0 %6276
      %6278 = vrot.lane.b32.xlu0 %v5951, 1
      %v6279 = vpop.permute.xlu0 %6278
      %6280 = vrot.lane.b32.xlu0 %v5959, 1
      %v6281 = vpop.permute.xlu0 %6280
      %6282 = vrot.lane.b32.xlu0 %v5967, 1
      %v6283 = vpop.permute.xlu0 %6282
      %6284 = vrot.lane.b32.xlu0 %v5952, 1
      %v6285 = vpop.permute.xlu0 %6284
      %6286 = vrot.lane.b32.xlu0 %v5960, 1
      %v6287 = vpop.permute.xlu0 %6286
      %6288 = vrot.lane.b32.xlu0 %v5968, 1
      %v6289 = vpop.permute.xlu0 %6288
      %6290 = vrot.lane.b32.xlu0 %v5953, 1
      %v6291 = vpop.permute.xlu0 %6290
      %6292 = vrot.lane.b32.xlu0 %v5961, 1
      %v6293 = vpop.permute.xlu0 %6292
      %6294 = vrot.lane.b32.xlu0 %v5969, 1
      %v6295 = vpop.permute.xlu0 %6294
      %6296 = vrot.lane.b32.xlu0 %v5954, 1
      %v6297 = vpop.permute.xlu0 %6296
      %6298 = vrot.lane.b32.xlu0 %v5962, 1
      %v6299 = vpop.permute.xlu0 %6298
      %6300 = vrot.lane.b32.xlu0 %v5970, 1
      %v6301 = vpop.permute.xlu0 %6300
      %6302 = vrot.lane.b32.xlu0 %v5955, 1
      %v6303 = vpop.permute.xlu0 %6302
      %6304 = vrot.lane.b32.xlu0 %v5963, 1
      %v6305 = vpop.permute.xlu0 %6304
      %6306 = vrot.lane.b32.xlu0 %v5971, 1
      %v6307 = vpop.permute.xlu0 %6306
      %v6308 = vsel %vm2025, %v6297, %v6303
      %v6309 = vsel %vm2025, %v6299, %v6305
      %v6310 = vsel %vm2025, %v6301, %v6307
      %v6311 = vsel %vm2025, %v6291, %v6297
      %v6312 = vsel %vm2025, %v6293, %v6299
      %v6313 = vsel %vm2025, %v6295, %v6301
      %v6314 = vsel %vm2025, %v6285, %v6291
      %v6315 = vsel %vm2025, %v6287, %v6293
      %v6316 = vsel %vm2025, %v6289, %v6295
      %v6317 = vsel %vm2025, %v6279, %v6285
      %v6318 = vsel %vm2025, %v6281, %v6287
      %v6319 = vsel %vm2025, %v6283, %v6289
      %v6320 = vsel %vm2025, %v6273, %v6279
      %v6321 = vsel %vm2025, %v6275, %v6281
      %v6322 = vsel %vm2025, %v6277, %v6283
      %v6323 = vsel %vm2025, %v6267, %v6273
      %v6324 = vsel %vm2025, %v6269, %v6275
      %v6325 = vsel %vm2025, %v6271, %v6277
      %v6326 = vsel %vm2025, %v6261, %v6267
      %v6327 = vsel %vm2025, %v6263, %v6269
      %v6328 = vsel %vm2025, %v6265, %v6271
      %v6329 = vsel %vm2025, %v6303, %v6261
      %v6330 = vsel %vm2025, %v6305, %v6263
      %v6331 = vsel %vm2025, %v6307, %v6265
      %v6332 = vmul.f32 %v6329, %v2485
      %v6333 = vmul.f32 %v6326, %v2489
      %v6334 = vmul.f32 %v6323, %v2493
      %v6335 = vmul.f32 %v6320, %v2497
      %v6336 = vmul.f32 %v6317, %v2501
      %v6337 = vmul.f32 %v6314, %v2505
      %v6338 = vmul.f32 %v6311, %v2509
      %v6339 = vmul.f32 %v6308, %v2513
      %v6340 = vmul.f32 %v6330, %v2485
      %v6341 = vmul.f32 %v6327, %v2489
      %v6342 = vmul.f32 %v6324, %v2493
      %v6343 = vmul.f32 %v6321, %v2497
      %v6344 = vmul.f32 %v6318, %v2501
      %v6345 = vmul.f32 %v6315, %v2505
      %v6346 = vmul.f32 %v6312, %v2509
      %v6347 = vmul.f32 %v6309, %v2513
      %v6348 = vmul.f32 %v6331, %v2485
      %v6349 = vmul.f32 %v6328, %v2489
      %v6350 = vmul.f32 %v6325, %v2493
      %v6351 = vmul.f32 %v6322, %v2497
      %v6352 = vmul.f32 %v6319, %v2501
      %v6353 = vmul.f32 %v6316, %v2505
      %v6354 = vmul.f32 %v6313, %v2509
      %v6355 = vmul.f32 %v6310, %v2513
      %6356 = vrot.lane.b32.xlu0 %v5948, 127
      %v6357 = vpop.permute.xlu0 %6356
      %6358 = vrot.lane.b32.xlu0 %v5956, 127
      %v6359 = vpop.permute.xlu0 %6358
      %6360 = vrot.lane.b32.xlu0 %v5964, 127
      %v6361 = vpop.permute.xlu0 %6360
      %6362 = vrot.lane.b32.xlu0 %v5949, 127
      %v6363 = vpop.permute.xlu0 %6362
      %6364 = vrot.lane.b32.xlu0 %v5957, 127
      %v6365 = vpop.permute.xlu0 %6364
      %6366 = vrot.lane.b32.xlu0 %v5965, 127
      %v6367 = vpop.permute.xlu0 %6366
      %6368 = vrot.lane.b32.xlu0 %v5950, 127
      %v6369 = vpop.permute.xlu0 %6368
      %6370 = vrot.lane.b32.xlu0 %v5958, 127
      %v6371 = vpop.permute.xlu0 %6370
      %6372 = vrot.lane.b32.xlu0 %v5966, 127
      %v6373 = vpop.permute.xlu0 %6372
      %6374 = vrot.lane.b32.xlu0 %v5951, 127
      %v6375 = vpop.permute.xlu0 %6374
      %6376 = vrot.lane.b32.xlu0 %v5959, 127
      %v6377 = vpop.permute.xlu0 %6376
      %6378 = vrot.lane.b32.xlu0 %v5967, 127
      %v6379 = vpop.permute.xlu0 %6378
      %6380 = vrot.lane.b32.xlu0 %v5952, 127
      %v6381 = vpop.permute.xlu0 %6380
      %6382 = vrot.lane.b32.xlu0 %v5960, 127
      %v6383 = vpop.permute.xlu0 %6382
      %6384 = vrot.lane.b32.xlu0 %v5968, 127
      %v6385 = vpop.permute.xlu0 %6384
      %6386 = vrot.lane.b32.xlu0 %v5953, 127
      %v6387 = vpop.permute.xlu0 %6386
      %6388 = vrot.lane.b32.xlu0 %v5961, 127
      %v6389 = vpop.permute.xlu0 %6388
      %6390 = vrot.lane.b32.xlu0 %v5969, 127
      %v6391 = vpop.permute.xlu0 %6390
      %6392 = vrot.lane.b32.xlu0 %v5954, 127
      %v6393 = vpop.permute.xlu0 %6392
      %6394 = vrot.lane.b32.xlu0 %v5962, 127
      %v6395 = vpop.permute.xlu0 %6394
      %6396 = vrot.lane.b32.xlu0 %v5970, 127
      %v6397 = vpop.permute.xlu0 %6396
      %6398 = vrot.lane.b32.xlu0 %v5955, 127
      %v6399 = vpop.permute.xlu0 %6398
      %6400 = vrot.lane.b32.xlu0 %v5963, 127
      %v6401 = vpop.permute.xlu0 %6400
      %6402 = vrot.lane.b32.xlu0 %v5971, 127
      %v6403 = vpop.permute.xlu0 %6402
      %v6404 = vsel %vm2047, %v6393, %v6399
      %v6405 = vsel %vm2047, %v6395, %v6401
      %v6406 = vsel %vm2047, %v6397, %v6403
      %v6407 = vsel %vm2047, %v6387, %v6393
      %v6408 = vsel %vm2047, %v6389, %v6395
      %v6409 = vsel %vm2047, %v6391, %v6397
      %v6410 = vsel %vm2047, %v6381, %v6387
      %v6411 = vsel %vm2047, %v6383, %v6389
      %v6412 = vsel %vm2047, %v6385, %v6391
      %v6413 = vsel %vm2047, %v6375, %v6381
      %v6414 = vsel %vm2047, %v6377, %v6383
      %v6415 = vsel %vm2047, %v6379, %v6385
      %v6416 = vsel %vm2047, %v6369, %v6375
      %v6417 = vsel %vm2047, %v6371, %v6377
      %v6418 = vsel %vm2047, %v6373, %v6379
      %v6419 = vsel %vm2047, %v6363, %v6369
      %v6420 = vsel %vm2047, %v6365, %v6371
      %v6421 = vsel %vm2047, %v6367, %v6373
      %v6422 = vsel %vm2047, %v6357, %v6363
      %v6423 = vsel %vm2047, %v6359, %v6365
      %v6424 = vsel %vm2047, %v6361, %v6367
      %v6425 = vsel %vm2047, %v6399, %v6357
      %v6426 = vsel %vm2047, %v6401, %v6359
      %v6427 = vsel %vm2047, %v6403, %v6361
      %v6428 = vmul.f32 %v6422, %v2562
      %v6429 = vmul.f32 %v6419, %v2566
      %v6430 = vmul.f32 %v6416, %v2570
      %v6431 = vmul.f32 %v6413, %v2574
      %v6432 = vmul.f32 %v6410, %v2578
      %v6433 = vmul.f32 %v6407, %v2582
      %v6434 = vmul.f32 %v6404, %v2586
      %v6435 = vmul.f32 %v6425, %v2590
      %v6436 = vmul.f32 %v6423, %v2562
      %v6437 = vmul.f32 %v6420, %v2566
      %v6438 = vmul.f32 %v6417, %v2570
      %v6439 = vmul.f32 %v6414, %v2574
      %v6440 = vmul.f32 %v6411, %v2578
      %v6441 = vmul.f32 %v6408, %v2582
      %v6442 = vmul.f32 %v6405, %v2586
      %v6443 = vmul.f32 %v6426, %v2590
      %v6444 = vmul.f32 %v6424, %v2562
      %v6445 = vmul.f32 %v6421, %v2566
      %v6446 = vmul.f32 %v6418, %v2570
      %v6447 = vmul.f32 %v6415, %v2574
      %v6448 = vmul.f32 %v6412, %v2578
      %v6449 = vmul.f32 %v6409, %v2582
      %v6450 = vmul.f32 %v6406, %v2586
      %v6451 = vmul.f32 %v6427, %v2590
      %6452 = vrot.lane.b32.xlu0 %v5948, 97
      %v6453 = vpop.permute.xlu0 %6452
      %6454 = vrot.lane.b32.xlu0 %v5956, 97
      %v6455 = vpop.permute.xlu0 %6454
      %6456 = vrot.lane.b32.xlu0 %v5964, 97
      %v6457 = vpop.permute.xlu0 %6456
      %6458 = vrot.lane.b32.xlu0 %v5949, 97
      %v6459 = vpop.permute.xlu0 %6458
      %6460 = vrot.lane.b32.xlu0 %v5957, 97
      %v6461 = vpop.permute.xlu0 %6460
      %6462 = vrot.lane.b32.xlu0 %v5965, 97
      %v6463 = vpop.permute.xlu0 %6462
      %6464 = vrot.lane.b32.xlu0 %v5950, 97
      %v6465 = vpop.permute.xlu0 %6464
      %6466 = vrot.lane.b32.xlu0 %v5958, 97
      %v6467 = vpop.permute.xlu0 %6466
      %6468 = vrot.lane.b32.xlu0 %v5966, 97
      %v6469 = vpop.permute.xlu0 %6468
      %6470 = vrot.lane.b32.xlu0 %v5951, 97
      %v6471 = vpop.permute.xlu0 %6470
      %6472 = vrot.lane.b32.xlu0 %v5959, 97
      %v6473 = vpop.permute.xlu0 %6472
      %6474 = vrot.lane.b32.xlu0 %v5967, 97
      %v6475 = vpop.permute.xlu0 %6474
      %6476 = vrot.lane.b32.xlu0 %v5952, 97
      %v6477 = vpop.permute.xlu0 %6476
      %6478 = vrot.lane.b32.xlu0 %v5960, 97
      %v6479 = vpop.permute.xlu0 %6478
      %6480 = vrot.lane.b32.xlu0 %v5968, 97
      %v6481 = vpop.permute.xlu0 %6480
      %6482 = vrot.lane.b32.xlu0 %v5953, 97
      %v6483 = vpop.permute.xlu0 %6482
      %6484 = vrot.lane.b32.xlu0 %v5961, 97
      %v6485 = vpop.permute.xlu0 %6484
      %6486 = vrot.lane.b32.xlu0 %v5969, 97
      %v6487 = vpop.permute.xlu0 %6486
      %6488 = vrot.lane.b32.xlu0 %v5954, 97
      %v6489 = vpop.permute.xlu0 %6488
      %6490 = vrot.lane.b32.xlu0 %v5962, 97
      %v6491 = vpop.permute.xlu0 %6490
      %6492 = vrot.lane.b32.xlu0 %v5970, 97
      %v6493 = vpop.permute.xlu0 %6492
      %6494 = vrot.lane.b32.xlu0 %v5955, 97
      %v6495 = vpop.permute.xlu0 %6494
      %6496 = vrot.lane.b32.xlu0 %v5963, 97
      %v6497 = vpop.permute.xlu0 %6496
      %6498 = vrot.lane.b32.xlu0 %v5971, 97
      %v6499 = vpop.permute.xlu0 %6498
      %v6500 = vsel %vm2623, %v6489, %v6495
      %v6501 = vsel %vm2623, %v6491, %v6497
      %v6502 = vsel %vm2623, %v6493, %v6499
      %v6503 = vsel %vm2623, %v6483, %v6489
      %v6504 = vsel %vm2623, %v6485, %v6491
      %v6505 = vsel %vm2623, %v6487, %v6493
      %v6506 = vsel %vm2623, %v6477, %v6483
      %v6507 = vsel %vm2623, %v6479, %v6485
      %v6508 = vsel %vm2623, %v6481, %v6487
      %v6509 = vsel %vm2623, %v6471, %v6477
      %v6510 = vsel %vm2623, %v6473, %v6479
      %v6511 = vsel %vm2623, %v6475, %v6481
      %v6512 = vsel %vm2623, %v6465, %v6471
      %v6513 = vsel %vm2623, %v6467, %v6473
      %v6514 = vsel %vm2623, %v6469, %v6475
      %v6515 = vsel %vm2623, %v6459, %v6465
      %v6516 = vsel %vm2623, %v6461, %v6467
      %v6517 = vsel %vm2623, %v6463, %v6469
      %v6518 = vsel %vm2623, %v6453, %v6459
      %v6519 = vsel %vm2623, %v6455, %v6461
      %v6520 = vsel %vm2623, %v6457, %v6463
      %v6521 = vsel %vm2623, %v6495, %v6453
      %v6522 = vsel %vm2623, %v6497, %v6455
      %v6523 = vsel %vm2623, %v6499, %v6457
      %v6524 = vmul.f32 %v6518, %v2640
      %v6525 = vmul.f32 %v6515, %v2644
      %v6526 = vmul.f32 %v6512, %v2648
      %v6527 = vmul.f32 %v6509, %v2652
      %v6528 = vmul.f32 %v6506, %v2656
      %v6529 = vmul.f32 %v6503, %v2660
      %v6530 = vmul.f32 %v6500, %v2664
      %v6531 = vmul.f32 %v6521, %v2668
      %v6532 = vmul.f32 %v6519, %v2640
      %v6533 = vmul.f32 %v6516, %v2644
      %v6534 = vmul.f32 %v6513, %v2648
      %v6535 = vmul.f32 %v6510, %v2652
      %v6536 = vmul.f32 %v6507, %v2656
      %v6537 = vmul.f32 %v6504, %v2660
      %v6538 = vmul.f32 %v6501, %v2664
      %v6539 = vmul.f32 %v6522, %v2668
      %v6540 = vmul.f32 %v6520, %v2640
      %v6541 = vmul.f32 %v6517, %v2644
      %v6542 = vmul.f32 %v6514, %v2648
      %v6543 = vmul.f32 %v6511, %v2652
      %v6544 = vmul.f32 %v6508, %v2656
      %v6545 = vmul.f32 %v6505, %v2660
      %v6546 = vmul.f32 %v6502, %v2664
      %v6547 = vmul.f32 %v6523, %v2668
      %6548 = vrot.lane.b32.xlu0 %v5948, 96
      %v6549 = vpop.permute.xlu0 %6548
      %6550 = vrot.lane.b32.xlu0 %v5956, 96
      %v6551 = vpop.permute.xlu0 %6550
      %6552 = vrot.lane.b32.xlu0 %v5964, 96
      %v6553 = vpop.permute.xlu0 %6552
      %6554 = vrot.lane.b32.xlu0 %v5949, 96
      %v6555 = vpop.permute.xlu0 %6554
      %6556 = vrot.lane.b32.xlu0 %v5957, 96
      %v6557 = vpop.permute.xlu0 %6556
      %6558 = vrot.lane.b32.xlu0 %v5965, 96
      %v6559 = vpop.permute.xlu0 %6558
      %6560 = vrot.lane.b32.xlu0 %v5950, 96
      %v6561 = vpop.permute.xlu0 %6560
      %6562 = vrot.lane.b32.xlu0 %v5958, 96
      %v6563 = vpop.permute.xlu0 %6562
      %6564 = vrot.lane.b32.xlu0 %v5966, 96
      %v6565 = vpop.permute.xlu0 %6564
      %6566 = vrot.lane.b32.xlu0 %v5951, 96
      %v6567 = vpop.permute.xlu0 %6566
      %6568 = vrot.lane.b32.xlu0 %v5959, 96
      %v6569 = vpop.permute.xlu0 %6568
      %6570 = vrot.lane.b32.xlu0 %v5967, 96
      %v6571 = vpop.permute.xlu0 %6570
      %6572 = vrot.lane.b32.xlu0 %v5952, 96
      %v6573 = vpop.permute.xlu0 %6572
      %6574 = vrot.lane.b32.xlu0 %v5960, 96
      %v6575 = vpop.permute.xlu0 %6574
      %6576 = vrot.lane.b32.xlu0 %v5968, 96
      %v6577 = vpop.permute.xlu0 %6576
      %6578 = vrot.lane.b32.xlu0 %v5953, 96
      %v6579 = vpop.permute.xlu0 %6578
      %6580 = vrot.lane.b32.xlu0 %v5961, 96
      %v6581 = vpop.permute.xlu0 %6580
      %6582 = vrot.lane.b32.xlu0 %v5969, 96
      %v6583 = vpop.permute.xlu0 %6582
      %6584 = vrot.lane.b32.xlu0 %v5954, 96
      %v6585 = vpop.permute.xlu0 %6584
      %6586 = vrot.lane.b32.xlu0 %v5962, 96
      %v6587 = vpop.permute.xlu0 %6586
      %6588 = vrot.lane.b32.xlu0 %v5970, 96
      %v6589 = vpop.permute.xlu0 %6588
      %6590 = vrot.lane.b32.xlu0 %v5955, 96
      %v6591 = vpop.permute.xlu0 %6590
      %6592 = vrot.lane.b32.xlu0 %v5963, 96
      %v6593 = vpop.permute.xlu0 %6592
      %6594 = vrot.lane.b32.xlu0 %v5971, 96
      %v6595 = vpop.permute.xlu0 %6594
      %v6596 = vsel %vm2701, %v6585, %v6591
      %v6597 = vsel %vm2701, %v6587, %v6593
      %v6598 = vsel %vm2701, %v6589, %v6595
      %v6599 = vsel %vm2701, %v6579, %v6585
      %v6600 = vsel %vm2701, %v6581, %v6587
      %v6601 = vsel %vm2701, %v6583, %v6589
      %v6602 = vsel %vm2701, %v6573, %v6579
      %v6603 = vsel %vm2701, %v6575, %v6581
      %v6604 = vsel %vm2701, %v6577, %v6583
      %v6605 = vsel %vm2701, %v6567, %v6573
      %v6606 = vsel %vm2701, %v6569, %v6575
      %v6607 = vsel %vm2701, %v6571, %v6577
      %v6608 = vsel %vm2701, %v6561, %v6567
      %v6609 = vsel %vm2701, %v6563, %v6569
      %v6610 = vsel %vm2701, %v6565, %v6571
      %v6611 = vsel %vm2701, %v6555, %v6561
      %v6612 = vsel %vm2701, %v6557, %v6563
      %v6613 = vsel %vm2701, %v6559, %v6565
      %v6614 = vsel %vm2701, %v6549, %v6555
      %v6615 = vsel %vm2701, %v6551, %v6557
      %v6616 = vsel %vm2701, %v6553, %v6559
      %v6617 = vsel %vm2701, %v6591, %v6549
      %v6618 = vsel %vm2701, %v6593, %v6551
      %v6619 = vsel %vm2701, %v6595, %v6553
      %v6620 = vmul.f32 %v6614, %v2718
      %v6621 = vmul.f32 %v6611, %v2722
      %v6622 = vmul.f32 %v6608, %v2726
      %v6623 = vmul.f32 %v6605, %v2730
      %v6624 = vmul.f32 %v6602, %v2734
      %v6625 = vmul.f32 %v6599, %v2738
      %v6626 = vmul.f32 %v6596, %v2742
      %v6627 = vmul.f32 %v6617, %v2746
      %v6628 = vmul.f32 %v6615, %v2718
      %v6629 = vmul.f32 %v6612, %v2722
      %v6630 = vmul.f32 %v6609, %v2726
      %v6631 = vmul.f32 %v6606, %v2730
      %v6632 = vmul.f32 %v6603, %v2734
      %v6633 = vmul.f32 %v6600, %v2738
      %v6634 = vmul.f32 %v6597, %v2742
      %v6635 = vmul.f32 %v6618, %v2746
      %v6636 = vmul.f32 %v6616, %v2718
      %v6637 = vmul.f32 %v6613, %v2722
      %v6638 = vmul.f32 %v6610, %v2726
      %v6639 = vmul.f32 %v6607, %v2730
      %v6640 = vmul.f32 %v6604, %v2734
      %v6641 = vmul.f32 %v6601, %v2738
      %v6642 = vmul.f32 %v6598, %v2742
      %v6643 = vmul.f32 %v6619, %v2746
      %6644 = vrot.lane.b32.xlu0 %v5948, 95
      %v6645 = vpop.permute.xlu0 %6644
      %6646 = vrot.lane.b32.xlu0 %v5956, 95
      %v6647 = vpop.permute.xlu0 %6646
      %6648 = vrot.lane.b32.xlu0 %v5964, 95
      %v6649 = vpop.permute.xlu0 %6648
      %6650 = vrot.lane.b32.xlu0 %v5949, 95
      %v6651 = vpop.permute.xlu0 %6650
      %6652 = vrot.lane.b32.xlu0 %v5957, 95
      %v6653 = vpop.permute.xlu0 %6652
      %6654 = vrot.lane.b32.xlu0 %v5965, 95
      %v6655 = vpop.permute.xlu0 %6654
      %6656 = vrot.lane.b32.xlu0 %v5950, 95
      %v6657 = vpop.permute.xlu0 %6656
      %6658 = vrot.lane.b32.xlu0 %v5958, 95
      %v6659 = vpop.permute.xlu0 %6658
      %6660 = vrot.lane.b32.xlu0 %v5966, 95
      %v6661 = vpop.permute.xlu0 %6660
      %6662 = vrot.lane.b32.xlu0 %v5951, 95
      %v6663 = vpop.permute.xlu0 %6662
      %6664 = vrot.lane.b32.xlu0 %v5959, 95
      %v6665 = vpop.permute.xlu0 %6664
      %6666 = vrot.lane.b32.xlu0 %v5967, 95
      %v6667 = vpop.permute.xlu0 %6666
      %6668 = vrot.lane.b32.xlu0 %v5952, 95
      %v6669 = vpop.permute.xlu0 %6668
      %6670 = vrot.lane.b32.xlu0 %v5960, 95
      %v6671 = vpop.permute.xlu0 %6670
      %6672 = vrot.lane.b32.xlu0 %v5968, 95
      %v6673 = vpop.permute.xlu0 %6672
      %6674 = vrot.lane.b32.xlu0 %v5953, 95
      %v6675 = vpop.permute.xlu0 %6674
      %6676 = vrot.lane.b32.xlu0 %v5961, 95
      %v6677 = vpop.permute.xlu0 %6676
      %6678 = vrot.lane.b32.xlu0 %v5969, 95
      %v6679 = vpop.permute.xlu0 %6678
      %6680 = vrot.lane.b32.xlu0 %v5954, 95
      %v6681 = vpop.permute.xlu0 %6680
      %6682 = vrot.lane.b32.xlu0 %v5962, 95
      %v6683 = vpop.permute.xlu0 %6682
      %6684 = vrot.lane.b32.xlu0 %v5970, 95
      %v6685 = vpop.permute.xlu0 %6684
      %6686 = vrot.lane.b32.xlu0 %v5955, 95
      %v6687 = vpop.permute.xlu0 %6686
      %6688 = vrot.lane.b32.xlu0 %v5963, 95
      %v6689 = vpop.permute.xlu0 %6688
      %6690 = vrot.lane.b32.xlu0 %v5971, 95
      %v6691 = vpop.permute.xlu0 %6690
      %v6692 = vsel %vm2779, %v6681, %v6687
      %v6693 = vsel %vm2779, %v6683, %v6689
      %v6694 = vsel %vm2779, %v6685, %v6691
      %v6695 = vsel %vm2779, %v6675, %v6681
      %v6696 = vsel %vm2779, %v6677, %v6683
      %v6697 = vsel %vm2779, %v6679, %v6685
      %v6698 = vsel %vm2779, %v6669, %v6675
      %v6699 = vsel %vm2779, %v6671, %v6677
      %v6700 = vsel %vm2779, %v6673, %v6679
      %v6701 = vsel %vm2779, %v6663, %v6669
      %v6702 = vsel %vm2779, %v6665, %v6671
      %v6703 = vsel %vm2779, %v6667, %v6673
      %v6704 = vsel %vm2779, %v6657, %v6663
      %v6705 = vsel %vm2779, %v6659, %v6665
      %v6706 = vsel %vm2779, %v6661, %v6667
      %v6707 = vsel %vm2779, %v6651, %v6657
      %v6708 = vsel %vm2779, %v6653, %v6659
      %v6709 = vsel %vm2779, %v6655, %v6661
      %v6710 = vsel %vm2779, %v6645, %v6651
      %v6711 = vsel %vm2779, %v6647, %v6653
      %v6712 = vsel %vm2779, %v6649, %v6655
      %v6713 = vsel %vm2779, %v6687, %v6645
      %v6714 = vsel %vm2779, %v6689, %v6647
      %v6715 = vsel %vm2779, %v6691, %v6649
      %v6716 = vmul.f32 %v6710, %v2796
      %v6717 = vmul.f32 %v6707, %v2800
      %v6718 = vmul.f32 %v6704, %v2804
      %v6719 = vmul.f32 %v6701, %v2808
      %v6720 = vmul.f32 %v6698, %v2812
      %v6721 = vmul.f32 %v6695, %v2816
      %v6722 = vmul.f32 %v6692, %v2820
      %v6723 = vmul.f32 %v6713, %v2824
      %v6724 = vmul.f32 %v6711, %v2796
      %v6725 = vmul.f32 %v6708, %v2800
      %v6726 = vmul.f32 %v6705, %v2804
      %v6727 = vmul.f32 %v6702, %v2808
      %v6728 = vmul.f32 %v6699, %v2812
      %v6729 = vmul.f32 %v6696, %v2816
      %v6730 = vmul.f32 %v6693, %v2820
      %v6731 = vmul.f32 %v6714, %v2824
      %v6732 = vmul.f32 %v6712, %v2796
      %v6733 = vmul.f32 %v6709, %v2800
      %v6734 = vmul.f32 %v6706, %v2804
      %v6735 = vmul.f32 %v6703, %v2808
      %v6736 = vmul.f32 %v6700, %v2812
      %v6737 = vmul.f32 %v6697, %v2816
      %v6738 = vmul.f32 %v6694, %v2820
      %v6739 = vmul.f32 %v6715, %v2824
      %v6740 = vpack.c.bf16 %v6052, %v6044
      %v6741 = vpack.c.bf16 %v6053, %v6045
      %v6742 = vpack.c.bf16 %v6054, %v6046
      %v6743 = vpack.c.bf16 %v6055, %v6047
      %v6744 = vpack.c.bf16 %v6056, %v6048
      %v6745 = vpack.c.bf16 %v6057, %v6049
      %v6746 = vpack.c.bf16 %v6058, %v6050
      %v6747 = vpack.c.bf16 %v6059, %v6051
      %v6748 = vpack.c.bf16 %v6140, %v6060
      %v6749 = vpack.c.bf16 %v6141, %v6061
      %v6750 = vpack.c.bf16 %v6142, %v6062
      %v6751 = vpack.c.bf16 %v6143, %v6063
      %v6752 = vpack.c.bf16 %v6144, %v6064
      %v6753 = vpack.c.bf16 %v6145, %v6065
      %v6754 = vpack.c.bf16 %v6146, %v6066
      %v6755 = vpack.c.bf16 %v6147, %v6067
      %v6756 = vpack.c.bf16 %v6156, %v6148
      %v6757 = vpack.c.bf16 %v6157, %v6149
      %v6758 = vpack.c.bf16 %v6158, %v6150
      %v6759 = vpack.c.bf16 %v6159, %v6151
      %v6760 = vpack.c.bf16 %v6160, %v6152
      %v6761 = vpack.c.bf16 %v6161, %v6153
      %v6762 = vpack.c.bf16 %v6162, %v6154
      %v6763 = vpack.c.bf16 %v6163, %v6155
      %v6764 = vpack.c.bf16 %v6244, %v6236
      %v6765 = vpack.c.bf16 %v6245, %v6237
      %v6766 = vpack.c.bf16 %v6246, %v6238
      %v6767 = vpack.c.bf16 %v6247, %v6239
      %v6768 = vpack.c.bf16 %v6248, %v6240
      %v6769 = vpack.c.bf16 %v6249, %v6241
      %v6770 = vpack.c.bf16 %v6250, %v6242
      %v6771 = vpack.c.bf16 %v6251, %v6243
      %v6772 = vpack.c.bf16 %v6332, %v6252
      %v6773 = vpack.c.bf16 %v6333, %v6253
      %v6774 = vpack.c.bf16 %v6334, %v6254
      %v6775 = vpack.c.bf16 %v6335, %v6255
      %v6776 = vpack.c.bf16 %v6336, %v6256
      %v6777 = vpack.c.bf16 %v6337, %v6257
      %v6778 = vpack.c.bf16 %v6338, %v6258
      %v6779 = vpack.c.bf16 %v6339, %v6259
      %v6780 = vpack.c.bf16 %v6348, %v6340
      %v6781 = vpack.c.bf16 %v6349, %v6341
      %v6782 = vpack.c.bf16 %v6350, %v6342
      %v6783 = vpack.c.bf16 %v6351, %v6343
      %v6784 = vpack.c.bf16 %v6352, %v6344
      %v6785 = vpack.c.bf16 %v6353, %v6345
      %v6786 = vpack.c.bf16 %v6354, %v6346
      %v6787 = vpack.c.bf16 %v6355, %v6347
      %v6788 = vpack.c.bf16 %v5956, %v5948
      %v6789 = vpack.c.bf16 %v5957, %v5949
      %v6790 = vpack.c.bf16 %v5958, %v5950
      %v6791 = vpack.c.bf16 %v5959, %v5951
      %v6792 = vpack.c.bf16 %v5960, %v5952
      %v6793 = vpack.c.bf16 %v5961, %v5953
      %v6794 = vpack.c.bf16 %v5962, %v5954
      %v6795 = vpack.c.bf16 %v5963, %v5955
      %v6796 = vpack.c.bf16 %v6428, %v5964
      %v6797 = vpack.c.bf16 %v6429, %v5965
      %v6798 = vpack.c.bf16 %v6430, %v5966
      %v6799 = vpack.c.bf16 %v6431, %v5967
      %v6800 = vpack.c.bf16 %v6432, %v5968
      %v6801 = vpack.c.bf16 %v6433, %v5969
      %v6802 = vpack.c.bf16 %v6434, %v5970
      %v6803 = vpack.c.bf16 %v6435, %v5971
      %v6804 = vpack.c.bf16 %v6444, %v6436
      %v6805 = vpack.c.bf16 %v6445, %v6437
      %v6806 = vpack.c.bf16 %v6446, %v6438
      %v6807 = vpack.c.bf16 %v6447, %v6439
      %v6808 = vpack.c.bf16 %v6448, %v6440
      %v6809 = vpack.c.bf16 %v6449, %v6441
      %v6810 = vpack.c.bf16 %v6450, %v6442
      %v6811 = vpack.c.bf16 %v6451, %v6443
      %v6812 = vpack.c.bf16 %v6532, %v6524
      %v6813 = vpack.c.bf16 %v6533, %v6525
      %v6814 = vpack.c.bf16 %v6534, %v6526
      %v6815 = vpack.c.bf16 %v6535, %v6527
      %v6816 = vpack.c.bf16 %v6536, %v6528
      %v6817 = vpack.c.bf16 %v6537, %v6529
      %v6818 = vpack.c.bf16 %v6538, %v6530
      %v6819 = vpack.c.bf16 %v6539, %v6531
      %v6820 = vpack.c.bf16 %v6620, %v6540
      %v6821 = vpack.c.bf16 %v6621, %v6541
      %v6822 = vpack.c.bf16 %v6622, %v6542
      %v6823 = vpack.c.bf16 %v6623, %v6543
      %v6824 = vpack.c.bf16 %v6624, %v6544
      %v6825 = vpack.c.bf16 %v6625, %v6545
      %v6826 = vpack.c.bf16 %v6626, %v6546
      %v6827 = vpack.c.bf16 %v6627, %v6547
      %v6828 = vpack.c.bf16 %v6636, %v6628
      %v6829 = vpack.c.bf16 %v6637, %v6629
      %v6830 = vpack.c.bf16 %v6638, %v6630
      %v6831 = vpack.c.bf16 %v6639, %v6631
      %v6832 = vpack.c.bf16 %v6640, %v6632
      %v6833 = vpack.c.bf16 %v6641, %v6633
      %v6834 = vpack.c.bf16 %v6642, %v6634
      %v6835 = vpack.c.bf16 %v6643, %v6635
      %v6836 = vpack.c.bf16 %v6724, %v6716
      %v6837 = vpack.c.bf16 %v6725, %v6717
      %v6838 = vpack.c.bf16 %v6726, %v6718
      %v6839 = vpack.c.bf16 %v6727, %v6719
      %v6840 = vpack.c.bf16 %v6728, %v6720
      %v6841 = vpack.c.bf16 %v6729, %v6721
      %v6842 = vpack.c.bf16 %v6730, %v6722
      %v6843 = vpack.c.bf16 %v6731, %v6723
      %v6844 = vpack.c.bf16 %v6732, %v6732
      %v6845 = vpack.c.bf16 %v6733, %v6733
      %v6846 = vpack.c.bf16 %v6734, %v6734
      %v6847 = vpack.c.bf16 %v6735, %v6735
      %v6848 = vpack.c.bf16 %v6736, %v6736
      %v6849 = vpack.c.bf16 %v6737, %v6737
      %v6850 = vpack.c.bf16 %v6738, %v6738
      %v6851 = vpack.c.bf16 %v6739, %v6739
      %v6852 = vld [vmem:[%s19] sm:$0xff]
      %v6853 = vld [vmem:[%s19 + $0x8] sm:$0xff]
      %v6854 = vld [vmem:[%s19 + $0x10] sm:$0xff]
      %v6855 = vld [vmem:[%s20] sm:$0xff]
      %v6856 = vld [vmem:[%s20 + $0x8] sm:$0xff]
      %v6857 = vld [vmem:[%s20 + $0x10] sm:$0xff]
      %6859 = vset.pattern.permute.xlu0 0
      %6860 = vperm.xlu0 %6859, %v6855
      %v6861 = vpop.permute.xlu0 %6860
      %6864 = vset.pattern.permute.xlu0 0
      %6865 = vperm.xlu0 %6864, %v6856
      %v6866 = vpop.permute.xlu0 %6865
      %6869 = vset.pattern.permute.xlu0 0
      %6870 = vperm.xlu0 %6869, %v6857
      %v6871 = vpop.permute.xlu0 %6870
      %v6876 = vunpack.c.l.b16 %v6852
      %v6877 = vunpack.c.h.b16 %v6852
      %v6878 = vunpack.c.l.b16 %v6853
      %v6879 = vunpack.c.h.b16 %v6853
      %v6880 = vunpack.c.l.b16 %v6854
      %v6881 = vunpack.c.h.b16 %v6854
      %v6882 = vpack.c.b16 %v6878, %v6876
      %v6883 = vpack.c.b16 %v6879, %v6877
      %v6884 = vpack.c.b16 %v6880, %v6880
      %v6885 = vpack.c.b16 %v6881, %v6881
      %v6889 = vsel %vm5713, %v6883, 0
      %v6892 = vsel %vm5713, %v6885, 0
      %v6895 = vsel %vm2164, %v6844, 0
      %v6898 = vsel %vm2164, %v6845, 0
      %v6901 = vsel %vm2164, %v6846, 0
      %v6904 = vsel %vm2164, %v6847, 0
      %v6907 = vsel %vm2164, %v6848, 0
      %v6910 = vsel %vm2164, %v6849, 0
      %v6913 = vsel %vm2164, %v6850, 0
      %v6916 = vsel %vm2164, %v6851, 0
      %6918 = vmatprep.subr.bf16.mxu0 %v6741
      %6919 = vmatpush1.bf16.msra.mxu0 %v6740
      %6920 = vmatprep.subr.bf16.mxu0 %v6749
      %6921 = vmatpush1.bf16.msra.mxu0 %v6748
      %6922 = vmatprep.subr.bf16.mxu0 %v6757
      %6923 = vmatpush1.bf16.msra.mxu0 %v6756
      %6924 = vmatprep.subr.bf16.mxu0 %v6765
      %6925 = vmatpush1.bf16.msra.mxu0 %v6764
      %6926 = vmatprep.subr.bf16.mxu0 %v6773
      %6927 = vmatpush1.bf16.msra.mxu0 %v6772
      %6928 = vmatprep.subr.bf16.mxu0 %v6781
      %6929 = vmatpush1.bf16.msra.mxu0 %v6780
      %6930 = vmatprep.subr.bf16.mxu0 %v6789
      %6931 = vmatpush1.bf16.msra.mxu0 %v6788
      %6932 = vmatprep.subr.bf16.mxu0 %v6797
      %6933 = vmatpush1.bf16.msra.mxu0 %v6796
      %6934 = vmatprep.subr.bf16.mxu0 %v6805
      %6935 = vmatpush1.bf16.msra.mxu0 %v6804
      %6936 = vmatprep.subr.bf16.mxu0 %v6813
      %6937 = vmatpush1.bf16.msra.mxu0 %v6812
      %6938 = vmatprep.subr.bf16.mxu0 %v6821
      %6939 = vmatpush1.bf16.msra.mxu0 %v6820
      %6940 = vmatprep.subr.bf16.mxu0 %v6829
      %6941 = vmatpush1.bf16.msra.mxu0 %v6828
      %6942 = vmatprep.subr.bf16.mxu0 %v6837
      %6943 = vmatpush1.bf16.msra.mxu0 %v6836
      %6944 = vmatprep.subr.bf16.mxu0 %v6898
      %6945 = vmatpush1.bf16.msra.mxu0 %v6895
      %6946 = vmatprep.subr.bf16.mxu0 0
      %6947 = vmatpush1.bf16.msra.mxu0 0
      %6948 = vmatprep.subr.bf16.mxu0 0
      %6949 = vmatpush1.bf16.msra.mxu0 0
      %6950 = vmatprep.mubr.bf16.mxu0 %v6889
      %6951 = vmatmul.mubr.bf16.gmra.mrb[0].mxu0 %v6882
      %v6952 = vpop.f32.mrb[0].mxu0
      %v6953 = vadd.f32 %v6861, %v6952
      %v6954 = vpop.f32.mrb[0].mxu0
      %v6955 = vadd.f32 %v6861, %v6954
      %v6956 = vpop.f32.mrb[0].mxu0
      %v6957 = vadd.f32 %v6866, %v6956
      %v6958 = vpop.f32.mrb[0].mxu0
      %v6959 = vadd.f32 %v6866, %v6958
      %6960 = vmatprep.mubr.bf16.mxu0 %v6892
      %6961 = vmatmul.mubr.bf16.gmra.mrb[0].mxu0 %v6884
      %v6962 = vpop.f32.mrb[0].mxu0
      %v6963 = vadd.f32 %v6871, %v6962
      %v6964 = vpop.f32.mrb[0].mxu0
      %v6965 = vadd.f32 %v6871, %v6964
      %v6966 = vpop.f32.mrb[0].mxu0
      %v6967 = vpop.f32.mrb[0].mxu0
      %6968 = vdwg.mxu0
      %6969 = vmatprep.subr.bf16.mxu0 %v6743
      %6970 = vmatpush1.bf16.msra.mxu0 %v6742
      %6971 = vmatprep.subr.bf16.mxu0 %v6751
      %6972 = vmatpush1.bf16.msra.mxu0 %v6750
      %6973 = vmatprep.subr.bf16.mxu0 %v6759
      %6974 = vmatpush1.bf16.msra.mxu0 %v6758
      %6975 = vmatprep.subr.bf16.mxu0 %v6767
      %6976 = vmatpush1.bf16.msra.mxu0 %v6766
      %6977 = vmatprep.subr.bf16.mxu0 %v6775
      %6978 = vmatpush1.bf16.msra.mxu0 %v6774
      %6979 = vmatprep.subr.bf16.mxu0 %v6783
      %6980 = vmatpush1.bf16.msra.mxu0 %v6782
      %6981 = vmatprep.subr.bf16.mxu0 %v6791
      %6982 = vmatpush1.bf16.msra.mxu0 %v6790
      %6983 = vmatprep.subr.bf16.mxu0 %v6799
      %6984 = vmatpush1.bf16.msra.mxu0 %v6798
      %6985 = vmatprep.subr.bf16.mxu0 %v6807
      %6986 = vmatpush1.bf16.msra.mxu0 %v6806
      %6987 = vmatprep.subr.bf16.mxu0 %v6815
      %6988 = vmatpush1.bf16.msra.mxu0 %v6814
      %6989 = vmatprep.subr.bf16.mxu0 %v6823
      %6990 = vmatpush1.bf16.msra.mxu0 %v6822
      %6991 = vmatprep.subr.bf16.mxu0 %v6831
      %6992 = vmatpush1.bf16.msra.mxu0 %v6830
      %6993 = vmatprep.subr.bf16.mxu0 %v6839
      %6994 = vmatpush1.bf16.msra.mxu0 %v6838
      %6995 = vmatprep.subr.bf16.mxu0 %v6904
      %6996 = vmatpush1.bf16.msra.mxu0 %v6901
      %6997 = vmatprep.subr.bf16.mxu0 0
      %6998 = vmatpush1.bf16.msra.mxu0 0
      %6999 = vmatprep.subr.bf16.mxu0 0
      %7000 = vmatpush1.bf16.msra.mxu0 0
      %7001 = vmatprep.mubr.bf16.mxu0 %v6889
      %7002 = vmatmul.mubr.bf16.gmra.mrb[0].mxu0 %v6882
      %v7003 = vpop.f32.mrb[0].mxu0
      %v7004 = vadd.f32 %v6861, %v7003
      %v7005 = vpop.f32.mrb[0].mxu0
      %v7006 = vadd.f32 %v6861, %v7005
      %v7007 = vpop.f32.mrb[0].mxu0
      %v7008 = vadd.f32 %v6866, %v7007
      %v7009 = vpop.f32.mrb[0].mxu0
      %v7010 = vadd.f32 %v6866, %v7009
      %7011 = vmatprep.mubr.bf16.mxu0 %v6892
      %7012 = vmatmul.mubr.bf16.gmra.mrb[0].mxu0 %v6884
      %v7013 = vpop.f32.mrb[0].mxu0
      %v7014 = vadd.f32 %v6871, %v7013
      %v7015 = vpop.f32.mrb[0].mxu0
      %v7016 = vadd.f32 %v6871, %v7015
      %v7017 = vpop.f32.mrb[0].mxu0
      %v7018 = vpop.f32.mrb[0].mxu0
      %7019 = vdwg.mxu0
      %7020 = vmatprep.subr.bf16.mxu0 %v6745
      %7021 = vmatpush1.bf16.msra.mxu0 %v6744
      %7022 = vmatprep.subr.bf16.mxu0 %v6753
      %7023 = vmatpush1.bf16.msra.mxu0 %v6752
      %7024 = vmatprep.subr.bf16.mxu0 %v6761
      %7025 = vmatpush1.bf16.msra.mxu0 %v6760
      %7026 = vmatprep.subr.bf16.mxu0 %v6769
      %7027 = vmatpush1.bf16.msra.mxu0 %v6768
      %7028 = vmatprep.subr.bf16.mxu0 %v6777
      %7029 = vmatpush1.bf16.msra.mxu0 %v6776
      %7030 = vmatprep.subr.bf16.mxu0 %v6785
      %7031 = vmatpush1.bf16.msra.mxu0 %v6784
      %7032 = vmatprep.subr.bf16.mxu0 %v6793
      %7033 = vmatpush1.bf16.msra.mxu0 %v6792
      %7034 = vmatprep.subr.bf16.mxu0 %v6801
      %7035 = vmatpush1.bf16.msra.mxu0 %v6800
      %7036 = vmatprep.subr.bf16.mxu0 %v6809
      %7037 = vmatpush1.bf16.msra.mxu0 %v6808
      %7038 = vmatprep.subr.bf16.mxu0 %v6817
      %7039 = vmatpush1.bf16.msra.mxu0 %v6816
      %7040 = vmatprep.subr.bf16.mxu0 %v6825
      %7041 = vmatpush1.bf16.msra.mxu0 %v6824
      %7042 = vmatprep.subr.bf16.mxu0 %v6833
      %7043 = vmatpush1.bf16.msra.mxu0 %v6832
      %7044 = vmatprep.subr.bf16.mxu0 %v6841
      %7045 = vmatpush1.bf16.msra.mxu0 %v6840
      %7046 = vmatprep.subr.bf16.mxu0 %v6910
      %7047 = vmatpush1.bf16.msra.mxu0 %v6907
      %7048 = vmatprep.subr.bf16.mxu0 0
      %7049 = vmatpush1.bf16.msra.mxu0 0
      %7050 = vmatprep.subr.bf16.mxu0 0
      %7051 = vmatpush1.bf16.msra.mxu0 0
      %7052 = vmatprep.mubr.bf16.mxu0 %v6889
      %7053 = vmatmul.mubr.bf16.gmra.mrb[0].mxu0 %v6882
      %v7054 = vpop.f32.mrb[0].mxu0
      %v7055 = vadd.f32 %v6861, %v7054
      %v7056 = vpop.f32.mrb[0].mxu0
      %v7057 = vadd.f32 %v6861, %v7056
      %v7058 = vpop.f32.mrb[0].mxu0
      %v7059 = vadd.f32 %v6866, %v7058
      %v7060 = vpop.f32.mrb[0].mxu0
      %v7061 = vadd.f32 %v6866, %v7060
      %7062 = vmatprep.mubr.bf16.mxu0 %v6892
      %7063 = vmatmul.mubr.bf16.gmra.mrb[0].mxu0 %v6884
      %v7064 = vpop.f32.mrb[0].mxu0
      %v7065 = vadd.f32 %v6871, %v7064
      %v7066 = vpop.f32.mrb[0].mxu0
      %v7067 = vadd.f32 %v6871, %v7066
      %v7068 = vpop.f32.mrb[0].mxu0
      %v7069 = vpop.f32.mrb[0].mxu0
      %7070 = vdwg.mxu0
      %7071 = vmatprep.subr.bf16.mxu0 %v6747
      %7072 = vmatpush1.bf16.msra.mxu0 %v6746
      %7073 = vmatprep.subr.bf16.mxu0 %v6755
      %7074 = vmatpush1.bf16.msra.mxu0 %v6754
      %7075 = vmatprep.subr.bf16.mxu0 %v6763
      %7076 = vmatpush1.bf16.msra.mxu0 %v6762
      %7077 = vmatprep.subr.bf16.mxu0 %v6771
      %7078 = vmatpush1.bf16.msra.mxu0 %v6770
      %7079 = vmatprep.subr.bf16.mxu0 %v6779
      %7080 = vmatpush1.bf16.msra.mxu0 %v6778
      %7081 = vmatprep.subr.bf16.mxu0 %v6787
      %7082 = vmatpush1.bf16.msra.mxu0 %v6786
      %7083 = vmatprep.subr.bf16.mxu0 %v6795
      %7084 = vmatpush1.bf16.msra.mxu0 %v6794
      %7085 = vmatprep.subr.bf16.mxu0 %v6803
      %7086 = vmatpush1.bf16.msra.mxu0 %v6802
      %7087 = vmatprep.subr.bf16.mxu0 %v6811
      %7088 = vmatpush1.bf16.msra.mxu0 %v6810
      %7089 = vmatprep.subr.bf16.mxu0 %v6819
      %7090 = vmatpush1.bf16.msra.mxu0 %v6818
      %7091 = vmatprep.subr.bf16.mxu0 %v6827
      %7092 = vmatpush1.bf16.msra.mxu0 %v6826
      %7093 = vmatprep.subr.bf16.mxu0 %v6835
      %7094 = vmatpush1.bf16.msra.mxu0 %v6834
      %7095 = vmatprep.subr.bf16.mxu0 %v6843
      %7096 = vmatpush1.bf16.msra.mxu0 %v6842
      %7097 = vmatprep.subr.bf16.mxu0 %v6916
      %7098 = vmatpush1.bf16.msra.mxu0 %v6913
      %7099 = vmatprep.subr.bf16.mxu0 0
      %7100 = vmatpush1.bf16.msra.mxu0 0
      %7101 = vmatprep.subr.bf16.mxu0 0
      %7102 = vmatpush1.bf16.msra.mxu0 0
      %7103 = vmatprep.mubr.bf16.mxu0 %v6889
      %7104 = vmatmul.mubr.bf16.gmra.mrb[0].mxu0 %v6882
      %v7105 = vpop.f32.mrb[0].mxu0
      %v7106 = vadd.f32 %v6861, %v7105
      %v7107 = vpop.f32.mrb[0].mxu0
      %v7108 = vadd.f32 %v6861, %v7107
      %v7109 = vpop.f32.mrb[0].mxu0
      %v7110 = vadd.f32 %v6866, %v7109
      %v7111 = vpop.f32.mrb[0].mxu0
      %v7112 = vadd.f32 %v6866, %v7111
      %7113 = vmatprep.mubr.bf16.mxu0 %v6892
      %7114 = vmatmul.mubr.bf16.gmra.mrb[0].mxu0 %v6884
      %v7115 = vpop.f32.mrb[0].mxu0
      %v7116 = vadd.f32 %v6871, %v7115
      %v7117 = vpop.f32.mrb[0].mxu0
      %v7118 = vadd.f32 %v6871, %v7117
      %v7119 = vpop.f32.mrb[0].mxu0
      %v7120 = vpop.f32.mrb[0].mxu0
      %7121 = vdwg.mxu0
      %v7122 = vmax.f32 %v6953, 0.0
      %v7123 = vmax.f32 %v6955, 0.0
      %v7124 = vmax.f32 %v7004, 0.0
      %v7125 = vmax.f32 %v7006, 0.0
      %v7126 = vmax.f32 %v7055, 0.0
      %v7127 = vmax.f32 %v7057, 0.0
      %v7128 = vmax.f32 %v7106, 0.0
      %v7129 = vmax.f32 %v7108, 0.0
      %v7130 = vmax.f32 %v6957, 0.0
      %v7131 = vmax.f32 %v6959, 0.0
      %v7132 = vmax.f32 %v7008, 0.0
      %v7133 = vmax.f32 %v7010, 0.0
      %v7134 = vmax.f32 %v7059, 0.0
      %v7135 = vmax.f32 %v7061, 0.0
      %v7136 = vmax.f32 %v7110, 0.0
      %v7137 = vmax.f32 %v7112, 0.0
      %v7138 = vmax.f32 %v6963, 0.0
      %v7139 = vmax.f32 %v6965, 0.0
      %v7140 = vmax.f32 %v7014, 0.0
      %v7141 = vmax.f32 %v7016, 0.0
      %v7142 = vmax.f32 %v7065, 0.0
      %v7143 = vmax.f32 %v7067, 0.0
      %v7144 = vmax.f32 %v7116, 0.0
      %v7145 = vmax.f32 %v7118, 0.0
      %v7146 = vld [vmem:[%s21] sm:$0x1]
      %v7147 = vpack.c.bf16 %v7130, %v7122
      %v7148 = vpack.c.bf16 %v7131, %v7123
      %v7149 = vpack.c.bf16 %v7132, %v7124
      %v7150 = vpack.c.bf16 %v7133, %v7125
      %v7151 = vpack.c.bf16 %v7134, %v7126
      %v7152 = vpack.c.bf16 %v7135, %v7127
      %v7153 = vpack.c.bf16 %v7136, %v7128
      %v7154 = vpack.c.bf16 %v7137, %v7129
      %v7155 = vpack.c.bf16 %v7138, %v7138
      %v7156 = vpack.c.bf16 %v7139, %v7139
      %v7157 = vpack.c.bf16 %v7140, %v7140
      %v7158 = vpack.c.bf16 %v7141, %v7141
      %v7159 = vpack.c.bf16 %v7142, %v7142
      %v7160 = vpack.c.bf16 %v7143, %v7143
      %v7161 = vpack.c.bf16 %v7144, %v7144
      %v7162 = vpack.c.bf16 %v7145, %v7145
      %v7163 = vld [vmem:[#allocation2] sm:$0x1]
      %7165 = vset.pattern.permute.xlu0 0
      %7166 = vperm.xlu0 %7165, %v7163
      %v7167 = vpop.permute.xlu0 %7166
      %v7169 = vlaneseq
      %v7170 = vshrl.u32 %v7169, 7
      %v7171 = vsub.s32 0, %v7170
      %v7172 = vrot.slane %v7167, %v7171
      %vm7173 = vcmask 195584
      %v7175 = vsel %vm7173, %v7146, 0
      %v7178 = vsel %vm2164, %v7155, 0
      %v7181 = vsel %vm2164, %v7156, 0
      %v7184 = vsel %vm2164, %v7157, 0
      %v7187 = vsel %vm2164, %v7158, 0
      %v7190 = vsel %vm2164, %v7159, 0
      %v7193 = vsel %vm2164, %v7160, 0
      %v7196 = vsel %vm2164, %v7161, 0
      %v7199 = vsel %vm2164, %v7162, 0
      %7201 = vmatprep.subr.bf16.mxu0 %v7148
      %7202 = vmatpush1.bf16.msra.mxu0 %v7147
      %7203 = vmatprep.subr.bf16.mxu0 %v7181
      %7204 = vmatpush1.bf16.msra.mxu0 %v7178
      %7205 = vmatprep.subr.bf16.mxu0 0
      %7206 = vmatpush1.bf16.msra.mxu0 0
      %7207 = vmatprep.subr.bf16.mxu0 0
      %7208 = vmatpush1.bf16.msra.mxu0 0
      %7209 = vmatprep.subr.bf16.mxu0 0
      %7210 = vmatpush1.bf16.msra.mxu0 0
      %7211 = vmatprep.subr.bf16.mxu0 0
      %7212 = vmatpush1.bf16.msra.mxu0 0
      %7213 = vmatprep.subr.bf16.mxu0 0
      %7214 = vmatpush1.bf16.msra.mxu0 0
      %7215 = vmatprep.subr.bf16.mxu0 0
      %7216 = vmatpush1.bf16.msra.mxu0 0
      %7217 = vmatprep.subr.bf16.mxu0 0
      %7218 = vmatpush1.bf16.msra.mxu0 0
      %7219 = vmatprep.subr.bf16.mxu0 0
      %7220 = vmatpush1.bf16.msra.mxu0 0
      %7221 = vmatprep.subr.bf16.mxu0 0
      %7222 = vmatpush1.bf16.msra.mxu0 0
      %7223 = vmatprep.subr.bf16.mxu0 0
      %7224 = vmatpush1.bf16.msra.mxu0 0
      %7225 = vmatprep.subr.bf16.mxu0 0
      %7226 = vmatpush1.bf16.msra.mxu0 0
      %7227 = vmatprep.subr.bf16.mxu0 0
      %7228 = vmatpush1.bf16.msra.mxu0 0
      %7229 = vmatprep.subr.bf16.mxu0 0
      %7230 = vmatpush1.bf16.msra.mxu0 0
      %7231 = vmatprep.subr.bf16.mxu0 0
      %7232 = vmatpush1.bf16.msra.mxu0 0
      %7233 = vmatprep.mubr.bf16.mxu0 0
      %7234 = vmatmul.mubr.bf16.gmra.mrb[0].mxu0 %v7175
      %v7235 = vpop.f32.mrb[0].mxu0
      %v7236 = vadd.f32 %v7172, %v7235
      %v7237 = vpop.f32.mrb[0].mxu0
      %v7238 = vadd.f32 %v7172, %v7237
      %v7239 = vpop.f32.mrb[0].mxu0
      %v7240 = vpop.f32.mrb[0].mxu0
      %7241 = vdwg.mxu0
      %7242 = vmatprep.subr.bf16.mxu0 %v7150
      %7243 = vmatpush1.bf16.msra.mxu0 %v7149
      %7244 = vmatprep.subr.bf16.mxu0 %v7187
      %7245 = vmatpush1.bf16.msra.mxu0 %v7184
      %7246 = vmatprep.subr.bf16.mxu0 0
      %7247 = vmatpush1.bf16.msra.mxu0 0
      %7248 = vmatprep.subr.bf16.mxu0 0
      %7249 = vmatpush1.bf16.msra.mxu0 0
      %7250 = vmatprep.subr.bf16.mxu0 0
      %7251 = vmatpush1.bf16.msra.mxu0 0
      %7252 = vmatprep.subr.bf16.mxu0 0
      %7253 = vmatpush1.bf16.msra.mxu0 0
      %7254 = vmatprep.subr.bf16.mxu0 0
      %7255 = vmatpush1.bf16.msra.mxu0 0
      %7256 = vmatprep.subr.bf16.mxu0 0
      %7257 = vmatpush1.bf16.msra.mxu0 0
      %7258 = vmatprep.subr.bf16.mxu0 0
      %7259 = vmatpush1.bf16.msra.mxu0 0
      %7260 = vmatprep.subr.bf16.mxu0 0
      %7261 = vmatpush1.bf16.msra.mxu0 0
      %7262 = vmatprep.subr.bf16.mxu0 0
      %7263 = vmatpush1.bf16.msra.mxu0 0
      %7264 = vmatprep.subr.bf16.mxu0 0
      %7265 = vmatpush1.bf16.msra.mxu0 0
      %7266 = vmatprep.subr.bf16.mxu0 0
      %7267 = vmatpush1.bf16.msra.mxu0 0
      %7268 = vmatprep.subr.bf16.mxu0 0
      %7269 = vmatpush1.bf16.msra.mxu0 0
      %7270 = vmatprep.subr.bf16.mxu0 0
      %7271 = vmatpush1.bf16.msra.mxu0 0
      %7272 = vmatprep.subr.bf16.mxu0 0
      %7273 = vmatpush1.bf16.msra.mxu0 0
      %7274 = vmatprep.mubr.bf16.mxu0 0
      %7275 = vmatmul.mubr.bf16.gmra.mrb[0].mxu0 %v7175
      %v7276 = vpop.f32.mrb[0].mxu0
      %v7277 = vadd.f32 %v7172, %v7276
      %v7278 = vpop.f32.mrb[0].mxu0
      %v7279 = vadd.f32 %v7172, %v7278
      %v7280 = vpop.f32.mrb[0].mxu0
      %v7281 = vpop.f32.mrb[0].mxu0
      %7282 = vdwg.mxu0
      %7283 = vmatprep.subr.bf16.mxu0 %v7152
      %7284 = vmatpush1.bf16.msra.mxu0 %v7151
      %7285 = vmatprep.subr.bf16.mxu0 %v7193
      %7286 = vmatpush1.bf16.msra.mxu0 %v7190
      %7287 = vmatprep.subr.bf16.mxu0 0
      %7288 = vmatpush1.bf16.msra.mxu0 0
      %7289 = vmatprep.subr.bf16.mxu0 0
      %7290 = vmatpush1.bf16.msra.mxu0 0
      %7291 = vmatprep.subr.bf16.mxu0 0
      %7292 = vmatpush1.bf16.msra.mxu0 0
      %7293 = vmatprep.subr.bf16.mxu0 0
      %7294 = vmatpush1.bf16.msra.mxu0 0
      %7295 = vmatprep.subr.bf16.mxu0 0
      %7296 = vmatpush1.bf16.msra.mxu0 0
      %7297 = vmatprep.subr.bf16.mxu0 0
      %7298 = vmatpush1.bf16.msra.mxu0 0
      %7299 = vmatprep.subr.bf16.mxu0 0
      %7300 = vmatpush1.bf16.msra.mxu0 0
      %7301 = vmatprep.subr.bf16.mxu0 0
      %7302 = vmatpush1.bf16.msra.mxu0 0
      %7303 = vmatprep.subr.bf16.mxu0 0
      %7304 = vmatpush1.bf16.msra.mxu0 0
      %7305 = vmatprep.subr.bf16.mxu0 0
      %7306 = vmatpush1.bf16.msra.mxu0 0
      %7307 = vmatprep.subr.bf16.mxu0 0
      %7308 = vmatpush1.bf16.msra.mxu0 0
      %7309 = vmatprep.subr.bf16.mxu0 0
      %7310 = vmatpush1.bf16.msra.mxu0 0
      %7311 = vmatprep.subr.bf16.mxu0 0
      %7312 = vmatpush1.bf16.msra.mxu0 0
      %7313 = vmatprep.subr.bf16.mxu0 0
      %7314 = vmatpush1.bf16.msra.mxu0 0
      %7315 = vmatprep.mubr.bf16.mxu0 0
      %7316 = vmatmul.mubr.bf16.gmra.mrb[0].mxu0 %v7175
      %v7317 = vpop.f32.mrb[0].mxu0
      %v7318 = vadd.f32 %v7172, %v7317
      %v7319 = vpop.f32.mrb[0].mxu0
      %v7320 = vadd.f32 %v7172, %v7319
      %v7321 = vpop.f32.mrb[0].mxu0
      %v7322 = vpop.f32.mrb[0].mxu0
      %7323 = vdwg.mxu0
      %7324 = vmatprep.subr.bf16.mxu0 %v7154
      %7325 = vmatpush1.bf16.msra.mxu0 %v7153
      %7326 = vmatprep.subr.bf16.mxu0 %v7199
      %7327 = vmatpush1.bf16.msra.mxu0 %v7196
      %7328 = vmatprep.subr.bf16.mxu0 0
      %7329 = vmatpush1.bf16.msra.mxu0 0
      %7330 = vmatprep.subr.bf16.mxu0 0
      %7331 = vmatpush1.bf16.msra.mxu0 0
      %7332 = vmatprep.subr.bf16.mxu0 0
      %7333 = vmatpush1.bf16.msra.mxu0 0
      %7334 = vmatprep.subr.bf16.mxu0 0
      %7335 = vmatpush1.bf16.msra.mxu0 0
      %7336 = vmatprep.subr.bf16.mxu0 0
      %7337 = vmatpush1.bf16.msra.mxu0 0
      %7338 = vmatprep.subr.bf16.mxu0 0
      %7339 = vmatpush1.bf16.msra.mxu0 0
      %7340 = vmatprep.subr.bf16.mxu0 0
      %7341 = vmatpush1.bf16.msra.mxu0 0
      %7342 = vmatprep.subr.bf16.mxu0 0
      %7343 = vmatpush1.bf16.msra.mxu0 0
      %7344 = vmatprep.subr.bf16.mxu0 0
      %7345 = vmatpush1.bf16.msra.mxu0 0
      %7346 = vmatprep.subr.bf16.mxu0 0
      %7347 = vmatpush1.bf16.msra.mxu0 0
      %7348 = vmatprep.subr.bf16.mxu0 0
      %7349 = vmatpush1.bf16.msra.mxu0 0
      %7350 = vmatprep.subr.bf16.mxu0 0
      %7351 = vmatpush1.bf16.msra.mxu0 0
      %7352 = vmatprep.subr.bf16.mxu0 0
      %7353 = vmatpush1.bf16.msra.mxu0 0
      %7354 = vmatprep.subr.bf16.mxu0 0
      %7355 = vmatpush1.bf16.msra.mxu0 0
      %7356 = vmatprep.mubr.bf16.mxu0 0
      %7357 = vmatmul.mubr.bf16.gmra.mrb[0].mxu0 %v7175
      %v7358 = vpop.f32.mrb[0].mxu0
      %v7359 = vadd.f32 %v7172, %v7358
      %v7360 = vpop.f32.mrb[0].mxu0
      %v7361 = vadd.f32 %v7172, %v7360
      %v7362 = vpop.f32.mrb[0].mxu0
      %v7363 = vpop.f32.mrb[0].mxu0
      %7364 = vdwg.mxu0
      %v7373 = vcombine.low %v7236, %v7238
      %v7374 = vcombine.low %v7277, %v7279
      %v7375 = vcombine.low %v7318, %v7320
      %v7376 = vcombine.low %v7359, %v7361
      %v7378 = vunpack.c.l.s4 1966171168
      %v7379 = vunpack.c.0.s8 %v7378
      %v7380 = vlaneseq
      %v7381 = vshrl.u32 %v7380, 7
      %v7382 = vsub.s32 %v7379, %v7381
      %v7383 = vrot.slane %v7373, %v7382
      %v7385 = vunpack.c.l.s4 1966171168
      %v7386 = vunpack.c.0.s8 %v7385
      %v7387 = vlaneseq
      %v7388 = vshrl.u32 %v7387, 7
      %v7389 = vsub.s32 %v7386, %v7388
      %v7390 = vrot.slane %v7374, %v7389
      %v7392 = vunpack.c.l.s4 1966171168
      %v7393 = vunpack.c.0.s8 %v7392
      %v7394 = vlaneseq
      %v7395 = vshrl.u32 %v7394, 7
      %v7396 = vsub.s32 %v7393, %v7395
      %v7397 = vrot.slane %v7375, %v7396
      %v7399 = vunpack.c.l.s4 1966171168
      %v7400 = vunpack.c.0.s8 %v7399
      %v7401 = vlaneseq
      %v7402 = vshrl.u32 %v7401, 7
      %v7403 = vsub.s32 %v7400, %v7402
      %v7404 = vrot.slane %v7376, %v7403
      %v7405 = vcombine.low %v7383, %v7390
      %v7406 = vcombine.low %v7397, %v7404
      %v7408 = vunpack.c.l.s4 1966171168
      %v7409 = vunpack.c.0.s8 %v7408
      %v7410 = vlaneseq
      %v7411 = vshrl.u32 %v7410, 7
      %v7412 = vsub.s32 %v7409, %v7411
      %v7413 = vrot.slane %v7405, %v7412
      %v7415 = vunpack.c.l.s4 1966171168
      %v7416 = vunpack.c.0.s8 %v7415
      %v7417 = vlaneseq
      %v7418 = vshrl.u32 %v7417, 7
      %v7419 = vsub.s32 %v7416, %v7418
      %v7420 = vrot.slane %v7406, %v7419
      %v7421 = vcombine.low %v7413, %v7420
      %7423 = vst [vmem:[%s747] sm:$0xff] %v7421
      %p7424 = scmp.lt.s32.totalorder %s36, 1
      %s7425 = scalar_select %p7424, %s36, 1
      %s7426 = smul.addr %s7425, 8
      %s7427 = scalar_lea.vmem %s23, %s7426
      // Predicated region
      $region113: #{aggregation_forward.1} parent=111 // pred_check
        %p7428 = pneg %p552
      $region114: #{aggregation_forward.1} parent=111 // pred_check_branch
        %7430 = sbr.rel (%p7428) target = $region116
      $region115: #{aggregation_forward.1} parent=111 // pred_region
        _
      $region116: #{aggregation_forward.1} parent=111 // pred_fallthru
        _
    $region112: #{aggregation_forward.1} parent=5 // pred_fallthru
      _
    %p7431 = scmp.le.s32.totalorder 2, %s31
    // Predicated region
    $region117: #{aggregation_forward.1} parent=5 // pred_check
      %p7432 = pneg %p7431
    $region118: #{aggregation_forward.1} parent=5 // pred_check_branch
      %7434 = sbr.rel (%p7432) target = $region120
    $region119: #{aggregation_forward.1} parent=5 // pred_region
      %s7435 = ssub.s32 %s31, 2
      // Predicated region
      $region121: #{aggregation_forward.1} parent=119 // pred_check
        %p7436 = pneg %p558
      $region122: #{aggregation_forward.1} parent=119 // pred_check_branch
        %7438 = sbr.rel (%p7436) target = $region124
      $region123: #{aggregation_forward.1} parent=119 // pred_region
        %p7439 = scmp.lt.s32.totalorder %s37, 1
        %s7440 = scalar_select %p7439, %s37, 1
        %s7441 = smul.addr %s7440, 8
        %s7442 = scalar_lea.vmem %s23, %s7441
      $region124: #{aggregation_forward.1} parent=119 // pred_fallthru
        _
    $region120: #{aggregation_forward.1} parent=5 // pred_fallthru
      _
  $region6: #{aggregation_forward.1} parent=0 // loop_footer
    %s35 = sadd.s32 1, %s31
  $region7: #{aggregation_forward.1} parent=0 // loop_footer_branch
    %30 = sbr.rel target = $region3
  $region8: #{aggregation_forward.1} parent=0 // loop_exit
    _

</llo_original>
